<compile_context>
chip_gen: v7x
topology: tpu7x:2x2x1
jax: 0.10.0
libtpu: 0.0.40
codegen_flags: <defaults>
</compile_context>

<pallas_src>
import numpy as np
import jax
import jax.numpy as jnp
from jax.experimental import pallas as pl
from jax.experimental.pallas import tpu as pltpu

BN_EPS = 1e-5


# --------------------------------------------------------------------------- config
def _conv_specs(input_channels):
    # (Cin, Cout, kernel, stride, pad) — mirrors the nn.Sequential in __init__
    return [
        (input_channels, 64, 7, 2, 3),
        (64, 128, 3, 2, 1),
        (128, 256, 3, 2, 1),
        (256, 256, 3, 2, 1),
        (256, 256, 3, 2, 1),
    ]


def _out_size(n, k, s, p):
    return (n + 2 * p - k) // s + 1


# --------------------------------------------------------------------------- kernel
def fused_encoder_kernel(
    p1_ref, w1_ref, g1_ref, be1_ref,
    s2_ref, w2_ref, g2_ref, be2_ref,
    s3_ref, w3_ref, g3_ref, be3_ref,
    s4_ref, w4_ref, g4_ref, be4_ref,
    s5_ref, w5_ref, g5_ref, be5_ref,
    pool_ref, wh_ref, bh_ref,
    o_ref,
):
    def bn_relu(z, g_ref, b_ref):
        # BatchNorm2d with batch statistics (training-mode forward), folded into a
        # single per-channel scale/shift; one-pass variance; ReLU.  All in f32.
        m = jnp.mean(z, axis=0, keepdims=True)
        var = jnp.mean(z * z, axis=0, keepdims=True) - m * m
        scale = g_ref[...] * jax.lax.rsqrt(var + BN_EPS)
        shift = b_ref[...] - m * scale
        return jnp.maximum(z * scale + shift, 0.0)

    def conv(f, s_ref, w_ref):
        # stride-2 padded conv as a sum over kernel offsets of
        # (0/1 row-selection matmul) @ (per-offset weight slice).  bf16 MXU, f32 acc.
        fb = f.astype(jnp.bfloat16)
        z = None
        for k in range(s_ref.shape[0]):  # static, fully unrolled (kh*kw = 9)
            rows = jnp.dot(s_ref[k], fb, preferred_element_type=jnp.float32)
            zk = jnp.dot(rows.astype(jnp.bfloat16), w_ref[k],
                         preferred_element_type=jnp.float32)
            z = zk if z is None else z + zk
        return z

    # ---- layer 1: pre-built im2col patches of the raw input @ W1 ----
    z1 = jnp.dot(p1_ref[...], w1_ref[...], preferred_element_type=jnp.float32)
    f = bn_relu(z1, g1_ref, be1_ref)                       # (N*H1*W1, 64)

    # ---- layers 2..5 (activations never leave the kernel) ----
    f = bn_relu(conv(f, s2_ref, w2_ref), g2_ref, be2_ref)  # (N*H2*W2, 128)
    f = bn_relu(conv(f, s3_ref, w3_ref), g3_ref, be3_ref)  # (N*H3*W3, 256)
    f = bn_relu(conv(f, s4_ref, w4_ref), g4_ref, be4_ref)  # (N*H4*W4, 256)
    f = bn_relu(conv(f, s5_ref, w5_ref), g5_ref, be5_ref)  # (N*H5*W5, 256)

    # ---- head: AdaptiveAvgPool2d((1,1)) + Conv2d(256, code, 1), fused ----
    # pool_ref is a 0/1 batch-membership matrix; 1/(H5*W5) is folded into wh.
    pooled = jnp.dot(pool_ref[...], f.astype(jnp.bfloat16),
                     preferred_element_type=jnp.float32)   # (N, 256)
    # (N, code) with code < 128 lanes -> masked store; negligible at this size.
    o_ref[...] = jnp.dot(pooled.astype(jnp.bfloat16), wh_ref[...],
                         preferred_element_type=jnp.float32) + bh_ref[...]


# --------------------------------------------------------------------------- pallas wrapper
def _full_spec(a):
    zeros = (0,) * a.ndim
    return pl.BlockSpec(tuple(a.shape), lambda i, _z=zeros: _z)


def _fused_call(kernel_inputs, batch, code_size):
    return pl.pallas_call(
        fused_encoder_kernel,
        out_shape=jax.ShapeDtypeStruct((batch, code_size), jnp.float32),
        grid=(1,),
        in_specs=[_full_spec(a) for a in kernel_inputs],
        out_specs=pl.BlockSpec((batch, code_size), lambda i: (0, 0)),
        compiler_params=pltpu.CompilerParams(
            dimension_semantics=("arbitrary",),
            vmem_limit_bytes=32 * 1024 * 1024,   # headroom on v5e's 16 MiB default
        ),
    )(*kernel_inputs)


# --------------------------------------------------------------------------- static plan (numpy, trace-time)
def _layer1_gather_indices(H, W, C, k, s, p, k_pad):
    """Flat gather indices turning (N, H*W*C) input into (Ho*Wo, k*k*C) patches.
    Column order (di, dj, c) — must match the layer-1 weight reshape below."""
    Ho, Wo = _out_size(H, k, s, p), _out_size(W, k, s, p)
    oob = H * W * C                        # >= size -> handled by mode='fill'
    idx = np.full((Ho * Wo, k_pad), oob, np.int32)
    for ho in range(Ho):
        for wo in range(Wo):
            r = ho * Wo + wo
            for di in range(k):
                for dj in range(k):
                    h = ho * s + di - p
                    w = wo * s + dj - p
                    if 0 <= h < H and 0 <= w < W:
                        base = (di * k + dj) * C
                        col = (h * W + w) * C
                        idx[r, base:base + C] = np.arange(col, col + C, dtype=np.int32)
    return idx, Ho, Wo


def _selection_matrices(N, Hin, Win, Hout, Wout, k, s, p):
    """S[k_off, out_row, in_row] = 1 iff input row feeds output row at that offset."""
    S = np.zeros((k * k, N * Hout * Wout, N * Hin * Win), np.float32)
    for n in range(N):
        for ho in range(Hout):
            for wo in range(Wout):
                r = (n * Hout + ho) * Wout + wo
                for di in range(k):
                    for dj in range(k):
                        h = ho * s + di - p
                        w = wo * s + dj - p
                        if 0 <= h < Hin and 0 <= w < Win:
                            S[di * k + dj, r, (n * Hin + h) * Win + w] = 1.0
    return S


# --------------------------------------------------------------------------- params & forward
def init_params(input_channels, code_size):
    key = jax.random.PRNGKey(42)
    convs = []
    for idx, (ci, co, ks, st, pd) in enumerate(_conv_specs(input_channels)):
        kk = jax.random.fold_in(key, idx)
        k1, k2, k3, k4 = jax.random.split(kk, 4)
        w = 0.05 * jax.random.normal(k1, (co, ci, ks, ks), jnp.float32)  # (Cout,Cin,kh,kw)
        b = 0.05 * jax.random.normal(k2, (co,), jnp.float32)  # kept for parity; cancelled by BN
        gamma = 1.0 + 0.05 * jax.random.normal(k3, (co,), jnp.float32)
        beta = 0.05 * jax.random.normal(k4, (co,), jnp.float32)
        convs.append((w, b, gamma, beta))
    kh1, kh2 = jax.random.split(jax.random.fold_in(key, 99), 2)
    head_w = 0.05 * jax.random.normal(kh1, (code_size, 256, 1, 1), jnp.float32)
    head_b = 0.05 * jax.random.normal(kh2, (code_size,), jnp.float32)
    return {"convs": convs, "head_w": head_w, "head_b": head_b}


@jax.jit
def private_encoder_forward(x_nchw, params):
    x = jnp.transpose(x_nchw, (0, 2, 3, 1)).astype(jnp.float32)   # NCHW -> NHWC
    N, H, W, Cin = x.shape
    specs = _conv_specs(Cin)

    # output spatial sizes per stage (static)
    spatial = [(H, W)]
    for (_, _, k, s, p) in specs:
        h, w = spatial[-1]
        spatial.append((_out_size(h, k, s, p), _out_size(w, k, s, p)))

    # ---- layer-1 im2col of the raw input via one XLA gather ----
    k1, s1, p1 = specs[0][2], specs[0][3], specs[0][4]
    K1 = k1 * k1 * Cin
    K1p = ((K1 + 127) // 128) * 128          # lane-pad K (matching zero rows in w1)
    idx, H1, W1 = _layer1_gather_indices(H, W, Cin, k1, s1, p1, K1p)
    patches = jnp.take(x.reshape(N, H * W * Cin), jnp.asarray(idx), axis=1,
                       mode="fill", fill_value=0.0)
    patches = patches.reshape(N * H1 * W1, K1p).astype(jnp.bfloat16)

    kernel_inputs = [patches]
    for li, (ci, co, k, s, p) in enumerate(specs):
        w, b, gamma, beta = params["convs"][li]
        del b  # conv bias immediately before batch-stat BN is exactly cancelled
        if li == 0:
            w_mat = jnp.transpose(w, (2, 3, 1, 0)).reshape(K1, co)   # (kh*kw*Cin, Cout)
            w_mat = jnp.pad(w_mat, ((0, K1p - K1), (0, 0)))
            kernel_inputs += [w_mat.astype(jnp.bfloat16)]
        else:
            (hi, wi), (ho, wo) = spatial[li], spatial[li + 1]
            S = _selection_matrices(N, hi, wi, ho, wo, k, s, p)
            w_stack = jnp.transpose(w, (2, 3, 1, 0)).reshape(k * k, ci, co)
            kernel_inputs += [jnp.asarray(S, jnp.bfloat16),
                              w_stack.astype(jnp.bfloat16)]
        kernel_inputs += [gamma.reshape(1, co), beta.reshape(1, co)]

    # ---- head: pool membership matrix (0/1) + 1x1 conv weight with 1/(H*W) folded ----
    H5, W5 = spatial[-1]
    M5 = N * H5 * W5
    pool = np.zeros((N, M5), np.float32)
    for n in range(N):
        pool[n, n * H5 * W5:(n + 1) * H5 * W5] = 1.0
    code = params["head_w"].shape[0]
    wh = (params["head_w"].reshape(code, 256).T * (1.0 / (H5 * W5))).astype(jnp.bfloat16)
    bh = params["head_b"].reshape(1, code)
    kernel_inputs += [jnp.asarray(pool, jnp.bfloat16), wh, bh]

    return _fused_call(kernel_inputs, N, code)   # (N, code_size)


# --------------------------------------------------------------------------- demo
if __name__ == "__main__":
    input_channels, code_size = 4, 32
    x = jax.random.normal(jax.random.PRNGKey(0), (2, input_channels, 16, 16), jnp.float32)
    params = init_params(input_channels, code_size)
    out = private_encoder_forward(x, params)
    out = jax.block_until_ready(out)
    assert out.shape == (2, code_size), out.shape
    print("KERNEL_OK")
</pallas_src>

<mosaic_0001>
module attributes {stable_mosaic.version = 11 : i64} {
  func.func @fused_encoder_kernel(%arg0: i32, %arg1: memref<128x256xbf16, #tpu.memory_space<vmem>>, %arg2: memref<256x64xbf16, #tpu.memory_space<vmem>>, %arg3: memref<1x64xf32, #tpu.memory_space<vmem>>, %arg4: memref<1x64xf32, #tpu.memory_space<vmem>>, %arg5: memref<9x32x128xbf16, #tpu.memory_space<vmem>>, %arg6: memref<9x64x128xbf16, #tpu.memory_space<vmem>>, %arg7: memref<1x128xf32, #tpu.memory_space<vmem>>, %arg8: memref<1x128xf32, #tpu.memory_space<vmem>>, %arg9: memref<9x8x32xbf16, #tpu.memory_space<vmem>>, %arg10: memref<9x128x256xbf16, #tpu.memory_space<vmem>>, %arg11: memref<1x256xf32, #tpu.memory_space<vmem>>, %arg12: memref<1x256xf32, #tpu.memory_space<vmem>>, %arg13: memref<9x2x8xbf16, #tpu.memory_space<vmem>>, %arg14: memref<9x256x256xbf16, #tpu.memory_space<vmem>>, %arg15: memref<1x256xf32, #tpu.memory_space<vmem>>, %arg16: memref<1x256xf32, #tpu.memory_space<vmem>>, %arg17: memref<9x2x2xbf16, #tpu.memory_space<vmem>>, %arg18: memref<9x256x256xbf16, #tpu.memory_space<vmem>>, %arg19: memref<1x256xf32, #tpu.memory_space<vmem>>, %arg20: memref<1x256xf32, #tpu.memory_space<vmem>>, %arg21: memref<2x2xbf16, #tpu.memory_space<vmem>>, %arg22: memref<256x32xbf16, #tpu.memory_space<vmem>>, %arg23: memref<1x32xf32, #tpu.memory_space<vmem>>, %arg24: memref<2x32xf32, #tpu.memory_space<vmem>>) attributes {dimension_semantics = [#tpu.dimension_semantics<arbitrary>], iteration_bounds = array<i64: 1>, scalar_prefetch = 0 : i64, scratch_operands = 0 : i64, tpu.core_type = #tpu.core_type<tc>, window_params = [{pipeline_mode = #tpu.pipeline_mode<synchronous>, transform_indices = @transform_0, window_bounds = array<i64: 128, 256>}, {pipeline_mode = #tpu.pipeline_mode<synchronous>, transform_indices = @transform_1, window_bounds = array<i64: 256, 64>}, {pipeline_mode = #tpu.pipeline_mode<synchronous>, transform_indices = @transform_2, window_bounds = array<i64: 1, 64>}, {pipeline_mode = #tpu.pipeline_mode<synchronous>, transform_indices = @transform_3, window_bounds = array<i64: 1, 64>}, {pipeline_mode = #tpu.pipeline_mode<synchronous>, transform_indices = @transform_4, window_bounds = array<i64: 9, 32, 128>}, {pipeline_mode = #tpu.pipeline_mode<synchronous>, transform_indices = @transform_5, window_bounds = array<i64: 9, 64, 128>}, {pipeline_mode = #tpu.pipeline_mode<synchronous>, transform_indices = @transform_6, window_bounds = array<i64: 1, 128>}, {pipeline_mode = #tpu.pipeline_mode<synchronous>, transform_indices = @transform_7, window_bounds = array<i64: 1, 128>}, {pipeline_mode = #tpu.pipeline_mode<synchronous>, transform_indices = @transform_8, window_bounds = array<i64: 9, 8, 32>}, {pipeline_mode = #tpu.pipeline_mode<synchronous>, transform_indices = @transform_9, window_bounds = array<i64: 9, 128, 256>}, {pipeline_mode = #tpu.pipeline_mode<synchronous>, transform_indices = @transform_10, window_bounds = array<i64: 1, 256>}, {pipeline_mode = #tpu.pipeline_mode<synchronous>, transform_indices = @transform_11, window_bounds = array<i64: 1, 256>}, {pipeline_mode = #tpu.pipeline_mode<synchronous>, transform_indices = @transform_12, window_bounds = array<i64: 9, 2, 8>}, {pipeline_mode = #tpu.pipeline_mode<synchronous>, transform_indices = @transform_13, window_bounds = array<i64: 9, 256, 256>}, {pipeline_mode = #tpu.pipeline_mode<synchronous>, transform_indices = @transform_14, window_bounds = array<i64: 1, 256>}, {pipeline_mode = #tpu.pipeline_mode<synchronous>, transform_indices = @transform_15, window_bounds = array<i64: 1, 256>}, {pipeline_mode = #tpu.pipeline_mode<synchronous>, transform_indices = @transform_16, window_bounds = array<i64: 9, 2, 2>}, {pipeline_mode = #tpu.pipeline_mode<synchronous>, transform_indices = @transform_17, window_bounds = array<i64: 9, 256, 256>}, {pipeline_mode = #tpu.pipeline_mode<synchronous>, transform_indices = @transform_18, window_bounds = array<i64: 1, 256>}, {pipeline_mode = #tpu.pipeline_mode<synchronous>, transform_indices = @transform_19, window_bounds = array<i64: 1, 256>}, {pipeline_mode = #tpu.pipeline_mode<synchronous>, transform_indices = @transform_20, window_bounds = array<i64: 2, 2>}, {pipeline_mode = #tpu.pipeline_mode<synchronous>, transform_indices = @transform_21, window_bounds = array<i64: 256, 32>}, {pipeline_mode = #tpu.pipeline_mode<synchronous>, transform_indices = @transform_22, window_bounds = array<i64: 1, 32>}, {pipeline_mode = #tpu.pipeline_mode<synchronous>, transform_indices = @transform_23, window_bounds = array<i64: 2, 32>}]} {
    %c0 = arith.constant 0 : index
    %c0_0 = arith.constant 0 : index
    %0 = vector.load %arg1[%c0, %c0_0] : memref<128x256xbf16, #tpu.memory_space<vmem>>, vector<128x256xbf16>
    %c0_1 = arith.constant 0 : index
    %c0_2 = arith.constant 0 : index
    %1 = vector.load %arg2[%c0_1, %c0_2] : memref<256x64xbf16, #tpu.memory_space<vmem>>, vector<256x64xbf16>
    %cst = arith.constant dense<0.000000e+00> : vector<128x64xf32>
    %2 = tpu.matmul %0, %1, %cst {dimension_numbers = #tpu.dot_dimension_numbers<[1], [0], [0], [1], [0, 0, 1, 1], [], []>} : vector<128x256xbf16>, vector<256x64xbf16>, vector<128x64xf32> -> vector<128x64xf32>
    %cst_3 = arith.constant dense<0.000000e+00> : vector<64xf32>
    %3 = vector.multi_reduction <add>, %2, %cst_3 [0] : vector<128x64xf32> to vector<64xf32>
    %4 = vector.shape_cast %3 : vector<64xf32> to vector<1x64xf32>
    %cst_4 = arith.constant 1.280000e+02 : f32
    %5 = vector.broadcast %cst_4 : f32 to vector<1x64xf32>
    %6 = arith.divf %4, %5 : vector<1x64xf32>
    %7 = arith.mulf %2, %2 : vector<128x64xf32>
    %cst_5 = arith.constant dense<0.000000e+00> : vector<64xf32>
    %8 = vector.multi_reduction <add>, %7, %cst_5 [0] : vector<128x64xf32> to vector<64xf32>
    %9 = vector.shape_cast %8 : vector<64xf32> to vector<1x64xf32>
    %cst_6 = arith.constant 1.280000e+02 : f32
    %10 = vector.broadcast %cst_6 : f32 to vector<1x64xf32>
    %11 = arith.divf %9, %10 : vector<1x64xf32>
    %12 = arith.mulf %6, %6 : vector<1x64xf32>
    %13 = arith.subf %11, %12 : vector<1x64xf32>
    %c0_7 = arith.constant 0 : index
    %c0_8 = arith.constant 0 : index
    %14 = vector.load %arg3[%c0_7, %c0_8] : memref<1x64xf32, #tpu.memory_space<vmem>>, vector<1x64xf32>
    %cst_9 = arith.constant 9.99999974E-6 : f32
    %15 = vector.broadcast %cst_9 : f32 to vector<1x64xf32>
    %16 = arith.addf %13, %15 : vector<1x64xf32>
    %17 = math.rsqrt %16 : vector<1x64xf32>
    %18 = arith.mulf %14, %17 : vector<1x64xf32>
    %c0_10 = arith.constant 0 : index
    %c0_11 = arith.constant 0 : index
    %19 = vector.load %arg4[%c0_10, %c0_11] : memref<1x64xf32, #tpu.memory_space<vmem>>, vector<1x64xf32>
    %20 = arith.mulf %6, %18 : vector<1x64xf32>
    %21 = arith.subf %19, %20 : vector<1x64xf32>
    %22 = vector.broadcast %18 : vector<1x64xf32> to vector<128x64xf32>
    %23 = arith.mulf %2, %22 : vector<128x64xf32>
    %24 = vector.broadcast %21 : vector<1x64xf32> to vector<128x64xf32>
    %25 = arith.addf %23, %24 : vector<128x64xf32>
    %cst_12 = arith.constant 0.000000e+00 : f32
    %26 = vector.broadcast %cst_12 : f32 to vector<128x64xf32>
    %27 = arith.maximumf %25, %26 : vector<128x64xf32>
    %28 = arith.truncf %27 : vector<128x64xf32> to vector<128x64xbf16>
    %c0_13 = arith.constant 0 : index
    %c0_14 = arith.constant 0 : index
    %c0_15 = arith.constant 0 : index
    %29 = vector.load %arg5[%c0_13, %c0_14, %c0_15] : memref<9x32x128xbf16, #tpu.memory_space<vmem>>, vector<1x32x128xbf16>
    %30 = vector.shape_cast %29 : vector<1x32x128xbf16> to vector<32x128xbf16>
    %cst_16 = arith.constant dense<0.000000e+00> : vector<32x64xf32>
    %31 = tpu.matmul %30, %28, %cst_16 {dimension_numbers = #tpu.dot_dimension_numbers<[1], [0], [0], [1], [0, 0, 1, 1], [], []>} : vector<32x128xbf16>, vector<128x64xbf16>, vector<32x64xf32> -> vector<32x64xf32>
    %32 = arith.truncf %31 : vector<32x64xf32> to vector<32x64xbf16>
    %c0_17 = arith.constant 0 : index
    %c0_18 = arith.constant 0 : index
    %c0_19 = arith.constant 0 : index
    %33 = vector.load %arg6[%c0_17, %c0_18, %c0_19] : memref<9x64x128xbf16, #tpu.memory_space<vmem>>, vector<1x64x128xbf16>
    %34 = vector.shape_cast %33 : vector<1x64x128xbf16> to vector<64x128xbf16>
    %cst_20 = arith.constant dense<0.000000e+00> : vector<32x128xf32>
    %35 = tpu.matmul %32, %34, %cst_20 {dimension_numbers = #tpu.dot_dimension_numbers<[1], [0], [0], [1], [0, 0, 1, 1], [], []>} : vector<32x64xbf16>, vector<64x128xbf16>, vector<32x128xf32> -> vector<32x128xf32>
    %c1 = arith.constant 1 : index
    %c0_21 = arith.constant 0 : index
    %c0_22 = arith.constant 0 : index
    %36 = vector.load %arg5[%c1, %c0_21, %c0_22] : memref<9x32x128xbf16, #tpu.memory_space<vmem>>, vector<1x32x128xbf16>
    %37 = vector.shape_cast %36 : vector<1x32x128xbf16> to vector<32x128xbf16>
    %cst_23 = arith.constant dense<0.000000e+00> : vector<32x64xf32>
    %38 = tpu.matmul %37, %28, %cst_23 {dimension_numbers = #tpu.dot_dimension_numbers<[1], [0], [0], [1], [0, 0, 1, 1], [], []>} : vector<32x128xbf16>, vector<128x64xbf16>, vector<32x64xf32> -> vector<32x64xf32>
    %39 = arith.truncf %38 : vector<32x64xf32> to vector<32x64xbf16>
    %c1_24 = arith.constant 1 : index
    %c0_25 = arith.constant 0 : index
    %c0_26 = arith.constant 0 : index
    %40 = vector.load %arg6[%c1_24, %c0_25, %c0_26] : memref<9x64x128xbf16, #tpu.memory_space<vmem>>, vector<1x64x128xbf16>
    %41 = vector.shape_cast %40 : vector<1x64x128xbf16> to vector<64x128xbf16>
    %cst_27 = arith.constant dense<0.000000e+00> : vector<32x128xf32>
    %42 = tpu.matmul %39, %41, %cst_27 {dimension_numbers = #tpu.dot_dimension_numbers<[1], [0], [0], [1], [0, 0, 1, 1], [], []>} : vector<32x64xbf16>, vector<64x128xbf16>, vector<32x128xf32> -> vector<32x128xf32>
    %43 = arith.addf %35, %42 : vector<32x128xf32>
    %c2 = arith.constant 2 : index
    %c0_28 = arith.constant 0 : index
    %c0_29 = arith.constant 0 : index
    %44 = vector.load %arg5[%c2, %c0_28, %c0_29] : memref<9x32x128xbf16, #tpu.memory_space<vmem>>, vector<1x32x128xbf16>
    %45 = vector.shape_cast %44 : vector<1x32x128xbf16> to vector<32x128xbf16>
    %cst_30 = arith.constant dense<0.000000e+00> : vector<32x64xf32>
    %46 = tpu.matmul %45, %28, %cst_30 {dimension_numbers = #tpu.dot_dimension_numbers<[1], [0], [0], [1], [0, 0, 1, 1], [], []>} : vector<32x128xbf16>, vector<128x64xbf16>, vector<32x64xf32> -> vector<32x64xf32>
    %47 = arith.truncf %46 : vector<32x64xf32> to vector<32x64xbf16>
    %c2_31 = arith.constant 2 : index
    %c0_32 = arith.constant 0 : index
    %c0_33 = arith.constant 0 : index
    %48 = vector.load %arg6[%c2_31, %c0_32, %c0_33] : memref<9x64x128xbf16, #tpu.memory_space<vmem>>, vector<1x64x128xbf16>
    %49 = vector.shape_cast %48 : vector<1x64x128xbf16> to vector<64x128xbf16>
    %cst_34 = arith.constant dense<0.000000e+00> : vector<32x128xf32>
    %50 = tpu.matmul %47, %49, %cst_34 {dimension_numbers = #tpu.dot_dimension_numbers<[1], [0], [0], [1], [0, 0, 1, 1], [], []>} : vector<32x64xbf16>, vector<64x128xbf16>, vector<32x128xf32> -> vector<32x128xf32>
    %51 = arith.addf %43, %50 : vector<32x128xf32>
    %c3 = arith.constant 3 : index
    %c0_35 = arith.constant 0 : index
    %c0_36 = arith.constant 0 : index
    %52 = vector.load %arg5[%c3, %c0_35, %c0_36] : memref<9x32x128xbf16, #tpu.memory_space<vmem>>, vector<1x32x128xbf16>
    %53 = vector.shape_cast %52 : vector<1x32x128xbf16> to vector<32x128xbf16>
    %cst_37 = arith.constant dense<0.000000e+00> : vector<32x64xf32>
    %54 = tpu.matmul %53, %28, %cst_37 {dimension_numbers = #tpu.dot_dimension_numbers<[1], [0], [0], [1], [0, 0, 1, 1], [], []>} : vector<32x128xbf16>, vector<128x64xbf16>, vector<32x64xf32> -> vector<32x64xf32>
    %55 = arith.truncf %54 : vector<32x64xf32> to vector<32x64xbf16>
    %c3_38 = arith.constant 3 : index
    %c0_39 = arith.constant 0 : index
    %c0_40 = arith.constant 0 : index
    %56 = vector.load %arg6[%c3_38, %c0_39, %c0_40] : memref<9x64x128xbf16, #tpu.memory_space<vmem>>, vector<1x64x128xbf16>
    %57 = vector.shape_cast %56 : vector<1x64x128xbf16> to vector<64x128xbf16>
    %cst_41 = arith.constant dense<0.000000e+00> : vector<32x128xf32>
    %58 = tpu.matmul %55, %57, %cst_41 {dimension_numbers = #tpu.dot_dimension_numbers<[1], [0], [0], [1], [0, 0, 1, 1], [], []>} : vector<32x64xbf16>, vector<64x128xbf16>, vector<32x128xf32> -> vector<32x128xf32>
    %59 = arith.addf %51, %58 : vector<32x128xf32>
    %c4 = arith.constant 4 : index
    %c0_42 = arith.constant 0 : index
    %c0_43 = arith.constant 0 : index
    %60 = vector.load %arg5[%c4, %c0_42, %c0_43] : memref<9x32x128xbf16, #tpu.memory_space<vmem>>, vector<1x32x128xbf16>
    %61 = vector.shape_cast %60 : vector<1x32x128xbf16> to vector<32x128xbf16>
    %cst_44 = arith.constant dense<0.000000e+00> : vector<32x64xf32>
    %62 = tpu.matmul %61, %28, %cst_44 {dimension_numbers = #tpu.dot_dimension_numbers<[1], [0], [0], [1], [0, 0, 1, 1], [], []>} : vector<32x128xbf16>, vector<128x64xbf16>, vector<32x64xf32> -> vector<32x64xf32>
    %63 = arith.truncf %62 : vector<32x64xf32> to vector<32x64xbf16>
    %c4_45 = arith.constant 4 : index
    %c0_46 = arith.constant 0 : index
    %c0_47 = arith.constant 0 : index
    %64 = vector.load %arg6[%c4_45, %c0_46, %c0_47] : memref<9x64x128xbf16, #tpu.memory_space<vmem>>, vector<1x64x128xbf16>
    %65 = vector.shape_cast %64 : vector<1x64x128xbf16> to vector<64x128xbf16>
    %cst_48 = arith.constant dense<0.000000e+00> : vector<32x128xf32>
    %66 = tpu.matmul %63, %65, %cst_48 {dimension_numbers = #tpu.dot_dimension_numbers<[1], [0], [0], [1], [0, 0, 1, 1], [], []>} : vector<32x64xbf16>, vector<64x128xbf16>, vector<32x128xf32> -> vector<32x128xf32>
    %67 = arith.addf %59, %66 : vector<32x128xf32>
    %c5 = arith.constant 5 : index
    %c0_49 = arith.constant 0 : index
    %c0_50 = arith.constant 0 : index
    %68 = vector.load %arg5[%c5, %c0_49, %c0_50] : memref<9x32x128xbf16, #tpu.memory_space<vmem>>, vector<1x32x128xbf16>
    %69 = vector.shape_cast %68 : vector<1x32x128xbf16> to vector<32x128xbf16>
    %cst_51 = arith.constant dense<0.000000e+00> : vector<32x64xf32>
    %70 = tpu.matmul %69, %28, %cst_51 {dimension_numbers = #tpu.dot_dimension_numbers<[1], [0], [0], [1], [0, 0, 1, 1], [], []>} : vector<32x128xbf16>, vector<128x64xbf16>, vector<32x64xf32> -> vector<32x64xf32>
    %71 = arith.truncf %70 : vector<32x64xf32> to vector<32x64xbf16>
    %c5_52 = arith.constant 5 : index
    %c0_53 = arith.constant 0 : index
    %c0_54 = arith.constant 0 : index
    %72 = vector.load %arg6[%c5_52, %c0_53, %c0_54] : memref<9x64x128xbf16, #tpu.memory_space<vmem>>, vector<1x64x128xbf16>
    %73 = vector.shape_cast %72 : vector<1x64x128xbf16> to vector<64x128xbf16>
    %cst_55 = arith.constant dense<0.000000e+00> : vector<32x128xf32>
    %74 = tpu.matmul %71, %73, %cst_55 {dimension_numbers = #tpu.dot_dimension_numbers<[1], [0], [0], [1], [0, 0, 1, 1], [], []>} : vector<32x64xbf16>, vector<64x128xbf16>, vector<32x128xf32> -> vector<32x128xf32>
    %75 = arith.addf %67, %74 : vector<32x128xf32>
    %c6 = arith.constant 6 : index
    %c0_56 = arith.constant 0 : index
    %c0_57 = arith.constant 0 : index
    %76 = vector.load %arg5[%c6, %c0_56, %c0_57] : memref<9x32x128xbf16, #tpu.memory_space<vmem>>, vector<1x32x128xbf16>
    %77 = vector.shape_cast %76 : vector<1x32x128xbf16> to vector<32x128xbf16>
    %cst_58 = arith.constant dense<0.000000e+00> : vector<32x64xf32>
    %78 = tpu.matmul %77, %28, %cst_58 {dimension_numbers = #tpu.dot_dimension_numbers<[1], [0], [0], [1], [0, 0, 1, 1], [], []>} : vector<32x128xbf16>, vector<128x64xbf16>, vector<32x64xf32> -> vector<32x64xf32>
    %79 = arith.truncf %78 : vector<32x64xf32> to vector<32x64xbf16>
    %c6_59 = arith.constant 6 : index
    %c0_60 = arith.constant 0 : index
    %c0_61 = arith.constant 0 : index
    %80 = vector.load %arg6[%c6_59, %c0_60, %c0_61] : memref<9x64x128xbf16, #tpu.memory_space<vmem>>, vector<1x64x128xbf16>
    %81 = vector.shape_cast %80 : vector<1x64x128xbf16> to vector<64x128xbf16>
    %cst_62 = arith.constant dense<0.000000e+00> : vector<32x128xf32>
    %82 = tpu.matmul %79, %81, %cst_62 {dimension_numbers = #tpu.dot_dimension_numbers<[1], [0], [0], [1], [0, 0, 1, 1], [], []>} : vector<32x64xbf16>, vector<64x128xbf16>, vector<32x128xf32> -> vector<32x128xf32>
    %83 = arith.addf %75, %82 : vector<32x128xf32>
    %c7 = arith.constant 7 : index
    %c0_63 = arith.constant 0 : index
    %c0_64 = arith.constant 0 : index
    %84 = vector.load %arg5[%c7, %c0_63, %c0_64] : memref<9x32x128xbf16, #tpu.memory_space<vmem>>, vector<1x32x128xbf16>
    %85 = vector.shape_cast %84 : vector<1x32x128xbf16> to vector<32x128xbf16>
    %cst_65 = arith.constant dense<0.000000e+00> : vector<32x64xf32>
    %86 = tpu.matmul %85, %28, %cst_65 {dimension_numbers = #tpu.dot_dimension_numbers<[1], [0], [0], [1], [0, 0, 1, 1], [], []>} : vector<32x128xbf16>, vector<128x64xbf16>, vector<32x64xf32> -> vector<32x64xf32>
    %87 = arith.truncf %86 : vector<32x64xf32> to vector<32x64xbf16>
    %c7_66 = arith.constant 7 : index
    %c0_67 = arith.constant 0 : index
    %c0_68 = arith.constant 0 : index
    %88 = vector.load %arg6[%c7_66, %c0_67, %c0_68] : memref<9x64x128xbf16, #tpu.memory_space<vmem>>, vector<1x64x128xbf16>
    %89 = vector.shape_cast %88 : vector<1x64x128xbf16> to vector<64x128xbf16>
    %cst_69 = arith.constant dense<0.000000e+00> : vector<32x128xf32>
    %90 = tpu.matmul %87, %89, %cst_69 {dimension_numbers = #tpu.dot_dimension_numbers<[1], [0], [0], [1], [0, 0, 1, 1], [], []>} : vector<32x64xbf16>, vector<64x128xbf16>, vector<32x128xf32> -> vector<32x128xf32>
    %91 = arith.addf %83, %90 : vector<32x128xf32>
    %c8 = arith.constant 8 : index
    %c0_70 = arith.constant 0 : index
    %c0_71 = arith.constant 0 : index
    %92 = vector.load %arg5[%c8, %c0_70, %c0_71] : memref<9x32x128xbf16, #tpu.memory_space<vmem>>, vector<1x32x128xbf16>
    %93 = vector.shape_cast %92 : vector<1x32x128xbf16> to vector<32x128xbf16>
    %cst_72 = arith.constant dense<0.000000e+00> : vector<32x64xf32>
    %94 = tpu.matmul %93, %28, %cst_72 {dimension_numbers = #tpu.dot_dimension_numbers<[1], [0], [0], [1], [0, 0, 1, 1], [], []>} : vector<32x128xbf16>, vector<128x64xbf16>, vector<32x64xf32> -> vector<32x64xf32>
    %95 = arith.truncf %94 : vector<32x64xf32> to vector<32x64xbf16>
    %c8_73 = arith.constant 8 : index
    %c0_74 = arith.constant 0 : index
    %c0_75 = arith.constant 0 : index
    %96 = vector.load %arg6[%c8_73, %c0_74, %c0_75] : memref<9x64x128xbf16, #tpu.memory_space<vmem>>, vector<1x64x128xbf16>
    %97 = vector.shape_cast %96 : vector<1x64x128xbf16> to vector<64x128xbf16>
    %cst_76 = arith.constant dense<0.000000e+00> : vector<32x128xf32>
    %98 = tpu.matmul %95, %97, %cst_76 {dimension_numbers = #tpu.dot_dimension_numbers<[1], [0], [0], [1], [0, 0, 1, 1], [], []>} : vector<32x64xbf16>, vector<64x128xbf16>, vector<32x128xf32> -> vector<32x128xf32>
    %99 = arith.addf %91, %98 : vector<32x128xf32>
    %cst_77 = arith.constant dense<0.000000e+00> : vector<128xf32>
    %100 = vector.multi_reduction <add>, %99, %cst_77 [0] : vector<32x128xf32> to vector<128xf32>
    %101 = vector.shape_cast %100 : vector<128xf32> to vector<1x128xf32>
    %cst_78 = arith.constant 3.200000e+01 : f32
    %102 = vector.broadcast %cst_78 : f32 to vector<1x128xf32>
    %103 = arith.divf %101, %102 : vector<1x128xf32>
    %104 = arith.mulf %99, %99 : vector<32x128xf32>
    %cst_79 = arith.constant dense<0.000000e+00> : vector<128xf32>
    %105 = vector.multi_reduction <add>, %104, %cst_79 [0] : vector<32x128xf32> to vector<128xf32>
    %106 = vector.shape_cast %105 : vector<128xf32> to vector<1x128xf32>
    %cst_80 = arith.constant 3.200000e+01 : f32
    %107 = vector.broadcast %cst_80 : f32 to vector<1x128xf32>
    %108 = arith.divf %106, %107 : vector<1x128xf32>
    %109 = arith.mulf %103, %103 : vector<1x128xf32>
    %110 = arith.subf %108, %109 : vector<1x128xf32>
    %c0_81 = arith.constant 0 : index
    %c0_82 = arith.constant 0 : index
    %111 = vector.load %arg7[%c0_81, %c0_82] : memref<1x128xf32, #tpu.memory_space<vmem>>, vector<1x128xf32>
    %cst_83 = arith.constant 9.99999974E-6 : f32
    %112 = vector.broadcast %cst_83 : f32 to vector<1x128xf32>
    %113 = arith.addf %110, %112 : vector<1x128xf32>
    %114 = math.rsqrt %113 : vector<1x128xf32>
    %115 = arith.mulf %111, %114 : vector<1x128xf32>
    %c0_84 = arith.constant 0 : index
    %c0_85 = arith.constant 0 : index
    %116 = vector.load %arg8[%c0_84, %c0_85] : memref<1x128xf32, #tpu.memory_space<vmem>>, vector<1x128xf32>
    %117 = arith.mulf %103, %115 : vector<1x128xf32>
    %118 = arith.subf %116, %117 : vector<1x128xf32>
    %119 = vector.broadcast %115 : vector<1x128xf32> to vector<32x128xf32>
    %120 = arith.mulf %99, %119 : vector<32x128xf32>
    %121 = vector.broadcast %118 : vector<1x128xf32> to vector<32x128xf32>
    %122 = arith.addf %120, %121 : vector<32x128xf32>
    %cst_86 = arith.constant 0.000000e+00 : f32
    %123 = vector.broadcast %cst_86 : f32 to vector<32x128xf32>
    %124 = arith.maximumf %122, %123 : vector<32x128xf32>
    %125 = arith.truncf %124 : vector<32x128xf32> to vector<32x128xbf16>
    %c0_87 = arith.constant 0 : index
    %c0_88 = arith.constant 0 : index
    %c0_89 = arith.constant 0 : index
    %126 = vector.load %arg9[%c0_87, %c0_88, %c0_89] : memref<9x8x32xbf16, #tpu.memory_space<vmem>>, vector<1x8x32xbf16>
    %127 = vector.shape_cast %126 : vector<1x8x32xbf16> to vector<8x32xbf16>
    %cst_90 = arith.constant dense<0.000000e+00> : vector<8x128xf32>
    %128 = tpu.matmul %127, %125, %cst_90 {dimension_numbers = #tpu.dot_dimension_numbers<[1], [0], [0], [1], [0, 0, 1, 1], [], []>} : vector<8x32xbf16>, vector<32x128xbf16>, vector<8x128xf32> -> vector<8x128xf32>
    %129 = arith.truncf %128 : vector<8x128xf32> to vector<8x128xbf16>
    %c0_91 = arith.constant 0 : index
    %c0_92 = arith.constant 0 : index
    %c0_93 = arith.constant 0 : index
    %130 = vector.load %arg10[%c0_91, %c0_92, %c0_93] : memref<9x128x256xbf16, #tpu.memory_space<vmem>>, vector<1x128x256xbf16>
    %131 = vector.shape_cast %130 : vector<1x128x256xbf16> to vector<128x256xbf16>
    %cst_94 = arith.constant dense<0.000000e+00> : vector<8x256xf32>
    %132 = tpu.matmul %129, %131, %cst_94 {dimension_numbers = #tpu.dot_dimension_numbers<[1], [0], [0], [1], [0, 0, 1, 1], [], []>} : vector<8x128xbf16>, vector<128x256xbf16>, vector<8x256xf32> -> vector<8x256xf32>
    %c1_95 = arith.constant 1 : index
    %c0_96 = arith.constant 0 : index
    %c0_97 = arith.constant 0 : index
    %133 = vector.load %arg9[%c1_95, %c0_96, %c0_97] : memref<9x8x32xbf16, #tpu.memory_space<vmem>>, vector<1x8x32xbf16>
    %134 = vector.shape_cast %133 : vector<1x8x32xbf16> to vector<8x32xbf16>
    %cst_98 = arith.constant dense<0.000000e+00> : vector<8x128xf32>
    %135 = tpu.matmul %134, %125, %cst_98 {dimension_numbers = #tpu.dot_dimension_numbers<[1], [0], [0], [1], [0, 0, 1, 1], [], []>} : vector<8x32xbf16>, vector<32x128xbf16>, vector<8x128xf32> -> vector<8x128xf32>
    %136 = arith.truncf %135 : vector<8x128xf32> to vector<8x128xbf16>
    %c1_99 = arith.constant 1 : index
    %c0_100 = arith.constant 0 : index
    %c0_101 = arith.constant 0 : index
    %137 = vector.load %arg10[%c1_99, %c0_100, %c0_101] : memref<9x128x256xbf16, #tpu.memory_space<vmem>>, vector<1x128x256xbf16>
    %138 = vector.shape_cast %137 : vector<1x128x256xbf16> to vector<128x256xbf16>
    %cst_102 = arith.constant dense<0.000000e+00> : vector<8x256xf32>
    %139 = tpu.matmul %136, %138, %cst_102 {dimension_numbers = #tpu.dot_dimension_numbers<[1], [0], [0], [1], [0, 0, 1, 1], [], []>} : vector<8x128xbf16>, vector<128x256xbf16>, vector<8x256xf32> -> vector<8x256xf32>
    %140 = arith.addf %132, %139 : vector<8x256xf32>
    %c2_103 = arith.constant 2 : index
    %c0_104 = arith.constant 0 : index
    %c0_105 = arith.constant 0 : index
    %141 = vector.load %arg9[%c2_103, %c0_104, %c0_105] : memref<9x8x32xbf16, #tpu.memory_space<vmem>>, vector<1x8x32xbf16>
    %142 = vector.shape_cast %141 : vector<1x8x32xbf16> to vector<8x32xbf16>
    %cst_106 = arith.constant dense<0.000000e+00> : vector<8x128xf32>
    %143 = tpu.matmul %142, %125, %cst_106 {dimension_numbers = #tpu.dot_dimension_numbers<[1], [0], [0], [1], [0, 0, 1, 1], [], []>} : vector<8x32xbf16>, vector<32x128xbf16>, vector<8x128xf32> -> vector<8x128xf32>
    %144 = arith.truncf %143 : vector<8x128xf32> to vector<8x128xbf16>
    %c2_107 = arith.constant 2 : index
    %c0_108 = arith.constant 0 : index
    %c0_109 = arith.constant 0 : index
    %145 = vector.load %arg10[%c2_107, %c0_108, %c0_109] : memref<9x128x256xbf16, #tpu.memory_space<vmem>>, vector<1x128x256xbf16>
    %146 = vector.shape_cast %145 : vector<1x128x256xbf16> to vector<128x256xbf16>
    %cst_110 = arith.constant dense<0.000000e+00> : vector<8x256xf32>
    %147 = tpu.matmul %144, %146, %cst_110 {dimension_numbers = #tpu.dot_dimension_numbers<[1], [0], [0], [1], [0, 0, 1, 1], [], []>} : vector<8x128xbf16>, vector<128x256xbf16>, vector<8x256xf32> -> vector<8x256xf32>
    %148 = arith.addf %140, %147 : vector<8x256xf32>
    %c3_111 = arith.constant 3 : index
    %c0_112 = arith.constant 0 : index
    %c0_113 = arith.constant 0 : index
    %149 = vector.load %arg9[%c3_111, %c0_112, %c0_113] : memref<9x8x32xbf16, #tpu.memory_space<vmem>>, vector<1x8x32xbf16>
    %150 = vector.shape_cast %149 : vector<1x8x32xbf16> to vector<8x32xbf16>
    %cst_114 = arith.constant dense<0.000000e+00> : vector<8x128xf32>
    %151 = tpu.matmul %150, %125, %cst_114 {dimension_numbers = #tpu.dot_dimension_numbers<[1], [0], [0], [1], [0, 0, 1, 1], [], []>} : vector<8x32xbf16>, vector<32x128xbf16>, vector<8x128xf32> -> vector<8x128xf32>
    %152 = arith.truncf %151 : vector<8x128xf32> to vector<8x128xbf16>
    %c3_115 = arith.constant 3 : index
    %c0_116 = arith.constant 0 : index
    %c0_117 = arith.constant 0 : index
    %153 = vector.load %arg10[%c3_115, %c0_116, %c0_117] : memref<9x128x256xbf16, #tpu.memory_space<vmem>>, vector<1x128x256xbf16>
    %154 = vector.shape_cast %153 : vector<1x128x256xbf16> to vector<128x256xbf16>
    %cst_118 = arith.constant dense<0.000000e+00> : vector<8x256xf32>
    %155 = tpu.matmul %152, %154, %cst_118 {dimension_numbers = #tpu.dot_dimension_numbers<[1], [0], [0], [1], [0, 0, 1, 1], [], []>} : vector<8x128xbf16>, vector<128x256xbf16>, vector<8x256xf32> -> vector<8x256xf32>
    %156 = arith.addf %148, %155 : vector<8x256xf32>
    %c4_119 = arith.constant 4 : index
    %c0_120 = arith.constant 0 : index
    %c0_121 = arith.constant 0 : index
    %157 = vector.load %arg9[%c4_119, %c0_120, %c0_121] : memref<9x8x32xbf16, #tpu.memory_space<vmem>>, vector<1x8x32xbf16>
    %158 = vector.shape_cast %157 : vector<1x8x32xbf16> to vector<8x32xbf16>
    %cst_122 = arith.constant dense<0.000000e+00> : vector<8x128xf32>
    %159 = tpu.matmul %158, %125, %cst_122 {dimension_numbers = #tpu.dot_dimension_numbers<[1], [0], [0], [1], [0, 0, 1, 1], [], []>} : vector<8x32xbf16>, vector<32x128xbf16>, vector<8x128xf32> -> vector<8x128xf32>
    %160 = arith.truncf %159 : vector<8x128xf32> to vector<8x128xbf16>
    %c4_123 = arith.constant 4 : index
    %c0_124 = arith.constant 0 : index
    %c0_125 = arith.constant 0 : index
    %161 = vector.load %arg10[%c4_123, %c0_124, %c0_125] : memref<9x128x256xbf16, #tpu.memory_space<vmem>>, vector<1x128x256xbf16>
    %162 = vector.shape_cast %161 : vector<1x128x256xbf16> to vector<128x256xbf16>
    %cst_126 = arith.constant dense<0.000000e+00> : vector<8x256xf32>
    %163 = tpu.matmul %160, %162, %cst_126 {dimension_numbers = #tpu.dot_dimension_numbers<[1], [0], [0], [1], [0, 0, 1, 1], [], []>} : vector<8x128xbf16>, vector<128x256xbf16>, vector<8x256xf32> -> vector<8x256xf32>
    %164 = arith.addf %156, %163 : vector<8x256xf32>
    %c5_127 = arith.constant 5 : index
    %c0_128 = arith.constant 0 : index
    %c0_129 = arith.constant 0 : index
    %165 = vector.load %arg9[%c5_127, %c0_128, %c0_129] : memref<9x8x32xbf16, #tpu.memory_space<vmem>>, vector<1x8x32xbf16>
    %166 = vector.shape_cast %165 : vector<1x8x32xbf16> to vector<8x32xbf16>
    %cst_130 = arith.constant dense<0.000000e+00> : vector<8x128xf32>
    %167 = tpu.matmul %166, %125, %cst_130 {dimension_numbers = #tpu.dot_dimension_numbers<[1], [0], [0], [1], [0, 0, 1, 1], [], []>} : vector<8x32xbf16>, vector<32x128xbf16>, vector<8x128xf32> -> vector<8x128xf32>
    %168 = arith.truncf %167 : vector<8x128xf32> to vector<8x128xbf16>
    %c5_131 = arith.constant 5 : index
    %c0_132 = arith.constant 0 : index
    %c0_133 = arith.constant 0 : index
    %169 = vector.load %arg10[%c5_131, %c0_132, %c0_133] : memref<9x128x256xbf16, #tpu.memory_space<vmem>>, vector<1x128x256xbf16>
    %170 = vector.shape_cast %169 : vector<1x128x256xbf16> to vector<128x256xbf16>
    %cst_134 = arith.constant dense<0.000000e+00> : vector<8x256xf32>
    %171 = tpu.matmul %168, %170, %cst_134 {dimension_numbers = #tpu.dot_dimension_numbers<[1], [0], [0], [1], [0, 0, 1, 1], [], []>} : vector<8x128xbf16>, vector<128x256xbf16>, vector<8x256xf32> -> vector<8x256xf32>
    %172 = arith.addf %164, %171 : vector<8x256xf32>
    %c6_135 = arith.constant 6 : index
    %c0_136 = arith.constant 0 : index
    %c0_137 = arith.constant 0 : index
    %173 = vector.load %arg9[%c6_135, %c0_136, %c0_137] : memref<9x8x32xbf16, #tpu.memory_space<vmem>>, vector<1x8x32xbf16>
    %174 = vector.shape_cast %173 : vector<1x8x32xbf16> to vector<8x32xbf16>
    %cst_138 = arith.constant dense<0.000000e+00> : vector<8x128xf32>
    %175 = tpu.matmul %174, %125, %cst_138 {dimension_numbers = #tpu.dot_dimension_numbers<[1], [0], [0], [1], [0, 0, 1, 1], [], []>} : vector<8x32xbf16>, vector<32x128xbf16>, vector<8x128xf32> -> vector<8x128xf32>
    %176 = arith.truncf %175 : vector<8x128xf32> to vector<8x128xbf16>
    %c6_139 = arith.constant 6 : index
    %c0_140 = arith.constant 0 : index
    %c0_141 = arith.constant 0 : index
    %177 = vector.load %arg10[%c6_139, %c0_140, %c0_141] : memref<9x128x256xbf16, #tpu.memory_space<vmem>>, vector<1x128x256xbf16>
    %178 = vector.shape_cast %177 : vector<1x128x256xbf16> to vector<128x256xbf16>
    %cst_142 = arith.constant dense<0.000000e+00> : vector<8x256xf32>
    %179 = tpu.matmul %176, %178, %cst_142 {dimension_numbers = #tpu.dot_dimension_numbers<[1], [0], [0], [1], [0, 0, 1, 1], [], []>} : vector<8x128xbf16>, vector<128x256xbf16>, vector<8x256xf32> -> vector<8x256xf32>
    %180 = arith.addf %172, %179 : vector<8x256xf32>
    %c7_143 = arith.constant 7 : index
    %c0_144 = arith.constant 0 : index
    %c0_145 = arith.constant 0 : index
    %181 = vector.load %arg9[%c7_143, %c0_144, %c0_145] : memref<9x8x32xbf16, #tpu.memory_space<vmem>>, vector<1x8x32xbf16>
    %182 = vector.shape_cast %181 : vector<1x8x32xbf16> to vector<8x32xbf16>
    %cst_146 = arith.constant dense<0.000000e+00> : vector<8x128xf32>
    %183 = tpu.matmul %182, %125, %cst_146 {dimension_numbers = #tpu.dot_dimension_numbers<[1], [0], [0], [1], [0, 0, 1, 1], [], []>} : vector<8x32xbf16>, vector<32x128xbf16>, vector<8x128xf32> -> vector<8x128xf32>
    %184 = arith.truncf %183 : vector<8x128xf32> to vector<8x128xbf16>
    %c7_147 = arith.constant 7 : index
    %c0_148 = arith.constant 0 : index
    %c0_149 = arith.constant 0 : index
    %185 = vector.load %arg10[%c7_147, %c0_148, %c0_149] : memref<9x128x256xbf16, #tpu.memory_space<vmem>>, vector<1x128x256xbf16>
    %186 = vector.shape_cast %185 : vector<1x128x256xbf16> to vector<128x256xbf16>
    %cst_150 = arith.constant dense<0.000000e+00> : vector<8x256xf32>
    %187 = tpu.matmul %184, %186, %cst_150 {dimension_numbers = #tpu.dot_dimension_numbers<[1], [0], [0], [1], [0, 0, 1, 1], [], []>} : vector<8x128xbf16>, vector<128x256xbf16>, vector<8x256xf32> -> vector<8x256xf32>
    %188 = arith.addf %180, %187 : vector<8x256xf32>
    %c8_151 = arith.constant 8 : index
    %c0_152 = arith.constant 0 : index
    %c0_153 = arith.constant 0 : index
    %189 = vector.load %arg9[%c8_151, %c0_152, %c0_153] : memref<9x8x32xbf16, #tpu.memory_space<vmem>>, vector<1x8x32xbf16>
    %190 = vector.shape_cast %189 : vector<1x8x32xbf16> to vector<8x32xbf16>
    %cst_154 = arith.constant dense<0.000000e+00> : vector<8x128xf32>
    %191 = tpu.matmul %190, %125, %cst_154 {dimension_numbers = #tpu.dot_dimension_numbers<[1], [0], [0], [1], [0, 0, 1, 1], [], []>} : vector<8x32xbf16>, vector<32x128xbf16>, vector<8x128xf32> -> vector<8x128xf32>
    %192 = arith.truncf %191 : vector<8x128xf32> to vector<8x128xbf16>
    %c8_155 = arith.constant 8 : index
    %c0_156 = arith.constant 0 : index
    %c0_157 = arith.constant 0 : index
    %193 = vector.load %arg10[%c8_155, %c0_156, %c0_157] : memref<9x128x256xbf16, #tpu.memory_space<vmem>>, vector<1x128x256xbf16>
    %194 = vector.shape_cast %193 : vector<1x128x256xbf16> to vector<128x256xbf16>
    %cst_158 = arith.constant dense<0.000000e+00> : vector<8x256xf32>
    %195 = tpu.matmul %192, %194, %cst_158 {dimension_numbers = #tpu.dot_dimension_numbers<[1], [0], [0], [1], [0, 0, 1, 1], [], []>} : vector<8x128xbf16>, vector<128x256xbf16>, vector<8x256xf32> -> vector<8x256xf32>
    %196 = arith.addf %188, %195 : vector<8x256xf32>
    %cst_159 = arith.constant dense<0.000000e+00> : vector<256xf32>
    %197 = vector.multi_reduction <add>, %196, %cst_159 [0] : vector<8x256xf32> to vector<256xf32>
    %198 = vector.shape_cast %197 : vector<256xf32> to vector<1x256xf32>
    %cst_160 = arith.constant 8.000000e+00 : f32
    %199 = vector.broadcast %cst_160 : f32 to vector<1x256xf32>
    %200 = arith.divf %198, %199 : vector<1x256xf32>
    %201 = arith.mulf %196, %196 : vector<8x256xf32>
    %cst_161 = arith.constant dense<0.000000e+00> : vector<256xf32>
    %202 = vector.multi_reduction <add>, %201, %cst_161 [0] : vector<8x256xf32> to vector<256xf32>
    %203 = vector.shape_cast %202 : vector<256xf32> to vector<1x256xf32>
    %cst_162 = arith.constant 8.000000e+00 : f32
    %204 = vector.broadcast %cst_162 : f32 to vector<1x256xf32>
    %205 = arith.divf %203, %204 : vector<1x256xf32>
    %206 = arith.mulf %200, %200 : vector<1x256xf32>
    %207 = arith.subf %205, %206 : vector<1x256xf32>
    %c0_163 = arith.constant 0 : index
    %c0_164 = arith.constant 0 : index
    %208 = vector.load %arg11[%c0_163, %c0_164] : memref<1x256xf32, #tpu.memory_space<vmem>>, vector<1x256xf32>
    %cst_165 = arith.constant 9.99999974E-6 : f32
    %209 = vector.broadcast %cst_165 : f32 to vector<1x256xf32>
    %210 = arith.addf %207, %209 : vector<1x256xf32>
    %211 = math.rsqrt %210 : vector<1x256xf32>
    %212 = arith.mulf %208, %211 : vector<1x256xf32>
    %c0_166 = arith.constant 0 : index
    %c0_167 = arith.constant 0 : index
    %213 = vector.load %arg12[%c0_166, %c0_167] : memref<1x256xf32, #tpu.memory_space<vmem>>, vector<1x256xf32>
    %214 = arith.mulf %200, %212 : vector<1x256xf32>
    %215 = arith.subf %213, %214 : vector<1x256xf32>
    %216 = vector.broadcast %212 : vector<1x256xf32> to vector<8x256xf32>
    %217 = arith.mulf %196, %216 : vector<8x256xf32>
    %218 = vector.broadcast %215 : vector<1x256xf32> to vector<8x256xf32>
    %219 = arith.addf %217, %218 : vector<8x256xf32>
    %cst_168 = arith.constant 0.000000e+00 : f32
    %220 = vector.broadcast %cst_168 : f32 to vector<8x256xf32>
    %221 = arith.maximumf %219, %220 : vector<8x256xf32>
    %222 = arith.truncf %221 : vector<8x256xf32> to vector<8x256xbf16>
    %c0_169 = arith.constant 0 : index
    %c0_170 = arith.constant 0 : index
    %c0_171 = arith.constant 0 : index
    %223 = vector.load %arg13[%c0_169, %c0_170, %c0_171] : memref<9x2x8xbf16, #tpu.memory_space<vmem>>, vector<1x2x8xbf16>
    %224 = vector.shape_cast %223 : vector<1x2x8xbf16> to vector<2x8xbf16>
    %cst_172 = arith.constant dense<0.000000e+00> : vector<2x256xf32>
    %225 = tpu.matmul %224, %222, %cst_172 {dimension_numbers = #tpu.dot_dimension_numbers<[1], [0], [0], [1], [0, 0, 1, 1], [], []>} : vector<2x8xbf16>, vector<8x256xbf16>, vector<2x256xf32> -> vector<2x256xf32>
    %226 = arith.truncf %225 : vector<2x256xf32> to vector<2x256xbf16>
    %c0_173 = arith.constant 0 : index
    %c0_174 = arith.constant 0 : index
    %c0_175 = arith.constant 0 : index
    %227 = vector.load %arg14[%c0_173, %c0_174, %c0_175] : memref<9x256x256xbf16, #tpu.memory_space<vmem>>, vector<1x256x256xbf16>
    %228 = vector.shape_cast %227 : vector<1x256x256xbf16> to vector<256x256xbf16>
    %cst_176 = arith.constant dense<0.000000e+00> : vector<2x256xf32>
    %229 = tpu.matmul %226, %228, %cst_176 {dimension_numbers = #tpu.dot_dimension_numbers<[1], [0], [0], [1], [0, 0, 1, 1], [], []>} : vector<2x256xbf16>, vector<256x256xbf16>, vector<2x256xf32> -> vector<2x256xf32>
    %c1_177 = arith.constant 1 : index
    %c0_178 = arith.constant 0 : index
    %c0_179 = arith.constant 0 : index
    %230 = vector.load %arg13[%c1_177, %c0_178, %c0_179] : memref<9x2x8xbf16, #tpu.memory_space<vmem>>, vector<1x2x8xbf16>
    %231 = vector.shape_cast %230 : vector<1x2x8xbf16> to vector<2x8xbf16>
    %cst_180 = arith.constant dense<0.000000e+00> : vector<2x256xf32>
    %232 = tpu.matmul %231, %222, %cst_180 {dimension_numbers = #tpu.dot_dimension_numbers<[1], [0], [0], [1], [0, 0, 1, 1], [], []>} : vector<2x8xbf16>, vector<8x256xbf16>, vector<2x256xf32> -> vector<2x256xf32>
    %233 = arith.truncf %232 : vector<2x256xf32> to vector<2x256xbf16>
    %c1_181 = arith.constant 1 : index
    %c0_182 = arith.constant 0 : index
    %c0_183 = arith.constant 0 : index
    %234 = vector.load %arg14[%c1_181, %c0_182, %c0_183] : memref<9x256x256xbf16, #tpu.memory_space<vmem>>, vector<1x256x256xbf16>
    %235 = vector.shape_cast %234 : vector<1x256x256xbf16> to vector<256x256xbf16>
    %cst_184 = arith.constant dense<0.000000e+00> : vector<2x256xf32>
    %236 = tpu.matmul %233, %235, %cst_184 {dimension_numbers = #tpu.dot_dimension_numbers<[1], [0], [0], [1], [0, 0, 1, 1], [], []>} : vector<2x256xbf16>, vector<256x256xbf16>, vector<2x256xf32> -> vector<2x256xf32>
    %237 = arith.addf %229, %236 : vector<2x256xf32>
    %c2_185 = arith.constant 2 : index
    %c0_186 = arith.constant 0 : index
    %c0_187 = arith.constant 0 : index
    %238 = vector.load %arg13[%c2_185, %c0_186, %c0_187] : memref<9x2x8xbf16, #tpu.memory_space<vmem>>, vector<1x2x8xbf16>
    %239 = vector.shape_cast %238 : vector<1x2x8xbf16> to vector<2x8xbf16>
    %cst_188 = arith.constant dense<0.000000e+00> : vector<2x256xf32>
    %240 = tpu.matmul %239, %222, %cst_188 {dimension_numbers = #tpu.dot_dimension_numbers<[1], [0], [0], [1], [0, 0, 1, 1], [], []>} : vector<2x8xbf16>, vector<8x256xbf16>, vector<2x256xf32> -> vector<2x256xf32>
    %241 = arith.truncf %240 : vector<2x256xf32> to vector<2x256xbf16>
    %c2_189 = arith.constant 2 : index
    %c0_190 = arith.constant 0 : index
    %c0_191 = arith.constant 0 : index
    %242 = vector.load %arg14[%c2_189, %c0_190, %c0_191] : memref<9x256x256xbf16, #tpu.memory_space<vmem>>, vector<1x256x256xbf16>
    %243 = vector.shape_cast %242 : vector<1x256x256xbf16> to vector<256x256xbf16>
    %cst_192 = arith.constant dense<0.000000e+00> : vector<2x256xf32>
    %244 = tpu.matmul %241, %243, %cst_192 {dimension_numbers = #tpu.dot_dimension_numbers<[1], [0], [0], [1], [0, 0, 1, 1], [], []>} : vector<2x256xbf16>, vector<256x256xbf16>, vector<2x256xf32> -> vector<2x256xf32>
    %245 = arith.addf %237, %244 : vector<2x256xf32>
    %c3_193 = arith.constant 3 : index
    %c0_194 = arith.constant 0 : index
    %c0_195 = arith.constant 0 : index
    %246 = vector.load %arg13[%c3_193, %c0_194, %c0_195] : memref<9x2x8xbf16, #tpu.memory_space<vmem>>, vector<1x2x8xbf16>
    %247 = vector.shape_cast %246 : vector<1x2x8xbf16> to vector<2x8xbf16>
    %cst_196 = arith.constant dense<0.000000e+00> : vector<2x256xf32>
    %248 = tpu.matmul %247, %222, %cst_196 {dimension_numbers = #tpu.dot_dimension_numbers<[1], [0], [0], [1], [0, 0, 1, 1], [], []>} : vector<2x8xbf16>, vector<8x256xbf16>, vector<2x256xf32> -> vector<2x256xf32>
    %249 = arith.truncf %248 : vector<2x256xf32> to vector<2x256xbf16>
    %c3_197 = arith.constant 3 : index
    %c0_198 = arith.constant 0 : index
    %c0_199 = arith.constant 0 : index
    %250 = vector.load %arg14[%c3_197, %c0_198, %c0_199] : memref<9x256x256xbf16, #tpu.memory_space<vmem>>, vector<1x256x256xbf16>
    %251 = vector.shape_cast %250 : vector<1x256x256xbf16> to vector<256x256xbf16>
    %cst_200 = arith.constant dense<0.000000e+00> : vector<2x256xf32>
    %252 = tpu.matmul %249, %251, %cst_200 {dimension_numbers = #tpu.dot_dimension_numbers<[1], [0], [0], [1], [0, 0, 1, 1], [], []>} : vector<2x256xbf16>, vector<256x256xbf16>, vector<2x256xf32> -> vector<2x256xf32>
    %253 = arith.addf %245, %252 : vector<2x256xf32>
    %c4_201 = arith.constant 4 : index
    %c0_202 = arith.constant 0 : index
    %c0_203 = arith.constant 0 : index
    %254 = vector.load %arg13[%c4_201, %c0_202, %c0_203] : memref<9x2x8xbf16, #tpu.memory_space<vmem>>, vector<1x2x8xbf16>
    %255 = vector.shape_cast %254 : vector<1x2x8xbf16> to vector<2x8xbf16>
    %cst_204 = arith.constant dense<0.000000e+00> : vector<2x256xf32>
    %256 = tpu.matmul %255, %222, %cst_204 {dimension_numbers = #tpu.dot_dimension_numbers<[1], [0], [0], [1], [0, 0, 1, 1], [], []>} : vector<2x8xbf16>, vector<8x256xbf16>, vector<2x256xf32> -> vector<2x256xf32>
    %257 = arith.truncf %256 : vector<2x256xf32> to vector<2x256xbf16>
    %c4_205 = arith.constant 4 : index
    %c0_206 = arith.constant 0 : index
    %c0_207 = arith.constant 0 : index
    %258 = vector.load %arg14[%c4_205, %c0_206, %c0_207] : memref<9x256x256xbf16, #tpu.memory_space<vmem>>, vector<1x256x256xbf16>
    %259 = vector.shape_cast %258 : vector<1x256x256xbf16> to vector<256x256xbf16>
    %cst_208 = arith.constant dense<0.000000e+00> : vector<2x256xf32>
    %260 = tpu.matmul %257, %259, %cst_208 {dimension_numbers = #tpu.dot_dimension_numbers<[1], [0], [0], [1], [0, 0, 1, 1], [], []>} : vector<2x256xbf16>, vector<256x256xbf16>, vector<2x256xf32> -> vector<2x256xf32>
    %261 = arith.addf %253, %260 : vector<2x256xf32>
    %c5_209 = arith.constant 5 : index
    %c0_210 = arith.constant 0 : index
    %c0_211 = arith.constant 0 : index
    %262 = vector.load %arg13[%c5_209, %c0_210, %c0_211] : memref<9x2x8xbf16, #tpu.memory_space<vmem>>, vector<1x2x8xbf16>
    %263 = vector.shape_cast %262 : vector<1x2x8xbf16> to vector<2x8xbf16>
    %cst_212 = arith.constant dense<0.000000e+00> : vector<2x256xf32>
    %264 = tpu.matmul %263, %222, %cst_212 {dimension_numbers = #tpu.dot_dimension_numbers<[1], [0], [0], [1], [0, 0, 1, 1], [], []>} : vector<2x8xbf16>, vector<8x256xbf16>, vector<2x256xf32> -> vector<2x256xf32>
    %265 = arith.truncf %264 : vector<2x256xf32> to vector<2x256xbf16>
    %c5_213 = arith.constant 5 : index
    %c0_214 = arith.constant 0 : index
    %c0_215 = arith.constant 0 : index
    %266 = vector.load %arg14[%c5_213, %c0_214, %c0_215] : memref<9x256x256xbf16, #tpu.memory_space<vmem>>, vector<1x256x256xbf16>
    %267 = vector.shape_cast %266 : vector<1x256x256xbf16> to vector<256x256xbf16>
    %cst_216 = arith.constant dense<0.000000e+00> : vector<2x256xf32>
    %268 = tpu.matmul %265, %267, %cst_216 {dimension_numbers = #tpu.dot_dimension_numbers<[1], [0], [0], [1], [0, 0, 1, 1], [], []>} : vector<2x256xbf16>, vector<256x256xbf16>, vector<2x256xf32> -> vector<2x256xf32>
    %269 = arith.addf %261, %268 : vector<2x256xf32>
    %c6_217 = arith.constant 6 : index
    %c0_218 = arith.constant 0 : index
    %c0_219 = arith.constant 0 : index
    %270 = vector.load %arg13[%c6_217, %c0_218, %c0_219] : memref<9x2x8xbf16, #tpu.memory_space<vmem>>, vector<1x2x8xbf16>
    %271 = vector.shape_cast %270 : vector<1x2x8xbf16> to vector<2x8xbf16>
    %cst_220 = arith.constant dense<0.000000e+00> : vector<2x256xf32>
    %272 = tpu.matmul %271, %222, %cst_220 {dimension_numbers = #tpu.dot_dimension_numbers<[1], [0], [0], [1], [0, 0, 1, 1], [], []>} : vector<2x8xbf16>, vector<8x256xbf16>, vector<2x256xf32> -> vector<2x256xf32>
    %273 = arith.truncf %272 : vector<2x256xf32> to vector<2x256xbf16>
    %c6_221 = arith.constant 6 : index
    %c0_222 = arith.constant 0 : index
    %c0_223 = arith.constant 0 : index
    %274 = vector.load %arg14[%c6_221, %c0_222, %c0_223] : memref<9x256x256xbf16, #tpu.memory_space<vmem>>, vector<1x256x256xbf16>
    %275 = vector.shape_cast %274 : vector<1x256x256xbf16> to vector<256x256xbf16>
    %cst_224 = arith.constant dense<0.000000e+00> : vector<2x256xf32>
    %276 = tpu.matmul %273, %275, %cst_224 {dimension_numbers = #tpu.dot_dimension_numbers<[1], [0], [0], [1], [0, 0, 1, 1], [], []>} : vector<2x256xbf16>, vector<256x256xbf16>, vector<2x256xf32> -> vector<2x256xf32>
    %277 = arith.addf %269, %276 : vector<2x256xf32>
    %c7_225 = arith.constant 7 : index
    %c0_226 = arith.constant 0 : index
    %c0_227 = arith.constant 0 : index
    %278 = vector.load %arg13[%c7_225, %c0_226, %c0_227] : memref<9x2x8xbf16, #tpu.memory_space<vmem>>, vector<1x2x8xbf16>
    %279 = vector.shape_cast %278 : vector<1x2x8xbf16> to vector<2x8xbf16>
    %cst_228 = arith.constant dense<0.000000e+00> : vector<2x256xf32>
    %280 = tpu.matmul %279, %222, %cst_228 {dimension_numbers = #tpu.dot_dimension_numbers<[1], [0], [0], [1], [0, 0, 1, 1], [], []>} : vector<2x8xbf16>, vector<8x256xbf16>, vector<2x256xf32> -> vector<2x256xf32>
    %281 = arith.truncf %280 : vector<2x256xf32> to vector<2x256xbf16>
    %c7_229 = arith.constant 7 : index
    %c0_230 = arith.constant 0 : index
    %c0_231 = arith.constant 0 : index
    %282 = vector.load %arg14[%c7_229, %c0_230, %c0_231] : memref<9x256x256xbf16, #tpu.memory_space<vmem>>, vector<1x256x256xbf16>
    %283 = vector.shape_cast %282 : vector<1x256x256xbf16> to vector<256x256xbf16>
    %cst_232 = arith.constant dense<0.000000e+00> : vector<2x256xf32>
    %284 = tpu.matmul %281, %283, %cst_232 {dimension_numbers = #tpu.dot_dimension_numbers<[1], [0], [0], [1], [0, 0, 1, 1], [], []>} : vector<2x256xbf16>, vector<256x256xbf16>, vector<2x256xf32> -> vector<2x256xf32>
    %285 = arith.addf %277, %284 : vector<2x256xf32>
    %c8_233 = arith.constant 8 : index
    %c0_234 = arith.constant 0 : index
    %c0_235 = arith.constant 0 : index
    %286 = vector.load %arg13[%c8_233, %c0_234, %c0_235] : memref<9x2x8xbf16, #tpu.memory_space<vmem>>, vector<1x2x8xbf16>
    %287 = vector.shape_cast %286 : vector<1x2x8xbf16> to vector<2x8xbf16>
    %cst_236 = arith.constant dense<0.000000e+00> : vector<2x256xf32>
    %288 = tpu.matmul %287, %222, %cst_236 {dimension_numbers = #tpu.dot_dimension_numbers<[1], [0], [0], [1], [0, 0, 1, 1], [], []>} : vector<2x8xbf16>, vector<8x256xbf16>, vector<2x256xf32> -> vector<2x256xf32>
    %289 = arith.truncf %288 : vector<2x256xf32> to vector<2x256xbf16>
    %c8_237 = arith.constant 8 : index
    %c0_238 = arith.constant 0 : index
    %c0_239 = arith.constant 0 : index
    %290 = vector.load %arg14[%c8_237, %c0_238, %c0_239] : memref<9x256x256xbf16, #tpu.memory_space<vmem>>, vector<1x256x256xbf16>
    %291 = vector.shape_cast %290 : vector<1x256x256xbf16> to vector<256x256xbf16>
    %cst_240 = arith.constant dense<0.000000e+00> : vector<2x256xf32>
    %292 = tpu.matmul %289, %291, %cst_240 {dimension_numbers = #tpu.dot_dimension_numbers<[1], [0], [0], [1], [0, 0, 1, 1], [], []>} : vector<2x256xbf16>, vector<256x256xbf16>, vector<2x256xf32> -> vector<2x256xf32>
    %293 = arith.addf %285, %292 : vector<2x256xf32>
    %cst_241 = arith.constant dense<0.000000e+00> : vector<256xf32>
    %294 = vector.multi_reduction <add>, %293, %cst_241 [0] : vector<2x256xf32> to vector<256xf32>
    %295 = vector.shape_cast %294 : vector<256xf32> to vector<1x256xf32>
    %cst_242 = arith.constant 2.000000e+00 : f32
    %296 = vector.broadcast %cst_242 : f32 to vector<1x256xf32>
    %297 = arith.divf %295, %296 : vector<1x256xf32>
    %298 = arith.mulf %293, %293 : vector<2x256xf32>
    %cst_243 = arith.constant dense<0.000000e+00> : vector<256xf32>
    %299 = vector.multi_reduction <add>, %298, %cst_243 [0] : vector<2x256xf32> to vector<256xf32>
    %300 = vector.shape_cast %299 : vector<256xf32> to vector<1x256xf32>
    %cst_244 = arith.constant 2.000000e+00 : f32
    %301 = vector.broadcast %cst_244 : f32 to vector<1x256xf32>
    %302 = arith.divf %300, %301 : vector<1x256xf32>
    %303 = arith.mulf %297, %297 : vector<1x256xf32>
    %304 = arith.subf %302, %303 : vector<1x256xf32>
    %c0_245 = arith.constant 0 : index
    %c0_246 = arith.constant 0 : index
    %305 = vector.load %arg15[%c0_245, %c0_246] : memref<1x256xf32, #tpu.memory_space<vmem>>, vector<1x256xf32>
    %cst_247 = arith.constant 9.99999974E-6 : f32
    %306 = vector.broadcast %cst_247 : f32 to vector<1x256xf32>
    %307 = arith.addf %304, %306 : vector<1x256xf32>
    %308 = math.rsqrt %307 : vector<1x256xf32>
    %309 = arith.mulf %305, %308 : vector<1x256xf32>
    %c0_248 = arith.constant 0 : index
    %c0_249 = arith.constant 0 : index
    %310 = vector.load %arg16[%c0_248, %c0_249] : memref<1x256xf32, #tpu.memory_space<vmem>>, vector<1x256xf32>
    %311 = arith.mulf %297, %309 : vector<1x256xf32>
    %312 = arith.subf %310, %311 : vector<1x256xf32>
    %313 = vector.broadcast %309 : vector<1x256xf32> to vector<2x256xf32>
    %314 = arith.mulf %293, %313 : vector<2x256xf32>
    %315 = vector.broadcast %312 : vector<1x256xf32> to vector<2x256xf32>
    %316 = arith.addf %314, %315 : vector<2x256xf32>
    %cst_250 = arith.constant 0.000000e+00 : f32
    %317 = vector.broadcast %cst_250 : f32 to vector<2x256xf32>
    %318 = arith.maximumf %316, %317 : vector<2x256xf32>
    %319 = arith.truncf %318 : vector<2x256xf32> to vector<2x256xbf16>
    %c0_251 = arith.constant 0 : index
    %c0_252 = arith.constant 0 : index
    %c0_253 = arith.constant 0 : index
    %320 = vector.load %arg17[%c0_251, %c0_252, %c0_253] : memref<9x2x2xbf16, #tpu.memory_space<vmem>>, vector<1x2x2xbf16>
    %321 = vector.shape_cast %320 : vector<1x2x2xbf16> to vector<2x2xbf16>
    %cst_254 = arith.constant dense<0.000000e+00> : vector<2x256xf32>
    %322 = tpu.matmul %321, %319, %cst_254 {dimension_numbers = #tpu.dot_dimension_numbers<[1], [0], [0], [1], [0, 0, 1, 1], [], []>} : vector<2x2xbf16>, vector<2x256xbf16>, vector<2x256xf32> -> vector<2x256xf32>
    %323 = arith.truncf %322 : vector<2x256xf32> to vector<2x256xbf16>
    %c0_255 = arith.constant 0 : index
    %c0_256 = arith.constant 0 : index
    %c0_257 = arith.constant 0 : index
    %324 = vector.load %arg18[%c0_255, %c0_256, %c0_257] : memref<9x256x256xbf16, #tpu.memory_space<vmem>>, vector<1x256x256xbf16>
    %325 = vector.shape_cast %324 : vector<1x256x256xbf16> to vector<256x256xbf16>
    %cst_258 = arith.constant dense<0.000000e+00> : vector<2x256xf32>
    %326 = tpu.matmul %323, %325, %cst_258 {dimension_numbers = #tpu.dot_dimension_numbers<[1], [0], [0], [1], [0, 0, 1, 1], [], []>} : vector<2x256xbf16>, vector<256x256xbf16>, vector<2x256xf32> -> vector<2x256xf32>
    %c1_259 = arith.constant 1 : index
    %c0_260 = arith.constant 0 : index
    %c0_261 = arith.constant 0 : index
    %327 = vector.load %arg17[%c1_259, %c0_260, %c0_261] : memref<9x2x2xbf16, #tpu.memory_space<vmem>>, vector<1x2x2xbf16>
    %328 = vector.shape_cast %327 : vector<1x2x2xbf16> to vector<2x2xbf16>
    %cst_262 = arith.constant dense<0.000000e+00> : vector<2x256xf32>
    %329 = tpu.matmul %328, %319, %cst_262 {dimension_numbers = #tpu.dot_dimension_numbers<[1], [0], [0], [1], [0, 0, 1, 1], [], []>} : vector<2x2xbf16>, vector<2x256xbf16>, vector<2x256xf32> -> vector<2x256xf32>
    %330 = arith.truncf %329 : vector<2x256xf32> to vector<2x256xbf16>
    %c1_263 = arith.constant 1 : index
    %c0_264 = arith.constant 0 : index
    %c0_265 = arith.constant 0 : index
    %331 = vector.load %arg18[%c1_263, %c0_264, %c0_265] : memref<9x256x256xbf16, #tpu.memory_space<vmem>>, vector<1x256x256xbf16>
    %332 = vector.shape_cast %331 : vector<1x256x256xbf16> to vector<256x256xbf16>
    %cst_266 = arith.constant dense<0.000000e+00> : vector<2x256xf32>
    %333 = tpu.matmul %330, %332, %cst_266 {dimension_numbers = #tpu.dot_dimension_numbers<[1], [0], [0], [1], [0, 0, 1, 1], [], []>} : vector<2x256xbf16>, vector<256x256xbf16>, vector<2x256xf32> -> vector<2x256xf32>
    %334 = arith.addf %326, %333 : vector<2x256xf32>
    %c2_267 = arith.constant 2 : index
    %c0_268 = arith.constant 0 : index
    %c0_269 = arith.constant 0 : index
    %335 = vector.load %arg17[%c2_267, %c0_268, %c0_269] : memref<9x2x2xbf16, #tpu.memory_space<vmem>>, vector<1x2x2xbf16>
    %336 = vector.shape_cast %335 : vector<1x2x2xbf16> to vector<2x2xbf16>
    %cst_270 = arith.constant dense<0.000000e+00> : vector<2x256xf32>
    %337 = tpu.matmul %336, %319, %cst_270 {dimension_numbers = #tpu.dot_dimension_numbers<[1], [0], [0], [1], [0, 0, 1, 1], [], []>} : vector<2x2xbf16>, vector<2x256xbf16>, vector<2x256xf32> -> vector<2x256xf32>
    %338 = arith.truncf %337 : vector<2x256xf32> to vector<2x256xbf16>
    %c2_271 = arith.constant 2 : index
    %c0_272 = arith.constant 0 : index
    %c0_273 = arith.constant 0 : index
    %339 = vector.load %arg18[%c2_271, %c0_272, %c0_273] : memref<9x256x256xbf16, #tpu.memory_space<vmem>>, vector<1x256x256xbf16>
    %340 = vector.shape_cast %339 : vector<1x256x256xbf16> to vector<256x256xbf16>
    %cst_274 = arith.constant dense<0.000000e+00> : vector<2x256xf32>
    %341 = tpu.matmul %338, %340, %cst_274 {dimension_numbers = #tpu.dot_dimension_numbers<[1], [0], [0], [1], [0, 0, 1, 1], [], []>} : vector<2x256xbf16>, vector<256x256xbf16>, vector<2x256xf32> -> vector<2x256xf32>
    %342 = arith.addf %334, %341 : vector<2x256xf32>
    %c3_275 = arith.constant 3 : index
    %c0_276 = arith.constant 0 : index
    %c0_277 = arith.constant 0 : index
    %343 = vector.load %arg17[%c3_275, %c0_276, %c0_277] : memref<9x2x2xbf16, #tpu.memory_space<vmem>>, vector<1x2x2xbf16>
    %344 = vector.shape_cast %343 : vector<1x2x2xbf16> to vector<2x2xbf16>
    %cst_278 = arith.constant dense<0.000000e+00> : vector<2x256xf32>
    %345 = tpu.matmul %344, %319, %cst_278 {dimension_numbers = #tpu.dot_dimension_numbers<[1], [0], [0], [1], [0, 0, 1, 1], [], []>} : vector<2x2xbf16>, vector<2x256xbf16>, vector<2x256xf32> -> vector<2x256xf32>
    %346 = arith.truncf %345 : vector<2x256xf32> to vector<2x256xbf16>
    %c3_279 = arith.constant 3 : index
    %c0_280 = arith.constant 0 : index
    %c0_281 = arith.constant 0 : index
    %347 = vector.load %arg18[%c3_279, %c0_280, %c0_281] : memref<9x256x256xbf16, #tpu.memory_space<vmem>>, vector<1x256x256xbf16>
    %348 = vector.shape_cast %347 : vector<1x256x256xbf16> to vector<256x256xbf16>
    %cst_282 = arith.constant dense<0.000000e+00> : vector<2x256xf32>
    %349 = tpu.matmul %346, %348, %cst_282 {dimension_numbers = #tpu.dot_dimension_numbers<[1], [0], [0], [1], [0, 0, 1, 1], [], []>} : vector<2x256xbf16>, vector<256x256xbf16>, vector<2x256xf32> -> vector<2x256xf32>
    %350 = arith.addf %342, %349 : vector<2x256xf32>
    %c4_283 = arith.constant 4 : index
    %c0_284 = arith.constant 0 : index
    %c0_285 = arith.constant 0 : index
    %351 = vector.load %arg17[%c4_283, %c0_284, %c0_285] : memref<9x2x2xbf16, #tpu.memory_space<vmem>>, vector<1x2x2xbf16>
    %352 = vector.shape_cast %351 : vector<1x2x2xbf16> to vector<2x2xbf16>
    %cst_286 = arith.constant dense<0.000000e+00> : vector<2x256xf32>
    %353 = tpu.matmul %352, %319, %cst_286 {dimension_numbers = #tpu.dot_dimension_numbers<[1], [0], [0], [1], [0, 0, 1, 1], [], []>} : vector<2x2xbf16>, vector<2x256xbf16>, vector<2x256xf32> -> vector<2x256xf32>
    %354 = arith.truncf %353 : vector<2x256xf32> to vector<2x256xbf16>
    %c4_287 = arith.constant 4 : index
    %c0_288 = arith.constant 0 : index
    %c0_289 = arith.constant 0 : index
    %355 = vector.load %arg18[%c4_287, %c0_288, %c0_289] : memref<9x256x256xbf16, #tpu.memory_space<vmem>>, vector<1x256x256xbf16>
    %356 = vector.shape_cast %355 : vector<1x256x256xbf16> to vector<256x256xbf16>
    %cst_290 = arith.constant dense<0.000000e+00> : vector<2x256xf32>
    %357 = tpu.matmul %354, %356, %cst_290 {dimension_numbers = #tpu.dot_dimension_numbers<[1], [0], [0], [1], [0, 0, 1, 1], [], []>} : vector<2x256xbf16>, vector<256x256xbf16>, vector<2x256xf32> -> vector<2x256xf32>
    %358 = arith.addf %350, %357 : vector<2x256xf32>
    %c5_291 = arith.constant 5 : index
    %c0_292 = arith.constant 0 : index
    %c0_293 = arith.constant 0 : index
    %359 = vector.load %arg17[%c5_291, %c0_292, %c0_293] : memref<9x2x2xbf16, #tpu.memory_space<vmem>>, vector<1x2x2xbf16>
    %360 = vector.shape_cast %359 : vector<1x2x2xbf16> to vector<2x2xbf16>
    %cst_294 = arith.constant dense<0.000000e+00> : vector<2x256xf32>
    %361 = tpu.matmul %360, %319, %cst_294 {dimension_numbers = #tpu.dot_dimension_numbers<[1], [0], [0], [1], [0, 0, 1, 1], [], []>} : vector<2x2xbf16>, vector<2x256xbf16>, vector<2x256xf32> -> vector<2x256xf32>
    %362 = arith.truncf %361 : vector<2x256xf32> to vector<2x256xbf16>
    %c5_295 = arith.constant 5 : index
    %c0_296 = arith.constant 0 : index
    %c0_297 = arith.constant 0 : index
    %363 = vector.load %arg18[%c5_295, %c0_296, %c0_297] : memref<9x256x256xbf16, #tpu.memory_space<vmem>>, vector<1x256x256xbf16>
    %364 = vector.shape_cast %363 : vector<1x256x256xbf16> to vector<256x256xbf16>
    %cst_298 = arith.constant dense<0.000000e+00> : vector<2x256xf32>
    %365 = tpu.matmul %362, %364, %cst_298 {dimension_numbers = #tpu.dot_dimension_numbers<[1], [0], [0], [1], [0, 0, 1, 1], [], []>} : vector<2x256xbf16>, vector<256x256xbf16>, vector<2x256xf32> -> vector<2x256xf32>
    %366 = arith.addf %358, %365 : vector<2x256xf32>
    %c6_299 = arith.constant 6 : index
    %c0_300 = arith.constant 0 : index
    %c0_301 = arith.constant 0 : index
    %367 = vector.load %arg17[%c6_299, %c0_300, %c0_301] : memref<9x2x2xbf16, #tpu.memory_space<vmem>>, vector<1x2x2xbf16>
    %368 = vector.shape_cast %367 : vector<1x2x2xbf16> to vector<2x2xbf16>
    %cst_302 = arith.constant dense<0.000000e+00> : vector<2x256xf32>
    %369 = tpu.matmul %368, %319, %cst_302 {dimension_numbers = #tpu.dot_dimension_numbers<[1], [0], [0], [1], [0, 0, 1, 1], [], []>} : vector<2x2xbf16>, vector<2x256xbf16>, vector<2x256xf32> -> vector<2x256xf32>
    %370 = arith.truncf %369 : vector<2x256xf32> to vector<2x256xbf16>
    %c6_303 = arith.constant 6 : index
    %c0_304 = arith.constant 0 : index
    %c0_305 = arith.constant 0 : index
    %371 = vector.load %arg18[%c6_303, %c0_304, %c0_305] : memref<9x256x256xbf16, #tpu.memory_space<vmem>>, vector<1x256x256xbf16>
    %372 = vector.shape_cast %371 : vector<1x256x256xbf16> to vector<256x256xbf16>
    %cst_306 = arith.constant dense<0.000000e+00> : vector<2x256xf32>
    %373 = tpu.matmul %370, %372, %cst_306 {dimension_numbers = #tpu.dot_dimension_numbers<[1], [0], [0], [1], [0, 0, 1, 1], [], []>} : vector<2x256xbf16>, vector<256x256xbf16>, vector<2x256xf32> -> vector<2x256xf32>
    %374 = arith.addf %366, %373 : vector<2x256xf32>
    %c7_307 = arith.constant 7 : index
    %c0_308 = arith.constant 0 : index
    %c0_309 = arith.constant 0 : index
    %375 = vector.load %arg17[%c7_307, %c0_308, %c0_309] : memref<9x2x2xbf16, #tpu.memory_space<vmem>>, vector<1x2x2xbf16>
    %376 = vector.shape_cast %375 : vector<1x2x2xbf16> to vector<2x2xbf16>
    %cst_310 = arith.constant dense<0.000000e+00> : vector<2x256xf32>
    %377 = tpu.matmul %376, %319, %cst_310 {dimension_numbers = #tpu.dot_dimension_numbers<[1], [0], [0], [1], [0, 0, 1, 1], [], []>} : vector<2x2xbf16>, vector<2x256xbf16>, vector<2x256xf32> -> vector<2x256xf32>
    %378 = arith.truncf %377 : vector<2x256xf32> to vector<2x256xbf16>
    %c7_311 = arith.constant 7 : index
    %c0_312 = arith.constant 0 : index
    %c0_313 = arith.constant 0 : index
    %379 = vector.load %arg18[%c7_311, %c0_312, %c0_313] : memref<9x256x256xbf16, #tpu.memory_space<vmem>>, vector<1x256x256xbf16>
    %380 = vector.shape_cast %379 : vector<1x256x256xbf16> to vector<256x256xbf16>
    %cst_314 = arith.constant dense<0.000000e+00> : vector<2x256xf32>
    %381 = tpu.matmul %378, %380, %cst_314 {dimension_numbers = #tpu.dot_dimension_numbers<[1], [0], [0], [1], [0, 0, 1, 1], [], []>} : vector<2x256xbf16>, vector<256x256xbf16>, vector<2x256xf32> -> vector<2x256xf32>
    %382 = arith.addf %374, %381 : vector<2x256xf32>
    %c8_315 = arith.constant 8 : index
    %c0_316 = arith.constant 0 : index
    %c0_317 = arith.constant 0 : index
    %383 = vector.load %arg17[%c8_315, %c0_316, %c0_317] : memref<9x2x2xbf16, #tpu.memory_space<vmem>>, vector<1x2x2xbf16>
    %384 = vector.shape_cast %383 : vector<1x2x2xbf16> to vector<2x2xbf16>
    %cst_318 = arith.constant dense<0.000000e+00> : vector<2x256xf32>
    %385 = tpu.matmul %384, %319, %cst_318 {dimension_numbers = #tpu.dot_dimension_numbers<[1], [0], [0], [1], [0, 0, 1, 1], [], []>} : vector<2x2xbf16>, vector<2x256xbf16>, vector<2x256xf32> -> vector<2x256xf32>
    %386 = arith.truncf %385 : vector<2x256xf32> to vector<2x256xbf16>
    %c8_319 = arith.constant 8 : index
    %c0_320 = arith.constant 0 : index
    %c0_321 = arith.constant 0 : index
    %387 = vector.load %arg18[%c8_319, %c0_320, %c0_321] : memref<9x256x256xbf16, #tpu.memory_space<vmem>>, vector<1x256x256xbf16>
    %388 = vector.shape_cast %387 : vector<1x256x256xbf16> to vector<256x256xbf16>
    %cst_322 = arith.constant dense<0.000000e+00> : vector<2x256xf32>
    %389 = tpu.matmul %386, %388, %cst_322 {dimension_numbers = #tpu.dot_dimension_numbers<[1], [0], [0], [1], [0, 0, 1, 1], [], []>} : vector<2x256xbf16>, vector<256x256xbf16>, vector<2x256xf32> -> vector<2x256xf32>
    %390 = arith.addf %382, %389 : vector<2x256xf32>
    %cst_323 = arith.constant dense<0.000000e+00> : vector<256xf32>
    %391 = vector.multi_reduction <add>, %390, %cst_323 [0] : vector<2x256xf32> to vector<256xf32>
    %392 = vector.shape_cast %391 : vector<256xf32> to vector<1x256xf32>
    %cst_324 = arith.constant 2.000000e+00 : f32
    %393 = vector.broadcast %cst_324 : f32 to vector<1x256xf32>
    %394 = arith.divf %392, %393 : vector<1x256xf32>
    %395 = arith.mulf %390, %390 : vector<2x256xf32>
    %cst_325 = arith.constant dense<0.000000e+00> : vector<256xf32>
    %396 = vector.multi_reduction <add>, %395, %cst_325 [0] : vector<2x256xf32> to vector<256xf32>
    %397 = vector.shape_cast %396 : vector<256xf32> to vector<1x256xf32>
    %cst_326 = arith.constant 2.000000e+00 : f32
    %398 = vector.broadcast %cst_326 : f32 to vector<1x256xf32>
    %399 = arith.divf %397, %398 : vector<1x256xf32>
    %400 = arith.mulf %394, %394 : vector<1x256xf32>
    %401 = arith.subf %399, %400 : vector<1x256xf32>
    %c0_327 = arith.constant 0 : index
    %c0_328 = arith.constant 0 : index
    %402 = vector.load %arg19[%c0_327, %c0_328] : memref<1x256xf32, #tpu.memory_space<vmem>>, vector<1x256xf32>
    %cst_329 = arith.constant 9.99999974E-6 : f32
    %403 = vector.broadcast %cst_329 : f32 to vector<1x256xf32>
    %404 = arith.addf %401, %403 : vector<1x256xf32>
    %405 = math.rsqrt %404 : vector<1x256xf32>
    %406 = arith.mulf %402, %405 : vector<1x256xf32>
    %c0_330 = arith.constant 0 : index
    %c0_331 = arith.constant 0 : index
    %407 = vector.load %arg20[%c0_330, %c0_331] : memref<1x256xf32, #tpu.memory_space<vmem>>, vector<1x256xf32>
    %408 = arith.mulf %394, %406 : vector<1x256xf32>
    %409 = arith.subf %407, %408 : vector<1x256xf32>
    %410 = vector.broadcast %406 : vector<1x256xf32> to vector<2x256xf32>
    %411 = arith.mulf %390, %410 : vector<2x256xf32>
    %412 = vector.broadcast %409 : vector<1x256xf32> to vector<2x256xf32>
    %413 = arith.addf %411, %412 : vector<2x256xf32>
    %cst_332 = arith.constant 0.000000e+00 : f32
    %414 = vector.broadcast %cst_332 : f32 to vector<2x256xf32>
    %415 = arith.maximumf %413, %414 : vector<2x256xf32>
    %c0_333 = arith.constant 0 : index
    %c0_334 = arith.constant 0 : index
    %416 = vector.load %arg21[%c0_333, %c0_334] : memref<2x2xbf16, #tpu.memory_space<vmem>>, vector<2x2xbf16>
    %417 = arith.truncf %415 : vector<2x256xf32> to vector<2x256xbf16>
    %cst_335 = arith.constant dense<0.000000e+00> : vector<2x256xf32>
    %418 = tpu.matmul %416, %417, %cst_335 {dimension_numbers = #tpu.dot_dimension_numbers<[1], [0], [0], [1], [0, 0, 1, 1], [], []>} : vector<2x2xbf16>, vector<2x256xbf16>, vector<2x256xf32> -> vector<2x256xf32>
    %419 = arith.truncf %418 : vector<2x256xf32> to vector<2x256xbf16>
    %c0_336 = arith.constant 0 : index
    %c0_337 = arith.constant 0 : index
    %420 = vector.load %arg22[%c0_336, %c0_337] : memref<256x32xbf16, #tpu.memory_space<vmem>>, vector<256x32xbf16>
    %cst_338 = arith.constant dense<0.000000e+00> : vector<2x32xf32>
    %421 = tpu.matmul %419, %420, %cst_338 {dimension_numbers = #tpu.dot_dimension_numbers<[1], [0], [0], [1], [0, 0, 1, 1], [], []>} : vector<2x256xbf16>, vector<256x32xbf16>, vector<2x32xf32> -> vector<2x32xf32>
    %c0_339 = arith.constant 0 : index
    %c0_340 = arith.constant 0 : index
    %422 = vector.load %arg23[%c0_339, %c0_340] : memref<1x32xf32, #tpu.memory_space<vmem>>, vector<1x32xf32>
    %423 = vector.broadcast %422 : vector<1x32xf32> to vector<2x32xf32>
    %424 = arith.addf %421, %423 : vector<2x32xf32>
    %c0_341 = arith.constant 0 : index
    %c0_342 = arith.constant 0 : index
    %425 = vector.load %arg24[%c0_341, %c0_342] : memref<2x32xf32, #tpu.memory_space<vmem>>, vector<2x32xf32>
    tpu.vector_store %arg24[%c0_341, %c0_342], %424 {strides = array<i32>} : memref<2x32xf32, #tpu.memory_space<vmem>>, vector<2x32xf32>,
    return
  }
  func.func @transform_0(%arg0: i32) -> (i32, i32) {
    %c0_i32 = arith.constant 0 : i32
    %c0_i32_0 = arith.constant 0 : i32
    %c0_i32_1 = arith.constant 0 : i32
    return %c0_i32, %c0_i32_0 : i32, i32
  }
  func.func @transform_1(%arg0: i32) -> (i32, i32) {
    %c0_i32 = arith.constant 0 : i32
    %c0_i32_0 = arith.constant 0 : i32
    %c0_i32_1 = arith.constant 0 : i32
    return %c0_i32, %c0_i32_0 : i32, i32
  }
  func.func @transform_2(%arg0: i32) -> (i32, i32) {
    %c0_i32 = arith.constant 0 : i32
    %c0_i32_0 = arith.constant 0 : i32
    %c0_i32_1 = arith.constant 0 : i32
    return %c0_i32, %c0_i32_0 : i32, i32
  }
  func.func @transform_3(%arg0: i32) -> (i32, i32) {
    %c0_i32 = arith.constant 0 : i32
    %c0_i32_0 = arith.constant 0 : i32
    %c0_i32_1 = arith.constant 0 : i32
    return %c0_i32, %c0_i32_0 : i32, i32
  }
  func.func @transform_4(%arg0: i32) -> (i32, i32, i32) {
    %c0_i32 = arith.constant 0 : i32
    %c0_i32_0 = arith.constant 0 : i32
    %c0_i32_1 = arith.constant 0 : i32
    %c0_i32_2 = arith.constant 0 : i32
    return %c0_i32, %c0_i32_0, %c0_i32_1 : i32, i32, i32
  }
  func.func @transform_5(%arg0: i32) -> (i32, i32, i32) {
    %c0_i32 = arith.constant 0 : i32
    %c0_i32_0 = arith.constant 0 : i32
    %c0_i32_1 = arith.constant 0 : i32
    %c0_i32_2 = arith.constant 0 : i32
    return %c0_i32, %c0_i32_0, %c0_i32_1 : i32, i32, i32
  }
  func.func @transform_6(%arg0: i32) -> (i32, i32) {
    %c0_i32 = arith.constant 0 : i32
    %c0_i32_0 = arith.constant 0 : i32
    %c0_i32_1 = arith.constant 0 : i32
    return %c0_i32, %c0_i32_0 : i32, i32
  }
  func.func @transform_7(%arg0: i32) -> (i32, i32) {
    %c0_i32 = arith.constant 0 : i32
    %c0_i32_0 = arith.constant 0 : i32
    %c0_i32_1 = arith.constant 0 : i32
    return %c0_i32, %c0_i32_0 : i32, i32
  }
  func.func @transform_8(%arg0: i32) -> (i32, i32, i32) {
    %c0_i32 = arith.constant 0 : i32
    %c0_i32_0 = arith.constant 0 : i32
    %c0_i32_1 = arith.constant 0 : i32
    %c0_i32_2 = arith.constant 0 : i32
    return %c0_i32, %c0_i32_0, %c0_i32_1 : i32, i32, i32
  }
  func.func @transform_9(%arg0: i32) -> (i32, i32, i32) {
    %c0_i32 = arith.constant 0 : i32
    %c0_i32_0 = arith.constant 0 : i32
    %c0_i32_1 = arith.constant 0 : i32
    %c0_i32_2 = arith.constant 0 : i32
    return %c0_i32, %c0_i32_0, %c0_i32_1 : i32, i32, i32
  }
  func.func @transform_10(%arg0: i32) -> (i32, i32) {
    %c0_i32 = arith.constant 0 : i32
    %c0_i32_0 = arith.constant 0 : i32
    %c0_i32_1 = arith.constant 0 : i32
    return %c0_i32, %c0_i32_0 : i32, i32
  }
  func.func @transform_11(%arg0: i32) -> (i32, i32) {
    %c0_i32 = arith.constant 0 : i32
    %c0_i32_0 = arith.constant 0 : i32
    %c0_i32_1 = arith.constant 0 : i32
    return %c0_i32, %c0_i32_0 : i32, i32
  }
  func.func @transform_12(%arg0: i32) -> (i32, i32, i32) {
    %c0_i32 = arith.constant 0 : i32
    %c0_i32_0 = arith.constant 0 : i32
    %c0_i32_1 = arith.constant 0 : i32
    %c0_i32_2 = arith.constant 0 : i32
    return %c0_i32, %c0_i32_0, %c0_i32_1 : i32, i32, i32
  }
  func.func @transform_13(%arg0: i32) -> (i32, i32, i32) {
    %c0_i32 = arith.constant 0 : i32
    %c0_i32_0 = arith.constant 0 : i32
    %c0_i32_1 = arith.constant 0 : i32
    %c0_i32_2 = arith.constant 0 : i32
    return %c0_i32, %c0_i32_0, %c0_i32_1 : i32, i32, i32
  }
  func.func @transform_14(%arg0: i32) -> (i32, i32) {
    %c0_i32 = arith.constant 0 : i32
    %c0_i32_0 = arith.constant 0 : i32
    %c0_i32_1 = arith.constant 0 : i32
    return %c0_i32, %c0_i32_0 : i32, i32
  }
  func.func @transform_15(%arg0: i32) -> (i32, i32) {
    %c0_i32 = arith.constant 0 : i32
    %c0_i32_0 = arith.constant 0 : i32
    %c0_i32_1 = arith.constant 0 : i32
    return %c0_i32, %c0_i32_0 : i32, i32
  }
  func.func @transform_16(%arg0: i32) -> (i32, i32, i32) {
    %c0_i32 = arith.constant 0 : i32
    %c0_i32_0 = arith.constant 0 : i32
    %c0_i32_1 = arith.constant 0 : i32
    %c0_i32_2 = arith.constant 0 : i32
    return %c0_i32, %c0_i32_0, %c0_i32_1 : i32, i32, i32
  }
  func.func @transform_17(%arg0: i32) -> (i32, i32, i32) {
    %c0_i32 = arith.constant 0 : i32
    %c0_i32_0 = arith.constant 0 : i32
    %c0_i32_1 = arith.constant 0 : i32
    %c0_i32_2 = arith.constant 0 : i32
    return %c0_i32, %c0_i32_0, %c0_i32_1 : i32, i32, i32
  }
  func.func @transform_18(%arg0: i32) -> (i32, i32) {
    %c0_i32 = arith.constant 0 : i32
    %c0_i32_0 = arith.constant 0 : i32
    %c0_i32_1 = arith.constant 0 : i32
    return %c0_i32, %c0_i32_0 : i32, i32
  }
  func.func @transform_19(%arg0: i32) -> (i32, i32) {
    %c0_i32 = arith.constant 0 : i32
    %c0_i32_0 = arith.constant 0 : i32
    %c0_i32_1 = arith.constant 0 : i32
    return %c0_i32, %c0_i32_0 : i32, i32
  }
  func.func @transform_20(%arg0: i32) -> (i32, i32) {
    %c0_i32 = arith.constant 0 : i32
    %c0_i32_0 = arith.constant 0 : i32
    %c0_i32_1 = arith.constant 0 : i32
    return %c0_i32, %c0_i32_0 : i32, i32
  }
  func.func @transform_21(%arg0: i32) -> (i32, i32) {
    %c0_i32 = arith.constant 0 : i32
    %c0_i32_0 = arith.constant 0 : i32
    %c0_i32_1 = arith.constant 0 : i32
    return %c0_i32, %c0_i32_0 : i32, i32
  }
  func.func @transform_22(%arg0: i32) -> (i32, i32) {
    %c0_i32 = arith.constant 0 : i32
    %c0_i32_0 = arith.constant 0 : i32
    %c0_i32_1 = arith.constant 0 : i32
    return %c0_i32, %c0_i32_0 : i32, i32
  }
  func.func @transform_23(%arg0: i32) -> (i32, i32) {
    %c0_i32 = arith.constant 0 : i32
    %c0_i32_0 = arith.constant 0 : i32
    %c0_i32_1 = arith.constant 0 : i32
    return %c0_i32, %c0_i32_0 : i32, i32
  }
}

</mosaic_0001>

<llo_original>
// kernel: private_encoder_forward.1
$region0: #{private_encoder_forward.1}
  #allocation0 [shape = 'u32[]', space=smem, size = 0x4, offset = 0x4, fixed_abs, tag = 'smem constant byte address 0x4 - core index']
  #allocation1 [shape = 'u32[144,128]{1,0:T(1,128)}', space=vmem, size = 0x12000, scoped, tag = 'internal scratch']
  %s0 = inlined_call_operand.vmem [shape: bf16[128,256], index: 0, kind: input, shape index: {}]
  %s1 = inlined_call_operand.vmem [shape: bf16[256,64], index: 1, kind: input, shape index: {}]
  %s2 = inlined_call_operand.vmem [shape: f32[1,64], index: 2, kind: input, shape index: {}]
  %s3 = inlined_call_operand.vmem [shape: f32[1,64], index: 3, kind: input, shape index: {}]
  %s4 = inlined_call_operand.vmem [shape: bf16[9,32,128], index: 4, kind: input, shape index: {}]
  %s5 = inlined_call_operand.vmem [shape: bf16[9,64,128], index: 5, kind: input, shape index: {}]
  %s6 = inlined_call_operand.vmem [shape: f32[1,128], index: 6, kind: input, shape index: {}]
  %s7 = inlined_call_operand.vmem [shape: f32[1,128], index: 7, kind: input, shape index: {}]
  %s8 = inlined_call_operand.vmem [shape: bf16[9,8,32], index: 8, kind: input, shape index: {}]
  %s9 = inlined_call_operand.vmem [shape: bf16[9,128,256], index: 9, kind: input, shape index: {}]
  %s10 = inlined_call_operand.vmem [shape: f32[1,256], index: 10, kind: input, shape index: {}]
  %s11 = inlined_call_operand.vmem [shape: f32[1,256], index: 11, kind: input, shape index: {}]
  %s12 = inlined_call_operand.vmem [shape: bf16[9,2,8], index: 12, kind: input, shape index: {}]
  %s13 = inlined_call_operand.vmem [shape: bf16[9,256,256], index: 13, kind: input, shape index: {}]
  %s14 = inlined_call_operand.vmem [shape: f32[1,256], index: 14, kind: input, shape index: {}]
  %s15 = inlined_call_operand.vmem [shape: f32[1,256], index: 15, kind: input, shape index: {}]
  %s16 = inlined_call_operand.vmem [shape: bf16[9,2,2], index: 16, kind: input, shape index: {}]
  %s17 = inlined_call_operand.vmem [shape: bf16[9,256,256], index: 17, kind: input, shape index: {}]
  %s18 = inlined_call_operand.vmem [shape: f32[1,256], index: 18, kind: input, shape index: {}]
  %s19 = inlined_call_operand.vmem [shape: f32[1,256], index: 19, kind: input, shape index: {}]
  %s20 = inlined_call_operand.vmem [shape: bf16[2,2], index: 20, kind: input, shape index: {}]
  %s21 = inlined_call_operand.vmem [shape: bf16[256,32], index: 21, kind: input, shape index: {}]
  %s22 = inlined_call_operand.vmem [shape: f32[1,32], index: 22, kind: input, shape index: {}]
  %s23 = inlined_call_operand.hbm [shape: f32[2,32], index: 23, kind: output, shape index: {}]
  %s24 = sld [smem:[#allocation0]]
  $region102: #{private_encoder_forward.1} parent=0
    _
  %s26 = ssub.s32 1, %s24
  %s27 = scalar_select 0, %s26, %s24
  $region1: #{private_encoder_forward.1} parent=0
    #allocation2 [shape = 'u8[1024]{0}', space=vmem, size = 0x400, scoped, tag = 'output window, operand 0, single buffered']
    #allocation3 [shape = 's32[1]{0}', space=sflag, size = 0x4, scoped, tag = 'scoped memory for private_encoder_forward.1']
    %28 = vsyncpa [#allocation3], 0
    // Predicated region
    $region2: #{private_encoder_forward.1} parent=1 // pred_check
      _
    $region3: #{private_encoder_forward.1} parent=1 // pred_check_branch
      %30 = sbr.rel (0) target = $region5
    $region4: #{private_encoder_forward.1} parent=1 // pred_region
      _
    $region5: #{private_encoder_forward.1} parent=1 // pred_fallthru
      _
    // Predicated region
    $region6: #{private_encoder_forward.1} parent=1 // pred_check
      _
    $region7: #{private_encoder_forward.1} parent=1 // pred_check_branch
      %32 = sbr.rel (0) target = $region9
    $region8: #{private_encoder_forward.1} parent=1 // pred_region
      _
    $region9: #{private_encoder_forward.1} parent=1 // pred_fallthru
      _
    // Predicated region
    $region10: #{private_encoder_forward.1} parent=1 // pred_check
      _
    $region11: #{private_encoder_forward.1} parent=1 // pred_check_branch
      %34 = sbr.rel (0) target = $region13
    $region12: #{private_encoder_forward.1} parent=1 // pred_region
      _
    $region13: #{private_encoder_forward.1} parent=1 // pred_fallthru
      _
    // Predicated region
    $region14: #{private_encoder_forward.1} parent=1 // pred_check
      _
    $region15: #{private_encoder_forward.1} parent=1 // pred_check_branch
      %36 = sbr.rel (0) target = $region17
    $region16: #{private_encoder_forward.1} parent=1 // pred_region
      _
    $region17: #{private_encoder_forward.1} parent=1 // pred_fallthru
      _
    // Predicated region
    $region18: #{private_encoder_forward.1} parent=1 // pred_check
      _
    $region19: #{private_encoder_forward.1} parent=1 // pred_check_branch
      %38 = sbr.rel (0) target = $region21
    $region20: #{private_encoder_forward.1} parent=1 // pred_region
      _
    $region21: #{private_encoder_forward.1} parent=1 // pred_fallthru
      _
    // Predicated region
    $region22: #{private_encoder_forward.1} parent=1 // pred_check
      _
    $region23: #{private_encoder_forward.1} parent=1 // pred_check_branch
      %40 = sbr.rel (0) target = $region25
    $region24: #{private_encoder_forward.1} parent=1 // pred_region
      _
    $region25: #{private_encoder_forward.1} parent=1 // pred_fallthru
      _
    // Predicated region
    $region26: #{private_encoder_forward.1} parent=1 // pred_check
      _
    $region27: #{private_encoder_forward.1} parent=1 // pred_check_branch
      %42 = sbr.rel (0) target = $region29
    $region28: #{private_encoder_forward.1} parent=1 // pred_region
      _
    $region29: #{private_encoder_forward.1} parent=1 // pred_fallthru
      _
    // Predicated region
    $region30: #{private_encoder_forward.1} parent=1 // pred_check
      _
    $region31: #{private_encoder_forward.1} parent=1 // pred_check_branch
      %44 = sbr.rel (0) target = $region33
    $region32: #{private_encoder_forward.1} parent=1 // pred_region
      _
    $region33: #{private_encoder_forward.1} parent=1 // pred_fallthru
      _
    // Predicated region
    $region34: #{private_encoder_forward.1} parent=1 // pred_check
      _
    $region35: #{private_encoder_forward.1} parent=1 // pred_check_branch
      %46 = sbr.rel (0) target = $region37
    $region36: #{private_encoder_forward.1} parent=1 // pred_region
      _
    $region37: #{private_encoder_forward.1} parent=1 // pred_fallthru
      _
    // Predicated region
    $region38: #{private_encoder_forward.1} parent=1 // pred_check
      _
    $region39: #{private_encoder_forward.1} parent=1 // pred_check_branch
      %48 = sbr.rel (0) target = $region41
    $region40: #{private_encoder_forward.1} parent=1 // pred_region
      _
    $region41: #{private_encoder_forward.1} parent=1 // pred_fallthru
      _
    // Predicated region
    $region42: #{private_encoder_forward.1} parent=1 // pred_check
      _
    $region43: #{private_encoder_forward.1} parent=1 // pred_check_branch
      %50 = sbr.rel (0) target = $region45
    $region44: #{private_encoder_forward.1} parent=1 // pred_region
      _
    $region45: #{private_encoder_forward.1} parent=1 // pred_fallthru
      _
    // Predicated region
    $region46: #{private_encoder_forward.1} parent=1 // pred_check
      _
    $region47: #{private_encoder_forward.1} parent=1 // pred_check_branch
      %52 = sbr.rel (0) target = $region49
    $region48: #{private_encoder_forward.1} parent=1 // pred_region
      _
    $region49: #{private_encoder_forward.1} parent=1 // pred_fallthru
      _
    // Predicated region
    $region50: #{private_encoder_forward.1} parent=1 // pred_check
      _
    $region51: #{private_encoder_forward.1} parent=1 // pred_check_branch
      %54 = sbr.rel (0) target = $region53
    $region52: #{private_encoder_forward.1} parent=1 // pred_region
      _
    $region53: #{private_encoder_forward.1} parent=1 // pred_fallthru
      _
    // Predicated region
    $region54: #{private_encoder_forward.1} parent=1 // pred_check
      _
    $region55: #{private_encoder_forward.1} parent=1 // pred_check_branch
      %56 = sbr.rel (0) target = $region57
    $region56: #{private_encoder_forward.1} parent=1 // pred_region
      _
    $region57: #{private_encoder_forward.1} parent=1 // pred_fallthru
      _
    // Predicated region
    $region58: #{private_encoder_forward.1} parent=1 // pred_check
      _
    $region59: #{private_encoder_forward.1} parent=1 // pred_check_branch
      %58 = sbr.rel (0) target = $region61
    $region60: #{private_encoder_forward.1} parent=1 // pred_region
      _
    $region61: #{private_encoder_forward.1} parent=1 // pred_fallthru
      _
    // Predicated region
    $region62: #{private_encoder_forward.1} parent=1 // pred_check
      _
    $region63: #{private_encoder_forward.1} parent=1 // pred_check_branch
      %60 = sbr.rel (0) target = $region65
    $region64: #{private_encoder_forward.1} parent=1 // pred_region
      _
    $region65: #{private_encoder_forward.1} parent=1 // pred_fallthru
      _
    // Predicated region
    $region66: #{private_encoder_forward.1} parent=1 // pred_check
      _
    $region67: #{private_encoder_forward.1} parent=1 // pred_check_branch
      %62 = sbr.rel (0) target = $region69
    $region68: #{private_encoder_forward.1} parent=1 // pred_region
      _
    $region69: #{private_encoder_forward.1} parent=1 // pred_fallthru
      _
    // Predicated region
    $region70: #{private_encoder_forward.1} parent=1 // pred_check
      _
    $region71: #{private_encoder_forward.1} parent=1 // pred_check_branch
      %64 = sbr.rel (0) target = $region73
    $region72: #{private_encoder_forward.1} parent=1 // pred_region
      _
    $region73: #{private_encoder_forward.1} parent=1 // pred_fallthru
      _
    // Predicated region
    $region74: #{private_encoder_forward.1} parent=1 // pred_check
      _
    $region75: #{private_encoder_forward.1} parent=1 // pred_check_branch
      %66 = sbr.rel (0) target = $region77
    $region76: #{private_encoder_forward.1} parent=1 // pred_region
      _
    $region77: #{private_encoder_forward.1} parent=1 // pred_fallthru
      _
    // Predicated region
    $region78: #{private_encoder_forward.1} parent=1 // pred_check
      _
    $region79: #{private_encoder_forward.1} parent=1 // pred_check_branch
      %68 = sbr.rel (0) target = $region81
    $region80: #{private_encoder_forward.1} parent=1 // pred_region
      _
    $region81: #{private_encoder_forward.1} parent=1 // pred_fallthru
      _
    // Predicated region
    $region82: #{private_encoder_forward.1} parent=1 // pred_check
      _
    $region83: #{private_encoder_forward.1} parent=1 // pred_check_branch
      %70 = sbr.rel (0) target = $region85
    $region84: #{private_encoder_forward.1} parent=1 // pred_region
      _
    $region85: #{private_encoder_forward.1} parent=1 // pred_fallthru
      _
    // Predicated region
    $region86: #{private_encoder_forward.1} parent=1 // pred_check
      _
    $region87: #{private_encoder_forward.1} parent=1 // pred_check_branch
      %72 = sbr.rel (0) target = $region89
    $region88: #{private_encoder_forward.1} parent=1 // pred_region
      _
    $region89: #{private_encoder_forward.1} parent=1 // pred_fallthru
      _
    // Predicated region
    $region90: #{private_encoder_forward.1} parent=1 // pred_check
      _
    $region91: #{private_encoder_forward.1} parent=1 // pred_check_branch
      %74 = sbr.rel (0) target = $region93
    $region92: #{private_encoder_forward.1} parent=1 // pred_region
      _
    $region93: #{private_encoder_forward.1} parent=1 // pred_fallthru
      _
    %v76 = vld [vmem:[%s0] sm:$0xff]
    %v77 = vld [vmem:[%s0 + $0x8] sm:$0xff]
    %v78 = vld [vmem:[%s0 + $0x10] sm:$0xff]
    %v79 = vld [vmem:[%s0 + $0x18] sm:$0xff]
    %v80 = vld [vmem:[%s0 + $0x20] sm:$0xff]
    %v81 = vld [vmem:[%s0 + $0x28] sm:$0xff]
    %v82 = vld [vmem:[%s0 + $0x30] sm:$0xff]
    %v83 = vld [vmem:[%s0 + $0x38] sm:$0xff]
    %v84 = vld [vmem:[%s0 + $0x40] sm:$0xff]
    %v85 = vld [vmem:[%s0 + $0x48] sm:$0xff]
    %v86 = vld [vmem:[%s0 + $0x50] sm:$0xff]
    %v87 = vld [vmem:[%s0 + $0x58] sm:$0xff]
    %v88 = vld [vmem:[%s0 + $0x60] sm:$0xff]
    %v89 = vld [vmem:[%s0 + $0x68] sm:$0xff]
    %v90 = vld [vmem:[%s0 + $0x70] sm:$0xff]
    %v91 = vld [vmem:[%s0 + $0x78] sm:$0xff]
    %v92 = vld [vmem:[%s1] sm:$0xf]
    %v93 = vld [vmem:[%s1 + $0x4] sm:$0xf]
    %v94 = vld [vmem:[%s1 + $0x8] sm:$0xf]
    %v95 = vld [vmem:[%s1 + $0xc] sm:$0xf]
    %v96 = vld [vmem:[%s1 + $0x10] sm:$0xf]
    %v97 = vld [vmem:[%s1 + $0x14] sm:$0xf]
    %v98 = vld [vmem:[%s1 + $0x18] sm:$0xf]
    %v99 = vld [vmem:[%s1 + $0x1c] sm:$0xf]
    %v100 = vld [vmem:[%s1 + $0x20] sm:$0xf]
    %v101 = vld [vmem:[%s1 + $0x24] sm:$0xf]
    %v102 = vld [vmem:[%s1 + $0x28] sm:$0xf]
    %v103 = vld [vmem:[%s1 + $0x2c] sm:$0xf]
    %v104 = vld [vmem:[%s1 + $0x30] sm:$0xf]
    %v105 = vld [vmem:[%s1 + $0x34] sm:$0xf]
    %v106 = vld [vmem:[%s1 + $0x38] sm:$0xf]
    %v107 = vld [vmem:[%s1 + $0x3c] sm:$0xf]
    %v108 = vld [vmem:[%s1 + $0x40] sm:$0xf]
    %v109 = vld [vmem:[%s1 + $0x44] sm:$0xf]
    %v110 = vld [vmem:[%s1 + $0x48] sm:$0xf]
    %v111 = vld [vmem:[%s1 + $0x4c] sm:$0xf]
    %v112 = vld [vmem:[%s1 + $0x50] sm:$0xf]
    %v113 = vld [vmem:[%s1 + $0x54] sm:$0xf]
    %v114 = vld [vmem:[%s1 + $0x58] sm:$0xf]
    %v115 = vld [vmem:[%s1 + $0x5c] sm:$0xf]
    %v116 = vld [vmem:[%s1 + $0x60] sm:$0xf]
    %v117 = vld [vmem:[%s1 + $0x64] sm:$0xf]
    %v118 = vld [vmem:[%s1 + $0x68] sm:$0xf]
    %v119 = vld [vmem:[%s1 + $0x6c] sm:$0xf]
    %v120 = vld [vmem:[%s1 + $0x70] sm:$0xf]
    %v121 = vld [vmem:[%s1 + $0x74] sm:$0xf]
    %v122 = vld [vmem:[%s1 + $0x78] sm:$0xf]
    %v123 = vld [vmem:[%s1 + $0x7c] sm:$0xf]
    %v140 = vunpack.c.l.b16 %v76
    %v141 = vunpack.c.h.b16 %v76
    %v142 = vunpack.c.l.b16 %v77
    %v143 = vunpack.c.h.b16 %v77
    %v144 = vunpack.c.l.b16 %v78
    %v145 = vunpack.c.h.b16 %v78
    %v146 = vunpack.c.l.b16 %v79
    %v147 = vunpack.c.h.b16 %v79
    %v148 = vunpack.c.l.b16 %v80
    %v149 = vunpack.c.h.b16 %v80
    %v150 = vunpack.c.l.b16 %v81
    %v151 = vunpack.c.h.b16 %v81
    %v152 = vunpack.c.l.b16 %v82
    %v153 = vunpack.c.h.b16 %v82
    %v154 = vunpack.c.l.b16 %v83
    %v155 = vunpack.c.h.b16 %v83
    %v156 = vunpack.c.l.b16 %v84
    %v157 = vunpack.c.h.b16 %v84
    %v158 = vunpack.c.l.b16 %v85
    %v159 = vunpack.c.h.b16 %v85
    %v160 = vunpack.c.l.b16 %v86
    %v161 = vunpack.c.h.b16 %v86
    %v162 = vunpack.c.l.b16 %v87
    %v163 = vunpack.c.h.b16 %v87
    %v164 = vunpack.c.l.b16 %v88
    %v165 = vunpack.c.h.b16 %v88
    %v166 = vunpack.c.l.b16 %v89
    %v167 = vunpack.c.h.b16 %v89
    %v168 = vunpack.c.l.b16 %v90
    %v169 = vunpack.c.h.b16 %v90
    %v170 = vunpack.c.l.b16 %v91
    %v171 = vunpack.c.h.b16 %v91
    %v172 = vpack.c.b16 %v142, %v140
    %v173 = vpack.c.b16 %v143, %v141
    %v174 = vpack.c.b16 %v146, %v144
    %v175 = vpack.c.b16 %v147, %v145
    %v176 = vpack.c.b16 %v150, %v148
    %v177 = vpack.c.b16 %v151, %v149
    %v178 = vpack.c.b16 %v154, %v152
    %v179 = vpack.c.b16 %v155, %v153
    %v180 = vpack.c.b16 %v158, %v156
    %v181 = vpack.c.b16 %v159, %v157
    %v182 = vpack.c.b16 %v162, %v160
    %v183 = vpack.c.b16 %v163, %v161
    %v184 = vpack.c.b16 %v166, %v164
    %v185 = vpack.c.b16 %v167, %v165
    %v186 = vpack.c.b16 %v170, %v168
    %v187 = vpack.c.b16 %v171, %v169
    %v236 = vunpack.c.l.b16 %v92
    %v237 = vunpack.c.l.b16 %v93
    %v238 = vunpack.c.l.b16 %v94
    %v239 = vunpack.c.l.b16 %v95
    %v240 = vunpack.c.l.b16 %v96
    %v241 = vunpack.c.l.b16 %v97
    %v242 = vunpack.c.l.b16 %v98
    %v243 = vunpack.c.l.b16 %v99
    %v244 = vunpack.c.l.b16 %v100
    %v245 = vunpack.c.l.b16 %v101
    %v246 = vunpack.c.l.b16 %v102
    %v247 = vunpack.c.l.b16 %v103
    %v248 = vunpack.c.l.b16 %v104
    %v249 = vunpack.c.l.b16 %v105
    %v250 = vunpack.c.l.b16 %v106
    %v251 = vunpack.c.l.b16 %v107
    %v252 = vunpack.c.l.b16 %v108
    %v253 = vunpack.c.l.b16 %v109
    %v254 = vunpack.c.l.b16 %v110
    %v255 = vunpack.c.l.b16 %v111
    %v256 = vunpack.c.l.b16 %v112
    %v257 = vunpack.c.l.b16 %v113
    %v258 = vunpack.c.l.b16 %v114
    %v259 = vunpack.c.l.b16 %v115
    %v260 = vunpack.c.l.b16 %v116
    %v261 = vunpack.c.l.b16 %v117
    %v262 = vunpack.c.l.b16 %v118
    %v263 = vunpack.c.l.b16 %v119
    %v264 = vunpack.c.l.b16 %v120
    %v265 = vunpack.c.l.b16 %v121
    %v266 = vunpack.c.l.b16 %v122
    %v267 = vunpack.c.l.b16 %v123
    %v268 = vpack.c.b16 %v237, %v236
    %v269 = vpack.c.b16 %v239, %v238
    %v270 = vpack.c.b16 %v241, %v240
    %v271 = vpack.c.b16 %v243, %v242
    %v272 = vpack.c.b16 %v245, %v244
    %v273 = vpack.c.b16 %v247, %v246
    %v274 = vpack.c.b16 %v249, %v248
    %v275 = vpack.c.b16 %v251, %v250
    %v276 = vpack.c.b16 %v253, %v252
    %v277 = vpack.c.b16 %v255, %v254
    %v278 = vpack.c.b16 %v257, %v256
    %v279 = vpack.c.b16 %v259, %v258
    %v280 = vpack.c.b16 %v261, %v260
    %v281 = vpack.c.b16 %v263, %v262
    %v282 = vpack.c.b16 %v265, %v264
    %v283 = vpack.c.b16 %v267, %v266
    %300 = vmatprep.subr.bf16.mxu0 0
    %301 = vmatpush1.bf16.msra.mxu0 %v268
    %302 = vmatprep.subr.bf16.mxu0 0
    %303 = vmatpush1.bf16.msra.mxu0 %v269
    %304 = vmatprep.subr.bf16.mxu0 0
    %305 = vmatpush1.bf16.msra.mxu0 %v270
    %306 = vmatprep.subr.bf16.mxu0 0
    %307 = vmatpush1.bf16.msra.mxu0 %v271
    %308 = vmatprep.subr.bf16.mxu0 0
    %309 = vmatpush1.bf16.msra.mxu0 %v272
    %310 = vmatprep.subr.bf16.mxu0 0
    %311 = vmatpush1.bf16.msra.mxu0 %v273
    %312 = vmatprep.subr.bf16.mxu0 0
    %313 = vmatpush1.bf16.msra.mxu0 %v274
    %314 = vmatprep.subr.bf16.mxu0 0
    %315 = vmatpush1.bf16.msra.mxu0 %v275
    %316 = vmatprep.subr.bf16.mxu0 0
    %317 = vmatpush1.bf16.msra.mxu0 %v276
    %318 = vmatprep.subr.bf16.mxu0 0
    %319 = vmatpush1.bf16.msra.mxu0 %v277
    %320 = vmatprep.subr.bf16.mxu0 0
    %321 = vmatpush1.bf16.msra.mxu0 %v278
    %322 = vmatprep.subr.bf16.mxu0 0
    %323 = vmatpush1.bf16.msra.mxu0 %v279
    %324 = vmatprep.subr.bf16.mxu0 0
    %325 = vmatpush1.bf16.msra.mxu0 %v280
    %326 = vmatprep.subr.bf16.mxu0 0
    %327 = vmatpush1.bf16.msra.mxu0 %v281
    %328 = vmatprep.subr.bf16.mxu0 0
    %329 = vmatpush1.bf16.msra.mxu0 %v282
    %330 = vmatprep.subr.bf16.mxu0 0
    %331 = vmatpush1.bf16.msra.mxu0 %v283
    %332 = vmatprep.mubr.bf16.mxu0 %v173
    %333 = vmatmul.mubr.bf16.gmra.mrb[0].mxu0 %v172
    %v334 = vpop.f32.mrb[0].mxu0
    %v335 = vadd.f32 0.0, %v334
    %v336 = vpop.f32.mrb[0].mxu0
    %v337 = vpop.f32.mrb[0].mxu0
    %v338 = vadd.f32 0.0, %v337
    %v339 = vpop.f32.mrb[0].mxu0
    %340 = vmatprep.mubr.bf16.mxu0 %v175
    %341 = vmatmul.mubr.bf16.gmra.mrb[0].mxu0 %v174
    %v342 = vpop.f32.mrb[0].mxu0
    %v343 = vadd.f32 0.0, %v342
    %v344 = vpop.f32.mrb[0].mxu0
    %v345 = vpop.f32.mrb[0].mxu0
    %v346 = vadd.f32 0.0, %v345
    %v347 = vpop.f32.mrb[0].mxu0
    %348 = vmatprep.mubr.bf16.mxu0 %v177
    %349 = vmatmul.mubr.bf16.gmra.mrb[0].mxu0 %v176
    %v350 = vpop.f32.mrb[0].mxu0
    %v351 = vadd.f32 0.0, %v350
    %v352 = vpop.f32.mrb[0].mxu0
    %v353 = vpop.f32.mrb[0].mxu0
    %v354 = vadd.f32 0.0, %v353
    %v355 = vpop.f32.mrb[0].mxu0
    %356 = vmatprep.mubr.bf16.mxu0 %v179
    %357 = vmatmul.mubr.bf16.gmra.mrb[0].mxu0 %v178
    %v358 = vpop.f32.mrb[0].mxu0
    %v359 = vadd.f32 0.0, %v358
    %v360 = vpop.f32.mrb[0].mxu0
    %v361 = vpop.f32.mrb[0].mxu0
    %v362 = vadd.f32 0.0, %v361
    %v363 = vpop.f32.mrb[0].mxu0
    %364 = vmatprep.mubr.bf16.mxu0 %v181
    %365 = vmatmul.mubr.bf16.gmra.mrb[0].mxu0 %v180
    %v366 = vpop.f32.mrb[0].mxu0
    %v367 = vadd.f32 0.0, %v366
    %v368 = vpop.f32.mrb[0].mxu0
    %v369 = vpop.f32.mrb[0].mxu0
    %v370 = vadd.f32 0.0, %v369
    %v371 = vpop.f32.mrb[0].mxu0
    %372 = vmatprep.mubr.bf16.mxu0 %v183
    %373 = vmatmul.mubr.bf16.gmra.mrb[0].mxu0 %v182
    %v374 = vpop.f32.mrb[0].mxu0
    %v375 = vadd.f32 0.0, %v374
    %v376 = vpop.f32.mrb[0].mxu0
    %v377 = vpop.f32.mrb[0].mxu0
    %v378 = vadd.f32 0.0, %v377
    %v379 = vpop.f32.mrb[0].mxu0
    %380 = vmatprep.mubr.bf16.mxu0 %v185
    %381 = vmatmul.mubr.bf16.gmra.mrb[0].mxu0 %v184
    %v382 = vpop.f32.mrb[0].mxu0
    %v383 = vadd.f32 0.0, %v382
    %v384 = vpop.f32.mrb[0].mxu0
    %v385 = vpop.f32.mrb[0].mxu0
    %v386 = vadd.f32 0.0, %v385
    %v387 = vpop.f32.mrb[0].mxu0
    %388 = vmatprep.mubr.bf16.mxu0 %v187
    %389 = vmatmul.mubr.bf16.gmra.mrb[0].mxu0 %v186
    %v390 = vpop.f32.mrb[0].mxu0
    %v391 = vadd.f32 0.0, %v390
    %v392 = vpop.f32.mrb[0].mxu0
    %v393 = vpop.f32.mrb[0].mxu0
    %v394 = vadd.f32 0.0, %v393
    %v395 = vpop.f32.mrb[0].mxu0
    %396 = vdwg.mxu0
    %vm397 = vcmask 523264
    %v398 = vsel %vm397, %v335, 0.0
    %v399 = vsel %vm397, %v338, 0.0
    %v400 = vadd.f32 %v398, %v399
    %v401 = vsel %vm397, %v343, 0.0
    %v402 = vadd.f32 %v400, %v401
    %v403 = vsel %vm397, %v346, 0.0
    %v404 = vadd.f32 %v402, %v403
    %v405 = vsel %vm397, %v351, 0.0
    %v406 = vadd.f32 %v404, %v405
    %v407 = vsel %vm397, %v354, 0.0
    %v408 = vadd.f32 %v406, %v407
    %v409 = vsel %vm397, %v359, 0.0
    %v410 = vadd.f32 %v408, %v409
    %v411 = vsel %vm397, %v362, 0.0
    %v412 = vadd.f32 %v410, %v411
    %v413 = vsel %vm397, %v367, 0.0
    %v414 = vadd.f32 %v412, %v413
    %v415 = vsel %vm397, %v370, 0.0
    %v416 = vadd.f32 %v414, %v415
    %v417 = vsel %vm397, %v375, 0.0
    %v418 = vadd.f32 %v416, %v417
    %v419 = vsel %vm397, %v378, 0.0
    %v420 = vadd.f32 %v418, %v419
    %v421 = vsel %vm397, %v383, 0.0
    %v422 = vadd.f32 %v420, %v421
    %v423 = vsel %vm397, %v386, 0.0
    %v424 = vadd.f32 %v422, %v423
    %v425 = vsel %vm397, %v391, 0.0
    %v426 = vadd.f32 %v424, %v425
    %v427 = vsel %vm397, %v394, 0.0
    %v428 = vadd.f32 %v426, %v427
    %v429 = vrot.slane %v428, 4
    %v430 = vadd.f32 %v428, %v429
    %v431 = vrot.slane %v430, 2
    %v432 = vadd.f32 %v430, %v431
    %v433 = vrot.slane %v432, 1
    %v434 = vadd.f32 %v432, %v433
    %v435 = vrcp.pop 128.0
    %v436 = vmul.f32 %v434, %v435
    %v437 = vmul.f32 %v335, %v335
    %v438 = vmul.f32 %v338, %v338
    %v439 = vmul.f32 %v343, %v343
    %v440 = vmul.f32 %v346, %v346
    %v441 = vmul.f32 %v351, %v351
    %v442 = vmul.f32 %v354, %v354
    %v443 = vmul.f32 %v359, %v359
    %v444 = vmul.f32 %v362, %v362
    %v445 = vmul.f32 %v367, %v367
    %v446 = vmul.f32 %v370, %v370
    %v447 = vmul.f32 %v375, %v375
    %v448 = vmul.f32 %v378, %v378
    %v449 = vmul.f32 %v383, %v383
    %v450 = vmul.f32 %v386, %v386
    %v451 = vmul.f32 %v391, %v391
    %v452 = vmul.f32 %v394, %v394
    %v453 = vsel %vm397, %v437, 0.0
    %v454 = vsel %vm397, %v438, 0.0
    %v455 = vadd.f32 %v453, %v454
    %v456 = vsel %vm397, %v439, 0.0
    %v457 = vadd.f32 %v455, %v456
    %v458 = vsel %vm397, %v440, 0.0
    %v459 = vadd.f32 %v457, %v458
    %v460 = vsel %vm397, %v441, 0.0
    %v461 = vadd.f32 %v459, %v460
    %v462 = vsel %vm397, %v442, 0.0
    %v463 = vadd.f32 %v461, %v462
    %v464 = vsel %vm397, %v443, 0.0
    %v465 = vadd.f32 %v463, %v464
    %v466 = vsel %vm397, %v444, 0.0
    %v467 = vadd.f32 %v465, %v466
    %v468 = vsel %vm397, %v445, 0.0
    %v469 = vadd.f32 %v467, %v468
    %v470 = vsel %vm397, %v446, 0.0
    %v471 = vadd.f32 %v469, %v470
    %v472 = vsel %vm397, %v447, 0.0
    %v473 = vadd.f32 %v471, %v472
    %v474 = vsel %vm397, %v448, 0.0
    %v475 = vadd.f32 %v473, %v474
    %v476 = vsel %vm397, %v449, 0.0
    %v477 = vadd.f32 %v475, %v476
    %v478 = vsel %vm397, %v450, 0.0
    %v479 = vadd.f32 %v477, %v478
    %v480 = vsel %vm397, %v451, 0.0
    %v481 = vadd.f32 %v479, %v480
    %v482 = vsel %vm397, %v452, 0.0
    %v483 = vadd.f32 %v481, %v482
    %v484 = vrot.slane %v483, 4
    %v485 = vadd.f32 %v483, %v484
    %v486 = vrot.slane %v485, 2
    %v487 = vadd.f32 %v485, %v486
    %v488 = vrot.slane %v487, 1
    %v489 = vadd.f32 %v487, %v488
    %v490 = vmul.f32 %v489, %v435
    %v491 = vmul.f32 %v436, %v436
    %v492 = vsub.f32 %v490, %v491
    %v493 = vld [vmem:[%s2] sm:$0x1]
    %v494 = vadd.f32 %v492, 1e-05
    %v495 = vrsqrt.pop %v494
    %v496 = vmul.f32 %v493, %v495
    %v497 = vld [vmem:[%s3] sm:$0x1]
    %v498 = vmul.f32 %v436, %v496
    %v499 = vsub.f32 %v497, %v498
    %v501 = vlaneseq
    %v502 = vshrl.u32 %v501, 7
    %v503 = vsub.s32 0, %v502
    %v504 = vrot.slane %v496, %v503
    %v506 = vmul.f32 %v335, %v504
    %v507 = vmul.f32 %v338, %v504
    %v508 = vmul.f32 %v343, %v504
    %v509 = vmul.f32 %v346, %v504
    %v510 = vmul.f32 %v351, %v504
    %v511 = vmul.f32 %v354, %v504
    %v512 = vmul.f32 %v359, %v504
    %v513 = vmul.f32 %v362, %v504
    %v514 = vmul.f32 %v367, %v504
    %v515 = vmul.f32 %v370, %v504
    %v516 = vmul.f32 %v375, %v504
    %v517 = vmul.f32 %v378, %v504
    %v518 = vmul.f32 %v383, %v504
    %v519 = vmul.f32 %v386, %v504
    %v520 = vmul.f32 %v391, %v504
    %v521 = vmul.f32 %v394, %v504
    %v523 = vlaneseq
    %v524 = vshrl.u32 %v523, 7
    %v525 = vsub.s32 0, %v524
    %v526 = vrot.slane %v499, %v525
    %v528 = vadd.f32 %v506, %v526
    %v529 = vadd.f32 %v507, %v526
    %v530 = vadd.f32 %v508, %v526
    %v531 = vadd.f32 %v509, %v526
    %v532 = vadd.f32 %v510, %v526
    %v533 = vadd.f32 %v511, %v526
    %v534 = vadd.f32 %v512, %v526
    %v535 = vadd.f32 %v513, %v526
    %v536 = vadd.f32 %v514, %v526
    %v537 = vadd.f32 %v515, %v526
    %v538 = vadd.f32 %v516, %v526
    %v539 = vadd.f32 %v517, %v526
    %v540 = vadd.f32 %v518, %v526
    %v541 = vadd.f32 %v519, %v526
    %v542 = vadd.f32 %v520, %v526
    %v543 = vadd.f32 %v521, %v526
    %v544 = vmax.f32 %v528, 0.0
    %v545 = vmax.f32 %v529, 0.0
    %v546 = vmax.f32 %v530, 0.0
    %v547 = vmax.f32 %v531, 0.0
    %v548 = vmax.f32 %v532, 0.0
    %v549 = vmax.f32 %v533, 0.0
    %v550 = vmax.f32 %v534, 0.0
    %v551 = vmax.f32 %v535, 0.0
    %v552 = vmax.f32 %v536, 0.0
    %v553 = vmax.f32 %v537, 0.0
    %v554 = vmax.f32 %v538, 0.0
    %v555 = vmax.f32 %v539, 0.0
    %v556 = vmax.f32 %v540, 0.0
    %v557 = vmax.f32 %v541, 0.0
    %v558 = vmax.f32 %v542, 0.0
    %v559 = vmax.f32 %v543, 0.0
    %v560 = vpack.c.bf16 %v545, %v544
    %v561 = vpack.c.bf16 %v547, %v546
    %v562 = vpack.c.bf16 %v549, %v548
    %v563 = vpack.c.bf16 %v551, %v550
    %v564 = vpack.c.bf16 %v553, %v552
    %v565 = vpack.c.bf16 %v555, %v554
    %v566 = vpack.c.bf16 %v557, %v556
    %v567 = vpack.c.bf16 %v559, %v558
    %v568 = vld [vmem:[%s4] sm:$0xf]
    %v569 = vld [vmem:[%s4 + $0x4] sm:$0xf]
    %v570 = vld [vmem:[%s4 + $0x8] sm:$0xf]
    %v571 = vld [vmem:[%s4 + $0xc] sm:$0xf]
    %v576 = vunpack.c.l.b16 %v568
    %v577 = vunpack.c.l.b16 %v569
    %v578 = vunpack.c.l.b16 %v570
    %v579 = vunpack.c.l.b16 %v571
    %v580 = vpack.c.b16 %v577, %v576
    %v581 = vpack.c.b16 %v579, %v578
    %584 = vmatprep.subr.bf16.mxu0 0
    %585 = vmatpush1.bf16.msra.mxu0 %v560
    %586 = vmatprep.subr.bf16.mxu0 0
    %587 = vmatpush1.bf16.msra.mxu0 %v561
    %588 = vmatprep.subr.bf16.mxu0 0
    %589 = vmatpush1.bf16.msra.mxu0 %v562
    %590 = vmatprep.subr.bf16.mxu0 0
    %591 = vmatpush1.bf16.msra.mxu0 %v563
    %592 = vmatprep.subr.bf16.mxu0 0
    %593 = vmatpush1.bf16.msra.mxu0 %v564
    %594 = vmatprep.subr.bf16.mxu0 0
    %595 = vmatpush1.bf16.msra.mxu0 %v565
    %596 = vmatprep.subr.bf16.mxu0 0
    %597 = vmatpush1.bf16.msra.mxu0 %v566
    %598 = vmatprep.subr.bf16.mxu0 0
    %599 = vmatpush1.bf16.msra.mxu0 %v567
    %600 = vmatprep.subr.bf16.mxu0 0
    %601 = vmatpush1.bf16.msra.mxu0 0
    %602 = vmatprep.subr.bf16.mxu0 0
    %603 = vmatpush1.bf16.msra.mxu0 0
    %604 = vmatprep.subr.bf16.mxu0 0
    %605 = vmatpush1.bf16.msra.mxu0 0
    %606 = vmatprep.subr.bf16.mxu0 0
    %607 = vmatpush1.bf16.msra.mxu0 0
    %608 = vmatprep.subr.bf16.mxu0 0
    %609 = vmatpush1.bf16.msra.mxu0 0
    %610 = vmatprep.subr.bf16.mxu0 0
    %611 = vmatpush1.bf16.msra.mxu0 0
    %612 = vmatprep.subr.bf16.mxu0 0
    %613 = vmatpush1.bf16.msra.mxu0 0
    %614 = vmatprep.subr.bf16.mxu0 0
    %615 = vmatpush1.bf16.msra.mxu0 0
    %616 = vmatprep.mubr.bf16.mxu0 0
    %617 = vmatmul.mubr.bf16.gmra.mrb[0].mxu0 %v580
    %v618 = vpop.f32.mrb[0].mxu0
    %v619 = vadd.f32 0.0, %v618
    %v620 = vpop.f32.mrb[0].mxu0
    %v621 = vpop.f32.mrb[0].mxu0
    %v622 = vadd.f32 0.0, %v621
    %v623 = vpop.f32.mrb[0].mxu0
    %624 = vmatprep.mubr.bf16.mxu0 0
    %625 = vmatmul.mubr.bf16.gmra.mrb[0].mxu0 %v581
    %v626 = vpop.f32.mrb[0].mxu0
    %v627 = vadd.f32 0.0, %v626
    %v628 = vpop.f32.mrb[0].mxu0
    %v629 = vpop.f32.mrb[0].mxu0
    %v630 = vadd.f32 0.0, %v629
    %v631 = vpop.f32.mrb[0].mxu0
    %632 = vdwg.mxu0
    %v633 = vpack.c.bf16 %v622, %v619
    %v634 = vpack.c.bf16 %v630, %v627
    %v635 = vld [vmem:[%s5] sm:$0xf]
    %v636 = vld [vmem:[%s5 + $0x4] sm:$0xf]
    %v637 = vld [vmem:[%s5 + $0x8] sm:$0xf]
    %v638 = vld [vmem:[%s5 + $0xc] sm:$0xf]
    %v639 = vld [vmem:[%s5 + $0x10] sm:$0xf]
    %v640 = vld [vmem:[%s5 + $0x14] sm:$0xf]
    %v641 = vld [vmem:[%s5 + $0x18] sm:$0xf]
    %v642 = vld [vmem:[%s5 + $0x1c] sm:$0xf]
    %s643 = scalar_lea.vmem %s4, 16
    %v644 = vld [vmem:[%s643] sm:$0xf]
    %v645 = vld [vmem:[%s643 + $0x4] sm:$0xf]
    %v646 = vld [vmem:[%s643 + $0x8] sm:$0xf]
    %v647 = vld [vmem:[%s643 + $0xc] sm:$0xf]
    %v652 = vunpack.c.l.b16 %v644
    %v653 = vunpack.c.l.b16 %v645
    %v654 = vunpack.c.l.b16 %v646
    %v655 = vunpack.c.l.b16 %v647
    %v656 = vpack.c.b16 %v653, %v652
    %v657 = vpack.c.b16 %v655, %v654
    %660 = vmatprep.subr.bf16.mxu0 0
    %661 = vmatpush1.bf16.msra.mxu0 %v560
    %662 = vmatprep.subr.bf16.mxu0 0
    %663 = vmatpush1.bf16.msra.mxu0 %v561
    %664 = vmatprep.subr.bf16.mxu0 0
    %665 = vmatpush1.bf16.msra.mxu0 %v562
    %666 = vmatprep.subr.bf16.mxu0 0
    %667 = vmatpush1.bf16.msra.mxu0 %v563
    %668 = vmatprep.subr.bf16.mxu0 0
    %669 = vmatpush1.bf16.msra.mxu0 %v564
    %670 = vmatprep.subr.bf16.mxu0 0
    %671 = vmatpush1.bf16.msra.mxu0 %v565
    %672 = vmatprep.subr.bf16.mxu0 0
    %673 = vmatpush1.bf16.msra.mxu0 %v566
    %674 = vmatprep.subr.bf16.mxu0 0
    %675 = vmatpush1.bf16.msra.mxu0 %v567
    %676 = vmatprep.subr.bf16.mxu0 0
    %677 = vmatpush1.bf16.msra.mxu0 0
    %678 = vmatprep.subr.bf16.mxu0 0
    %679 = vmatpush1.bf16.msra.mxu0 0
    %680 = vmatprep.subr.bf16.mxu0 0
    %681 = vmatpush1.bf16.msra.mxu0 0
    %682 = vmatprep.subr.bf16.mxu0 0
    %683 = vmatpush1.bf16.msra.mxu0 0
    %684 = vmatprep.subr.bf16.mxu0 0
    %685 = vmatpush1.bf16.msra.mxu0 0
    %686 = vmatprep.subr.bf16.mxu0 0
    %687 = vmatpush1.bf16.msra.mxu0 0
    %688 = vmatprep.subr.bf16.mxu0 0
    %689 = vmatpush1.bf16.msra.mxu0 0
    %690 = vmatprep.subr.bf16.mxu0 0
    %691 = vmatpush1.bf16.msra.mxu0 0
    %692 = vmatprep.mubr.bf16.mxu0 0
    %693 = vmatmul.mubr.bf16.gmra.mrb[0].mxu0 %v656
    %v694 = vpop.f32.mrb[0].mxu0
    %v695 = vadd.f32 0.0, %v694
    %v696 = vpop.f32.mrb[0].mxu0
    %v697 = vpop.f32.mrb[0].mxu0
    %v698 = vadd.f32 0.0, %v697
    %v699 = vpop.f32.mrb[0].mxu0
    %700 = vmatprep.mubr.bf16.mxu0 0
    %701 = vmatmul.mubr.bf16.gmra.mrb[0].mxu0 %v657
    %v702 = vpop.f32.mrb[0].mxu0
    %v703 = vadd.f32 0.0, %v702
    %v704 = vpop.f32.mrb[0].mxu0
    %v705 = vpop.f32.mrb[0].mxu0
    %v706 = vadd.f32 0.0, %v705
    %v707 = vpop.f32.mrb[0].mxu0
    %708 = vdwg.mxu0
    %v709 = vpack.c.bf16 %v698, %v695
    %v710 = vpack.c.bf16 %v706, %v703
    %s711 = scalar_lea.vmem %s5, 32
    %v712 = vld [vmem:[%s711] sm:$0xf]
    %v713 = vld [vmem:[%s711 + $0x4] sm:$0xf]
    %v714 = vld [vmem:[%s711 + $0x8] sm:$0xf]
    %v715 = vld [vmem:[%s711 + $0xc] sm:$0xf]
    %v716 = vld [vmem:[%s711 + $0x10] sm:$0xf]
    %v717 = vld [vmem:[%s711 + $0x14] sm:$0xf]
    %v718 = vld [vmem:[%s711 + $0x18] sm:$0xf]
    %v719 = vld [vmem:[%s711 + $0x1c] sm:$0xf]
    %v728 = vunpack.c.l.b16 %v712
    %v729 = vunpack.c.l.b16 %v713
    %v730 = vunpack.c.l.b16 %v714
    %v731 = vunpack.c.l.b16 %v715
    %v732 = vunpack.c.l.b16 %v716
    %v733 = vunpack.c.l.b16 %v717
    %v734 = vunpack.c.l.b16 %v718
    %v735 = vunpack.c.l.b16 %v719
    %v736 = vpack.c.b16 %v729, %v728
    %v737 = vpack.c.b16 %v731, %v730
    %v738 = vpack.c.b16 %v733, %v732
    %v739 = vpack.c.b16 %v735, %v734
    %v745 = vsel %vm397, %v709, 0
    %v748 = vsel %vm397, %v710, 0
    %750 = vmatprep.subr.bf16.mxu0 0
    %751 = vmatpush1.bf16.msra.mxu0 %v736
    %752 = vmatprep.subr.bf16.mxu0 0
    %753 = vmatpush1.bf16.msra.mxu0 %v737
    %754 = vmatprep.subr.bf16.mxu0 0
    %755 = vmatpush1.bf16.msra.mxu0 %v738
    %756 = vmatprep.subr.bf16.mxu0 0
    %757 = vmatpush1.bf16.msra.mxu0 %v739
    %758 = vmatprep.subr.bf16.mxu0 0
    %759 = vmatpush1.bf16.msra.mxu0 0
    %760 = vmatprep.subr.bf16.mxu0 0
    %761 = vmatpush1.bf16.msra.mxu0 0
    %762 = vmatprep.subr.bf16.mxu0 0
    %763 = vmatpush1.bf16.msra.mxu0 0
    %764 = vmatprep.subr.bf16.mxu0 0
    %765 = vmatpush1.bf16.msra.mxu0 0
    %766 = vmatprep.subr.bf16.mxu0 0
    %767 = vmatpush1.bf16.msra.mxu0 0
    %768 = vmatprep.subr.bf16.mxu0 0
    %769 = vmatpush1.bf16.msra.mxu0 0
    %770 = vmatprep.subr.bf16.mxu0 0
    %771 = vmatpush1.bf16.msra.mxu0 0
    %772 = vmatprep.subr.bf16.mxu0 0
    %773 = vmatpush1.bf16.msra.mxu0 0
    %774 = vmatprep.subr.bf16.mxu0 0
    %775 = vmatpush1.bf16.msra.mxu0 0
    %776 = vmatprep.subr.bf16.mxu0 0
    %777 = vmatpush1.bf16.msra.mxu0 0
    %778 = vmatprep.subr.bf16.mxu0 0
    %779 = vmatpush1.bf16.msra.mxu0 0
    %780 = vmatprep.subr.bf16.mxu0 0
    %781 = vmatpush1.bf16.msra.mxu0 0
    %782 = vmatprep.mubr.bf16.mxu0 0
    %783 = vmatmul.mubr.bf16.gmra.mrb[0].mxu0 %v745
    %v784 = vpop.f32.mrb[0].mxu0
    %v785 = vadd.f32 0.0, %v784
    %v786 = vpop.f32.mrb[0].mxu0
    %v787 = vpop.f32.mrb[0].mxu0
    %v788 = vadd.f32 0.0, %v787
    %v789 = vpop.f32.mrb[0].mxu0
    %790 = vmatprep.mubr.bf16.mxu0 0
    %791 = vmatmul.mubr.bf16.gmra.mrb[0].mxu0 %v748
    %v792 = vpop.f32.mrb[0].mxu0
    %v793 = vadd.f32 0.0, %v792
    %v794 = vpop.f32.mrb[0].mxu0
    %v795 = vpop.f32.mrb[0].mxu0
    %v796 = vadd.f32 0.0, %v795
    %v797 = vpop.f32.mrb[0].mxu0
    %798 = vdwg.mxu0
    %v807 = vunpack.c.l.b16 %v635
    %v808 = vunpack.c.l.b16 %v636
    %v809 = vunpack.c.l.b16 %v637
    %v810 = vunpack.c.l.b16 %v638
    %v811 = vunpack.c.l.b16 %v639
    %v812 = vunpack.c.l.b16 %v640
    %v813 = vunpack.c.l.b16 %v641
    %v814 = vunpack.c.l.b16 %v642
    %v815 = vpack.c.b16 %v808, %v807
    %v816 = vpack.c.b16 %v810, %v809
    %v817 = vpack.c.b16 %v812, %v811
    %v818 = vpack.c.b16 %v814, %v813
    %v824 = vsel %vm397, %v633, 0
    %v827 = vsel %vm397, %v634, 0
    %829 = vmatprep.subr.bf16.mxu0 0
    %830 = vmatpush1.bf16.msra.mxu0 %v815
    %831 = vmatprep.subr.bf16.mxu0 0
    %832 = vmatpush1.bf16.msra.mxu0 %v816
    %833 = vmatprep.subr.bf16.mxu0 0
    %834 = vmatpush1.bf16.msra.mxu0 %v817
    %835 = vmatprep.subr.bf16.mxu0 0
    %836 = vmatpush1.bf16.msra.mxu0 %v818
    %837 = vmatprep.subr.bf16.mxu0 0
    %838 = vmatpush1.bf16.msra.mxu0 0
    %839 = vmatprep.subr.bf16.mxu0 0
    %840 = vmatpush1.bf16.msra.mxu0 0
    %841 = vmatprep.subr.bf16.mxu0 0
    %842 = vmatpush1.bf16.msra.mxu0 0
    %843 = vmatprep.subr.bf16.mxu0 0
    %844 = vmatpush1.bf16.msra.mxu0 0
    %845 = vmatprep.subr.bf16.mxu0 0
    %846 = vmatpush1.bf16.msra.mxu0 0
    %847 = vmatprep.subr.bf16.mxu0 0
    %848 = vmatpush1.bf16.msra.mxu0 0
    %849 = vmatprep.subr.bf16.mxu0 0
    %850 = vmatpush1.bf16.msra.mxu0 0
    %851 = vmatprep.subr.bf16.mxu0 0
    %852 = vmatpush1.bf16.msra.mxu0 0
    %853 = vmatprep.subr.bf16.mxu0 0
    %854 = vmatpush1.bf16.msra.mxu0 0
    %855 = vmatprep.subr.bf16.mxu0 0
    %856 = vmatpush1.bf16.msra.mxu0 0
    %857 = vmatprep.subr.bf16.mxu0 0
    %858 = vmatpush1.bf16.msra.mxu0 0
    %859 = vmatprep.subr.bf16.mxu0 0
    %860 = vmatpush1.bf16.msra.mxu0 0
    %861 = vmatprep.mubr.bf16.mxu0 0
    %862 = vmatmul.mubr.bf16.gmra.mrb[0].mxu0 %v824
    %v863 = vpop.f32.mrb[0].mxu0
    %v864 = vadd.f32 %v785, %v863
    %v865 = vpop.f32.mrb[0].mxu0
    %v866 = vpop.f32.mrb[0].mxu0
    %v867 = vadd.f32 %v788, %v866
    %v868 = vpop.f32.mrb[0].mxu0
    %869 = vmatprep.mubr.bf16.mxu0 0
    %870 = vmatmul.mubr.bf16.gmra.mrb[0].mxu0 %v827
    %v871 = vpop.f32.mrb[0].mxu0
    %v872 = vadd.f32 %v793, %v871
    %v873 = vpop.f32.mrb[0].mxu0
    %v874 = vpop.f32.mrb[0].mxu0
    %v875 = vadd.f32 %v796, %v874
    %v876 = vpop.f32.mrb[0].mxu0
    %877 = vdwg.mxu0
    %s878 = scalar_lea.vmem %s4, 32
    %v879 = vld [vmem:[%s878] sm:$0xf]
    %v880 = vld [vmem:[%s878 + $0x4] sm:$0xf]
    %v881 = vld [vmem:[%s878 + $0x8] sm:$0xf]
    %v882 = vld [vmem:[%s878 + $0xc] sm:$0xf]
    %v887 = vunpack.c.l.b16 %v879
    %v888 = vunpack.c.l.b16 %v880
    %v889 = vunpack.c.l.b16 %v881
    %v890 = vunpack.c.l.b16 %v882
    %v891 = vpack.c.b16 %v888, %v887
    %v892 = vpack.c.b16 %v890, %v889
    %895 = vmatprep.subr.bf16.mxu0 0
    %896 = vmatpush1.bf16.msra.mxu0 %v560
    %897 = vmatprep.subr.bf16.mxu0 0
    %898 = vmatpush1.bf16.msra.mxu0 %v561
    %899 = vmatprep.subr.bf16.mxu0 0
    %900 = vmatpush1.bf16.msra.mxu0 %v562
    %901 = vmatprep.subr.bf16.mxu0 0
    %902 = vmatpush1.bf16.msra.mxu0 %v563
    %903 = vmatprep.subr.bf16.mxu0 0
    %904 = vmatpush1.bf16.msra.mxu0 %v564
    %905 = vmatprep.subr.bf16.mxu0 0
    %906 = vmatpush1.bf16.msra.mxu0 %v565
    %907 = vmatprep.subr.bf16.mxu0 0
    %908 = vmatpush1.bf16.msra.mxu0 %v566
    %909 = vmatprep.subr.bf16.mxu0 0
    %910 = vmatpush1.bf16.msra.mxu0 %v567
    %911 = vmatprep.subr.bf16.mxu0 0
    %912 = vmatpush1.bf16.msra.mxu0 0
    %913 = vmatprep.subr.bf16.mxu0 0
    %914 = vmatpush1.bf16.msra.mxu0 0
    %915 = vmatprep.subr.bf16.mxu0 0
    %916 = vmatpush1.bf16.msra.mxu0 0
    %917 = vmatprep.subr.bf16.mxu0 0
    %918 = vmatpush1.bf16.msra.mxu0 0
    %919 = vmatprep.subr.bf16.mxu0 0
    %920 = vmatpush1.bf16.msra.mxu0 0
    %921 = vmatprep.subr.bf16.mxu0 0
    %922 = vmatpush1.bf16.msra.mxu0 0
    %923 = vmatprep.subr.bf16.mxu0 0
    %924 = vmatpush1.bf16.msra.mxu0 0
    %925 = vmatprep.subr.bf16.mxu0 0
    %926 = vmatpush1.bf16.msra.mxu0 0
    %927 = vmatprep.mubr.bf16.mxu0 0
    %928 = vmatmul.mubr.bf16.gmra.mrb[0].mxu0 %v891
    %v929 = vpop.f32.mrb[0].mxu0
    %v930 = vadd.f32 0.0, %v929
    %v931 = vpop.f32.mrb[0].mxu0
    %v932 = vpop.f32.mrb[0].mxu0
    %v933 = vadd.f32 0.0, %v932
    %v934 = vpop.f32.mrb[0].mxu0
    %935 = vmatprep.mubr.bf16.mxu0 0
    %936 = vmatmul.mubr.bf16.gmra.mrb[0].mxu0 %v892
    %v937 = vpop.f32.mrb[0].mxu0
    %v938 = vadd.f32 0.0, %v937
    %v939 = vpop.f32.mrb[0].mxu0
    %v940 = vpop.f32.mrb[0].mxu0
    %v941 = vadd.f32 0.0, %v940
    %v942 = vpop.f32.mrb[0].mxu0
    %943 = vdwg.mxu0
    %v944 = vpack.c.bf16 %v933, %v930
    %v945 = vpack.c.bf16 %v941, %v938
    %s946 = scalar_lea.vmem %s5, 64
    %v947 = vld [vmem:[%s946] sm:$0xf]
    %v948 = vld [vmem:[%s946 + $0x4] sm:$0xf]
    %v949 = vld [vmem:[%s946 + $0x8] sm:$0xf]
    %v950 = vld [vmem:[%s946 + $0xc] sm:$0xf]
    %v951 = vld [vmem:[%s946 + $0x10] sm:$0xf]
    %v952 = vld [vmem:[%s946 + $0x14] sm:$0xf]
    %v953 = vld [vmem:[%s946 + $0x18] sm:$0xf]
    %v954 = vld [vmem:[%s946 + $0x1c] sm:$0xf]
    %v963 = vunpack.c.l.b16 %v947
    %v964 = vunpack.c.l.b16 %v948
    %v965 = vunpack.c.l.b16 %v949
    %v966 = vunpack.c.l.b16 %v950
    %v967 = vunpack.c.l.b16 %v951
    %v968 = vunpack.c.l.b16 %v952
    %v969 = vunpack.c.l.b16 %v953
    %v970 = vunpack.c.l.b16 %v954
    %v971 = vpack.c.b16 %v964, %v963
    %v972 = vpack.c.b16 %v966, %v965
    %v973 = vpack.c.b16 %v968, %v967
    %v974 = vpack.c.b16 %v970, %v969
    %v980 = vsel %vm397, %v944, 0
    %v983 = vsel %vm397, %v945, 0
    %985 = vmatprep.subr.bf16.mxu0 0
    %986 = vmatpush1.bf16.msra.mxu0 %v971
    %987 = vmatprep.subr.bf16.mxu0 0
    %988 = vmatpush1.bf16.msra.mxu0 %v972
    %989 = vmatprep.subr.bf16.mxu0 0
    %990 = vmatpush1.bf16.msra.mxu0 %v973
    %991 = vmatprep.subr.bf16.mxu0 0
    %992 = vmatpush1.bf16.msra.mxu0 %v974
    %993 = vmatprep.subr.bf16.mxu0 0
    %994 = vmatpush1.bf16.msra.mxu0 0
    %995 = vmatprep.subr.bf16.mxu0 0
    %996 = vmatpush1.bf16.msra.mxu0 0
    %997 = vmatprep.subr.bf16.mxu0 0
    %998 = vmatpush1.bf16.msra.mxu0 0
    %999 = vmatprep.subr.bf16.mxu0 0
    %1000 = vmatpush1.bf16.msra.mxu0 0
    %1001 = vmatprep.subr.bf16.mxu0 0
    %1002 = vmatpush1.bf16.msra.mxu0 0
    %1003 = vmatprep.subr.bf16.mxu0 0
    %1004 = vmatpush1.bf16.msra.mxu0 0
    %1005 = vmatprep.subr.bf16.mxu0 0
    %1006 = vmatpush1.bf16.msra.mxu0 0
    %1007 = vmatprep.subr.bf16.mxu0 0
    %1008 = vmatpush1.bf16.msra.mxu0 0
    %1009 = vmatprep.subr.bf16.mxu0 0
    %1010 = vmatpush1.bf16.msra.mxu0 0
    %1011 = vmatprep.subr.bf16.mxu0 0
    %1012 = vmatpush1.bf16.msra.mxu0 0
    %1013 = vmatprep.subr.bf16.mxu0 0
    %1014 = vmatpush1.bf16.msra.mxu0 0
    %1015 = vmatprep.subr.bf16.mxu0 0
    %1016 = vmatpush1.bf16.msra.mxu0 0
    %1017 = vmatprep.mubr.bf16.mxu0 0
    %1018 = vmatmul.mubr.bf16.gmra.mrb[0].mxu0 %v980
    %v1019 = vpop.f32.mrb[0].mxu0
    %v1020 = vadd.f32 0.0, %v1019
    %v1021 = vpop.f32.mrb[0].mxu0
    %v1022 = vpop.f32.mrb[0].mxu0
    %v1023 = vadd.f32 0.0, %v1022
    %v1024 = vpop.f32.mrb[0].mxu0
    %1025 = vmatprep.mubr.bf16.mxu0 0
    %1026 = vmatmul.mubr.bf16.gmra.mrb[0].mxu0 %v983
    %v1027 = vpop.f32.mrb[0].mxu0
    %v1028 = vadd.f32 0.0, %v1027
    %v1029 = vpop.f32.mrb[0].mxu0
    %v1030 = vpop.f32.mrb[0].mxu0
    %v1031 = vadd.f32 0.0, %v1030
    %v1032 = vpop.f32.mrb[0].mxu0
    %1033 = vdwg.mxu0
    %v1034 = vadd.f32 %v864, %v1020
    %v1035 = vadd.f32 %v867, %v1023
    %v1036 = vadd.f32 %v872, %v1028
    %v1037 = vadd.f32 %v875, %v1031
    %s1038 = scalar_lea.vmem %s4, 48
    %v1039 = vld [vmem:[%s1038] sm:$0xf]
    %v1040 = vld [vmem:[%s1038 + $0x4] sm:$0xf]
    %v1041 = vld [vmem:[%s1038 + $0x8] sm:$0xf]
    %v1042 = vld [vmem:[%s1038 + $0xc] sm:$0xf]
    %v1047 = vunpack.c.l.b16 %v1039
    %v1048 = vunpack.c.l.b16 %v1040
    %v1049 = vunpack.c.l.b16 %v1041
    %v1050 = vunpack.c.l.b16 %v1042
    %v1051 = vpack.c.b16 %v1048, %v1047
    %v1052 = vpack.c.b16 %v1050, %v1049
    %1055 = vmatprep.subr.bf16.mxu0 0
    %1056 = vmatpush1.bf16.msra.mxu0 %v560
    %1057 = vmatprep.subr.bf16.mxu0 0
    %1058 = vmatpush1.bf16.msra.mxu0 %v561
    %1059 = vmatprep.subr.bf16.mxu0 0
    %1060 = vmatpush1.bf16.msra.mxu0 %v562
    %1061 = vmatprep.subr.bf16.mxu0 0
    %1062 = vmatpush1.bf16.msra.mxu0 %v563
    %1063 = vmatprep.subr.bf16.mxu0 0
    %1064 = vmatpush1.bf16.msra.mxu0 %v564
    %1065 = vmatprep.subr.bf16.mxu0 0
    %1066 = vmatpush1.bf16.msra.mxu0 %v565
    %1067 = vmatprep.subr.bf16.mxu0 0
    %1068 = vmatpush1.bf16.msra.mxu0 %v566
    %1069 = vmatprep.subr.bf16.mxu0 0
    %1070 = vmatpush1.bf16.msra.mxu0 %v567
    %1071 = vmatprep.subr.bf16.mxu0 0
    %1072 = vmatpush1.bf16.msra.mxu0 0
    %1073 = vmatprep.subr.bf16.mxu0 0
    %1074 = vmatpush1.bf16.msra.mxu0 0
    %1075 = vmatprep.subr.bf16.mxu0 0
    %1076 = vmatpush1.bf16.msra.mxu0 0
    %1077 = vmatprep.subr.bf16.mxu0 0
    %1078 = vmatpush1.bf16.msra.mxu0 0
    %1079 = vmatprep.subr.bf16.mxu0 0
    %1080 = vmatpush1.bf16.msra.mxu0 0
    %1081 = vmatprep.subr.bf16.mxu0 0
    %1082 = vmatpush1.bf16.msra.mxu0 0
    %1083 = vmatprep.subr.bf16.mxu0 0
    %1084 = vmatpush1.bf16.msra.mxu0 0
    %1085 = vmatprep.subr.bf16.mxu0 0
    %1086 = vmatpush1.bf16.msra.mxu0 0
    %1087 = vmatprep.mubr.bf16.mxu0 0
    %1088 = vmatmul.mubr.bf16.gmra.mrb[0].mxu0 %v1051
    %v1089 = vpop.f32.mrb[0].mxu0
    %v1090 = vadd.f32 0.0, %v1089
    %v1091 = vpop.f32.mrb[0].mxu0
    %v1092 = vpop.f32.mrb[0].mxu0
    %v1093 = vadd.f32 0.0, %v1092
    %v1094 = vpop.f32.mrb[0].mxu0
    %1095 = vmatprep.mubr.bf16.mxu0 0
    %1096 = vmatmul.mubr.bf16.gmra.mrb[0].mxu0 %v1052
    %v1097 = vpop.f32.mrb[0].mxu0
    %v1098 = vadd.f32 0.0, %v1097
    %v1099 = vpop.f32.mrb[0].mxu0
    %v1100 = vpop.f32.mrb[0].mxu0
    %v1101 = vadd.f32 0.0, %v1100
    %v1102 = vpop.f32.mrb[0].mxu0
    %1103 = vdwg.mxu0
    %v1104 = vpack.c.bf16 %v1093, %v1090
    %v1105 = vpack.c.bf16 %v1101, %v1098
    %s1106 = scalar_lea.vmem %s5, 96
    %v1107 = vld [vmem:[%s1106] sm:$0xf]
    %v1108 = vld [vmem:[%s1106 + $0x4] sm:$0xf]
    %v1109 = vld [vmem:[%s1106 + $0x8] sm:$0xf]
    %v1110 = vld [vmem:[%s1106 + $0xc] sm:$0xf]
    %v1111 = vld [vmem:[%s1106 + $0x10] sm:$0xf]
    %v1112 = vld [vmem:[%s1106 + $0x14] sm:$0xf]
    %v1113 = vld [vmem:[%s1106 + $0x18] sm:$0xf]
    %v1114 = vld [vmem:[%s1106 + $0x1c] sm:$0xf]
    %v1123 = vunpack.c.l.b16 %v1107
    %v1124 = vunpack.c.l.b16 %v1108
    %v1125 = vunpack.c.l.b16 %v1109
    %v1126 = vunpack.c.l.b16 %v1110
    %v1127 = vunpack.c.l.b16 %v1111
    %v1128 = vunpack.c.l.b16 %v1112
    %v1129 = vunpack.c.l.b16 %v1113
    %v1130 = vunpack.c.l.b16 %v1114
    %v1131 = vpack.c.b16 %v1124, %v1123
    %v1132 = vpack.c.b16 %v1126, %v1125
    %v1133 = vpack.c.b16 %v1128, %v1127
    %v1134 = vpack.c.b16 %v1130, %v1129
    %v1140 = vsel %vm397, %v1104, 0
    %v1143 = vsel %vm397, %v1105, 0
    %1145 = vmatprep.subr.bf16.mxu0 0
    %1146 = vmatpush1.bf16.msra.mxu0 %v1131
    %1147 = vmatprep.subr.bf16.mxu0 0
    %1148 = vmatpush1.bf16.msra.mxu0 %v1132
    %1149 = vmatprep.subr.bf16.mxu0 0
    %1150 = vmatpush1.bf16.msra.mxu0 %v1133
    %1151 = vmatprep.subr.bf16.mxu0 0
    %1152 = vmatpush1.bf16.msra.mxu0 %v1134
    %1153 = vmatprep.subr.bf16.mxu0 0
    %1154 = vmatpush1.bf16.msra.mxu0 0
    %1155 = vmatprep.subr.bf16.mxu0 0
    %1156 = vmatpush1.bf16.msra.mxu0 0
    %1157 = vmatprep.subr.bf16.mxu0 0
    %1158 = vmatpush1.bf16.msra.mxu0 0
    %1159 = vmatprep.subr.bf16.mxu0 0
    %1160 = vmatpush1.bf16.msra.mxu0 0
    %1161 = vmatprep.subr.bf16.mxu0 0
    %1162 = vmatpush1.bf16.msra.mxu0 0
    %1163 = vmatprep.subr.bf16.mxu0 0
    %1164 = vmatpush1.bf16.msra.mxu0 0
    %1165 = vmatprep.subr.bf16.mxu0 0
    %1166 = vmatpush1.bf16.msra.mxu0 0
    %1167 = vmatprep.subr.bf16.mxu0 0
    %1168 = vmatpush1.bf16.msra.mxu0 0
    %1169 = vmatprep.subr.bf16.mxu0 0
    %1170 = vmatpush1.bf16.msra.mxu0 0
    %1171 = vmatprep.subr.bf16.mxu0 0
    %1172 = vmatpush1.bf16.msra.mxu0 0
    %1173 = vmatprep.subr.bf16.mxu0 0
    %1174 = vmatpush1.bf16.msra.mxu0 0
    %1175 = vmatprep.subr.bf16.mxu0 0
    %1176 = vmatpush1.bf16.msra.mxu0 0
    %1177 = vmatprep.mubr.bf16.mxu0 0
    %1178 = vmatmul.mubr.bf16.gmra.mrb[0].mxu0 %v1140
    %v1179 = vpop.f32.mrb[0].mxu0
    %v1180 = vadd.f32 0.0, %v1179
    %v1181 = vpop.f32.mrb[0].mxu0
    %v1182 = vpop.f32.mrb[0].mxu0
    %v1183 = vadd.f32 0.0, %v1182
    %v1184 = vpop.f32.mrb[0].mxu0
    %1185 = vmatprep.mubr.bf16.mxu0 0
    %1186 = vmatmul.mubr.bf16.gmra.mrb[0].mxu0 %v1143
    %v1187 = vpop.f32.mrb[0].mxu0
    %v1188 = vadd.f32 0.0, %v1187
    %v1189 = vpop.f32.mrb[0].mxu0
    %v1190 = vpop.f32.mrb[0].mxu0
    %v1191 = vadd.f32 0.0, %v1190
    %v1192 = vpop.f32.mrb[0].mxu0
    %1193 = vdwg.mxu0
    %v1194 = vadd.f32 %v1034, %v1180
    %v1195 = vadd.f32 %v1035, %v1183
    %v1196 = vadd.f32 %v1036, %v1188
    %v1197 = vadd.f32 %v1037, %v1191
    %s1198 = scalar_lea.vmem %s4, 64
    %v1199 = vld [vmem:[%s1198] sm:$0xf]
    %v1200 = vld [vmem:[%s1198 + $0x4] sm:$0xf]
    %v1201 = vld [vmem:[%s1198 + $0x8] sm:$0xf]
    %v1202 = vld [vmem:[%s1198 + $0xc] sm:$0xf]
    %v1207 = vunpack.c.l.b16 %v1199
    %v1208 = vunpack.c.l.b16 %v1200
    %v1209 = vunpack.c.l.b16 %v1201
    %v1210 = vunpack.c.l.b16 %v1202
    %v1211 = vpack.c.b16 %v1208, %v1207
    %v1212 = vpack.c.b16 %v1210, %v1209
    %1215 = vmatprep.subr.bf16.mxu0 0
    %1216 = vmatpush1.bf16.msra.mxu0 %v560
    %1217 = vmatprep.subr.bf16.mxu0 0
    %1218 = vmatpush1.bf16.msra.mxu0 %v561
    %1219 = vmatprep.subr.bf16.mxu0 0
    %1220 = vmatpush1.bf16.msra.mxu0 %v562
    %1221 = vmatprep.subr.bf16.mxu0 0
    %1222 = vmatpush1.bf16.msra.mxu0 %v563
    %1223 = vmatprep.subr.bf16.mxu0 0
    %1224 = vmatpush1.bf16.msra.mxu0 %v564
    %1225 = vmatprep.subr.bf16.mxu0 0
    %1226 = vmatpush1.bf16.msra.mxu0 %v565
    %1227 = vmatprep.subr.bf16.mxu0 0
    %1228 = vmatpush1.bf16.msra.mxu0 %v566
    %1229 = vmatprep.subr.bf16.mxu0 0
    %1230 = vmatpush1.bf16.msra.mxu0 %v567
    %1231 = vmatprep.subr.bf16.mxu0 0
    %1232 = vmatpush1.bf16.msra.mxu0 0
    %1233 = vmatprep.subr.bf16.mxu0 0
    %1234 = vmatpush1.bf16.msra.mxu0 0
    %1235 = vmatprep.subr.bf16.mxu0 0
    %1236 = vmatpush1.bf16.msra.mxu0 0
    %1237 = vmatprep.subr.bf16.mxu0 0
    %1238 = vmatpush1.bf16.msra.mxu0 0
    %1239 = vmatprep.subr.bf16.mxu0 0
    %1240 = vmatpush1.bf16.msra.mxu0 0
    %1241 = vmatprep.subr.bf16.mxu0 0
    %1242 = vmatpush1.bf16.msra.mxu0 0
    %1243 = vmatprep.subr.bf16.mxu0 0
    %1244 = vmatpush1.bf16.msra.mxu0 0
    %1245 = vmatprep.subr.bf16.mxu0 0
    %1246 = vmatpush1.bf16.msra.mxu0 0
    %1247 = vmatprep.mubr.bf16.mxu0 0
    %1248 = vmatmul.mubr.bf16.gmra.mrb[0].mxu0 %v1211
    %v1249 = vpop.f32.mrb[0].mxu0
    %v1250 = vadd.f32 0.0, %v1249
    %v1251 = vpop.f32.mrb[0].mxu0
    %v1252 = vpop.f32.mrb[0].mxu0
    %v1253 = vadd.f32 0.0, %v1252
    %v1254 = vpop.f32.mrb[0].mxu0
    %1255 = vmatprep.mubr.bf16.mxu0 0
    %1256 = vmatmul.mubr.bf16.gmra.mrb[0].mxu0 %v1212
    %v1257 = vpop.f32.mrb[0].mxu0
    %v1258 = vadd.f32 0.0, %v1257
    %v1259 = vpop.f32.mrb[0].mxu0
    %v1260 = vpop.f32.mrb[0].mxu0
    %v1261 = vadd.f32 0.0, %v1260
    %v1262 = vpop.f32.mrb[0].mxu0
    %1263 = vdwg.mxu0
    %v1264 = vpack.c.bf16 %v1253, %v1250
    %v1265 = vpack.c.bf16 %v1261, %v1258
    %s1266 = scalar_lea.vmem %s5, 128
    %v1267 = vld [vmem:[%s1266] sm:$0xf]
    %v1268 = vld [vmem:[%s1266 + $0x4] sm:$0xf]
    %v1269 = vld [vmem:[%s1266 + $0x8] sm:$0xf]
    %v1270 = vld [vmem:[%s1266 + $0xc] sm:$0xf]
    %v1271 = vld [vmem:[%s1266 + $0x10] sm:$0xf]
    %v1272 = vld [vmem:[%s1266 + $0x14] sm:$0xf]
    %v1273 = vld [vmem:[%s1266 + $0x18] sm:$0xf]
    %v1274 = vld [vmem:[%s1266 + $0x1c] sm:$0xf]
    %v1283 = vunpack.c.l.b16 %v1267
    %v1284 = vunpack.c.l.b16 %v1268
    %v1285 = vunpack.c.l.b16 %v1269
    %v1286 = vunpack.c.l.b16 %v1270
    %v1287 = vunpack.c.l.b16 %v1271
    %v1288 = vunpack.c.l.b16 %v1272
    %v1289 = vunpack.c.l.b16 %v1273
    %v1290 = vunpack.c.l.b16 %v1274
    %v1291 = vpack.c.b16 %v1284, %v1283
    %v1292 = vpack.c.b16 %v1286, %v1285
    %v1293 = vpack.c.b16 %v1288, %v1287
    %v1294 = vpack.c.b16 %v1290, %v1289
    %v1300 = vsel %vm397, %v1264, 0
    %v1303 = vsel %vm397, %v1265, 0
    %1305 = vmatprep.subr.bf16.mxu0 0
    %1306 = vmatpush1.bf16.msra.mxu0 %v1291
    %1307 = vmatprep.subr.bf16.mxu0 0
    %1308 = vmatpush1.bf16.msra.mxu0 %v1292
    %1309 = vmatprep.subr.bf16.mxu0 0
    %1310 = vmatpush1.bf16.msra.mxu0 %v1293
    %1311 = vmatprep.subr.bf16.mxu0 0
    %1312 = vmatpush1.bf16.msra.mxu0 %v1294
    %1313 = vmatprep.subr.bf16.mxu0 0
    %1314 = vmatpush1.bf16.msra.mxu0 0
    %1315 = vmatprep.subr.bf16.mxu0 0
    %1316 = vmatpush1.bf16.msra.mxu0 0
    %1317 = vmatprep.subr.bf16.mxu0 0
    %1318 = vmatpush1.bf16.msra.mxu0 0
    %1319 = vmatprep.subr.bf16.mxu0 0
    %1320 = vmatpush1.bf16.msra.mxu0 0
    %1321 = vmatprep.subr.bf16.mxu0 0
    %1322 = vmatpush1.bf16.msra.mxu0 0
    %1323 = vmatprep.subr.bf16.mxu0 0
    %1324 = vmatpush1.bf16.msra.mxu0 0
    %1325 = vmatprep.subr.bf16.mxu0 0
    %1326 = vmatpush1.bf16.msra.mxu0 0
    %1327 = vmatprep.subr.bf16.mxu0 0
    %1328 = vmatpush1.bf16.msra.mxu0 0
    %1329 = vmatprep.subr.bf16.mxu0 0
    %1330 = vmatpush1.bf16.msra.mxu0 0
    %1331 = vmatprep.subr.bf16.mxu0 0
    %1332 = vmatpush1.bf16.msra.mxu0 0
    %1333 = vmatprep.subr.bf16.mxu0 0
    %1334 = vmatpush1.bf16.msra.mxu0 0
    %1335 = vmatprep.subr.bf16.mxu0 0
    %1336 = vmatpush1.bf16.msra.mxu0 0
    %1337 = vmatprep.mubr.bf16.mxu0 0
    %1338 = vmatmul.mubr.bf16.gmra.mrb[0].mxu0 %v1300
    %v1339 = vpop.f32.mrb[0].mxu0
    %v1340 = vadd.f32 0.0, %v1339
    %v1341 = vpop.f32.mrb[0].mxu0
    %v1342 = vpop.f32.mrb[0].mxu0
    %v1343 = vadd.f32 0.0, %v1342
    %v1344 = vpop.f32.mrb[0].mxu0
    %1345 = vmatprep.mubr.bf16.mxu0 0
    %1346 = vmatmul.mubr.bf16.gmra.mrb[0].mxu0 %v1303
    %v1347 = vpop.f32.mrb[0].mxu0
    %v1348 = vadd.f32 0.0, %v1347
    %v1349 = vpop.f32.mrb[0].mxu0
    %v1350 = vpop.f32.mrb[0].mxu0
    %v1351 = vadd.f32 0.0, %v1350
    %v1352 = vpop.f32.mrb[0].mxu0
    %1353 = vdwg.mxu0
    %v1354 = vadd.f32 %v1194, %v1340
    %v1355 = vadd.f32 %v1195, %v1343
    %v1356 = vadd.f32 %v1196, %v1348
    %v1357 = vadd.f32 %v1197, %v1351
    %s1358 = scalar_lea.vmem %s4, 80
    %v1359 = vld [vmem:[%s1358] sm:$0xf]
    %v1360 = vld [vmem:[%s1358 + $0x4] sm:$0xf]
    %v1361 = vld [vmem:[%s1358 + $0x8] sm:$0xf]
    %v1362 = vld [vmem:[%s1358 + $0xc] sm:$0xf]
    %v1367 = vunpack.c.l.b16 %v1359
    %v1368 = vunpack.c.l.b16 %v1360
    %v1369 = vunpack.c.l.b16 %v1361
    %v1370 = vunpack.c.l.b16 %v1362
    %v1371 = vpack.c.b16 %v1368, %v1367
    %v1372 = vpack.c.b16 %v1370, %v1369
    %1375 = vmatprep.subr.bf16.mxu0 0
    %1376 = vmatpush1.bf16.msra.mxu0 %v560
    %1377 = vmatprep.subr.bf16.mxu0 0
    %1378 = vmatpush1.bf16.msra.mxu0 %v561
    %1379 = vmatprep.subr.bf16.mxu0 0
    %1380 = vmatpush1.bf16.msra.mxu0 %v562
    %1381 = vmatprep.subr.bf16.mxu0 0
    %1382 = vmatpush1.bf16.msra.mxu0 %v563
    %1383 = vmatprep.subr.bf16.mxu0 0
    %1384 = vmatpush1.bf16.msra.mxu0 %v564
    %1385 = vmatprep.subr.bf16.mxu0 0
    %1386 = vmatpush1.bf16.msra.mxu0 %v565
    %1387 = vmatprep.subr.bf16.mxu0 0
    %1388 = vmatpush1.bf16.msra.mxu0 %v566
    %1389 = vmatprep.subr.bf16.mxu0 0
    %1390 = vmatpush1.bf16.msra.mxu0 %v567
    %1391 = vmatprep.subr.bf16.mxu0 0
    %1392 = vmatpush1.bf16.msra.mxu0 0
    %1393 = vmatprep.subr.bf16.mxu0 0
    %1394 = vmatpush1.bf16.msra.mxu0 0
    %1395 = vmatprep.subr.bf16.mxu0 0
    %1396 = vmatpush1.bf16.msra.mxu0 0
    %1397 = vmatprep.subr.bf16.mxu0 0
    %1398 = vmatpush1.bf16.msra.mxu0 0
    %1399 = vmatprep.subr.bf16.mxu0 0
    %1400 = vmatpush1.bf16.msra.mxu0 0
    %1401 = vmatprep.subr.bf16.mxu0 0
    %1402 = vmatpush1.bf16.msra.mxu0 0
    %1403 = vmatprep.subr.bf16.mxu0 0
    %1404 = vmatpush1.bf16.msra.mxu0 0
    %1405 = vmatprep.subr.bf16.mxu0 0
    %1406 = vmatpush1.bf16.msra.mxu0 0
    %1407 = vmatprep.mubr.bf16.mxu0 0
    %1408 = vmatmul.mubr.bf16.gmra.mrb[0].mxu0 %v1371
    %v1409 = vpop.f32.mrb[0].mxu0
    %v1410 = vadd.f32 0.0, %v1409
    %v1411 = vpop.f32.mrb[0].mxu0
    %v1412 = vpop.f32.mrb[0].mxu0
    %v1413 = vadd.f32 0.0, %v1412
    %v1414 = vpop.f32.mrb[0].mxu0
    %1415 = vmatprep.mubr.bf16.mxu0 0
    %1416 = vmatmul.mubr.bf16.gmra.mrb[0].mxu0 %v1372
    %v1417 = vpop.f32.mrb[0].mxu0
    %v1418 = vadd.f32 0.0, %v1417
    %v1419 = vpop.f32.mrb[0].mxu0
    %v1420 = vpop.f32.mrb[0].mxu0
    %v1421 = vadd.f32 0.0, %v1420
    %v1422 = vpop.f32.mrb[0].mxu0
    %1423 = vdwg.mxu0
    %v1424 = vpack.c.bf16 %v1413, %v1410
    %v1425 = vpack.c.bf16 %v1421, %v1418
    %s1426 = scalar_lea.vmem %s5, 160
    %v1427 = vld [vmem:[%s1426] sm:$0xf]
    %v1428 = vld [vmem:[%s1426 + $0x4] sm:$0xf]
    %v1429 = vld [vmem:[%s1426 + $0x8] sm:$0xf]
    %v1430 = vld [vmem:[%s1426 + $0xc] sm:$0xf]
    %v1431 = vld [vmem:[%s1426 + $0x10] sm:$0xf]
    %v1432 = vld [vmem:[%s1426 + $0x14] sm:$0xf]
    %v1433 = vld [vmem:[%s1426 + $0x18] sm:$0xf]
    %v1434 = vld [vmem:[%s1426 + $0x1c] sm:$0xf]
    %v1443 = vunpack.c.l.b16 %v1427
    %v1444 = vunpack.c.l.b16 %v1428
    %v1445 = vunpack.c.l.b16 %v1429
    %v1446 = vunpack.c.l.b16 %v1430
    %v1447 = vunpack.c.l.b16 %v1431
    %v1448 = vunpack.c.l.b16 %v1432
    %v1449 = vunpack.c.l.b16 %v1433
    %v1450 = vunpack.c.l.b16 %v1434
    %v1451 = vpack.c.b16 %v1444, %v1443
    %v1452 = vpack.c.b16 %v1446, %v1445
    %v1453 = vpack.c.b16 %v1448, %v1447
    %v1454 = vpack.c.b16 %v1450, %v1449
    %v1460 = vsel %vm397, %v1424, 0
    %v1463 = vsel %vm397, %v1425, 0
    %1465 = vmatprep.subr.bf16.mxu0 0
    %1466 = vmatpush1.bf16.msra.mxu0 %v1451
    %1467 = vmatprep.subr.bf16.mxu0 0
    %1468 = vmatpush1.bf16.msra.mxu0 %v1452
    %1469 = vmatprep.subr.bf16.mxu0 0
    %1470 = vmatpush1.bf16.msra.mxu0 %v1453
    %1471 = vmatprep.subr.bf16.mxu0 0
    %1472 = vmatpush1.bf16.msra.mxu0 %v1454
    %1473 = vmatprep.subr.bf16.mxu0 0
    %1474 = vmatpush1.bf16.msra.mxu0 0
    %1475 = vmatprep.subr.bf16.mxu0 0
    %1476 = vmatpush1.bf16.msra.mxu0 0
    %1477 = vmatprep.subr.bf16.mxu0 0
    %1478 = vmatpush1.bf16.msra.mxu0 0
    %1479 = vmatprep.subr.bf16.mxu0 0
    %1480 = vmatpush1.bf16.msra.mxu0 0
    %1481 = vmatprep.subr.bf16.mxu0 0
    %1482 = vmatpush1.bf16.msra.mxu0 0
    %1483 = vmatprep.subr.bf16.mxu0 0
    %1484 = vmatpush1.bf16.msra.mxu0 0
    %1485 = vmatprep.subr.bf16.mxu0 0
    %1486 = vmatpush1.bf16.msra.mxu0 0
    %1487 = vmatprep.subr.bf16.mxu0 0
    %1488 = vmatpush1.bf16.msra.mxu0 0
    %1489 = vmatprep.subr.bf16.mxu0 0
    %1490 = vmatpush1.bf16.msra.mxu0 0
    %1491 = vmatprep.subr.bf16.mxu0 0
    %1492 = vmatpush1.bf16.msra.mxu0 0
    %1493 = vmatprep.subr.bf16.mxu0 0
    %1494 = vmatpush1.bf16.msra.mxu0 0
    %1495 = vmatprep.subr.bf16.mxu0 0
    %1496 = vmatpush1.bf16.msra.mxu0 0
    %1497 = vmatprep.mubr.bf16.mxu0 0
    %1498 = vmatmul.mubr.bf16.gmra.mrb[0].mxu0 %v1460
    %v1499 = vpop.f32.mrb[0].mxu0
    %v1500 = vadd.f32 0.0, %v1499
    %v1501 = vpop.f32.mrb[0].mxu0
    %v1502 = vpop.f32.mrb[0].mxu0
    %v1503 = vadd.f32 0.0, %v1502
    %v1504 = vpop.f32.mrb[0].mxu0
    %1505 = vmatprep.mubr.bf16.mxu0 0
    %1506 = vmatmul.mubr.bf16.gmra.mrb[0].mxu0 %v1463
    %v1507 = vpop.f32.mrb[0].mxu0
    %v1508 = vadd.f32 0.0, %v1507
    %v1509 = vpop.f32.mrb[0].mxu0
    %v1510 = vpop.f32.mrb[0].mxu0
    %v1511 = vadd.f32 0.0, %v1510
    %v1512 = vpop.f32.mrb[0].mxu0
    %1513 = vdwg.mxu0
    %v1514 = vadd.f32 %v1354, %v1500
    %v1515 = vadd.f32 %v1355, %v1503
    %v1516 = vadd.f32 %v1356, %v1508
    %v1517 = vadd.f32 %v1357, %v1511
    %s1518 = scalar_lea.vmem %s4, 96
    %v1519 = vld [vmem:[%s1518] sm:$0xf]
    %v1520 = vld [vmem:[%s1518 + $0x4] sm:$0xf]
    %v1521 = vld [vmem:[%s1518 + $0x8] sm:$0xf]
    %v1522 = vld [vmem:[%s1518 + $0xc] sm:$0xf]
    %v1527 = vunpack.c.l.b16 %v1519
    %v1528 = vunpack.c.l.b16 %v1520
    %v1529 = vunpack.c.l.b16 %v1521
    %v1530 = vunpack.c.l.b16 %v1522
    %v1531 = vpack.c.b16 %v1528, %v1527
    %v1532 = vpack.c.b16 %v1530, %v1529
    %1535 = vmatprep.subr.bf16.mxu0 0
    %1536 = vmatpush1.bf16.msra.mxu0 %v560
    %1537 = vmatprep.subr.bf16.mxu0 0
    %1538 = vmatpush1.bf16.msra.mxu0 %v561
    %1539 = vmatprep.subr.bf16.mxu0 0
    %1540 = vmatpush1.bf16.msra.mxu0 %v562
    %1541 = vmatprep.subr.bf16.mxu0 0
    %1542 = vmatpush1.bf16.msra.mxu0 %v563
    %1543 = vmatprep.subr.bf16.mxu0 0
    %1544 = vmatpush1.bf16.msra.mxu0 %v564
    %1545 = vmatprep.subr.bf16.mxu0 0
    %1546 = vmatpush1.bf16.msra.mxu0 %v565
    %1547 = vmatprep.subr.bf16.mxu0 0
    %1548 = vmatpush1.bf16.msra.mxu0 %v566
    %1549 = vmatprep.subr.bf16.mxu0 0
    %1550 = vmatpush1.bf16.msra.mxu0 %v567
    %1551 = vmatprep.subr.bf16.mxu0 0
    %1552 = vmatpush1.bf16.msra.mxu0 0
    %1553 = vmatprep.subr.bf16.mxu0 0
    %1554 = vmatpush1.bf16.msra.mxu0 0
    %1555 = vmatprep.subr.bf16.mxu0 0
    %1556 = vmatpush1.bf16.msra.mxu0 0
    %1557 = vmatprep.subr.bf16.mxu0 0
    %1558 = vmatpush1.bf16.msra.mxu0 0
    %1559 = vmatprep.subr.bf16.mxu0 0
    %1560 = vmatpush1.bf16.msra.mxu0 0
    %1561 = vmatprep.subr.bf16.mxu0 0
    %1562 = vmatpush1.bf16.msra.mxu0 0
    %1563 = vmatprep.subr.bf16.mxu0 0
    %1564 = vmatpush1.bf16.msra.mxu0 0
    %1565 = vmatprep.subr.bf16.mxu0 0
    %1566 = vmatpush1.bf16.msra.mxu0 0
    %1567 = vmatprep.mubr.bf16.mxu0 0
    %1568 = vmatmul.mubr.bf16.gmra.mrb[0].mxu0 %v1531
    %v1569 = vpop.f32.mrb[0].mxu0
    %v1570 = vadd.f32 0.0, %v1569
    %v1571 = vpop.f32.mrb[0].mxu0
    %v1572 = vpop.f32.mrb[0].mxu0
    %v1573 = vadd.f32 0.0, %v1572
    %v1574 = vpop.f32.mrb[0].mxu0
    %1575 = vmatprep.mubr.bf16.mxu0 0
    %1576 = vmatmul.mubr.bf16.gmra.mrb[0].mxu0 %v1532
    %v1577 = vpop.f32.mrb[0].mxu0
    %v1578 = vadd.f32 0.0, %v1577
    %v1579 = vpop.f32.mrb[0].mxu0
    %v1580 = vpop.f32.mrb[0].mxu0
    %v1581 = vadd.f32 0.0, %v1580
    %v1582 = vpop.f32.mrb[0].mxu0
    %1583 = vdwg.mxu0
    %v1584 = vpack.c.bf16 %v1573, %v1570
    %v1585 = vpack.c.bf16 %v1581, %v1578
    %s1586 = scalar_lea.vmem %s5, 192
    %v1587 = vld [vmem:[%s1586] sm:$0xf]
    %v1588 = vld [vmem:[%s1586 + $0x4] sm:$0xf]
    %v1589 = vld [vmem:[%s1586 + $0x8] sm:$0xf]
    %v1590 = vld [vmem:[%s1586 + $0xc] sm:$0xf]
    %v1591 = vld [vmem:[%s1586 + $0x10] sm:$0xf]
    %v1592 = vld [vmem:[%s1586 + $0x14] sm:$0xf]
    %v1593 = vld [vmem:[%s1586 + $0x18] sm:$0xf]
    %v1594 = vld [vmem:[%s1586 + $0x1c] sm:$0xf]
    %v1603 = vunpack.c.l.b16 %v1587
    %v1604 = vunpack.c.l.b16 %v1588
    %v1605 = vunpack.c.l.b16 %v1589
    %v1606 = vunpack.c.l.b16 %v1590
    %v1607 = vunpack.c.l.b16 %v1591
    %v1608 = vunpack.c.l.b16 %v1592
    %v1609 = vunpack.c.l.b16 %v1593
    %v1610 = vunpack.c.l.b16 %v1594
    %v1611 = vpack.c.b16 %v1604, %v1603
    %v1612 = vpack.c.b16 %v1606, %v1605
    %v1613 = vpack.c.b16 %v1608, %v1607
    %v1614 = vpack.c.b16 %v1610, %v1609
    %v1620 = vsel %vm397, %v1584, 0
    %v1623 = vsel %vm397, %v1585, 0
    %1625 = vmatprep.subr.bf16.mxu0 0
    %1626 = vmatpush1.bf16.msra.mxu0 %v1611
    %1627 = vmatprep.subr.bf16.mxu0 0
    %1628 = vmatpush1.bf16.msra.mxu0 %v1612
    %1629 = vmatprep.subr.bf16.mxu0 0
    %1630 = vmatpush1.bf16.msra.mxu0 %v1613
    %1631 = vmatprep.subr.bf16.mxu0 0
    %1632 = vmatpush1.bf16.msra.mxu0 %v1614
    %1633 = vmatprep.subr.bf16.mxu0 0
    %1634 = vmatpush1.bf16.msra.mxu0 0
    %1635 = vmatprep.subr.bf16.mxu0 0
    %1636 = vmatpush1.bf16.msra.mxu0 0
    %1637 = vmatprep.subr.bf16.mxu0 0
    %1638 = vmatpush1.bf16.msra.mxu0 0
    %1639 = vmatprep.subr.bf16.mxu0 0
    %1640 = vmatpush1.bf16.msra.mxu0 0
    %1641 = vmatprep.subr.bf16.mxu0 0
    %1642 = vmatpush1.bf16.msra.mxu0 0
    %1643 = vmatprep.subr.bf16.mxu0 0
    %1644 = vmatpush1.bf16.msra.mxu0 0
    %1645 = vmatprep.subr.bf16.mxu0 0
    %1646 = vmatpush1.bf16.msra.mxu0 0
    %1647 = vmatprep.subr.bf16.mxu0 0
    %1648 = vmatpush1.bf16.msra.mxu0 0
    %1649 = vmatprep.subr.bf16.mxu0 0
    %1650 = vmatpush1.bf16.msra.mxu0 0
    %1651 = vmatprep.subr.bf16.mxu0 0
    %1652 = vmatpush1.bf16.msra.mxu0 0
    %1653 = vmatprep.subr.bf16.mxu0 0
    %1654 = vmatpush1.bf16.msra.mxu0 0
    %1655 = vmatprep.subr.bf16.mxu0 0
    %1656 = vmatpush1.bf16.msra.mxu0 0
    %1657 = vmatprep.mubr.bf16.mxu0 0
    %1658 = vmatmul.mubr.bf16.gmra.mrb[0].mxu0 %v1620
    %v1659 = vpop.f32.mrb[0].mxu0
    %v1660 = vadd.f32 0.0, %v1659
    %v1661 = vpop.f32.mrb[0].mxu0
    %v1662 = vpop.f32.mrb[0].mxu0
    %v1663 = vadd.f32 0.0, %v1662
    %v1664 = vpop.f32.mrb[0].mxu0
    %1665 = vmatprep.mubr.bf16.mxu0 0
    %1666 = vmatmul.mubr.bf16.gmra.mrb[0].mxu0 %v1623
    %v1667 = vpop.f32.mrb[0].mxu0
    %v1668 = vadd.f32 0.0, %v1667
    %v1669 = vpop.f32.mrb[0].mxu0
    %v1670 = vpop.f32.mrb[0].mxu0
    %v1671 = vadd.f32 0.0, %v1670
    %v1672 = vpop.f32.mrb[0].mxu0
    %1673 = vdwg.mxu0
    %v1674 = vadd.f32 %v1514, %v1660
    %v1675 = vadd.f32 %v1515, %v1663
    %v1676 = vadd.f32 %v1516, %v1668
    %v1677 = vadd.f32 %v1517, %v1671
    %s1678 = scalar_lea.vmem %s4, 112
    %v1679 = vld [vmem:[%s1678] sm:$0xf]
    %v1680 = vld [vmem:[%s1678 + $0x4] sm:$0xf]
    %v1681 = vld [vmem:[%s1678 + $0x8] sm:$0xf]
    %v1682 = vld [vmem:[%s1678 + $0xc] sm:$0xf]
    %v1687 = vunpack.c.l.b16 %v1679
    %v1688 = vunpack.c.l.b16 %v1680
    %v1689 = vunpack.c.l.b16 %v1681
    %v1690 = vunpack.c.l.b16 %v1682
    %v1691 = vpack.c.b16 %v1688, %v1687
    %v1692 = vpack.c.b16 %v1690, %v1689
    %1695 = vmatprep.subr.bf16.mxu0 0
    %1696 = vmatpush1.bf16.msra.mxu0 %v560
    %1697 = vmatprep.subr.bf16.mxu0 0
    %1698 = vmatpush1.bf16.msra.mxu0 %v561
    %1699 = vmatprep.subr.bf16.mxu0 0
    %1700 = vmatpush1.bf16.msra.mxu0 %v562
    %1701 = vmatprep.subr.bf16.mxu0 0
    %1702 = vmatpush1.bf16.msra.mxu0 %v563
    %1703 = vmatprep.subr.bf16.mxu0 0
    %1704 = vmatpush1.bf16.msra.mxu0 %v564
    %1705 = vmatprep.subr.bf16.mxu0 0
    %1706 = vmatpush1.bf16.msra.mxu0 %v565
    %1707 = vmatprep.subr.bf16.mxu0 0
    %1708 = vmatpush1.bf16.msra.mxu0 %v566
    %1709 = vmatprep.subr.bf16.mxu0 0
    %1710 = vmatpush1.bf16.msra.mxu0 %v567
    %1711 = vmatprep.subr.bf16.mxu0 0
    %1712 = vmatpush1.bf16.msra.mxu0 0
    %1713 = vmatprep.subr.bf16.mxu0 0
    %1714 = vmatpush1.bf16.msra.mxu0 0
    %1715 = vmatprep.subr.bf16.mxu0 0
    %1716 = vmatpush1.bf16.msra.mxu0 0
    %1717 = vmatprep.subr.bf16.mxu0 0
    %1718 = vmatpush1.bf16.msra.mxu0 0
    %1719 = vmatprep.subr.bf16.mxu0 0
    %1720 = vmatpush1.bf16.msra.mxu0 0
    %1721 = vmatprep.subr.bf16.mxu0 0
    %1722 = vmatpush1.bf16.msra.mxu0 0
    %1723 = vmatprep.subr.bf16.mxu0 0
    %1724 = vmatpush1.bf16.msra.mxu0 0
    %1725 = vmatprep.subr.bf16.mxu0 0
    %1726 = vmatpush1.bf16.msra.mxu0 0
    %1727 = vmatprep.mubr.bf16.mxu0 0
    %1728 = vmatmul.mubr.bf16.gmra.mrb[0].mxu0 %v1691
    %v1729 = vpop.f32.mrb[0].mxu0
    %v1730 = vadd.f32 0.0, %v1729
    %v1731 = vpop.f32.mrb[0].mxu0
    %v1732 = vpop.f32.mrb[0].mxu0
    %v1733 = vadd.f32 0.0, %v1732
    %v1734 = vpop.f32.mrb[0].mxu0
    %1735 = vmatprep.mubr.bf16.mxu0 0
    %1736 = vmatmul.mubr.bf16.gmra.mrb[0].mxu0 %v1692
    %v1737 = vpop.f32.mrb[0].mxu0
    %v1738 = vadd.f32 0.0, %v1737
    %v1739 = vpop.f32.mrb[0].mxu0
    %v1740 = vpop.f32.mrb[0].mxu0
    %v1741 = vadd.f32 0.0, %v1740
    %v1742 = vpop.f32.mrb[0].mxu0
    %1743 = vdwg.mxu0
    %v1744 = vpack.c.bf16 %v1733, %v1730
    %v1745 = vpack.c.bf16 %v1741, %v1738
    %s1746 = scalar_lea.vmem %s5, 224
    %v1747 = vld [vmem:[%s1746] sm:$0xf]
    %v1748 = vld [vmem:[%s1746 + $0x4] sm:$0xf]
    %v1749 = vld [vmem:[%s1746 + $0x8] sm:$0xf]
    %v1750 = vld [vmem:[%s1746 + $0xc] sm:$0xf]
    %v1751 = vld [vmem:[%s1746 + $0x10] sm:$0xf]
    %v1752 = vld [vmem:[%s1746 + $0x14] sm:$0xf]
    %v1753 = vld [vmem:[%s1746 + $0x18] sm:$0xf]
    %v1754 = vld [vmem:[%s1746 + $0x1c] sm:$0xf]
    %v1763 = vunpack.c.l.b16 %v1747
    %v1764 = vunpack.c.l.b16 %v1748
    %v1765 = vunpack.c.l.b16 %v1749
    %v1766 = vunpack.c.l.b16 %v1750
    %v1767 = vunpack.c.l.b16 %v1751
    %v1768 = vunpack.c.l.b16 %v1752
    %v1769 = vunpack.c.l.b16 %v1753
    %v1770 = vunpack.c.l.b16 %v1754
    %v1771 = vpack.c.b16 %v1764, %v1763
    %v1772 = vpack.c.b16 %v1766, %v1765
    %v1773 = vpack.c.b16 %v1768, %v1767
    %v1774 = vpack.c.b16 %v1770, %v1769
    %v1780 = vsel %vm397, %v1744, 0
    %v1783 = vsel %vm397, %v1745, 0
    %1785 = vmatprep.subr.bf16.mxu0 0
    %1786 = vmatpush1.bf16.msra.mxu0 %v1771
    %1787 = vmatprep.subr.bf16.mxu0 0
    %1788 = vmatpush1.bf16.msra.mxu0 %v1772
    %1789 = vmatprep.subr.bf16.mxu0 0
    %1790 = vmatpush1.bf16.msra.mxu0 %v1773
    %1791 = vmatprep.subr.bf16.mxu0 0
    %1792 = vmatpush1.bf16.msra.mxu0 %v1774
    %1793 = vmatprep.subr.bf16.mxu0 0
    %1794 = vmatpush1.bf16.msra.mxu0 0
    %1795 = vmatprep.subr.bf16.mxu0 0
    %1796 = vmatpush1.bf16.msra.mxu0 0
    %1797 = vmatprep.subr.bf16.mxu0 0
    %1798 = vmatpush1.bf16.msra.mxu0 0
    %1799 = vmatprep.subr.bf16.mxu0 0
    %1800 = vmatpush1.bf16.msra.mxu0 0
    %1801 = vmatprep.subr.bf16.mxu0 0
    %1802 = vmatpush1.bf16.msra.mxu0 0
    %1803 = vmatprep.subr.bf16.mxu0 0
    %1804 = vmatpush1.bf16.msra.mxu0 0
    %1805 = vmatprep.subr.bf16.mxu0 0
    %1806 = vmatpush1.bf16.msra.mxu0 0
    %1807 = vmatprep.subr.bf16.mxu0 0
    %1808 = vmatpush1.bf16.msra.mxu0 0
    %1809 = vmatprep.subr.bf16.mxu0 0
    %1810 = vmatpush1.bf16.msra.mxu0 0
    %1811 = vmatprep.subr.bf16.mxu0 0
    %1812 = vmatpush1.bf16.msra.mxu0 0
    %1813 = vmatprep.subr.bf16.mxu0 0
    %1814 = vmatpush1.bf16.msra.mxu0 0
    %1815 = vmatprep.subr.bf16.mxu0 0
    %1816 = vmatpush1.bf16.msra.mxu0 0
    %1817 = vmatprep.mubr.bf16.mxu0 0
    %1818 = vmatmul.mubr.bf16.gmra.mrb[0].mxu0 %v1780
    %v1819 = vpop.f32.mrb[0].mxu0
    %v1820 = vadd.f32 0.0, %v1819
    %v1821 = vpop.f32.mrb[0].mxu0
    %v1822 = vpop.f32.mrb[0].mxu0
    %v1823 = vadd.f32 0.0, %v1822
    %v1824 = vpop.f32.mrb[0].mxu0
    %1825 = vmatprep.mubr.bf16.mxu0 0
    %1826 = vmatmul.mubr.bf16.gmra.mrb[0].mxu0 %v1783
    %v1827 = vpop.f32.mrb[0].mxu0
    %v1828 = vadd.f32 0.0, %v1827
    %v1829 = vpop.f32.mrb[0].mxu0
    %v1830 = vpop.f32.mrb[0].mxu0
    %v1831 = vadd.f32 0.0, %v1830
    %v1832 = vpop.f32.mrb[0].mxu0
    %1833 = vdwg.mxu0
    %v1834 = vadd.f32 %v1674, %v1820
    %v1835 = vadd.f32 %v1675, %v1823
    %v1836 = vadd.f32 %v1676, %v1828
    %v1837 = vadd.f32 %v1677, %v1831
    %s1838 = scalar_lea.vmem %s4, 128
    %v1839 = vld [vmem:[%s1838] sm:$0xf]
    %v1840 = vld [vmem:[%s1838 + $0x4] sm:$0xf]
    %v1841 = vld [vmem:[%s1838 + $0x8] sm:$0xf]
    %v1842 = vld [vmem:[%s1838 + $0xc] sm:$0xf]
    %v1847 = vunpack.c.l.b16 %v1839
    %v1848 = vunpack.c.l.b16 %v1840
    %v1849 = vunpack.c.l.b16 %v1841
    %v1850 = vunpack.c.l.b16 %v1842
    %v1851 = vpack.c.b16 %v1848, %v1847
    %v1852 = vpack.c.b16 %v1850, %v1849
    %1855 = vmatprep.subr.bf16.mxu0 0
    %1856 = vmatpush1.bf16.msra.mxu0 %v560
    %1857 = vmatprep.subr.bf16.mxu0 0
    %1858 = vmatpush1.bf16.msra.mxu0 %v561
    %1859 = vmatprep.subr.bf16.mxu0 0
    %1860 = vmatpush1.bf16.msra.mxu0 %v562
    %1861 = vmatprep.subr.bf16.mxu0 0
    %1862 = vmatpush1.bf16.msra.mxu0 %v563
    %1863 = vmatprep.subr.bf16.mxu0 0
    %1864 = vmatpush1.bf16.msra.mxu0 %v564
    %1865 = vmatprep.subr.bf16.mxu0 0
    %1866 = vmatpush1.bf16.msra.mxu0 %v565
    %1867 = vmatprep.subr.bf16.mxu0 0
    %1868 = vmatpush1.bf16.msra.mxu0 %v566
    %1869 = vmatprep.subr.bf16.mxu0 0
    %1870 = vmatpush1.bf16.msra.mxu0 %v567
    %1871 = vmatprep.subr.bf16.mxu0 0
    %1872 = vmatpush1.bf16.msra.mxu0 0
    %1873 = vmatprep.subr.bf16.mxu0 0
    %1874 = vmatpush1.bf16.msra.mxu0 0
    %1875 = vmatprep.subr.bf16.mxu0 0
    %1876 = vmatpush1.bf16.msra.mxu0 0
    %1877 = vmatprep.subr.bf16.mxu0 0
    %1878 = vmatpush1.bf16.msra.mxu0 0
    %1879 = vmatprep.subr.bf16.mxu0 0
    %1880 = vmatpush1.bf16.msra.mxu0 0
    %1881 = vmatprep.subr.bf16.mxu0 0
    %1882 = vmatpush1.bf16.msra.mxu0 0
    %1883 = vmatprep.subr.bf16.mxu0 0
    %1884 = vmatpush1.bf16.msra.mxu0 0
    %1885 = vmatprep.subr.bf16.mxu0 0
    %1886 = vmatpush1.bf16.msra.mxu0 0
    %1887 = vmatprep.mubr.bf16.mxu0 0
    %1888 = vmatmul.mubr.bf16.gmra.mrb[0].mxu0 %v1851
    %v1889 = vpop.f32.mrb[0].mxu0
    %v1890 = vadd.f32 0.0, %v1889
    %v1891 = vpop.f32.mrb[0].mxu0
    %v1892 = vpop.f32.mrb[0].mxu0
    %v1893 = vadd.f32 0.0, %v1892
    %v1894 = vpop.f32.mrb[0].mxu0
    %1895 = vmatprep.mubr.bf16.mxu0 0
    %1896 = vmatmul.mubr.bf16.gmra.mrb[0].mxu0 %v1852
    %v1897 = vpop.f32.mrb[0].mxu0
    %v1898 = vadd.f32 0.0, %v1897
    %v1899 = vpop.f32.mrb[0].mxu0
    %v1900 = vpop.f32.mrb[0].mxu0
    %v1901 = vadd.f32 0.0, %v1900
    %v1902 = vpop.f32.mrb[0].mxu0
    %1903 = vdwg.mxu0
    %v1904 = vpack.c.bf16 %v1893, %v1890
    %v1905 = vpack.c.bf16 %v1901, %v1898
    %s1906 = scalar_lea.vmem %s5, 256
    %v1907 = vld [vmem:[%s1906] sm:$0xf]
    %v1908 = vld [vmem:[%s1906 + $0x4] sm:$0xf]
    %v1909 = vld [vmem:[%s1906 + $0x8] sm:$0xf]
    %v1910 = vld [vmem:[%s1906 + $0xc] sm:$0xf]
    %v1911 = vld [vmem:[%s1906 + $0x10] sm:$0xf]
    %v1912 = vld [vmem:[%s1906 + $0x14] sm:$0xf]
    %v1913 = vld [vmem:[%s1906 + $0x18] sm:$0xf]
    %v1914 = vld [vmem:[%s1906 + $0x1c] sm:$0xf]
    %v1923 = vunpack.c.l.b16 %v1907
    %v1924 = vunpack.c.l.b16 %v1908
    %v1925 = vunpack.c.l.b16 %v1909
    %v1926 = vunpack.c.l.b16 %v1910
    %v1927 = vunpack.c.l.b16 %v1911
    %v1928 = vunpack.c.l.b16 %v1912
    %v1929 = vunpack.c.l.b16 %v1913
    %v1930 = vunpack.c.l.b16 %v1914
    %v1931 = vpack.c.b16 %v1924, %v1923
    %v1932 = vpack.c.b16 %v1926, %v1925
    %v1933 = vpack.c.b16 %v1928, %v1927
    %v1934 = vpack.c.b16 %v1930, %v1929
    %v1940 = vsel %vm397, %v1904, 0
    %v1943 = vsel %vm397, %v1905, 0
    %1945 = vmatprep.subr.bf16.mxu0 0
    %1946 = vmatpush1.bf16.msra.mxu0 %v1931
    %1947 = vmatprep.subr.bf16.mxu0 0
    %1948 = vmatpush1.bf16.msra.mxu0 %v1932
    %1949 = vmatprep.subr.bf16.mxu0 0
    %1950 = vmatpush1.bf16.msra.mxu0 %v1933
    %1951 = vmatprep.subr.bf16.mxu0 0
    %1952 = vmatpush1.bf16.msra.mxu0 %v1934
    %1953 = vmatprep.subr.bf16.mxu0 0
    %1954 = vmatpush1.bf16.msra.mxu0 0
    %1955 = vmatprep.subr.bf16.mxu0 0
    %1956 = vmatpush1.bf16.msra.mxu0 0
    %1957 = vmatprep.subr.bf16.mxu0 0
    %1958 = vmatpush1.bf16.msra.mxu0 0
    %1959 = vmatprep.subr.bf16.mxu0 0
    %1960 = vmatpush1.bf16.msra.mxu0 0
    %1961 = vmatprep.subr.bf16.mxu0 0
    %1962 = vmatpush1.bf16.msra.mxu0 0
    %1963 = vmatprep.subr.bf16.mxu0 0
    %1964 = vmatpush1.bf16.msra.mxu0 0
    %1965 = vmatprep.subr.bf16.mxu0 0
    %1966 = vmatpush1.bf16.msra.mxu0 0
    %1967 = vmatprep.subr.bf16.mxu0 0
    %1968 = vmatpush1.bf16.msra.mxu0 0
    %1969 = vmatprep.subr.bf16.mxu0 0
    %1970 = vmatpush1.bf16.msra.mxu0 0
    %1971 = vmatprep.subr.bf16.mxu0 0
    %1972 = vmatpush1.bf16.msra.mxu0 0
    %1973 = vmatprep.subr.bf16.mxu0 0
    %1974 = vmatpush1.bf16.msra.mxu0 0
    %1975 = vmatprep.subr.bf16.mxu0 0
    %1976 = vmatpush1.bf16.msra.mxu0 0
    %1977 = vmatprep.mubr.bf16.mxu0 0
    %1978 = vmatmul.mubr.bf16.gmra.mrb[0].mxu0 %v1940
    %v1979 = vpop.f32.mrb[0].mxu0
    %v1980 = vadd.f32 0.0, %v1979
    %v1981 = vpop.f32.mrb[0].mxu0
    %v1982 = vpop.f32.mrb[0].mxu0
    %v1983 = vadd.f32 0.0, %v1982
    %v1984 = vpop.f32.mrb[0].mxu0
    %1985 = vmatprep.mubr.bf16.mxu0 0
    %1986 = vmatmul.mubr.bf16.gmra.mrb[0].mxu0 %v1943
    %v1987 = vpop.f32.mrb[0].mxu0
    %v1988 = vadd.f32 0.0, %v1987
    %v1989 = vpop.f32.mrb[0].mxu0
    %v1990 = vpop.f32.mrb[0].mxu0
    %v1991 = vadd.f32 0.0, %v1990
    %v1992 = vpop.f32.mrb[0].mxu0
    %1993 = vdwg.mxu0
    %v1994 = vadd.f32 %v1834, %v1980
    %v1995 = vadd.f32 %v1835, %v1983
    %v1996 = vadd.f32 %v1836, %v1988
    %v1997 = vadd.f32 %v1837, %v1991
    %v1998 = vadd.f32 %v1994, %v1995
    %v1999 = vadd.f32 %v1998, %v1996
    %v2000 = vadd.f32 %v1999, %v1997
    %v2001 = vrot.slane %v2000, 4
    %v2002 = vadd.f32 %v2000, %v2001
    %v2003 = vrot.slane %v2002, 2
    %v2004 = vadd.f32 %v2002, %v2003
    %v2005 = vrot.slane %v2004, 1
    %v2006 = vadd.f32 %v2004, %v2005
    %v2007 = vrcp.pop 32.0
    %v2008 = vmul.f32 %v2006, %v2007
    %v2009 = vmul.f32 %v1994, %v1994
    %v2010 = vmul.f32 %v1995, %v1995
    %v2011 = vmul.f32 %v1996, %v1996
    %v2012 = vmul.f32 %v1997, %v1997
    %v2013 = vadd.f32 %v2009, %v2010
    %v2014 = vadd.f32 %v2013, %v2011
    %v2015 = vadd.f32 %v2014, %v2012
    %v2016 = vrot.slane %v2015, 4
    %v2017 = vadd.f32 %v2015, %v2016
    %v2018 = vrot.slane %v2017, 2
    %v2019 = vadd.f32 %v2017, %v2018
    %v2020 = vrot.slane %v2019, 1
    %v2021 = vadd.f32 %v2019, %v2020
    %v2022 = vmul.f32 %v2021, %v2007
    %v2023 = vmul.f32 %v2008, %v2008
    %v2024 = vsub.f32 %v2022, %v2023
    %v2025 = vld [vmem:[%s6] sm:$0x1]
    %v2026 = vadd.f32 %v2024, 1e-05
    %v2027 = vrsqrt.pop %v2026
    %v2028 = vmul.f32 %v2025, %v2027
    %v2029 = vld [vmem:[%s7] sm:$0x1]
    %v2030 = vmul.f32 %v2008, %v2028
    %v2031 = vsub.f32 %v2029, %v2030
    %v2033 = vlaneseq
    %v2034 = vshrl.u32 %v2033, 7
    %v2035 = vsub.s32 0, %v2034
    %v2036 = vrot.slane %v2028, %v2035
    %v2038 = vmul.f32 %v1994, %v2036
    %v2039 = vmul.f32 %v1995, %v2036
    %v2040 = vmul.f32 %v1996, %v2036
    %v2041 = vmul.f32 %v1997, %v2036
    %v2043 = vlaneseq
    %v2044 = vshrl.u32 %v2043, 7
    %v2045 = vsub.s32 0, %v2044
    %v2046 = vrot.slane %v2031, %v2045
    %v2048 = vadd.f32 %v2038, %v2046
    %v2049 = vadd.f32 %v2039, %v2046
    %v2050 = vadd.f32 %v2040, %v2046
    %v2051 = vadd.f32 %v2041, %v2046
    %v2052 = vmax.f32 %v2048, 0.0
    %v2053 = vmax.f32 %v2049, 0.0
    %v2054 = vmax.f32 %v2050, 0.0
    %v2055 = vmax.f32 %v2051, 0.0
    %v2056 = vpack.c.bf16 %v2053, %v2052
    %v2057 = vpack.c.bf16 %v2055, %v2054
    %v2058 = vld [vmem:[%s8] sm:$0xf]
    %vm2059 = vcmask 261120
    %v2061 = vsel %vm2059, %v2058, 0
    %2063 = vmatprep.subr.bf16.mxu0 0
    %2064 = vmatpush1.bf16.msra.mxu0 %v2056
    %2065 = vmatprep.subr.bf16.mxu0 0
    %2066 = vmatpush1.bf16.msra.mxu0 %v2057
    %2067 = vmatprep.subr.bf16.mxu0 0
    %2068 = vmatpush1.bf16.msra.mxu0 0
    %2069 = vmatprep.subr.bf16.mxu0 0
    %2070 = vmatpush1.bf16.msra.mxu0 0
    %2071 = vmatprep.subr.bf16.mxu0 0
    %2072 = vmatpush1.bf16.msra.mxu0 0
    %2073 = vmatprep.subr.bf16.mxu0 0
    %2074 = vmatpush1.bf16.msra.mxu0 0
    %2075 = vmatprep.subr.bf16.mxu0 0
    %2076 = vmatpush1.bf16.msra.mxu0 0
    %2077 = vmatprep.subr.bf16.mxu0 0
    %2078 = vmatpush1.bf16.msra.mxu0 0
    %2079 = vmatprep.subr.bf16.mxu0 0
    %2080 = vmatpush1.bf16.msra.mxu0 0
    %2081 = vmatprep.subr.bf16.mxu0 0
    %2082 = vmatpush1.bf16.msra.mxu0 0
    %2083 = vmatprep.subr.bf16.mxu0 0
    %2084 = vmatpush1.bf16.msra.mxu0 0
    %2085 = vmatprep.subr.bf16.mxu0 0
    %2086 = vmatpush1.bf16.msra.mxu0 0
    %2087 = vmatprep.subr.bf16.mxu0 0
    %2088 = vmatpush1.bf16.msra.mxu0 0
    %2089 = vmatprep.subr.bf16.mxu0 0
    %2090 = vmatpush1.bf16.msra.mxu0 0
    %2091 = vmatprep.subr.bf16.mxu0 0
    %2092 = vmatpush1.bf16.msra.mxu0 0
    %2093 = vmatprep.subr.bf16.mxu0 0
    %2094 = vmatpush1.bf16.msra.mxu0 0
    %2095 = vmatprep.mubr.bf16.mxu0 0
    %2096 = vmatmul.mubr.bf16.gmra.mrb[0].mxu0 %v2061
    %v2097 = vpop.f32.mrb[0].mxu0
    %v2098 = vadd.f32 0.0, %v2097
    %v2099 = vpop.f32.mrb[0].mxu0
    %v2100 = vpop.f32.mrb[0].mxu0
    %v2101 = vpop.f32.mrb[0].mxu0
    %2102 = vdwg.mxu0
    %v2103 = vpack.c.bf16 %v2098, %v2098
    %v2104 = vld [vmem:[%s9] sm:$0xff]
    %v2105 = vld [vmem:[%s9 + $0x8] sm:$0xff]
    %v2106 = vld [vmem:[%s9 + $0x10] sm:$0xff]
    %v2107 = vld [vmem:[%s9 + $0x18] sm:$0xff]
    %v2108 = vld [vmem:[%s9 + $0x20] sm:$0xff]
    %v2109 = vld [vmem:[%s9 + $0x28] sm:$0xff]
    %v2110 = vld [vmem:[%s9 + $0x30] sm:$0xff]
    %v2111 = vld [vmem:[%s9 + $0x38] sm:$0xff]
    %v2112 = vld [vmem:[%s9 + $0x40] sm:$0xff]
    %v2113 = vld [vmem:[%s9 + $0x48] sm:$0xff]
    %v2114 = vld [vmem:[%s9 + $0x50] sm:$0xff]
    %v2115 = vld [vmem:[%s9 + $0x58] sm:$0xff]
    %v2116 = vld [vmem:[%s9 + $0x60] sm:$0xff]
    %v2117 = vld [vmem:[%s9 + $0x68] sm:$0xff]
    %v2118 = vld [vmem:[%s9 + $0x70] sm:$0xff]
    %v2119 = vld [vmem:[%s9 + $0x78] sm:$0xff]
    %s2120 = scalar_lea.vmem %s8, 4
    %v2121 = vld [vmem:[%s2120] sm:$0xf]
    %v2123 = vsel %vm2059, %v2121, 0
    %2125 = vmatprep.subr.bf16.mxu0 0
    %2126 = vmatpush1.bf16.msra.mxu0 %v2056
    %2127 = vmatprep.subr.bf16.mxu0 0
    %2128 = vmatpush1.bf16.msra.mxu0 %v2057
    %2129 = vmatprep.subr.bf16.mxu0 0
    %2130 = vmatpush1.bf16.msra.mxu0 0
    %2131 = vmatprep.subr.bf16.mxu0 0
    %2132 = vmatpush1.bf16.msra.mxu0 0
    %2133 = vmatprep.subr.bf16.mxu0 0
    %2134 = vmatpush1.bf16.msra.mxu0 0
    %2135 = vmatprep.subr.bf16.mxu0 0
    %2136 = vmatpush1.bf16.msra.mxu0 0
    %2137 = vmatprep.subr.bf16.mxu0 0
    %2138 = vmatpush1.bf16.msra.mxu0 0
    %2139 = vmatprep.subr.bf16.mxu0 0
    %2140 = vmatpush1.bf16.msra.mxu0 0
    %2141 = vmatprep.subr.bf16.mxu0 0
    %2142 = vmatpush1.bf16.msra.mxu0 0
    %2143 = vmatprep.subr.bf16.mxu0 0
    %2144 = vmatpush1.bf16.msra.mxu0 0
    %2145 = vmatprep.subr.bf16.mxu0 0
    %2146 = vmatpush1.bf16.msra.mxu0 0
    %2147 = vmatprep.subr.bf16.mxu0 0
    %2148 = vmatpush1.bf16.msra.mxu0 0
    %2149 = vmatprep.subr.bf16.mxu0 0
    %2150 = vmatpush1.bf16.msra.mxu0 0
    %2151 = vmatprep.subr.bf16.mxu0 0
    %2152 = vmatpush1.bf16.msra.mxu0 0
    %2153 = vmatprep.subr.bf16.mxu0 0
    %2154 = vmatpush1.bf16.msra.mxu0 0
    %2155 = vmatprep.subr.bf16.mxu0 0
    %2156 = vmatpush1.bf16.msra.mxu0 0
    %2157 = vmatprep.mubr.bf16.mxu0 0
    %2158 = vmatmul.mubr.bf16.gmra.mrb[0].mxu0 %v2123
    %v2159 = vpop.f32.mrb[0].mxu0
    %v2160 = vadd.f32 0.0, %v2159
    %v2161 = vpop.f32.mrb[0].mxu0
    %v2162 = vpop.f32.mrb[0].mxu0
    %v2163 = vpop.f32.mrb[0].mxu0
    %2164 = vdwg.mxu0
    %v2165 = vpack.c.bf16 %v2160, %v2160
    %s2166 = scalar_lea.vmem %s9, 128
    %v2167 = vld [vmem:[%s2166] sm:$0xff]
    %v2168 = vld [vmem:[%s2166 + $0x8] sm:$0xff]
    %v2169 = vld [vmem:[%s2166 + $0x10] sm:$0xff]
    %v2170 = vld [vmem:[%s2166 + $0x18] sm:$0xff]
    %v2171 = vld [vmem:[%s2166 + $0x20] sm:$0xff]
    %v2172 = vld [vmem:[%s2166 + $0x28] sm:$0xff]
    %v2173 = vld [vmem:[%s2166 + $0x30] sm:$0xff]
    %v2174 = vld [vmem:[%s2166 + $0x38] sm:$0xff]
    %v2175 = vld [vmem:[%s2166 + $0x40] sm:$0xff]
    %v2176 = vld [vmem:[%s2166 + $0x48] sm:$0xff]
    %v2177 = vld [vmem:[%s2166 + $0x50] sm:$0xff]
    %v2178 = vld [vmem:[%s2166 + $0x58] sm:$0xff]
    %v2179 = vld [vmem:[%s2166 + $0x60] sm:$0xff]
    %v2180 = vld [vmem:[%s2166 + $0x68] sm:$0xff]
    %v2181 = vld [vmem:[%s2166 + $0x70] sm:$0xff]
    %v2182 = vld [vmem:[%s2166 + $0x78] sm:$0xff]
    %v2199 = vunpack.c.l.b16 %v2167
    %v2200 = vunpack.c.h.b16 %v2167
    %v2201 = vunpack.c.l.b16 %v2168
    %v2202 = vunpack.c.h.b16 %v2168
    %v2203 = vunpack.c.l.b16 %v2169
    %v2204 = vunpack.c.h.b16 %v2169
    %v2205 = vunpack.c.l.b16 %v2170
    %v2206 = vunpack.c.h.b16 %v2170
    %v2207 = vunpack.c.l.b16 %v2171
    %v2208 = vunpack.c.h.b16 %v2171
    %v2209 = vunpack.c.l.b16 %v2172
    %v2210 = vunpack.c.h.b16 %v2172
    %v2211 = vunpack.c.l.b16 %v2173
    %v2212 = vunpack.c.h.b16 %v2173
    %v2213 = vunpack.c.l.b16 %v2174
    %v2214 = vunpack.c.h.b16 %v2174
    %v2215 = vunpack.c.l.b16 %v2175
    %v2216 = vunpack.c.h.b16 %v2175
    %v2217 = vunpack.c.l.b16 %v2176
    %v2218 = vunpack.c.h.b16 %v2176
    %v2219 = vunpack.c.l.b16 %v2177
    %v2220 = vunpack.c.h.b16 %v2177
    %v2221 = vunpack.c.l.b16 %v2178
    %v2222 = vunpack.c.h.b16 %v2178
    %v2223 = vunpack.c.l.b16 %v2179
    %v2224 = vunpack.c.h.b16 %v2179
    %v2225 = vunpack.c.l.b16 %v2180
    %v2226 = vunpack.c.h.b16 %v2180
    %v2227 = vunpack.c.l.b16 %v2181
    %v2228 = vunpack.c.h.b16 %v2181
    %v2229 = vunpack.c.l.b16 %v2182
    %v2230 = vunpack.c.h.b16 %v2182
    %v2231 = vpack.c.b16 %v2201, %v2199
    %v2232 = vpack.c.b16 %v2202, %v2200
    %v2233 = vpack.c.b16 %v2205, %v2203
    %v2234 = vpack.c.b16 %v2206, %v2204
    %v2235 = vpack.c.b16 %v2209, %v2207
    %v2236 = vpack.c.b16 %v2210, %v2208
    %v2237 = vpack.c.b16 %v2213, %v2211
    %v2238 = vpack.c.b16 %v2214, %v2212
    %v2239 = vpack.c.b16 %v2217, %v2215
    %v2240 = vpack.c.b16 %v2218, %v2216
    %v2241 = vpack.c.b16 %v2221, %v2219
    %v2242 = vpack.c.b16 %v2222, %v2220
    %v2243 = vpack.c.b16 %v2225, %v2223
    %v2244 = vpack.c.b16 %v2226, %v2224
    %v2245 = vpack.c.b16 %v2229, %v2227
    %v2246 = vpack.c.b16 %v2230, %v2228
    %2263 = vmatprep.subr.bf16.mxu0 %v2232
    %2264 = vmatpush1.bf16.msra.mxu0 %v2231
    %2265 = vmatprep.subr.bf16.mxu0 %v2234
    %2266 = vmatpush1.bf16.msra.mxu0 %v2233
    %2267 = vmatprep.subr.bf16.mxu0 %v2236
    %2268 = vmatpush1.bf16.msra.mxu0 %v2235
    %2269 = vmatprep.subr.bf16.mxu0 %v2238
    %2270 = vmatpush1.bf16.msra.mxu0 %v2237
    %2271 = vmatprep.subr.bf16.mxu0 %v2240
    %2272 = vmatpush1.bf16.msra.mxu0 %v2239
    %2273 = vmatprep.subr.bf16.mxu0 %v2242
    %2274 = vmatpush1.bf16.msra.mxu0 %v2241
    %2275 = vmatprep.subr.bf16.mxu0 %v2244
    %2276 = vmatpush1.bf16.msra.mxu0 %v2243
    %2277 = vmatprep.subr.bf16.mxu0 %v2246
    %2278 = vmatpush1.bf16.msra.mxu0 %v2245
    %2279 = vmatprep.subr.bf16.mxu0 0
    %2280 = vmatpush1.bf16.msra.mxu0 0
    %2281 = vmatprep.subr.bf16.mxu0 0
    %2282 = vmatpush1.bf16.msra.mxu0 0
    %2283 = vmatprep.subr.bf16.mxu0 0
    %2284 = vmatpush1.bf16.msra.mxu0 0
    %2285 = vmatprep.subr.bf16.mxu0 0
    %2286 = vmatpush1.bf16.msra.mxu0 0
    %2287 = vmatprep.subr.bf16.mxu0 0
    %2288 = vmatpush1.bf16.msra.mxu0 0
    %2289 = vmatprep.subr.bf16.mxu0 0
    %2290 = vmatpush1.bf16.msra.mxu0 0
    %2291 = vmatprep.subr.bf16.mxu0 0
    %2292 = vmatpush1.bf16.msra.mxu0 0
    %2293 = vmatprep.subr.bf16.mxu0 0
    %2294 = vmatpush1.bf16.msra.mxu0 0
    %2295 = vmatprep.mubr.bf16.mxu0 0
    %2296 = vmatmul.mubr.bf16.gmra.mrb[0].mxu0 %v2165
    %v2297 = vpop.f32.mrb[0].mxu0
    %v2298 = vadd.f32 0.0, %v2297
    %v2299 = vpop.f32.mrb[0].mxu0
    %v2300 = vadd.f32 0.0, %v2299
    %v2301 = vpop.f32.mrb[0].mxu0
    %v2302 = vpop.f32.mrb[0].mxu0
    %2303 = vdwg.mxu0
    %v2320 = vunpack.c.l.b16 %v2104
    %v2321 = vunpack.c.h.b16 %v2104
    %v2322 = vunpack.c.l.b16 %v2105
    %v2323 = vunpack.c.h.b16 %v2105
    %v2324 = vunpack.c.l.b16 %v2106
    %v2325 = vunpack.c.h.b16 %v2106
    %v2326 = vunpack.c.l.b16 %v2107
    %v2327 = vunpack.c.h.b16 %v2107
    %v2328 = vunpack.c.l.b16 %v2108
    %v2329 = vunpack.c.h.b16 %v2108
    %v2330 = vunpack.c.l.b16 %v2109
    %v2331 = vunpack.c.h.b16 %v2109
    %v2332 = vunpack.c.l.b16 %v2110
    %v2333 = vunpack.c.h.b16 %v2110
    %v2334 = vunpack.c.l.b16 %v2111
    %v2335 = vunpack.c.h.b16 %v2111
    %v2336 = vunpack.c.l.b16 %v2112
    %v2337 = vunpack.c.h.b16 %v2112
    %v2338 = vunpack.c.l.b16 %v2113
    %v2339 = vunpack.c.h.b16 %v2113
    %v2340 = vunpack.c.l.b16 %v2114
    %v2341 = vunpack.c.h.b16 %v2114
    %v2342 = vunpack.c.l.b16 %v2115
    %v2343 = vunpack.c.h.b16 %v2115
    %v2344 = vunpack.c.l.b16 %v2116
    %v2345 = vunpack.c.h.b16 %v2116
    %v2346 = vunpack.c.l.b16 %v2117
    %v2347 = vunpack.c.h.b16 %v2117
    %v2348 = vunpack.c.l.b16 %v2118
    %v2349 = vunpack.c.h.b16 %v2118
    %v2350 = vunpack.c.l.b16 %v2119
    %v2351 = vunpack.c.h.b16 %v2119
    %v2352 = vpack.c.b16 %v2322, %v2320
    %v2353 = vpack.c.b16 %v2323, %v2321
    %v2354 = vpack.c.b16 %v2326, %v2324
    %v2355 = vpack.c.b16 %v2327, %v2325
    %v2356 = vpack.c.b16 %v2330, %v2328
    %v2357 = vpack.c.b16 %v2331, %v2329
    %v2358 = vpack.c.b16 %v2334, %v2332
    %v2359 = vpack.c.b16 %v2335, %v2333
    %v2360 = vpack.c.b16 %v2338, %v2336
    %v2361 = vpack.c.b16 %v2339, %v2337
    %v2362 = vpack.c.b16 %v2342, %v2340
    %v2363 = vpack.c.b16 %v2343, %v2341
    %v2364 = vpack.c.b16 %v2346, %v2344
    %v2365 = vpack.c.b16 %v2347, %v2345
    %v2366 = vpack.c.b16 %v2350, %v2348
    %v2367 = vpack.c.b16 %v2351, %v2349
    %2384 = vmatprep.subr.bf16.mxu0 %v2353
    %2385 = vmatpush1.bf16.msra.mxu0 %v2352
    %2386 = vmatprep.subr.bf16.mxu0 %v2355
    %2387 = vmatpush1.bf16.msra.mxu0 %v2354
    %2388 = vmatprep.subr.bf16.mxu0 %v2357
    %2389 = vmatpush1.bf16.msra.mxu0 %v2356
    %2390 = vmatprep.subr.bf16.mxu0 %v2359
    %2391 = vmatpush1.bf16.msra.mxu0 %v2358
    %2392 = vmatprep.subr.bf16.mxu0 %v2361
    %2393 = vmatpush1.bf16.msra.mxu0 %v2360
    %2394 = vmatprep.subr.bf16.mxu0 %v2363
    %2395 = vmatpush1.bf16.msra.mxu0 %v2362
    %2396 = vmatprep.subr.bf16.mxu0 %v2365
    %2397 = vmatpush1.bf16.msra.mxu0 %v2364
    %2398 = vmatprep.subr.bf16.mxu0 %v2367
    %2399 = vmatpush1.bf16.msra.mxu0 %v2366
    %2400 = vmatprep.subr.bf16.mxu0 0
    %2401 = vmatpush1.bf16.msra.mxu0 0
    %2402 = vmatprep.subr.bf16.mxu0 0
    %2403 = vmatpush1.bf16.msra.mxu0 0
    %2404 = vmatprep.subr.bf16.mxu0 0
    %2405 = vmatpush1.bf16.msra.mxu0 0
    %2406 = vmatprep.subr.bf16.mxu0 0
    %2407 = vmatpush1.bf16.msra.mxu0 0
    %2408 = vmatprep.subr.bf16.mxu0 0
    %2409 = vmatpush1.bf16.msra.mxu0 0
    %2410 = vmatprep.subr.bf16.mxu0 0
    %2411 = vmatpush1.bf16.msra.mxu0 0
    %2412 = vmatprep.subr.bf16.mxu0 0
    %2413 = vmatpush1.bf16.msra.mxu0 0
    %2414 = vmatprep.subr.bf16.mxu0 0
    %2415 = vmatpush1.bf16.msra.mxu0 0
    %2416 = vmatprep.mubr.bf16.mxu0 0
    %2417 = vmatmul.mubr.bf16.gmra.mrb[0].mxu0 %v2103
    %v2418 = vpop.f32.mrb[0].mxu0
    %v2419 = vadd.f32 %v2298, %v2418
    %v2420 = vpop.f32.mrb[0].mxu0
    %v2421 = vadd.f32 %v2300, %v2420
    %v2422 = vpop.f32.mrb[0].mxu0
    %v2423 = vpop.f32.mrb[0].mxu0
    %2424 = vdwg.mxu0
    %s2425 = scalar_lea.vmem %s8, 8
    %v2426 = vld [vmem:[%s2425] sm:$0xf]
    %v2428 = vsel %vm2059, %v2426, 0
    %2430 = vmatprep.subr.bf16.mxu0 0
    %2431 = vmatpush1.bf16.msra.mxu0 %v2056
    %2432 = vmatprep.subr.bf16.mxu0 0
    %2433 = vmatpush1.bf16.msra.mxu0 %v2057
    %2434 = vmatprep.subr.bf16.mxu0 0
    %2435 = vmatpush1.bf16.msra.mxu0 0
    %2436 = vmatprep.subr.bf16.mxu0 0
    %2437 = vmatpush1.bf16.msra.mxu0 0
    %2438 = vmatprep.subr.bf16.mxu0 0
    %2439 = vmatpush1.bf16.msra.mxu0 0
    %2440 = vmatprep.subr.bf16.mxu0 0
    %2441 = vmatpush1.bf16.msra.mxu0 0
    %2442 = vmatprep.subr.bf16.mxu0 0
    %2443 = vmatpush1.bf16.msra.mxu0 0
    %2444 = vmatprep.subr.bf16.mxu0 0
    %2445 = vmatpush1.bf16.msra.mxu0 0
    %2446 = vmatprep.subr.bf16.mxu0 0
    %2447 = vmatpush1.bf16.msra.mxu0 0
    %2448 = vmatprep.subr.bf16.mxu0 0
    %2449 = vmatpush1.bf16.msra.mxu0 0
    %2450 = vmatprep.subr.bf16.mxu0 0
    %2451 = vmatpush1.bf16.msra.mxu0 0
    %2452 = vmatprep.subr.bf16.mxu0 0
    %2453 = vmatpush1.bf16.msra.mxu0 0
    %2454 = vmatprep.subr.bf16.mxu0 0
    %2455 = vmatpush1.bf16.msra.mxu0 0
    %2456 = vmatprep.subr.bf16.mxu0 0
    %2457 = vmatpush1.bf16.msra.mxu0 0
    %2458 = vmatprep.subr.bf16.mxu0 0
    %2459 = vmatpush1.bf16.msra.mxu0 0
    %2460 = vmatprep.subr.bf16.mxu0 0
    %2461 = vmatpush1.bf16.msra.mxu0 0
    %2462 = vmatprep.mubr.bf16.mxu0 0
    %2463 = vmatmul.mubr.bf16.gmra.mrb[0].mxu0 %v2428
    %v2464 = vpop.f32.mrb[0].mxu0
    %v2465 = vadd.f32 0.0, %v2464
    %v2466 = vpop.f32.mrb[0].mxu0
    %v2467 = vpop.f32.mrb[0].mxu0
    %v2468 = vpop.f32.mrb[0].mxu0
    %2469 = vdwg.mxu0
    %v2470 = vpack.c.bf16 %v2465, %v2465
    %s2471 = scalar_lea.vmem %s9, 256
    %v2472 = vld [vmem:[%s2471] sm:$0xff]
    %v2473 = vld [vmem:[%s2471 + $0x8] sm:$0xff]
    %v2474 = vld [vmem:[%s2471 + $0x10] sm:$0xff]
    %v2475 = vld [vmem:[%s2471 + $0x18] sm:$0xff]
    %v2476 = vld [vmem:[%s2471 + $0x20] sm:$0xff]
    %v2477 = vld [vmem:[%s2471 + $0x28] sm:$0xff]
    %v2478 = vld [vmem:[%s2471 + $0x30] sm:$0xff]
    %v2479 = vld [vmem:[%s2471 + $0x38] sm:$0xff]
    %v2480 = vld [vmem:[%s2471 + $0x40] sm:$0xff]
    %v2481 = vld [vmem:[%s2471 + $0x48] sm:$0xff]
    %v2482 = vld [vmem:[%s2471 + $0x50] sm:$0xff]
    %v2483 = vld [vmem:[%s2471 + $0x58] sm:$0xff]
    %v2484 = vld [vmem:[%s2471 + $0x60] sm:$0xff]
    %v2485 = vld [vmem:[%s2471 + $0x68] sm:$0xff]
    %v2486 = vld [vmem:[%s2471 + $0x70] sm:$0xff]
    %v2487 = vld [vmem:[%s2471 + $0x78] sm:$0xff]
    %v2504 = vunpack.c.l.b16 %v2472
    %v2505 = vunpack.c.h.b16 %v2472
    %v2506 = vunpack.c.l.b16 %v2473
    %v2507 = vunpack.c.h.b16 %v2473
    %v2508 = vunpack.c.l.b16 %v2474
    %v2509 = vunpack.c.h.b16 %v2474
    %v2510 = vunpack.c.l.b16 %v2475
    %v2511 = vunpack.c.h.b16 %v2475
    %v2512 = vunpack.c.l.b16 %v2476
    %v2513 = vunpack.c.h.b16 %v2476
    %v2514 = vunpack.c.l.b16 %v2477
    %v2515 = vunpack.c.h.b16 %v2477
    %v2516 = vunpack.c.l.b16 %v2478
    %v2517 = vunpack.c.h.b16 %v2478
    %v2518 = vunpack.c.l.b16 %v2479
    %v2519 = vunpack.c.h.b16 %v2479
    %v2520 = vunpack.c.l.b16 %v2480
    %v2521 = vunpack.c.h.b16 %v2480
    %v2522 = vunpack.c.l.b16 %v2481
    %v2523 = vunpack.c.h.b16 %v2481
    %v2524 = vunpack.c.l.b16 %v2482
    %v2525 = vunpack.c.h.b16 %v2482
    %v2526 = vunpack.c.l.b16 %v2483
    %v2527 = vunpack.c.h.b16 %v2483
    %v2528 = vunpack.c.l.b16 %v2484
    %v2529 = vunpack.c.h.b16 %v2484
    %v2530 = vunpack.c.l.b16 %v2485
    %v2531 = vunpack.c.h.b16 %v2485
    %v2532 = vunpack.c.l.b16 %v2486
    %v2533 = vunpack.c.h.b16 %v2486
    %v2534 = vunpack.c.l.b16 %v2487
    %v2535 = vunpack.c.h.b16 %v2487
    %v2536 = vpack.c.b16 %v2506, %v2504
    %v2537 = vpack.c.b16 %v2507, %v2505
    %v2538 = vpack.c.b16 %v2510, %v2508
    %v2539 = vpack.c.b16 %v2511, %v2509
    %v2540 = vpack.c.b16 %v2514, %v2512
    %v2541 = vpack.c.b16 %v2515, %v2513
    %v2542 = vpack.c.b16 %v2518, %v2516
    %v2543 = vpack.c.b16 %v2519, %v2517
    %v2544 = vpack.c.b16 %v2522, %v2520
    %v2545 = vpack.c.b16 %v2523, %v2521
    %v2546 = vpack.c.b16 %v2526, %v2524
    %v2547 = vpack.c.b16 %v2527, %v2525
    %v2548 = vpack.c.b16 %v2530, %v2528
    %v2549 = vpack.c.b16 %v2531, %v2529
    %v2550 = vpack.c.b16 %v2534, %v2532
    %v2551 = vpack.c.b16 %v2535, %v2533
    %2568 = vmatprep.subr.bf16.mxu0 %v2537
    %2569 = vmatpush1.bf16.msra.mxu0 %v2536
    %2570 = vmatprep.subr.bf16.mxu0 %v2539
    %2571 = vmatpush1.bf16.msra.mxu0 %v2538
    %2572 = vmatprep.subr.bf16.mxu0 %v2541
    %2573 = vmatpush1.bf16.msra.mxu0 %v2540
    %2574 = vmatprep.subr.bf16.mxu0 %v2543
    %2575 = vmatpush1.bf16.msra.mxu0 %v2542
    %2576 = vmatprep.subr.bf16.mxu0 %v2545
    %2577 = vmatpush1.bf16.msra.mxu0 %v2544
    %2578 = vmatprep.subr.bf16.mxu0 %v2547
    %2579 = vmatpush1.bf16.msra.mxu0 %v2546
    %2580 = vmatprep.subr.bf16.mxu0 %v2549
    %2581 = vmatpush1.bf16.msra.mxu0 %v2548
    %2582 = vmatprep.subr.bf16.mxu0 %v2551
    %2583 = vmatpush1.bf16.msra.mxu0 %v2550
    %2584 = vmatprep.subr.bf16.mxu0 0
    %2585 = vmatpush1.bf16.msra.mxu0 0
    %2586 = vmatprep.subr.bf16.mxu0 0
    %2587 = vmatpush1.bf16.msra.mxu0 0
    %2588 = vmatprep.subr.bf16.mxu0 0
    %2589 = vmatpush1.bf16.msra.mxu0 0
    %2590 = vmatprep.subr.bf16.mxu0 0
    %2591 = vmatpush1.bf16.msra.mxu0 0
    %2592 = vmatprep.subr.bf16.mxu0 0
    %2593 = vmatpush1.bf16.msra.mxu0 0
    %2594 = vmatprep.subr.bf16.mxu0 0
    %2595 = vmatpush1.bf16.msra.mxu0 0
    %2596 = vmatprep.subr.bf16.mxu0 0
    %2597 = vmatpush1.bf16.msra.mxu0 0
    %2598 = vmatprep.subr.bf16.mxu0 0
    %2599 = vmatpush1.bf16.msra.mxu0 0
    %2600 = vmatprep.mubr.bf16.mxu0 0
    %2601 = vmatmul.mubr.bf16.gmra.mrb[0].mxu0 %v2470
    %v2602 = vpop.f32.mrb[0].mxu0
    %v2603 = vadd.f32 0.0, %v2602
    %v2604 = vpop.f32.mrb[0].mxu0
    %v2605 = vadd.f32 0.0, %v2604
    %v2606 = vpop.f32.mrb[0].mxu0
    %v2607 = vpop.f32.mrb[0].mxu0
    %2608 = vdwg.mxu0
    %v2609 = vadd.f32 %v2419, %v2603
    %v2610 = vadd.f32 %v2421, %v2605
    %s2611 = scalar_lea.vmem %s8, 12
    %v2612 = vld [vmem:[%s2611] sm:$0xf]
    %v2614 = vsel %vm2059, %v2612, 0
    %2616 = vmatprep.subr.bf16.mxu0 0
    %2617 = vmatpush1.bf16.msra.mxu0 %v2056
    %2618 = vmatprep.subr.bf16.mxu0 0
    %2619 = vmatpush1.bf16.msra.mxu0 %v2057
    %2620 = vmatprep.subr.bf16.mxu0 0
    %2621 = vmatpush1.bf16.msra.mxu0 0
    %2622 = vmatprep.subr.bf16.mxu0 0
    %2623 = vmatpush1.bf16.msra.mxu0 0
    %2624 = vmatprep.subr.bf16.mxu0 0
    %2625 = vmatpush1.bf16.msra.mxu0 0
    %2626 = vmatprep.subr.bf16.mxu0 0
    %2627 = vmatpush1.bf16.msra.mxu0 0
    %2628 = vmatprep.subr.bf16.mxu0 0
    %2629 = vmatpush1.bf16.msra.mxu0 0
    %2630 = vmatprep.subr.bf16.mxu0 0
    %2631 = vmatpush1.bf16.msra.mxu0 0
    %2632 = vmatprep.subr.bf16.mxu0 0
    %2633 = vmatpush1.bf16.msra.mxu0 0
    %2634 = vmatprep.subr.bf16.mxu0 0
    %2635 = vmatpush1.bf16.msra.mxu0 0
    %2636 = vmatprep.subr.bf16.mxu0 0
    %2637 = vmatpush1.bf16.msra.mxu0 0
    %2638 = vmatprep.subr.bf16.mxu0 0
    %2639 = vmatpush1.bf16.msra.mxu0 0
    %2640 = vmatprep.subr.bf16.mxu0 0
    %2641 = vmatpush1.bf16.msra.mxu0 0
    %2642 = vmatprep.subr.bf16.mxu0 0
    %2643 = vmatpush1.bf16.msra.mxu0 0
    %2644 = vmatprep.subr.bf16.mxu0 0
    %2645 = vmatpush1.bf16.msra.mxu0 0
    %2646 = vmatprep.subr.bf16.mxu0 0
    %2647 = vmatpush1.bf16.msra.mxu0 0
    %2648 = vmatprep.mubr.bf16.mxu0 0
    %2649 = vmatmul.mubr.bf16.gmra.mrb[0].mxu0 %v2614
    %v2650 = vpop.f32.mrb[0].mxu0
    %v2651 = vadd.f32 0.0, %v2650
    %v2652 = vpop.f32.mrb[0].mxu0
    %v2653 = vpop.f32.mrb[0].mxu0
    %v2654 = vpop.f32.mrb[0].mxu0
    %2655 = vdwg.mxu0
    %v2656 = vpack.c.bf16 %v2651, %v2651
    %s2657 = scalar_lea.vmem %s9, 384
    %v2658 = vld [vmem:[%s2657] sm:$0xff]
    %v2659 = vld [vmem:[%s2657 + $0x8] sm:$0xff]
    %v2660 = vld [vmem:[%s2657 + $0x10] sm:$0xff]
    %v2661 = vld [vmem:[%s2657 + $0x18] sm:$0xff]
    %v2662 = vld [vmem:[%s2657 + $0x20] sm:$0xff]
    %v2663 = vld [vmem:[%s2657 + $0x28] sm:$0xff]
    %v2664 = vld [vmem:[%s2657 + $0x30] sm:$0xff]
    %v2665 = vld [vmem:[%s2657 + $0x38] sm:$0xff]
    %v2666 = vld [vmem:[%s2657 + $0x40] sm:$0xff]
    %v2667 = vld [vmem:[%s2657 + $0x48] sm:$0xff]
    %v2668 = vld [vmem:[%s2657 + $0x50] sm:$0xff]
    %v2669 = vld [vmem:[%s2657 + $0x58] sm:$0xff]
    %v2670 = vld [vmem:[%s2657 + $0x60] sm:$0xff]
    %v2671 = vld [vmem:[%s2657 + $0x68] sm:$0xff]
    %v2672 = vld [vmem:[%s2657 + $0x70] sm:$0xff]
    %v2673 = vld [vmem:[%s2657 + $0x78] sm:$0xff]
    %v2690 = vunpack.c.l.b16 %v2658
    %v2691 = vunpack.c.h.b16 %v2658
    %v2692 = vunpack.c.l.b16 %v2659
    %v2693 = vunpack.c.h.b16 %v2659
    %v2694 = vunpack.c.l.b16 %v2660
    %v2695 = vunpack.c.h.b16 %v2660
    %v2696 = vunpack.c.l.b16 %v2661
    %v2697 = vunpack.c.h.b16 %v2661
    %v2698 = vunpack.c.l.b16 %v2662
    %v2699 = vunpack.c.h.b16 %v2662
    %v2700 = vunpack.c.l.b16 %v2663
    %v2701 = vunpack.c.h.b16 %v2663
    %v2702 = vunpack.c.l.b16 %v2664
    %v2703 = vunpack.c.h.b16 %v2664
    %v2704 = vunpack.c.l.b16 %v2665
    %v2705 = vunpack.c.h.b16 %v2665
    %v2706 = vunpack.c.l.b16 %v2666
    %v2707 = vunpack.c.h.b16 %v2666
    %v2708 = vunpack.c.l.b16 %v2667
    %v2709 = vunpack.c.h.b16 %v2667
    %v2710 = vunpack.c.l.b16 %v2668
    %v2711 = vunpack.c.h.b16 %v2668
    %v2712 = vunpack.c.l.b16 %v2669
    %v2713 = vunpack.c.h.b16 %v2669
    %v2714 = vunpack.c.l.b16 %v2670
    %v2715 = vunpack.c.h.b16 %v2670
    %v2716 = vunpack.c.l.b16 %v2671
    %v2717 = vunpack.c.h.b16 %v2671
    %v2718 = vunpack.c.l.b16 %v2672
    %v2719 = vunpack.c.h.b16 %v2672
    %v2720 = vunpack.c.l.b16 %v2673
    %v2721 = vunpack.c.h.b16 %v2673
    %v2722 = vpack.c.b16 %v2692, %v2690
    %v2723 = vpack.c.b16 %v2693, %v2691
    %v2724 = vpack.c.b16 %v2696, %v2694
    %v2725 = vpack.c.b16 %v2697, %v2695
    %v2726 = vpack.c.b16 %v2700, %v2698
    %v2727 = vpack.c.b16 %v2701, %v2699
    %v2728 = vpack.c.b16 %v2704, %v2702
    %v2729 = vpack.c.b16 %v2705, %v2703
    %v2730 = vpack.c.b16 %v2708, %v2706
    %v2731 = vpack.c.b16 %v2709, %v2707
    %v2732 = vpack.c.b16 %v2712, %v2710
    %v2733 = vpack.c.b16 %v2713, %v2711
    %v2734 = vpack.c.b16 %v2716, %v2714
    %v2735 = vpack.c.b16 %v2717, %v2715
    %v2736 = vpack.c.b16 %v2720, %v2718
    %v2737 = vpack.c.b16 %v2721, %v2719
    %2754 = vmatprep.subr.bf16.mxu0 %v2723
    %2755 = vmatpush1.bf16.msra.mxu0 %v2722
    %2756 = vmatprep.subr.bf16.mxu0 %v2725
    %2757 = vmatpush1.bf16.msra.mxu0 %v2724
    %2758 = vmatprep.subr.bf16.mxu0 %v2727
    %2759 = vmatpush1.bf16.msra.mxu0 %v2726
    %2760 = vmatprep.subr.bf16.mxu0 %v2729
    %2761 = vmatpush1.bf16.msra.mxu0 %v2728
    %2762 = vmatprep.subr.bf16.mxu0 %v2731
    %2763 = vmatpush1.bf16.msra.mxu0 %v2730
    %2764 = vmatprep.subr.bf16.mxu0 %v2733
    %2765 = vmatpush1.bf16.msra.mxu0 %v2732
    %2766 = vmatprep.subr.bf16.mxu0 %v2735
    %2767 = vmatpush1.bf16.msra.mxu0 %v2734
    %2768 = vmatprep.subr.bf16.mxu0 %v2737
    %2769 = vmatpush1.bf16.msra.mxu0 %v2736
    %2770 = vmatprep.subr.bf16.mxu0 0
    %2771 = vmatpush1.bf16.msra.mxu0 0
    %2772 = vmatprep.subr.bf16.mxu0 0
    %2773 = vmatpush1.bf16.msra.mxu0 0
    %2774 = vmatprep.subr.bf16.mxu0 0
    %2775 = vmatpush1.bf16.msra.mxu0 0
    %2776 = vmatprep.subr.bf16.mxu0 0
    %2777 = vmatpush1.bf16.msra.mxu0 0
    %2778 = vmatprep.subr.bf16.mxu0 0
    %2779 = vmatpush1.bf16.msra.mxu0 0
    %2780 = vmatprep.subr.bf16.mxu0 0
    %2781 = vmatpush1.bf16.msra.mxu0 0
    %2782 = vmatprep.subr.bf16.mxu0 0
    %2783 = vmatpush1.bf16.msra.mxu0 0
    %2784 = vmatprep.subr.bf16.mxu0 0
    %2785 = vmatpush1.bf16.msra.mxu0 0
    %2786 = vmatprep.mubr.bf16.mxu0 0
    %2787 = vmatmul.mubr.bf16.gmra.mrb[0].mxu0 %v2656
    %v2788 = vpop.f32.mrb[0].mxu0
    %v2789 = vadd.f32 0.0, %v2788
    %v2790 = vpop.f32.mrb[0].mxu0
    %v2791 = vadd.f32 0.0, %v2790
    %v2792 = vpop.f32.mrb[0].mxu0
    %v2793 = vpop.f32.mrb[0].mxu0
    %2794 = vdwg.mxu0
    %v2795 = vadd.f32 %v2609, %v2789
    %v2796 = vadd.f32 %v2610, %v2791
    %s2797 = scalar_lea.vmem %s8, 16
    %v2798 = vld [vmem:[%s2797] sm:$0xf]
    %v2800 = vsel %vm2059, %v2798, 0
    %2802 = vmatprep.subr.bf16.mxu0 0
    %2803 = vmatpush1.bf16.msra.mxu0 %v2056
    %2804 = vmatprep.subr.bf16.mxu0 0
    %2805 = vmatpush1.bf16.msra.mxu0 %v2057
    %2806 = vmatprep.subr.bf16.mxu0 0
    %2807 = vmatpush1.bf16.msra.mxu0 0
    %2808 = vmatprep.subr.bf16.mxu0 0
    %2809 = vmatpush1.bf16.msra.mxu0 0
    %2810 = vmatprep.subr.bf16.mxu0 0
    %2811 = vmatpush1.bf16.msra.mxu0 0
    %2812 = vmatprep.subr.bf16.mxu0 0
    %2813 = vmatpush1.bf16.msra.mxu0 0
    %2814 = vmatprep.subr.bf16.mxu0 0
    %2815 = vmatpush1.bf16.msra.mxu0 0
    %2816 = vmatprep.subr.bf16.mxu0 0
    %2817 = vmatpush1.bf16.msra.mxu0 0
    %2818 = vmatprep.subr.bf16.mxu0 0
    %2819 = vmatpush1.bf16.msra.mxu0 0
    %2820 = vmatprep.subr.bf16.mxu0 0
    %2821 = vmatpush1.bf16.msra.mxu0 0
    %2822 = vmatprep.subr.bf16.mxu0 0
    %2823 = vmatpush1.bf16.msra.mxu0 0
    %2824 = vmatprep.subr.bf16.mxu0 0
    %2825 = vmatpush1.bf16.msra.mxu0 0
    %2826 = vmatprep.subr.bf16.mxu0 0
    %2827 = vmatpush1.bf16.msra.mxu0 0
    %2828 = vmatprep.subr.bf16.mxu0 0
    %2829 = vmatpush1.bf16.msra.mxu0 0
    %2830 = vmatprep.subr.bf16.mxu0 0
    %2831 = vmatpush1.bf16.msra.mxu0 0
    %2832 = vmatprep.subr.bf16.mxu0 0
    %2833 = vmatpush1.bf16.msra.mxu0 0
    %2834 = vmatprep.mubr.bf16.mxu0 0
    %2835 = vmatmul.mubr.bf16.gmra.mrb[0].mxu0 %v2800
    %v2836 = vpop.f32.mrb[0].mxu0
    %v2837 = vadd.f32 0.0, %v2836
    %v2838 = vpop.f32.mrb[0].mxu0
    %v2839 = vpop.f32.mrb[0].mxu0
    %v2840 = vpop.f32.mrb[0].mxu0
    %2841 = vdwg.mxu0
    %v2842 = vpack.c.bf16 %v2837, %v2837
    %s2843 = scalar_lea.vmem %s9, 512
    %v2844 = vld [vmem:[%s2843] sm:$0xff]
    %v2845 = vld [vmem:[%s2843 + $0x8] sm:$0xff]
    %v2846 = vld [vmem:[%s2843 + $0x10] sm:$0xff]
    %v2847 = vld [vmem:[%s2843 + $0x18] sm:$0xff]
    %v2848 = vld [vmem:[%s2843 + $0x20] sm:$0xff]
    %v2849 = vld [vmem:[%s2843 + $0x28] sm:$0xff]
    %v2850 = vld [vmem:[%s2843 + $0x30] sm:$0xff]
    %v2851 = vld [vmem:[%s2843 + $0x38] sm:$0xff]
    %v2852 = vld [vmem:[%s2843 + $0x40] sm:$0xff]
    %v2853 = vld [vmem:[%s2843 + $0x48] sm:$0xff]
    %v2854 = vld [vmem:[%s2843 + $0x50] sm:$0xff]
    %v2855 = vld [vmem:[%s2843 + $0x58] sm:$0xff]
    %v2856 = vld [vmem:[%s2843 + $0x60] sm:$0xff]
    %v2857 = vld [vmem:[%s2843 + $0x68] sm:$0xff]
    %v2858 = vld [vmem:[%s2843 + $0x70] sm:$0xff]
    %v2859 = vld [vmem:[%s2843 + $0x78] sm:$0xff]
    %v2876 = vunpack.c.l.b16 %v2844
    %v2877 = vunpack.c.h.b16 %v2844
    %v2878 = vunpack.c.l.b16 %v2845
    %v2879 = vunpack.c.h.b16 %v2845
    %v2880 = vunpack.c.l.b16 %v2846
    %v2881 = vunpack.c.h.b16 %v2846
    %v2882 = vunpack.c.l.b16 %v2847
    %v2883 = vunpack.c.h.b16 %v2847
    %v2884 = vunpack.c.l.b16 %v2848
    %v2885 = vunpack.c.h.b16 %v2848
    %v2886 = vunpack.c.l.b16 %v2849
    %v2887 = vunpack.c.h.b16 %v2849
    %v2888 = vunpack.c.l.b16 %v2850
    %v2889 = vunpack.c.h.b16 %v2850
    %v2890 = vunpack.c.l.b16 %v2851
    %v2891 = vunpack.c.h.b16 %v2851
    %v2892 = vunpack.c.l.b16 %v2852
    %v2893 = vunpack.c.h.b16 %v2852
    %v2894 = vunpack.c.l.b16 %v2853
    %v2895 = vunpack.c.h.b16 %v2853
    %v2896 = vunpack.c.l.b16 %v2854
    %v2897 = vunpack.c.h.b16 %v2854
    %v2898 = vunpack.c.l.b16 %v2855
    %v2899 = vunpack.c.h.b16 %v2855
    %v2900 = vunpack.c.l.b16 %v2856
    %v2901 = vunpack.c.h.b16 %v2856
    %v2902 = vunpack.c.l.b16 %v2857
    %v2903 = vunpack.c.h.b16 %v2857
    %v2904 = vunpack.c.l.b16 %v2858
    %v2905 = vunpack.c.h.b16 %v2858
    %v2906 = vunpack.c.l.b16 %v2859
    %v2907 = vunpack.c.h.b16 %v2859
    %v2908 = vpack.c.b16 %v2878, %v2876
    %v2909 = vpack.c.b16 %v2879, %v2877
    %v2910 = vpack.c.b16 %v2882, %v2880
    %v2911 = vpack.c.b16 %v2883, %v2881
    %v2912 = vpack.c.b16 %v2886, %v2884
    %v2913 = vpack.c.b16 %v2887, %v2885
    %v2914 = vpack.c.b16 %v2890, %v2888
    %v2915 = vpack.c.b16 %v2891, %v2889
    %v2916 = vpack.c.b16 %v2894, %v2892
    %v2917 = vpack.c.b16 %v2895, %v2893
    %v2918 = vpack.c.b16 %v2898, %v2896
    %v2919 = vpack.c.b16 %v2899, %v2897
    %v2920 = vpack.c.b16 %v2902, %v2900
    %v2921 = vpack.c.b16 %v2903, %v2901
    %v2922 = vpack.c.b16 %v2906, %v2904
    %v2923 = vpack.c.b16 %v2907, %v2905
    %2940 = vmatprep.subr.bf16.mxu0 %v2909
    %2941 = vmatpush1.bf16.msra.mxu0 %v2908
    %2942 = vmatprep.subr.bf16.mxu0 %v2911
    %2943 = vmatpush1.bf16.msra.mxu0 %v2910
    %2944 = vmatprep.subr.bf16.mxu0 %v2913
    %2945 = vmatpush1.bf16.msra.mxu0 %v2912
    %2946 = vmatprep.subr.bf16.mxu0 %v2915
    %2947 = vmatpush1.bf16.msra.mxu0 %v2914
    %2948 = vmatprep.subr.bf16.mxu0 %v2917
    %2949 = vmatpush1.bf16.msra.mxu0 %v2916
    %2950 = vmatprep.subr.bf16.mxu0 %v2919
    %2951 = vmatpush1.bf16.msra.mxu0 %v2918
    %2952 = vmatprep.subr.bf16.mxu0 %v2921
    %2953 = vmatpush1.bf16.msra.mxu0 %v2920
    %2954 = vmatprep.subr.bf16.mxu0 %v2923
    %2955 = vmatpush1.bf16.msra.mxu0 %v2922
    %2956 = vmatprep.subr.bf16.mxu0 0
    %2957 = vmatpush1.bf16.msra.mxu0 0
    %2958 = vmatprep.subr.bf16.mxu0 0
    %2959 = vmatpush1.bf16.msra.mxu0 0
    %2960 = vmatprep.subr.bf16.mxu0 0
    %2961 = vmatpush1.bf16.msra.mxu0 0
    %2962 = vmatprep.subr.bf16.mxu0 0
    %2963 = vmatpush1.bf16.msra.mxu0 0
    %2964 = vmatprep.subr.bf16.mxu0 0
    %2965 = vmatpush1.bf16.msra.mxu0 0
    %2966 = vmatprep.subr.bf16.mxu0 0
    %2967 = vmatpush1.bf16.msra.mxu0 0
    %2968 = vmatprep.subr.bf16.mxu0 0
    %2969 = vmatpush1.bf16.msra.mxu0 0
    %2970 = vmatprep.subr.bf16.mxu0 0
    %2971 = vmatpush1.bf16.msra.mxu0 0
    %2972 = vmatprep.mubr.bf16.mxu0 0
    %2973 = vmatmul.mubr.bf16.gmra.mrb[0].mxu0 %v2842
    %v2974 = vpop.f32.mrb[0].mxu0
    %v2975 = vadd.f32 0.0, %v2974
    %v2976 = vpop.f32.mrb[0].mxu0
    %v2977 = vadd.f32 0.0, %v2976
    %v2978 = vpop.f32.mrb[0].mxu0
    %v2979 = vpop.f32.mrb[0].mxu0
    %2980 = vdwg.mxu0
    %v2981 = vadd.f32 %v2795, %v2975
    %v2982 = vadd.f32 %v2796, %v2977
    %s2983 = scalar_lea.vmem %s8, 20
    %v2984 = vld [vmem:[%s2983] sm:$0xf]
    %v2986 = vsel %vm2059, %v2984, 0
    %2988 = vmatprep.subr.bf16.mxu0 0
    %2989 = vmatpush1.bf16.msra.mxu0 %v2056
    %2990 = vmatprep.subr.bf16.mxu0 0
    %2991 = vmatpush1.bf16.msra.mxu0 %v2057
    %2992 = vmatprep.subr.bf16.mxu0 0
    %2993 = vmatpush1.bf16.msra.mxu0 0
    %2994 = vmatprep.subr.bf16.mxu0 0
    %2995 = vmatpush1.bf16.msra.mxu0 0
    %2996 = vmatprep.subr.bf16.mxu0 0
    %2997 = vmatpush1.bf16.msra.mxu0 0
    %2998 = vmatprep.subr.bf16.mxu0 0
    %2999 = vmatpush1.bf16.msra.mxu0 0
    %3000 = vmatprep.subr.bf16.mxu0 0
    %3001 = vmatpush1.bf16.msra.mxu0 0
    %3002 = vmatprep.subr.bf16.mxu0 0
    %3003 = vmatpush1.bf16.msra.mxu0 0
    %3004 = vmatprep.subr.bf16.mxu0 0
    %3005 = vmatpush1.bf16.msra.mxu0 0
    %3006 = vmatprep.subr.bf16.mxu0 0
    %3007 = vmatpush1.bf16.msra.mxu0 0
    %3008 = vmatprep.subr.bf16.mxu0 0
    %3009 = vmatpush1.bf16.msra.mxu0 0
    %3010 = vmatprep.subr.bf16.mxu0 0
    %3011 = vmatpush1.bf16.msra.mxu0 0
    %3012 = vmatprep.subr.bf16.mxu0 0
    %3013 = vmatpush1.bf16.msra.mxu0 0
    %3014 = vmatprep.subr.bf16.mxu0 0
    %3015 = vmatpush1.bf16.msra.mxu0 0
    %3016 = vmatprep.subr.bf16.mxu0 0
    %3017 = vmatpush1.bf16.msra.mxu0 0
    %3018 = vmatprep.subr.bf16.mxu0 0
    %3019 = vmatpush1.bf16.msra.mxu0 0
    %3020 = vmatprep.mubr.bf16.mxu0 0
    %3021 = vmatmul.mubr.bf16.gmra.mrb[0].mxu0 %v2986
    %v3022 = vpop.f32.mrb[0].mxu0
    %v3023 = vadd.f32 0.0, %v3022
    %v3024 = vpop.f32.mrb[0].mxu0
    %v3025 = vpop.f32.mrb[0].mxu0
    %v3026 = vpop.f32.mrb[0].mxu0
    %3027 = vdwg.mxu0
    %v3028 = vpack.c.bf16 %v3023, %v3023
    %s3029 = scalar_lea.vmem %s9, 640
    %v3030 = vld [vmem:[%s3029] sm:$0xff]
    %v3031 = vld [vmem:[%s3029 + $0x8] sm:$0xff]
    %v3032 = vld [vmem:[%s3029 + $0x10] sm:$0xff]
    %v3033 = vld [vmem:[%s3029 + $0x18] sm:$0xff]
    %v3034 = vld [vmem:[%s3029 + $0x20] sm:$0xff]
    %v3035 = vld [vmem:[%s3029 + $0x28] sm:$0xff]
    %v3036 = vld [vmem:[%s3029 + $0x30] sm:$0xff]
    %v3037 = vld [vmem:[%s3029 + $0x38] sm:$0xff]
    %v3038 = vld [vmem:[%s3029 + $0x40] sm:$0xff]
    %v3039 = vld [vmem:[%s3029 + $0x48] sm:$0xff]
    %v3040 = vld [vmem:[%s3029 + $0x50] sm:$0xff]
    %v3041 = vld [vmem:[%s3029 + $0x58] sm:$0xff]
    %v3042 = vld [vmem:[%s3029 + $0x60] sm:$0xff]
    %v3043 = vld [vmem:[%s3029 + $0x68] sm:$0xff]
    %v3044 = vld [vmem:[%s3029 + $0x70] sm:$0xff]
    %v3045 = vld [vmem:[%s3029 + $0x78] sm:$0xff]
    %v3062 = vunpack.c.l.b16 %v3030
    %v3063 = vunpack.c.h.b16 %v3030
    %v3064 = vunpack.c.l.b16 %v3031
    %v3065 = vunpack.c.h.b16 %v3031
    %v3066 = vunpack.c.l.b16 %v3032
    %v3067 = vunpack.c.h.b16 %v3032
    %v3068 = vunpack.c.l.b16 %v3033
    %v3069 = vunpack.c.h.b16 %v3033
    %v3070 = vunpack.c.l.b16 %v3034
    %v3071 = vunpack.c.h.b16 %v3034
    %v3072 = vunpack.c.l.b16 %v3035
    %v3073 = vunpack.c.h.b16 %v3035
    %v3074 = vunpack.c.l.b16 %v3036
    %v3075 = vunpack.c.h.b16 %v3036
    %v3076 = vunpack.c.l.b16 %v3037
    %v3077 = vunpack.c.h.b16 %v3037
    %v3078 = vunpack.c.l.b16 %v3038
    %v3079 = vunpack.c.h.b16 %v3038
    %v3080 = vunpack.c.l.b16 %v3039
    %v3081 = vunpack.c.h.b16 %v3039
    %v3082 = vunpack.c.l.b16 %v3040
    %v3083 = vunpack.c.h.b16 %v3040
    %v3084 = vunpack.c.l.b16 %v3041
    %v3085 = vunpack.c.h.b16 %v3041
    %v3086 = vunpack.c.l.b16 %v3042
    %v3087 = vunpack.c.h.b16 %v3042
    %v3088 = vunpack.c.l.b16 %v3043
    %v3089 = vunpack.c.h.b16 %v3043
    %v3090 = vunpack.c.l.b16 %v3044
    %v3091 = vunpack.c.h.b16 %v3044
    %v3092 = vunpack.c.l.b16 %v3045
    %v3093 = vunpack.c.h.b16 %v3045
    %v3094 = vpack.c.b16 %v3064, %v3062
    %v3095 = vpack.c.b16 %v3065, %v3063
    %v3096 = vpack.c.b16 %v3068, %v3066
    %v3097 = vpack.c.b16 %v3069, %v3067
    %v3098 = vpack.c.b16 %v3072, %v3070
    %v3099 = vpack.c.b16 %v3073, %v3071
    %v3100 = vpack.c.b16 %v3076, %v3074
    %v3101 = vpack.c.b16 %v3077, %v3075
    %v3102 = vpack.c.b16 %v3080, %v3078
    %v3103 = vpack.c.b16 %v3081, %v3079
    %v3104 = vpack.c.b16 %v3084, %v3082
    %v3105 = vpack.c.b16 %v3085, %v3083
    %v3106 = vpack.c.b16 %v3088, %v3086
    %v3107 = vpack.c.b16 %v3089, %v3087
    %v3108 = vpack.c.b16 %v3092, %v3090
    %v3109 = vpack.c.b16 %v3093, %v3091
    %3126 = vmatprep.subr.bf16.mxu0 %v3095
    %3127 = vmatpush1.bf16.msra.mxu0 %v3094
    %3128 = vmatprep.subr.bf16.mxu0 %v3097
    %3129 = vmatpush1.bf16.msra.mxu0 %v3096
    %3130 = vmatprep.subr.bf16.mxu0 %v3099
    %3131 = vmatpush1.bf16.msra.mxu0 %v3098
    %3132 = vmatprep.subr.bf16.mxu0 %v3101
    %3133 = vmatpush1.bf16.msra.mxu0 %v3100
    %3134 = vmatprep.subr.bf16.mxu0 %v3103
    %3135 = vmatpush1.bf16.msra.mxu0 %v3102
    %3136 = vmatprep.subr.bf16.mxu0 %v3105
    %3137 = vmatpush1.bf16.msra.mxu0 %v3104
    %3138 = vmatprep.subr.bf16.mxu0 %v3107
    %3139 = vmatpush1.bf16.msra.mxu0 %v3106
    %3140 = vmatprep.subr.bf16.mxu0 %v3109
    %3141 = vmatpush1.bf16.msra.mxu0 %v3108
    %3142 = vmatprep.subr.bf16.mxu0 0
    %3143 = vmatpush1.bf16.msra.mxu0 0
    %3144 = vmatprep.subr.bf16.mxu0 0
    %3145 = vmatpush1.bf16.msra.mxu0 0
    %3146 = vmatprep.subr.bf16.mxu0 0
    %3147 = vmatpush1.bf16.msra.mxu0 0
    %3148 = vmatprep.subr.bf16.mxu0 0
    %3149 = vmatpush1.bf16.msra.mxu0 0
    %3150 = vmatprep.subr.bf16.mxu0 0
    %3151 = vmatpush1.bf16.msra.mxu0 0
    %3152 = vmatprep.subr.bf16.mxu0 0
    %3153 = vmatpush1.bf16.msra.mxu0 0
    %3154 = vmatprep.subr.bf16.mxu0 0
    %3155 = vmatpush1.bf16.msra.mxu0 0
    %3156 = vmatprep.subr.bf16.mxu0 0
    %3157 = vmatpush1.bf16.msra.mxu0 0
    %3158 = vmatprep.mubr.bf16.mxu0 0
    %3159 = vmatmul.mubr.bf16.gmra.mrb[0].mxu0 %v3028
    %v3160 = vpop.f32.mrb[0].mxu0
    %v3161 = vadd.f32 0.0, %v3160
    %v3162 = vpop.f32.mrb[0].mxu0
    %v3163 = vadd.f32 0.0, %v3162
    %v3164 = vpop.f32.mrb[0].mxu0
    %v3165 = vpop.f32.mrb[0].mxu0
    %3166 = vdwg.mxu0
    %v3167 = vadd.f32 %v2981, %v3161
    %v3168 = vadd.f32 %v2982, %v3163
    %s3169 = scalar_lea.vmem %s8, 24
    %v3170 = vld [vmem:[%s3169] sm:$0xf]
    %v3172 = vsel %vm2059, %v3170, 0
    %3174 = vmatprep.subr.bf16.mxu0 0
    %3175 = vmatpush1.bf16.msra.mxu0 %v2056
    %3176 = vmatprep.subr.bf16.mxu0 0
    %3177 = vmatpush1.bf16.msra.mxu0 %v2057
    %3178 = vmatprep.subr.bf16.mxu0 0
    %3179 = vmatpush1.bf16.msra.mxu0 0
    %3180 = vmatprep.subr.bf16.mxu0 0
    %3181 = vmatpush1.bf16.msra.mxu0 0
    %3182 = vmatprep.subr.bf16.mxu0 0
    %3183 = vmatpush1.bf16.msra.mxu0 0
    %3184 = vmatprep.subr.bf16.mxu0 0
    %3185 = vmatpush1.bf16.msra.mxu0 0
    %3186 = vmatprep.subr.bf16.mxu0 0
    %3187 = vmatpush1.bf16.msra.mxu0 0
    %3188 = vmatprep.subr.bf16.mxu0 0
    %3189 = vmatpush1.bf16.msra.mxu0 0
    %3190 = vmatprep.subr.bf16.mxu0 0
    %3191 = vmatpush1.bf16.msra.mxu0 0
    %3192 = vmatprep.subr.bf16.mxu0 0
    %3193 = vmatpush1.bf16.msra.mxu0 0
    %3194 = vmatprep.subr.bf16.mxu0 0
    %3195 = vmatpush1.bf16.msra.mxu0 0
    %3196 = vmatprep.subr.bf16.mxu0 0
    %3197 = vmatpush1.bf16.msra.mxu0 0
    %3198 = vmatprep.subr.bf16.mxu0 0
    %3199 = vmatpush1.bf16.msra.mxu0 0
    %3200 = vmatprep.subr.bf16.mxu0 0
    %3201 = vmatpush1.bf16.msra.mxu0 0
    %3202 = vmatprep.subr.bf16.mxu0 0
    %3203 = vmatpush1.bf16.msra.mxu0 0
    %3204 = vmatprep.subr.bf16.mxu0 0
    %3205 = vmatpush1.bf16.msra.mxu0 0
    %3206 = vmatprep.mubr.bf16.mxu0 0
    %3207 = vmatmul.mubr.bf16.gmra.mrb[0].mxu0 %v3172
    %v3208 = vpop.f32.mrb[0].mxu0
    %v3209 = vadd.f32 0.0, %v3208
    %v3210 = vpop.f32.mrb[0].mxu0
    %v3211 = vpop.f32.mrb[0].mxu0
    %v3212 = vpop.f32.mrb[0].mxu0
    %3213 = vdwg.mxu0
    %v3214 = vpack.c.bf16 %v3209, %v3209
    %s3215 = scalar_lea.vmem %s9, 768
    %v3216 = vld [vmem:[%s3215] sm:$0xff]
    %v3217 = vld [vmem:[%s3215 + $0x8] sm:$0xff]
    %v3218 = vld [vmem:[%s3215 + $0x10] sm:$0xff]
    %v3219 = vld [vmem:[%s3215 + $0x18] sm:$0xff]
    %v3220 = vld [vmem:[%s3215 + $0x20] sm:$0xff]
    %v3221 = vld [vmem:[%s3215 + $0x28] sm:$0xff]
    %v3222 = vld [vmem:[%s3215 + $0x30] sm:$0xff]
    %v3223 = vld [vmem:[%s3215 + $0x38] sm:$0xff]
    %v3224 = vld [vmem:[%s3215 + $0x40] sm:$0xff]
    %v3225 = vld [vmem:[%s3215 + $0x48] sm:$0xff]
    %v3226 = vld [vmem:[%s3215 + $0x50] sm:$0xff]
    %v3227 = vld [vmem:[%s3215 + $0x58] sm:$0xff]
    %v3228 = vld [vmem:[%s3215 + $0x60] sm:$0xff]
    %v3229 = vld [vmem:[%s3215 + $0x68] sm:$0xff]
    %v3230 = vld [vmem:[%s3215 + $0x70] sm:$0xff]
    %v3231 = vld [vmem:[%s3215 + $0x78] sm:$0xff]
    %v3248 = vunpack.c.l.b16 %v3216
    %v3249 = vunpack.c.h.b16 %v3216
    %v3250 = vunpack.c.l.b16 %v3217
    %v3251 = vunpack.c.h.b16 %v3217
    %v3252 = vunpack.c.l.b16 %v3218
    %v3253 = vunpack.c.h.b16 %v3218
    %v3254 = vunpack.c.l.b16 %v3219
    %v3255 = vunpack.c.h.b16 %v3219
    %v3256 = vunpack.c.l.b16 %v3220
    %v3257 = vunpack.c.h.b16 %v3220
    %v3258 = vunpack.c.l.b16 %v3221
    %v3259 = vunpack.c.h.b16 %v3221
    %v3260 = vunpack.c.l.b16 %v3222
    %v3261 = vunpack.c.h.b16 %v3222
    %v3262 = vunpack.c.l.b16 %v3223
    %v3263 = vunpack.c.h.b16 %v3223
    %v3264 = vunpack.c.l.b16 %v3224
    %v3265 = vunpack.c.h.b16 %v3224
    %v3266 = vunpack.c.l.b16 %v3225
    %v3267 = vunpack.c.h.b16 %v3225
    %v3268 = vunpack.c.l.b16 %v3226
    %v3269 = vunpack.c.h.b16 %v3226
    %v3270 = vunpack.c.l.b16 %v3227
    %v3271 = vunpack.c.h.b16 %v3227
    %v3272 = vunpack.c.l.b16 %v3228
    %v3273 = vunpack.c.h.b16 %v3228
    %v3274 = vunpack.c.l.b16 %v3229
    %v3275 = vunpack.c.h.b16 %v3229
    %v3276 = vunpack.c.l.b16 %v3230
    %v3277 = vunpack.c.h.b16 %v3230
    %v3278 = vunpack.c.l.b16 %v3231
    %v3279 = vunpack.c.h.b16 %v3231
    %v3280 = vpack.c.b16 %v3250, %v3248
    %v3281 = vpack.c.b16 %v3251, %v3249
    %v3282 = vpack.c.b16 %v3254, %v3252
    %v3283 = vpack.c.b16 %v3255, %v3253
    %v3284 = vpack.c.b16 %v3258, %v3256
    %v3285 = vpack.c.b16 %v3259, %v3257
    %v3286 = vpack.c.b16 %v3262, %v3260
    %v3287 = vpack.c.b16 %v3263, %v3261
    %v3288 = vpack.c.b16 %v3266, %v3264
    %v3289 = vpack.c.b16 %v3267, %v3265
    %v3290 = vpack.c.b16 %v3270, %v3268
    %v3291 = vpack.c.b16 %v3271, %v3269
    %v3292 = vpack.c.b16 %v3274, %v3272
    %v3293 = vpack.c.b16 %v3275, %v3273
    %v3294 = vpack.c.b16 %v3278, %v3276
    %v3295 = vpack.c.b16 %v3279, %v3277
    %3312 = vmatprep.subr.bf16.mxu0 %v3281
    %3313 = vmatpush1.bf16.msra.mxu0 %v3280
    %3314 = vmatprep.subr.bf16.mxu0 %v3283
    %3315 = vmatpush1.bf16.msra.mxu0 %v3282
    %3316 = vmatprep.subr.bf16.mxu0 %v3285
    %3317 = vmatpush1.bf16.msra.mxu0 %v3284
    %3318 = vmatprep.subr.bf16.mxu0 %v3287
    %3319 = vmatpush1.bf16.msra.mxu0 %v3286
    %3320 = vmatprep.subr.bf16.mxu0 %v3289
    %3321 = vmatpush1.bf16.msra.mxu0 %v3288
    %3322 = vmatprep.subr.bf16.mxu0 %v3291
    %3323 = vmatpush1.bf16.msra.mxu0 %v3290
    %3324 = vmatprep.subr.bf16.mxu0 %v3293
    %3325 = vmatpush1.bf16.msra.mxu0 %v3292
    %3326 = vmatprep.subr.bf16.mxu0 %v3295
    %3327 = vmatpush1.bf16.msra.mxu0 %v3294
    %3328 = vmatprep.subr.bf16.mxu0 0
    %3329 = vmatpush1.bf16.msra.mxu0 0
    %3330 = vmatprep.subr.bf16.mxu0 0
    %3331 = vmatpush1.bf16.msra.mxu0 0
    %3332 = vmatprep.subr.bf16.mxu0 0
    %3333 = vmatpush1.bf16.msra.mxu0 0
    %3334 = vmatprep.subr.bf16.mxu0 0
    %3335 = vmatpush1.bf16.msra.mxu0 0
    %3336 = vmatprep.subr.bf16.mxu0 0
    %3337 = vmatpush1.bf16.msra.mxu0 0
    %3338 = vmatprep.subr.bf16.mxu0 0
    %3339 = vmatpush1.bf16.msra.mxu0 0
    %3340 = vmatprep.subr.bf16.mxu0 0
    %3341 = vmatpush1.bf16.msra.mxu0 0
    %3342 = vmatprep.subr.bf16.mxu0 0
    %3343 = vmatpush1.bf16.msra.mxu0 0
    %3344 = vmatprep.mubr.bf16.mxu0 0
    %3345 = vmatmul.mubr.bf16.gmra.mrb[0].mxu0 %v3214
    %v3346 = vpop.f32.mrb[0].mxu0
    %v3347 = vadd.f32 0.0, %v3346
    %v3348 = vpop.f32.mrb[0].mxu0
    %v3349 = vadd.f32 0.0, %v3348
    %v3350 = vpop.f32.mrb[0].mxu0
    %v3351 = vpop.f32.mrb[0].mxu0
    %3352 = vdwg.mxu0
    %v3353 = vadd.f32 %v3167, %v3347
    %v3354 = vadd.f32 %v3168, %v3349
    %s3355 = scalar_lea.vmem %s8, 28
    %v3356 = vld [vmem:[%s3355] sm:$0xf]
    %v3358 = vsel %vm2059, %v3356, 0
    %3360 = vmatprep.subr.bf16.mxu0 0
    %3361 = vmatpush1.bf16.msra.mxu0 %v2056
    %3362 = vmatprep.subr.bf16.mxu0 0
    %3363 = vmatpush1.bf16.msra.mxu0 %v2057
    %3364 = vmatprep.subr.bf16.mxu0 0
    %3365 = vmatpush1.bf16.msra.mxu0 0
    %3366 = vmatprep.subr.bf16.mxu0 0
    %3367 = vmatpush1.bf16.msra.mxu0 0
    %3368 = vmatprep.subr.bf16.mxu0 0
    %3369 = vmatpush1.bf16.msra.mxu0 0
    %3370 = vmatprep.subr.bf16.mxu0 0
    %3371 = vmatpush1.bf16.msra.mxu0 0
    %3372 = vmatprep.subr.bf16.mxu0 0
    %3373 = vmatpush1.bf16.msra.mxu0 0
    %3374 = vmatprep.subr.bf16.mxu0 0
    %3375 = vmatpush1.bf16.msra.mxu0 0
    %3376 = vmatprep.subr.bf16.mxu0 0
    %3377 = vmatpush1.bf16.msra.mxu0 0
    %3378 = vmatprep.subr.bf16.mxu0 0
    %3379 = vmatpush1.bf16.msra.mxu0 0
    %3380 = vmatprep.subr.bf16.mxu0 0
    %3381 = vmatpush1.bf16.msra.mxu0 0
    %3382 = vmatprep.subr.bf16.mxu0 0
    %3383 = vmatpush1.bf16.msra.mxu0 0
    %3384 = vmatprep.subr.bf16.mxu0 0
    %3385 = vmatpush1.bf16.msra.mxu0 0
    %3386 = vmatprep.subr.bf16.mxu0 0
    %3387 = vmatpush1.bf16.msra.mxu0 0
    %3388 = vmatprep.subr.bf16.mxu0 0
    %3389 = vmatpush1.bf16.msra.mxu0 0
    %3390 = vmatprep.subr.bf16.mxu0 0
    %3391 = vmatpush1.bf16.msra.mxu0 0
    %3392 = vmatprep.mubr.bf16.mxu0 0
    %3393 = vmatmul.mubr.bf16.gmra.mrb[0].mxu0 %v3358
    %v3394 = vpop.f32.mrb[0].mxu0
    %v3395 = vadd.f32 0.0, %v3394
    %v3396 = vpop.f32.mrb[0].mxu0
    %v3397 = vpop.f32.mrb[0].mxu0
    %v3398 = vpop.f32.mrb[0].mxu0
    %3399 = vdwg.mxu0
    %v3400 = vpack.c.bf16 %v3395, %v3395
    %s3401 = scalar_lea.vmem %s9, 896
    %v3402 = vld [vmem:[%s3401] sm:$0xff]
    %v3403 = vld [vmem:[%s3401 + $0x8] sm:$0xff]
    %v3404 = vld [vmem:[%s3401 + $0x10] sm:$0xff]
    %v3405 = vld [vmem:[%s3401 + $0x18] sm:$0xff]
    %v3406 = vld [vmem:[%s3401 + $0x20] sm:$0xff]
    %v3407 = vld [vmem:[%s3401 + $0x28] sm:$0xff]
    %v3408 = vld [vmem:[%s3401 + $0x30] sm:$0xff]
    %v3409 = vld [vmem:[%s3401 + $0x38] sm:$0xff]
    %v3410 = vld [vmem:[%s3401 + $0x40] sm:$0xff]
    %v3411 = vld [vmem:[%s3401 + $0x48] sm:$0xff]
    %v3412 = vld [vmem:[%s3401 + $0x50] sm:$0xff]
    %v3413 = vld [vmem:[%s3401 + $0x58] sm:$0xff]
    %v3414 = vld [vmem:[%s3401 + $0x60] sm:$0xff]
    %v3415 = vld [vmem:[%s3401 + $0x68] sm:$0xff]
    %v3416 = vld [vmem:[%s3401 + $0x70] sm:$0xff]
    %v3417 = vld [vmem:[%s3401 + $0x78] sm:$0xff]
    %v3434 = vunpack.c.l.b16 %v3402
    %v3435 = vunpack.c.h.b16 %v3402
    %v3436 = vunpack.c.l.b16 %v3403
    %v3437 = vunpack.c.h.b16 %v3403
    %v3438 = vunpack.c.l.b16 %v3404
    %v3439 = vunpack.c.h.b16 %v3404
    %v3440 = vunpack.c.l.b16 %v3405
    %v3441 = vunpack.c.h.b16 %v3405
    %v3442 = vunpack.c.l.b16 %v3406
    %v3443 = vunpack.c.h.b16 %v3406
    %v3444 = vunpack.c.l.b16 %v3407
    %v3445 = vunpack.c.h.b16 %v3407
    %v3446 = vunpack.c.l.b16 %v3408
    %v3447 = vunpack.c.h.b16 %v3408
    %v3448 = vunpack.c.l.b16 %v3409
    %v3449 = vunpack.c.h.b16 %v3409
    %v3450 = vunpack.c.l.b16 %v3410
    %v3451 = vunpack.c.h.b16 %v3410
    %v3452 = vunpack.c.l.b16 %v3411
    %v3453 = vunpack.c.h.b16 %v3411
    %v3454 = vunpack.c.l.b16 %v3412
    %v3455 = vunpack.c.h.b16 %v3412
    %v3456 = vunpack.c.l.b16 %v3413
    %v3457 = vunpack.c.h.b16 %v3413
    %v3458 = vunpack.c.l.b16 %v3414
    %v3459 = vunpack.c.h.b16 %v3414
    %v3460 = vunpack.c.l.b16 %v3415
    %v3461 = vunpack.c.h.b16 %v3415
    %v3462 = vunpack.c.l.b16 %v3416
    %v3463 = vunpack.c.h.b16 %v3416
    %v3464 = vunpack.c.l.b16 %v3417
    %v3465 = vunpack.c.h.b16 %v3417
    %v3466 = vpack.c.b16 %v3436, %v3434
    %v3467 = vpack.c.b16 %v3437, %v3435
    %v3468 = vpack.c.b16 %v3440, %v3438
    %v3469 = vpack.c.b16 %v3441, %v3439
    %v3470 = vpack.c.b16 %v3444, %v3442
    %v3471 = vpack.c.b16 %v3445, %v3443
    %v3472 = vpack.c.b16 %v3448, %v3446
    %v3473 = vpack.c.b16 %v3449, %v3447
    %v3474 = vpack.c.b16 %v3452, %v3450
    %v3475 = vpack.c.b16 %v3453, %v3451
    %v3476 = vpack.c.b16 %v3456, %v3454
    %v3477 = vpack.c.b16 %v3457, %v3455
    %v3478 = vpack.c.b16 %v3460, %v3458
    %v3479 = vpack.c.b16 %v3461, %v3459
    %v3480 = vpack.c.b16 %v3464, %v3462
    %v3481 = vpack.c.b16 %v3465, %v3463
    %3498 = vmatprep.subr.bf16.mxu0 %v3467
    %3499 = vmatpush1.bf16.msra.mxu0 %v3466
    %3500 = vmatprep.subr.bf16.mxu0 %v3469
    %3501 = vmatpush1.bf16.msra.mxu0 %v3468
    %3502 = vmatprep.subr.bf16.mxu0 %v3471
    %3503 = vmatpush1.bf16.msra.mxu0 %v3470
    %3504 = vmatprep.subr.bf16.mxu0 %v3473
    %3505 = vmatpush1.bf16.msra.mxu0 %v3472
    %3506 = vmatprep.subr.bf16.mxu0 %v3475
    %3507 = vmatpush1.bf16.msra.mxu0 %v3474
    %3508 = vmatprep.subr.bf16.mxu0 %v3477
    %3509 = vmatpush1.bf16.msra.mxu0 %v3476
    %3510 = vmatprep.subr.bf16.mxu0 %v3479
    %3511 = vmatpush1.bf16.msra.mxu0 %v3478
    %3512 = vmatprep.subr.bf16.mxu0 %v3481
    %3513 = vmatpush1.bf16.msra.mxu0 %v3480
    %3514 = vmatprep.subr.bf16.mxu0 0
    %3515 = vmatpush1.bf16.msra.mxu0 0
    %3516 = vmatprep.subr.bf16.mxu0 0
    %3517 = vmatpush1.bf16.msra.mxu0 0
    %3518 = vmatprep.subr.bf16.mxu0 0
    %3519 = vmatpush1.bf16.msra.mxu0 0
    %3520 = vmatprep.subr.bf16.mxu0 0
    %3521 = vmatpush1.bf16.msra.mxu0 0
    %3522 = vmatprep.subr.bf16.mxu0 0
    %3523 = vmatpush1.bf16.msra.mxu0 0
    %3524 = vmatprep.subr.bf16.mxu0 0
    %3525 = vmatpush1.bf16.msra.mxu0 0
    %3526 = vmatprep.subr.bf16.mxu0 0
    %3527 = vmatpush1.bf16.msra.mxu0 0
    %3528 = vmatprep.subr.bf16.mxu0 0
    %3529 = vmatpush1.bf16.msra.mxu0 0
    %3530 = vmatprep.mubr.bf16.mxu0 0
    %3531 = vmatmul.mubr.bf16.gmra.mrb[0].mxu0 %v3400
    %v3532 = vpop.f32.mrb[0].mxu0
    %v3533 = vadd.f32 0.0, %v3532
    %v3534 = vpop.f32.mrb[0].mxu0
    %v3535 = vadd.f32 0.0, %v3534
    %v3536 = vpop.f32.mrb[0].mxu0
    %v3537 = vpop.f32.mrb[0].mxu0
    %3538 = vdwg.mxu0
    %v3539 = vadd.f32 %v3353, %v3533
    %v3540 = vadd.f32 %v3354, %v3535
    %s3541 = scalar_lea.vmem %s8, 32
    %v3542 = vld [vmem:[%s3541] sm:$0xf]
    %v3544 = vsel %vm2059, %v3542, 0
    %3546 = vmatprep.subr.bf16.mxu0 0
    %3547 = vmatpush1.bf16.msra.mxu0 %v2056
    %3548 = vmatprep.subr.bf16.mxu0 0
    %3549 = vmatpush1.bf16.msra.mxu0 %v2057
    %3550 = vmatprep.subr.bf16.mxu0 0
    %3551 = vmatpush1.bf16.msra.mxu0 0
    %3552 = vmatprep.subr.bf16.mxu0 0
    %3553 = vmatpush1.bf16.msra.mxu0 0
    %3554 = vmatprep.subr.bf16.mxu0 0
    %3555 = vmatpush1.bf16.msra.mxu0 0
    %3556 = vmatprep.subr.bf16.mxu0 0
    %3557 = vmatpush1.bf16.msra.mxu0 0
    %3558 = vmatprep.subr.bf16.mxu0 0
    %3559 = vmatpush1.bf16.msra.mxu0 0
    %3560 = vmatprep.subr.bf16.mxu0 0
    %3561 = vmatpush1.bf16.msra.mxu0 0
    %3562 = vmatprep.subr.bf16.mxu0 0
    %3563 = vmatpush1.bf16.msra.mxu0 0
    %3564 = vmatprep.subr.bf16.mxu0 0
    %3565 = vmatpush1.bf16.msra.mxu0 0
    %3566 = vmatprep.subr.bf16.mxu0 0
    %3567 = vmatpush1.bf16.msra.mxu0 0
    %3568 = vmatprep.subr.bf16.mxu0 0
    %3569 = vmatpush1.bf16.msra.mxu0 0
    %3570 = vmatprep.subr.bf16.mxu0 0
    %3571 = vmatpush1.bf16.msra.mxu0 0
    %3572 = vmatprep.subr.bf16.mxu0 0
    %3573 = vmatpush1.bf16.msra.mxu0 0
    %3574 = vmatprep.subr.bf16.mxu0 0
    %3575 = vmatpush1.bf16.msra.mxu0 0
    %3576 = vmatprep.subr.bf16.mxu0 0
    %3577 = vmatpush1.bf16.msra.mxu0 0
    %3578 = vmatprep.mubr.bf16.mxu0 0
    %3579 = vmatmul.mubr.bf16.gmra.mrb[0].mxu0 %v3544
    %v3580 = vpop.f32.mrb[0].mxu0
    %v3581 = vadd.f32 0.0, %v3580
    %v3582 = vpop.f32.mrb[0].mxu0
    %v3583 = vpop.f32.mrb[0].mxu0
    %v3584 = vpop.f32.mrb[0].mxu0
    %3585 = vdwg.mxu0
    %v3586 = vpack.c.bf16 %v3581, %v3581
    %s3587 = scalar_lea.vmem %s9, 1024
    %v3588 = vld [vmem:[%s3587] sm:$0xff]
    %v3589 = vld [vmem:[%s3587 + $0x8] sm:$0xff]
    %v3590 = vld [vmem:[%s3587 + $0x10] sm:$0xff]
    %v3591 = vld [vmem:[%s3587 + $0x18] sm:$0xff]
    %v3592 = vld [vmem:[%s3587 + $0x20] sm:$0xff]
    %v3593 = vld [vmem:[%s3587 + $0x28] sm:$0xff]
    %v3594 = vld [vmem:[%s3587 + $0x30] sm:$0xff]
    %v3595 = vld [vmem:[%s3587 + $0x38] sm:$0xff]
    %v3596 = vld [vmem:[%s3587 + $0x40] sm:$0xff]
    %v3597 = vld [vmem:[%s3587 + $0x48] sm:$0xff]
    %v3598 = vld [vmem:[%s3587 + $0x50] sm:$0xff]
    %v3599 = vld [vmem:[%s3587 + $0x58] sm:$0xff]
    %v3600 = vld [vmem:[%s3587 + $0x60] sm:$0xff]
    %v3601 = vld [vmem:[%s3587 + $0x68] sm:$0xff]
    %v3602 = vld [vmem:[%s3587 + $0x70] sm:$0xff]
    %v3603 = vld [vmem:[%s3587 + $0x78] sm:$0xff]
    %v3620 = vunpack.c.l.b16 %v3588
    %v3621 = vunpack.c.h.b16 %v3588
    %v3622 = vunpack.c.l.b16 %v3589
    %v3623 = vunpack.c.h.b16 %v3589
    %v3624 = vunpack.c.l.b16 %v3590
    %v3625 = vunpack.c.h.b16 %v3590
    %v3626 = vunpack.c.l.b16 %v3591
    %v3627 = vunpack.c.h.b16 %v3591
    %v3628 = vunpack.c.l.b16 %v3592
    %v3629 = vunpack.c.h.b16 %v3592
    %v3630 = vunpack.c.l.b16 %v3593
    %v3631 = vunpack.c.h.b16 %v3593
    %v3632 = vunpack.c.l.b16 %v3594
    %v3633 = vunpack.c.h.b16 %v3594
    %v3634 = vunpack.c.l.b16 %v3595
    %v3635 = vunpack.c.h.b16 %v3595
    %v3636 = vunpack.c.l.b16 %v3596
    %v3637 = vunpack.c.h.b16 %v3596
    %v3638 = vunpack.c.l.b16 %v3597
    %v3639 = vunpack.c.h.b16 %v3597
    %v3640 = vunpack.c.l.b16 %v3598
    %v3641 = vunpack.c.h.b16 %v3598
    %v3642 = vunpack.c.l.b16 %v3599
    %v3643 = vunpack.c.h.b16 %v3599
    %v3644 = vunpack.c.l.b16 %v3600
    %v3645 = vunpack.c.h.b16 %v3600
    %v3646 = vunpack.c.l.b16 %v3601
    %v3647 = vunpack.c.h.b16 %v3601
    %v3648 = vunpack.c.l.b16 %v3602
    %v3649 = vunpack.c.h.b16 %v3602
    %v3650 = vunpack.c.l.b16 %v3603
    %v3651 = vunpack.c.h.b16 %v3603
    %v3652 = vpack.c.b16 %v3622, %v3620
    %v3653 = vpack.c.b16 %v3623, %v3621
    %v3654 = vpack.c.b16 %v3626, %v3624
    %v3655 = vpack.c.b16 %v3627, %v3625
    %v3656 = vpack.c.b16 %v3630, %v3628
    %v3657 = vpack.c.b16 %v3631, %v3629
    %v3658 = vpack.c.b16 %v3634, %v3632
    %v3659 = vpack.c.b16 %v3635, %v3633
    %v3660 = vpack.c.b16 %v3638, %v3636
    %v3661 = vpack.c.b16 %v3639, %v3637
    %v3662 = vpack.c.b16 %v3642, %v3640
    %v3663 = vpack.c.b16 %v3643, %v3641
    %v3664 = vpack.c.b16 %v3646, %v3644
    %v3665 = vpack.c.b16 %v3647, %v3645
    %v3666 = vpack.c.b16 %v3650, %v3648
    %v3667 = vpack.c.b16 %v3651, %v3649
    %3684 = vmatprep.subr.bf16.mxu0 %v3653
    %3685 = vmatpush1.bf16.msra.mxu0 %v3652
    %3686 = vmatprep.subr.bf16.mxu0 %v3655
    %3687 = vmatpush1.bf16.msra.mxu0 %v3654
    %3688 = vmatprep.subr.bf16.mxu0 %v3657
    %3689 = vmatpush1.bf16.msra.mxu0 %v3656
    %3690 = vmatprep.subr.bf16.mxu0 %v3659
    %3691 = vmatpush1.bf16.msra.mxu0 %v3658
    %3692 = vmatprep.subr.bf16.mxu0 %v3661
    %3693 = vmatpush1.bf16.msra.mxu0 %v3660
    %3694 = vmatprep.subr.bf16.mxu0 %v3663
    %3695 = vmatpush1.bf16.msra.mxu0 %v3662
    %3696 = vmatprep.subr.bf16.mxu0 %v3665
    %3697 = vmatpush1.bf16.msra.mxu0 %v3664
    %3698 = vmatprep.subr.bf16.mxu0 %v3667
    %3699 = vmatpush1.bf16.msra.mxu0 %v3666
    %3700 = vmatprep.subr.bf16.mxu0 0
    %3701 = vmatpush1.bf16.msra.mxu0 0
    %3702 = vmatprep.subr.bf16.mxu0 0
    %3703 = vmatpush1.bf16.msra.mxu0 0
    %3704 = vmatprep.subr.bf16.mxu0 0
    %3705 = vmatpush1.bf16.msra.mxu0 0
    %3706 = vmatprep.subr.bf16.mxu0 0
    %3707 = vmatpush1.bf16.msra.mxu0 0
    %3708 = vmatprep.subr.bf16.mxu0 0
    %3709 = vmatpush1.bf16.msra.mxu0 0
    %3710 = vmatprep.subr.bf16.mxu0 0
    %3711 = vmatpush1.bf16.msra.mxu0 0
    %3712 = vmatprep.subr.bf16.mxu0 0
    %3713 = vmatpush1.bf16.msra.mxu0 0
    %3714 = vmatprep.subr.bf16.mxu0 0
    %3715 = vmatpush1.bf16.msra.mxu0 0
    %3716 = vmatprep.mubr.bf16.mxu0 0
    %3717 = vmatmul.mubr.bf16.gmra.mrb[0].mxu0 %v3586
    %v3718 = vpop.f32.mrb[0].mxu0
    %v3719 = vadd.f32 0.0, %v3718
    %v3720 = vpop.f32.mrb[0].mxu0
    %v3721 = vadd.f32 0.0, %v3720
    %v3722 = vpop.f32.mrb[0].mxu0
    %v3723 = vpop.f32.mrb[0].mxu0
    %3724 = vdwg.mxu0
    %v3725 = vadd.f32 %v3539, %v3719
    %v3726 = vadd.f32 %v3540, %v3721
    %v3727 = vrot.slane %v3725, 4
    %v3728 = vadd.f32 %v3725, %v3727
    %v3729 = vrot.slane %v3728, 2
    %v3730 = vadd.f32 %v3728, %v3729
    %v3731 = vrot.slane %v3730, 1
    %v3732 = vadd.f32 %v3730, %v3731
    %v3733 = vrot.slane %v3726, 4
    %v3734 = vadd.f32 %v3726, %v3733
    %v3735 = vrot.slane %v3734, 2
    %v3736 = vadd.f32 %v3734, %v3735
    %v3737 = vrot.slane %v3736, 1
    %v3738 = vadd.f32 %v3736, %v3737
    %v3739 = vrcp.pop 8.0
    %v3740 = vmul.f32 %v3732, %v3739
    %v3741 = vmul.f32 %v3738, %v3739
    %v3742 = vmul.f32 %v3725, %v3725
    %v3743 = vmul.f32 %v3726, %v3726
    %v3744 = vrot.slane %v3742, 4
    %v3745 = vadd.f32 %v3742, %v3744
    %v3746 = vrot.slane %v3745, 2
    %v3747 = vadd.f32 %v3745, %v3746
    %v3748 = vrot.slane %v3747, 1
    %v3749 = vadd.f32 %v3747, %v3748
    %v3750 = vrot.slane %v3743, 4
    %v3751 = vadd.f32 %v3743, %v3750
    %v3752 = vrot.slane %v3751, 2
    %v3753 = vadd.f32 %v3751, %v3752
    %v3754 = vrot.slane %v3753, 1
    %v3755 = vadd.f32 %v3753, %v3754
    %v3756 = vmul.f32 %v3749, %v3739
    %v3757 = vmul.f32 %v3755, %v3739
    %v3758 = vmul.f32 %v3740, %v3740
    %v3759 = vmul.f32 %v3741, %v3741
    %v3760 = vsub.f32 %v3756, %v3758
    %v3761 = vsub.f32 %v3757, %v3759
    %v3762 = vld [vmem:[%s10] sm:$0x3]
    %v3763 = vadd.f32 %v3760, 1e-05
    %v3764 = vadd.f32 %v3761, 1e-05
    %v3765 = vrsqrt.pop %v3763
    %v3766 = vrsqrt.pop %v3764
    %v3769 = vcombine.low %v3765, %v3766
    %v3771 = vunpack.c.l.s4 1966171168
    %v3772 = vunpack.c.0.s8 %v3771
    %v3773 = vlaneseq
    %v3774 = vshrl.u32 %v3773, 7
    %v3775 = vsub.s32 %v3772, %v3774
    %v3776 = vrot.slane %v3769, %v3775
    %v3778 = vunpack.c.l.s4 1966171168
    %v3779 = vunpack.c.0.s8 %v3778
    %v3780 = vlaneseq
    %v3781 = vshrl.u32 %v3780, 7
    %v3782 = vsub.s32 %v3779, %v3781
    %v3783 = vrot.slane %v3776, %v3782
    %v3785 = vmul.f32 %v3762, %v3783
    %v3786 = vld [vmem:[%s11] sm:$0x3]
    %v3788 = vlaneseq
    %v3789 = vshrl.u32 %v3788, 7
    %v3790 = vsub.s32 0, %v3789
    %v3791 = vrot.slane %v3785, %v3790
    %v3792 = vlaneseq
    %v3793 = vshrl.u32 %v3792, 7
    %v3794 = vsub.s32 1, %v3793
    %v3795 = vrot.slane %v3785, %v3794
    %v3798 = vmul.f32 %v3740, %v3791
    %v3799 = vmul.f32 %v3741, %v3795
    %v3802 = vcombine.low %v3798, %v3799
    %v3804 = vunpack.c.l.s4 1966171168
    %v3805 = vunpack.c.0.s8 %v3804
    %v3806 = vlaneseq
    %v3807 = vshrl.u32 %v3806, 7
    %v3808 = vsub.s32 %v3805, %v3807
    %v3809 = vrot.slane %v3802, %v3808
    %v3811 = vunpack.c.l.s4 1966171168
    %v3812 = vunpack.c.0.s8 %v3811
    %v3813 = vlaneseq
    %v3814 = vshrl.u32 %v3813, 7
    %v3815 = vsub.s32 %v3812, %v3814
    %v3816 = vrot.slane %v3809, %v3815
    %v3818 = vsub.f32 %v3786, %v3816
    %v3819 = vmul.f32 %v3725, %v3791
    %v3820 = vmul.f32 %v3726, %v3795
    %v3822 = vlaneseq
    %v3823 = vshrl.u32 %v3822, 7
    %v3824 = vsub.s32 0, %v3823
    %v3825 = vrot.slane %v3818, %v3824
    %v3826 = vlaneseq
    %v3827 = vshrl.u32 %v3826, 7
    %v3828 = vsub.s32 1, %v3827
    %v3829 = vrot.slane %v3818, %v3828
    %v3832 = vadd.f32 %v3819, %v3825
    %v3833 = vadd.f32 %v3820, %v3829
    %v3834 = vmax.f32 %v3832, 0.0
    %v3835 = vmax.f32 %v3833, 0.0
    %v3836 = vpack.c.bf16 %v3834, %v3834
    %v3837 = vpack.c.bf16 %v3835, %v3835
    %v3838 = vld [vmem:[%s12] sm:$0x1]
    %vm3839 = vcmask 64512
    %v3841 = vsel %vm3839, %v3838, 0
    %vm3843 = vcmask 1043456
    %v3845 = vsel %vm3843, %v3836, 0
    %v3848 = vsel %vm3843, %v3837, 0
    %3850 = vmatprep.subr.bf16.mxu0 %v3848
    %3851 = vmatpush1.bf16.msra.mxu0 %v3845
    %3852 = vmatprep.subr.bf16.mxu0 0
    %3853 = vmatpush1.bf16.msra.mxu0 0
    %3854 = vmatprep.subr.bf16.mxu0 0
    %3855 = vmatpush1.bf16.msra.mxu0 0
    %3856 = vmatprep.subr.bf16.mxu0 0
    %3857 = vmatpush1.bf16.msra.mxu0 0
    %3858 = vmatprep.subr.bf16.mxu0 0
    %3859 = vmatpush1.bf16.msra.mxu0 0
    %3860 = vmatprep.subr.bf16.mxu0 0
    %3861 = vmatpush1.bf16.msra.mxu0 0
    %3862 = vmatprep.subr.bf16.mxu0 0
    %3863 = vmatpush1.bf16.msra.mxu0 0
    %3864 = vmatprep.subr.bf16.mxu0 0
    %3865 = vmatpush1.bf16.msra.mxu0 0
    %3866 = vmatprep.subr.bf16.mxu0 0
    %3867 = vmatpush1.bf16.msra.mxu0 0
    %3868 = vmatprep.subr.bf16.mxu0 0
    %3869 = vmatpush1.bf16.msra.mxu0 0
    %3870 = vmatprep.subr.bf16.mxu0 0
    %3871 = vmatpush1.bf16.msra.mxu0 0
    %3872 = vmatprep.subr.bf16.mxu0 0
    %3873 = vmatpush1.bf16.msra.mxu0 0
    %3874 = vmatprep.subr.bf16.mxu0 0
    %3875 = vmatpush1.bf16.msra.mxu0 0
    %3876 = vmatprep.subr.bf16.mxu0 0
    %3877 = vmatpush1.bf16.msra.mxu0 0
    %3878 = vmatprep.subr.bf16.mxu0 0
    %3879 = vmatpush1.bf16.msra.mxu0 0
    %3880 = vmatprep.subr.bf16.mxu0 0
    %3881 = vmatpush1.bf16.msra.mxu0 0
    %3882 = vmatprep.mubr.bf16.mxu0 0
    %3883 = vmatmul.mubr.bf16.gmra.mrb[0].mxu0 %v3841
    %v3884 = vpop.f32.mrb[0].mxu0
    %v3885 = vadd.f32 0.0, %v3884
    %v3886 = vpop.f32.mrb[0].mxu0
    %v3887 = vadd.f32 0.0, %v3886
    %v3888 = vpop.f32.mrb[0].mxu0
    %v3889 = vpop.f32.mrb[0].mxu0
    %3890 = vdwg.mxu0
    %v3891 = vpack.c.bf16 %v3885, %v3885
    %v3892 = vpack.c.bf16 %v3887, %v3887
    %v3893 = vld [vmem:[%s13] sm:$0xff]
    %v3894 = vld [vmem:[%s13 + $0x8] sm:$0xff]
    %v3895 = vld [vmem:[%s13 + $0x10] sm:$0xff]
    %v3896 = vld [vmem:[%s13 + $0x18] sm:$0xff]
    %v3897 = vld [vmem:[%s13 + $0x20] sm:$0xff]
    %v3898 = vld [vmem:[%s13 + $0x28] sm:$0xff]
    %v3899 = vld [vmem:[%s13 + $0x30] sm:$0xff]
    %v3900 = vld [vmem:[%s13 + $0x38] sm:$0xff]
    %v3901 = vld [vmem:[%s13 + $0x40] sm:$0xff]
    %v3902 = vld [vmem:[%s13 + $0x48] sm:$0xff]
    %v3903 = vld [vmem:[%s13 + $0x50] sm:$0xff]
    %v3904 = vld [vmem:[%s13 + $0x58] sm:$0xff]
    %v3905 = vld [vmem:[%s13 + $0x60] sm:$0xff]
    %v3906 = vld [vmem:[%s13 + $0x68] sm:$0xff]
    %v3907 = vld [vmem:[%s13 + $0x70] sm:$0xff]
    %v3908 = vld [vmem:[%s13 + $0x78] sm:$0xff]
    %v3909 = vld [vmem:[%s13 + $0x80] sm:$0xff]
    %v3910 = vld [vmem:[%s13 + $0x88] sm:$0xff]
    %v3911 = vld [vmem:[%s13 + $0x90] sm:$0xff]
    %v3912 = vld [vmem:[%s13 + $0x98] sm:$0xff]
    %v3913 = vld [vmem:[%s13 + $0xa0] sm:$0xff]
    %v3914 = vld [vmem:[%s13 + $0xa8] sm:$0xff]
    %v3915 = vld [vmem:[%s13 + $0xb0] sm:$0xff]
    %v3916 = vld [vmem:[%s13 + $0xb8] sm:$0xff]
    %v3917 = vld [vmem:[%s13 + $0xc0] sm:$0xff]
    %v3918 = vld [vmem:[%s13 + $0xc8] sm:$0xff]
    %v3919 = vld [vmem:[%s13 + $0xd0] sm:$0xff]
    %v3920 = vld [vmem:[%s13 + $0xd8] sm:$0xff]
    %v3921 = vld [vmem:[%s13 + $0xe0] sm:$0xff]
    %v3922 = vld [vmem:[%s13 + $0xe8] sm:$0xff]
    %v3923 = vld [vmem:[%s13 + $0xf0] sm:$0xff]
    %v3924 = vld [vmem:[%s13 + $0xf8] sm:$0xff]
    %s3925 = scalar_lea.vmem %s12, 1
    %v3926 = vld [vmem:[%s3925] sm:$0x1]
    %v3928 = vsel %vm3839, %v3926, 0
    %3930 = vmatprep.subr.bf16.mxu0 %v3848
    %3931 = vmatpush1.bf16.msra.mxu0 %v3845
    %3932 = vmatprep.subr.bf16.mxu0 0
    %3933 = vmatpush1.bf16.msra.mxu0 0
    %3934 = vmatprep.subr.bf16.mxu0 0
    %3935 = vmatpush1.bf16.msra.mxu0 0
    %3936 = vmatprep.subr.bf16.mxu0 0
    %3937 = vmatpush1.bf16.msra.mxu0 0
    %3938 = vmatprep.subr.bf16.mxu0 0
    %3939 = vmatpush1.bf16.msra.mxu0 0
    %3940 = vmatprep.subr.bf16.mxu0 0
    %3941 = vmatpush1.bf16.msra.mxu0 0
    %3942 = vmatprep.subr.bf16.mxu0 0
    %3943 = vmatpush1.bf16.msra.mxu0 0
    %3944 = vmatprep.subr.bf16.mxu0 0
    %3945 = vmatpush1.bf16.msra.mxu0 0
    %3946 = vmatprep.subr.bf16.mxu0 0
    %3947 = vmatpush1.bf16.msra.mxu0 0
    %3948 = vmatprep.subr.bf16.mxu0 0
    %3949 = vmatpush1.bf16.msra.mxu0 0
    %3950 = vmatprep.subr.bf16.mxu0 0
    %3951 = vmatpush1.bf16.msra.mxu0 0
    %3952 = vmatprep.subr.bf16.mxu0 0
    %3953 = vmatpush1.bf16.msra.mxu0 0
    %3954 = vmatprep.subr.bf16.mxu0 0
    %3955 = vmatpush1.bf16.msra.mxu0 0
    %3956 = vmatprep.subr.bf16.mxu0 0
    %3957 = vmatpush1.bf16.msra.mxu0 0
    %3958 = vmatprep.subr.bf16.mxu0 0
    %3959 = vmatpush1.bf16.msra.mxu0 0
    %3960 = vmatprep.subr.bf16.mxu0 0
    %3961 = vmatpush1.bf16.msra.mxu0 0
    %3962 = vmatprep.mubr.bf16.mxu0 0
    %3963 = vmatmul.mubr.bf16.gmra.mrb[0].mxu0 %v3928
    %v3964 = vpop.f32.mrb[0].mxu0
    %v3965 = vadd.f32 0.0, %v3964
    %v3966 = vpop.f32.mrb[0].mxu0
    %v3967 = vadd.f32 0.0, %v3966
    %v3968 = vpop.f32.mrb[0].mxu0
    %v3969 = vpop.f32.mrb[0].mxu0
    %3970 = vdwg.mxu0
    %v3971 = vpack.c.bf16 %v3965, %v3965
    %v3972 = vpack.c.bf16 %v3967, %v3967
    %s3973 = scalar_lea.vmem %s13, 256
    %v3974 = vld [vmem:[%s3973] sm:$0xff]
    %v3975 = vld [vmem:[%s3973 + $0x8] sm:$0xff]
    %v3976 = vld [vmem:[%s3973 + $0x10] sm:$0xff]
    %v3977 = vld [vmem:[%s3973 + $0x18] sm:$0xff]
    %v3978 = vld [vmem:[%s3973 + $0x20] sm:$0xff]
    %v3979 = vld [vmem:[%s3973 + $0x28] sm:$0xff]
    %v3980 = vld [vmem:[%s3973 + $0x30] sm:$0xff]
    %v3981 = vld [vmem:[%s3973 + $0x38] sm:$0xff]
    %v3982 = vld [vmem:[%s3973 + $0x40] sm:$0xff]
    %v3983 = vld [vmem:[%s3973 + $0x48] sm:$0xff]
    %v3984 = vld [vmem:[%s3973 + $0x50] sm:$0xff]
    %v3985 = vld [vmem:[%s3973 + $0x58] sm:$0xff]
    %v3986 = vld [vmem:[%s3973 + $0x60] sm:$0xff]
    %v3987 = vld [vmem:[%s3973 + $0x68] sm:$0xff]
    %v3988 = vld [vmem:[%s3973 + $0x70] sm:$0xff]
    %v3989 = vld [vmem:[%s3973 + $0x78] sm:$0xff]
    %v3990 = vld [vmem:[%s3973 + $0x80] sm:$0xff]
    %v3991 = vld [vmem:[%s3973 + $0x88] sm:$0xff]
    %v3992 = vld [vmem:[%s3973 + $0x90] sm:$0xff]
    %v3993 = vld [vmem:[%s3973 + $0x98] sm:$0xff]
    %v3994 = vld [vmem:[%s3973 + $0xa0] sm:$0xff]
    %v3995 = vld [vmem:[%s3973 + $0xa8] sm:$0xff]
    %v3996 = vld [vmem:[%s3973 + $0xb0] sm:$0xff]
    %v3997 = vld [vmem:[%s3973 + $0xb8] sm:$0xff]
    %v3998 = vld [vmem:[%s3973 + $0xc0] sm:$0xff]
    %v3999 = vld [vmem:[%s3973 + $0xc8] sm:$0xff]
    %v4000 = vld [vmem:[%s3973 + $0xd0] sm:$0xff]
    %v4001 = vld [vmem:[%s3973 + $0xd8] sm:$0xff]
    %v4002 = vld [vmem:[%s3973 + $0xe0] sm:$0xff]
    %v4003 = vld [vmem:[%s3973 + $0xe8] sm:$0xff]
    %v4004 = vld [vmem:[%s3973 + $0xf0] sm:$0xff]
    %v4005 = vld [vmem:[%s3973 + $0xf8] sm:$0xff]
    %v4038 = vunpack.c.l.b16 %v3974
    %v4039 = vunpack.c.h.b16 %v3974
    %v4040 = vunpack.c.l.b16 %v3975
    %v4041 = vunpack.c.h.b16 %v3975
    %v4042 = vunpack.c.l.b16 %v3976
    %v4043 = vunpack.c.h.b16 %v3976
    %v4044 = vunpack.c.l.b16 %v3977
    %v4045 = vunpack.c.h.b16 %v3977
    %v4046 = vunpack.c.l.b16 %v3978
    %v4047 = vunpack.c.h.b16 %v3978
    %v4048 = vunpack.c.l.b16 %v3979
    %v4049 = vunpack.c.h.b16 %v3979
    %v4050 = vunpack.c.l.b16 %v3980
    %v4051 = vunpack.c.h.b16 %v3980
    %v4052 = vunpack.c.l.b16 %v3981
    %v4053 = vunpack.c.h.b16 %v3981
    %v4054 = vunpack.c.l.b16 %v3982
    %v4055 = vunpack.c.h.b16 %v3982
    %v4056 = vunpack.c.l.b16 %v3983
    %v4057 = vunpack.c.h.b16 %v3983
    %v4058 = vunpack.c.l.b16 %v3984
    %v4059 = vunpack.c.h.b16 %v3984
    %v4060 = vunpack.c.l.b16 %v3985
    %v4061 = vunpack.c.h.b16 %v3985
    %v4062 = vunpack.c.l.b16 %v3986
    %v4063 = vunpack.c.h.b16 %v3986
    %v4064 = vunpack.c.l.b16 %v3987
    %v4065 = vunpack.c.h.b16 %v3987
    %v4066 = vunpack.c.l.b16 %v3988
    %v4067 = vunpack.c.h.b16 %v3988
    %v4068 = vunpack.c.l.b16 %v3989
    %v4069 = vunpack.c.h.b16 %v3989
    %v4070 = vunpack.c.l.b16 %v3990
    %v4071 = vunpack.c.h.b16 %v3990
    %v4072 = vunpack.c.l.b16 %v3991
    %v4073 = vunpack.c.h.b16 %v3991
    %v4074 = vunpack.c.l.b16 %v3992
    %v4075 = vunpack.c.h.b16 %v3992
    %v4076 = vunpack.c.l.b16 %v3993
    %v4077 = vunpack.c.h.b16 %v3993
    %v4078 = vunpack.c.l.b16 %v3994
    %v4079 = vunpack.c.h.b16 %v3994
    %v4080 = vunpack.c.l.b16 %v3995
    %v4081 = vunpack.c.h.b16 %v3995
    %v4082 = vunpack.c.l.b16 %v3996
    %v4083 = vunpack.c.h.b16 %v3996
    %v4084 = vunpack.c.l.b16 %v3997
    %v4085 = vunpack.c.h.b16 %v3997
    %v4086 = vunpack.c.l.b16 %v3998
    %v4087 = vunpack.c.h.b16 %v3998
    %v4088 = vunpack.c.l.b16 %v3999
    %v4089 = vunpack.c.h.b16 %v3999
    %v4090 = vunpack.c.l.b16 %v4000
    %v4091 = vunpack.c.h.b16 %v4000
    %v4092 = vunpack.c.l.b16 %v4001
    %v4093 = vunpack.c.h.b16 %v4001
    %v4094 = vunpack.c.l.b16 %v4002
    %v4095 = vunpack.c.h.b16 %v4002
    %v4096 = vunpack.c.l.b16 %v4003
    %v4097 = vunpack.c.h.b16 %v4003
    %v4098 = vunpack.c.l.b16 %v4004
    %v4099 = vunpack.c.h.b16 %v4004
    %v4100 = vunpack.c.l.b16 %v4005
    %v4101 = vunpack.c.h.b16 %v4005
    %v4102 = vpack.c.b16 %v4040, %v4038
    %v4103 = vpack.c.b16 %v4041, %v4039
    %v4104 = vpack.c.b16 %v4044, %v4042
    %v4105 = vpack.c.b16 %v4045, %v4043
    %v4106 = vpack.c.b16 %v4048, %v4046
    %v4107 = vpack.c.b16 %v4049, %v4047
    %v4108 = vpack.c.b16 %v4052, %v4050
    %v4109 = vpack.c.b16 %v4053, %v4051
    %v4110 = vpack.c.b16 %v4056, %v4054
    %v4111 = vpack.c.b16 %v4057, %v4055
    %v4112 = vpack.c.b16 %v4060, %v4058
    %v4113 = vpack.c.b16 %v4061, %v4059
    %v4114 = vpack.c.b16 %v4064, %v4062
    %v4115 = vpack.c.b16 %v4065, %v4063
    %v4116 = vpack.c.b16 %v4068, %v4066
    %v4117 = vpack.c.b16 %v4069, %v4067
    %v4118 = vpack.c.b16 %v4072, %v4070
    %v4119 = vpack.c.b16 %v4073, %v4071
    %v4120 = vpack.c.b16 %v4076, %v4074
    %v4121 = vpack.c.b16 %v4077, %v4075
    %v4122 = vpack.c.b16 %v4080, %v4078
    %v4123 = vpack.c.b16 %v4081, %v4079
    %v4124 = vpack.c.b16 %v4084, %v4082
    %v4125 = vpack.c.b16 %v4085, %v4083
    %v4126 = vpack.c.b16 %v4088, %v4086
    %v4127 = vpack.c.b16 %v4089, %v4087
    %v4128 = vpack.c.b16 %v4092, %v4090
    %v4129 = vpack.c.b16 %v4093, %v4091
    %v4130 = vpack.c.b16 %v4096, %v4094
    %v4131 = vpack.c.b16 %v4097, %v4095
    %v4132 = vpack.c.b16 %v4100, %v4098
    %v4133 = vpack.c.b16 %v4101, %v4099
    %4166 = vmatprep.subr.bf16.mxu0 %v4103
    %4167 = vmatpush1.bf16.msra.mxu0 %v4102
    %4168 = vmatprep.subr.bf16.mxu0 %v4105
    %4169 = vmatpush1.bf16.msra.mxu0 %v4104
    %4170 = vmatprep.subr.bf16.mxu0 %v4107
    %4171 = vmatpush1.bf16.msra.mxu0 %v4106
    %4172 = vmatprep.subr.bf16.mxu0 %v4109
    %4173 = vmatpush1.bf16.msra.mxu0 %v4108
    %4174 = vmatprep.subr.bf16.mxu0 %v4111
    %4175 = vmatpush1.bf16.msra.mxu0 %v4110
    %4176 = vmatprep.subr.bf16.mxu0 %v4113
    %4177 = vmatpush1.bf16.msra.mxu0 %v4112
    %4178 = vmatprep.subr.bf16.mxu0 %v4115
    %4179 = vmatpush1.bf16.msra.mxu0 %v4114
    %4180 = vmatprep.subr.bf16.mxu0 %v4117
    %4181 = vmatpush1.bf16.msra.mxu0 %v4116
    %4182 = vmatprep.subr.bf16.mxu0 %v4119
    %4183 = vmatpush1.bf16.msra.mxu0 %v4118
    %4184 = vmatprep.subr.bf16.mxu0 %v4121
    %4185 = vmatpush1.bf16.msra.mxu0 %v4120
    %4186 = vmatprep.subr.bf16.mxu0 %v4123
    %4187 = vmatpush1.bf16.msra.mxu0 %v4122
    %4188 = vmatprep.subr.bf16.mxu0 %v4125
    %4189 = vmatpush1.bf16.msra.mxu0 %v4124
    %4190 = vmatprep.subr.bf16.mxu0 %v4127
    %4191 = vmatpush1.bf16.msra.mxu0 %v4126
    %4192 = vmatprep.subr.bf16.mxu0 %v4129
    %4193 = vmatpush1.bf16.msra.mxu0 %v4128
    %4194 = vmatprep.subr.bf16.mxu0 %v4131
    %4195 = vmatpush1.bf16.msra.mxu0 %v4130
    %4196 = vmatprep.subr.bf16.mxu0 %v4133
    %4197 = vmatpush1.bf16.msra.mxu0 %v4132
    %4198 = vmatprep.mubr.bf16.mxu0 %v3972
    %4199 = vmatmul.mubr.bf16.gmra.mrb[0].mxu0 %v3971
    %v4200 = vpop.f32.mrb[0].mxu0
    %v4201 = vadd.f32 0.0, %v4200
    %v4202 = vpop.f32.mrb[0].mxu0
    %v4203 = vadd.f32 0.0, %v4202
    %v4204 = vpop.f32.mrb[0].mxu0
    %v4205 = vpop.f32.mrb[0].mxu0
    %4206 = vdwg.mxu0
    %v4239 = vunpack.c.l.b16 %v3893
    %v4240 = vunpack.c.h.b16 %v3893
    %v4241 = vunpack.c.l.b16 %v3894
    %v4242 = vunpack.c.h.b16 %v3894
    %v4243 = vunpack.c.l.b16 %v3895
    %v4244 = vunpack.c.h.b16 %v3895
    %v4245 = vunpack.c.l.b16 %v3896
    %v4246 = vunpack.c.h.b16 %v3896
    %v4247 = vunpack.c.l.b16 %v3897
    %v4248 = vunpack.c.h.b16 %v3897
    %v4249 = vunpack.c.l.b16 %v3898
    %v4250 = vunpack.c.h.b16 %v3898
    %v4251 = vunpack.c.l.b16 %v3899
    %v4252 = vunpack.c.h.b16 %v3899
    %v4253 = vunpack.c.l.b16 %v3900
    %v4254 = vunpack.c.h.b16 %v3900
    %v4255 = vunpack.c.l.b16 %v3901
    %v4256 = vunpack.c.h.b16 %v3901
    %v4257 = vunpack.c.l.b16 %v3902
    %v4258 = vunpack.c.h.b16 %v3902
    %v4259 = vunpack.c.l.b16 %v3903
    %v4260 = vunpack.c.h.b16 %v3903
    %v4261 = vunpack.c.l.b16 %v3904
    %v4262 = vunpack.c.h.b16 %v3904
    %v4263 = vunpack.c.l.b16 %v3905
    %v4264 = vunpack.c.h.b16 %v3905
    %v4265 = vunpack.c.l.b16 %v3906
    %v4266 = vunpack.c.h.b16 %v3906
    %v4267 = vunpack.c.l.b16 %v3907
    %v4268 = vunpack.c.h.b16 %v3907
    %v4269 = vunpack.c.l.b16 %v3908
    %v4270 = vunpack.c.h.b16 %v3908
    %v4271 = vunpack.c.l.b16 %v3909
    %v4272 = vunpack.c.h.b16 %v3909
    %v4273 = vunpack.c.l.b16 %v3910
    %v4274 = vunpack.c.h.b16 %v3910
    %v4275 = vunpack.c.l.b16 %v3911
    %v4276 = vunpack.c.h.b16 %v3911
    %v4277 = vunpack.c.l.b16 %v3912
    %v4278 = vunpack.c.h.b16 %v3912
    %v4279 = vunpack.c.l.b16 %v3913
    %v4280 = vunpack.c.h.b16 %v3913
    %v4281 = vunpack.c.l.b16 %v3914
    %v4282 = vunpack.c.h.b16 %v3914
    %v4283 = vunpack.c.l.b16 %v3915
    %v4284 = vunpack.c.h.b16 %v3915
    %v4285 = vunpack.c.l.b16 %v3916
    %v4286 = vunpack.c.h.b16 %v3916
    %v4287 = vunpack.c.l.b16 %v3917
    %v4288 = vunpack.c.h.b16 %v3917
    %v4289 = vunpack.c.l.b16 %v3918
    %v4290 = vunpack.c.h.b16 %v3918
    %v4291 = vunpack.c.l.b16 %v3919
    %v4292 = vunpack.c.h.b16 %v3919
    %v4293 = vunpack.c.l.b16 %v3920
    %v4294 = vunpack.c.h.b16 %v3920
    %v4295 = vunpack.c.l.b16 %v3921
    %v4296 = vunpack.c.h.b16 %v3921
    %v4297 = vunpack.c.l.b16 %v3922
    %v4298 = vunpack.c.h.b16 %v3922
    %v4299 = vunpack.c.l.b16 %v3923
    %v4300 = vunpack.c.h.b16 %v3923
    %v4301 = vunpack.c.l.b16 %v3924
    %v4302 = vunpack.c.h.b16 %v3924
    %v4303 = vpack.c.b16 %v4241, %v4239
    %v4304 = vpack.c.b16 %v4242, %v4240
    %v4305 = vpack.c.b16 %v4245, %v4243
    %v4306 = vpack.c.b16 %v4246, %v4244
    %v4307 = vpack.c.b16 %v4249, %v4247
    %v4308 = vpack.c.b16 %v4250, %v4248
    %v4309 = vpack.c.b16 %v4253, %v4251
    %v4310 = vpack.c.b16 %v4254, %v4252
    %v4311 = vpack.c.b16 %v4257, %v4255
    %v4312 = vpack.c.b16 %v4258, %v4256
    %v4313 = vpack.c.b16 %v4261, %v4259
    %v4314 = vpack.c.b16 %v4262, %v4260
    %v4315 = vpack.c.b16 %v4265, %v4263
    %v4316 = vpack.c.b16 %v4266, %v4264
    %v4317 = vpack.c.b16 %v4269, %v4267
    %v4318 = vpack.c.b16 %v4270, %v4268
    %v4319 = vpack.c.b16 %v4273, %v4271
    %v4320 = vpack.c.b16 %v4274, %v4272
    %v4321 = vpack.c.b16 %v4277, %v4275
    %v4322 = vpack.c.b16 %v4278, %v4276
    %v4323 = vpack.c.b16 %v4281, %v4279
    %v4324 = vpack.c.b16 %v4282, %v4280
    %v4325 = vpack.c.b16 %v4285, %v4283
    %v4326 = vpack.c.b16 %v4286, %v4284
    %v4327 = vpack.c.b16 %v4289, %v4287
    %v4328 = vpack.c.b16 %v4290, %v4288
    %v4329 = vpack.c.b16 %v4293, %v4291
    %v4330 = vpack.c.b16 %v4294, %v4292
    %v4331 = vpack.c.b16 %v4297, %v4295
    %v4332 = vpack.c.b16 %v4298, %v4296
    %v4333 = vpack.c.b16 %v4301, %v4299
    %v4334 = vpack.c.b16 %v4302, %v4300
    %4367 = vmatprep.subr.bf16.mxu0 %v4304
    %4368 = vmatpush1.bf16.msra.mxu0 %v4303
    %4369 = vmatprep.subr.bf16.mxu0 %v4306
    %4370 = vmatpush1.bf16.msra.mxu0 %v4305
    %4371 = vmatprep.subr.bf16.mxu0 %v4308
    %4372 = vmatpush1.bf16.msra.mxu0 %v4307
    %4373 = vmatprep.subr.bf16.mxu0 %v4310
    %4374 = vmatpush1.bf16.msra.mxu0 %v4309
    %4375 = vmatprep.subr.bf16.mxu0 %v4312
    %4376 = vmatpush1.bf16.msra.mxu0 %v4311
    %4377 = vmatprep.subr.bf16.mxu0 %v4314
    %4378 = vmatpush1.bf16.msra.mxu0 %v4313
    %4379 = vmatprep.subr.bf16.mxu0 %v4316
    %4380 = vmatpush1.bf16.msra.mxu0 %v4315
    %4381 = vmatprep.subr.bf16.mxu0 %v4318
    %4382 = vmatpush1.bf16.msra.mxu0 %v4317
    %4383 = vmatprep.subr.bf16.mxu0 %v4320
    %4384 = vmatpush1.bf16.msra.mxu0 %v4319
    %4385 = vmatprep.subr.bf16.mxu0 %v4322
    %4386 = vmatpush1.bf16.msra.mxu0 %v4321
    %4387 = vmatprep.subr.bf16.mxu0 %v4324
    %4388 = vmatpush1.bf16.msra.mxu0 %v4323
    %4389 = vmatprep.subr.bf16.mxu0 %v4326
    %4390 = vmatpush1.bf16.msra.mxu0 %v4325
    %4391 = vmatprep.subr.bf16.mxu0 %v4328
    %4392 = vmatpush1.bf16.msra.mxu0 %v4327
    %4393 = vmatprep.subr.bf16.mxu0 %v4330
    %4394 = vmatpush1.bf16.msra.mxu0 %v4329
    %4395 = vmatprep.subr.bf16.mxu0 %v4332
    %4396 = vmatpush1.bf16.msra.mxu0 %v4331
    %4397 = vmatprep.subr.bf16.mxu0 %v4334
    %4398 = vmatpush1.bf16.msra.mxu0 %v4333
    %4399 = vmatprep.mubr.bf16.mxu0 %v3892
    %4400 = vmatmul.mubr.bf16.gmra.mrb[0].mxu0 %v3891
    %v4401 = vpop.f32.mrb[0].mxu0
    %v4402 = vadd.f32 %v4201, %v4401
    %v4403 = vpop.f32.mrb[0].mxu0
    %v4404 = vadd.f32 %v4203, %v4403
    %v4405 = vpop.f32.mrb[0].mxu0
    %v4406 = vpop.f32.mrb[0].mxu0
    %4407 = vdwg.mxu0
    %s4408 = scalar_lea.vmem %s12, 2
    %v4409 = vld [vmem:[%s4408] sm:$0x1]
    %v4411 = vsel %vm3839, %v4409, 0
    %4413 = vmatprep.subr.bf16.mxu0 %v3848
    %4414 = vmatpush1.bf16.msra.mxu0 %v3845
    %4415 = vmatprep.subr.bf16.mxu0 0
    %4416 = vmatpush1.bf16.msra.mxu0 0
    %4417 = vmatprep.subr.bf16.mxu0 0
    %4418 = vmatpush1.bf16.msra.mxu0 0
    %4419 = vmatprep.subr.bf16.mxu0 0
    %4420 = vmatpush1.bf16.msra.mxu0 0
    %4421 = vmatprep.subr.bf16.mxu0 0
    %4422 = vmatpush1.bf16.msra.mxu0 0
    %4423 = vmatprep.subr.bf16.mxu0 0
    %4424 = vmatpush1.bf16.msra.mxu0 0
    %4425 = vmatprep.subr.bf16.mxu0 0
    %4426 = vmatpush1.bf16.msra.mxu0 0
    %4427 = vmatprep.subr.bf16.mxu0 0
    %4428 = vmatpush1.bf16.msra.mxu0 0
    %4429 = vmatprep.subr.bf16.mxu0 0
    %4430 = vmatpush1.bf16.msra.mxu0 0
    %4431 = vmatprep.subr.bf16.mxu0 0
    %4432 = vmatpush1.bf16.msra.mxu0 0
    %4433 = vmatprep.subr.bf16.mxu0 0
    %4434 = vmatpush1.bf16.msra.mxu0 0
    %4435 = vmatprep.subr.bf16.mxu0 0
    %4436 = vmatpush1.bf16.msra.mxu0 0
    %4437 = vmatprep.subr.bf16.mxu0 0
    %4438 = vmatpush1.bf16.msra.mxu0 0
    %4439 = vmatprep.subr.bf16.mxu0 0
    %4440 = vmatpush1.bf16.msra.mxu0 0
    %4441 = vmatprep.subr.bf16.mxu0 0
    %4442 = vmatpush1.bf16.msra.mxu0 0
    %4443 = vmatprep.subr.bf16.mxu0 0
    %4444 = vmatpush1.bf16.msra.mxu0 0
    %4445 = vmatprep.mubr.bf16.mxu0 0
    %4446 = vmatmul.mubr.bf16.gmra.mrb[0].mxu0 %v4411
    %v4447 = vpop.f32.mrb[0].mxu0
    %v4448 = vadd.f32 0.0, %v4447
    %v4449 = vpop.f32.mrb[0].mxu0
    %v4450 = vadd.f32 0.0, %v4449
    %v4451 = vpop.f32.mrb[0].mxu0
    %v4452 = vpop.f32.mrb[0].mxu0
    %4453 = vdwg.mxu0
    %v4454 = vpack.c.bf16 %v4448, %v4448
    %v4455 = vpack.c.bf16 %v4450, %v4450
    %s4456 = scalar_lea.vmem %s13, 512
    %v4457 = vld [vmem:[%s4456] sm:$0xff]
    %v4458 = vld [vmem:[%s4456 + $0x8] sm:$0xff]
    %v4459 = vld [vmem:[%s4456 + $0x10] sm:$0xff]
    %v4460 = vld [vmem:[%s4456 + $0x18] sm:$0xff]
    %v4461 = vld [vmem:[%s4456 + $0x20] sm:$0xff]
    %v4462 = vld [vmem:[%s4456 + $0x28] sm:$0xff]
    %v4463 = vld [vmem:[%s4456 + $0x30] sm:$0xff]
    %v4464 = vld [vmem:[%s4456 + $0x38] sm:$0xff]
    %v4465 = vld [vmem:[%s4456 + $0x40] sm:$0xff]
    %v4466 = vld [vmem:[%s4456 + $0x48] sm:$0xff]
    %v4467 = vld [vmem:[%s4456 + $0x50] sm:$0xff]
    %v4468 = vld [vmem:[%s4456 + $0x58] sm:$0xff]
    %v4469 = vld [vmem:[%s4456 + $0x60] sm:$0xff]
    %v4470 = vld [vmem:[%s4456 + $0x68] sm:$0xff]
    %v4471 = vld [vmem:[%s4456 + $0x70] sm:$0xff]
    %v4472 = vld [vmem:[%s4456 + $0x78] sm:$0xff]
    %v4473 = vld [vmem:[%s4456 + $0x80] sm:$0xff]
    %v4474 = vld [vmem:[%s4456 + $0x88] sm:$0xff]
    %v4475 = vld [vmem:[%s4456 + $0x90] sm:$0xff]
    %v4476 = vld [vmem:[%s4456 + $0x98] sm:$0xff]
    %v4477 = vld [vmem:[%s4456 + $0xa0] sm:$0xff]
    %v4478 = vld [vmem:[%s4456 + $0xa8] sm:$0xff]
    %v4479 = vld [vmem:[%s4456 + $0xb0] sm:$0xff]
    %v4480 = vld [vmem:[%s4456 + $0xb8] sm:$0xff]
    %v4481 = vld [vmem:[%s4456 + $0xc0] sm:$0xff]
    %v4482 = vld [vmem:[%s4456 + $0xc8] sm:$0xff]
    %v4483 = vld [vmem:[%s4456 + $0xd0] sm:$0xff]
    %v4484 = vld [vmem:[%s4456 + $0xd8] sm:$0xff]
    %v4485 = vld [vmem:[%s4456 + $0xe0] sm:$0xff]
    %v4486 = vld [vmem:[%s4456 + $0xe8] sm:$0xff]
    %v4487 = vld [vmem:[%s4456 + $0xf0] sm:$0xff]
    %v4488 = vld [vmem:[%s4456 + $0xf8] sm:$0xff]
    %v4521 = vunpack.c.l.b16 %v4457
    %v4522 = vunpack.c.h.b16 %v4457
    %v4523 = vunpack.c.l.b16 %v4458
    %v4524 = vunpack.c.h.b16 %v4458
    %v4525 = vunpack.c.l.b16 %v4459
    %v4526 = vunpack.c.h.b16 %v4459
    %v4527 = vunpack.c.l.b16 %v4460
    %v4528 = vunpack.c.h.b16 %v4460
    %v4529 = vunpack.c.l.b16 %v4461
    %v4530 = vunpack.c.h.b16 %v4461
    %v4531 = vunpack.c.l.b16 %v4462
    %v4532 = vunpack.c.h.b16 %v4462
    %v4533 = vunpack.c.l.b16 %v4463
    %v4534 = vunpack.c.h.b16 %v4463
    %v4535 = vunpack.c.l.b16 %v4464
    %v4536 = vunpack.c.h.b16 %v4464
    %v4537 = vunpack.c.l.b16 %v4465
    %v4538 = vunpack.c.h.b16 %v4465
    %v4539 = vunpack.c.l.b16 %v4466
    %v4540 = vunpack.c.h.b16 %v4466
    %v4541 = vunpack.c.l.b16 %v4467
    %v4542 = vunpack.c.h.b16 %v4467
    %v4543 = vunpack.c.l.b16 %v4468
    %v4544 = vunpack.c.h.b16 %v4468
    %v4545 = vunpack.c.l.b16 %v4469
    %v4546 = vunpack.c.h.b16 %v4469
    %v4547 = vunpack.c.l.b16 %v4470
    %v4548 = vunpack.c.h.b16 %v4470
    %v4549 = vunpack.c.l.b16 %v4471
    %v4550 = vunpack.c.h.b16 %v4471
    %v4551 = vunpack.c.l.b16 %v4472
    %v4552 = vunpack.c.h.b16 %v4472
    %v4553 = vunpack.c.l.b16 %v4473
    %v4554 = vunpack.c.h.b16 %v4473
    %v4555 = vunpack.c.l.b16 %v4474
    %v4556 = vunpack.c.h.b16 %v4474
    %v4557 = vunpack.c.l.b16 %v4475
    %v4558 = vunpack.c.h.b16 %v4475
    %v4559 = vunpack.c.l.b16 %v4476
    %v4560 = vunpack.c.h.b16 %v4476
    %v4561 = vunpack.c.l.b16 %v4477
    %v4562 = vunpack.c.h.b16 %v4477
    %v4563 = vunpack.c.l.b16 %v4478
    %v4564 = vunpack.c.h.b16 %v4478
    %v4565 = vunpack.c.l.b16 %v4479
    %v4566 = vunpack.c.h.b16 %v4479
    %v4567 = vunpack.c.l.b16 %v4480
    %v4568 = vunpack.c.h.b16 %v4480
    %v4569 = vunpack.c.l.b16 %v4481
    %v4570 = vunpack.c.h.b16 %v4481
    %v4571 = vunpack.c.l.b16 %v4482
    %v4572 = vunpack.c.h.b16 %v4482
    %v4573 = vunpack.c.l.b16 %v4483
    %v4574 = vunpack.c.h.b16 %v4483
    %v4575 = vunpack.c.l.b16 %v4484
    %v4576 = vunpack.c.h.b16 %v4484
    %v4577 = vunpack.c.l.b16 %v4485
    %v4578 = vunpack.c.h.b16 %v4485
    %v4579 = vunpack.c.l.b16 %v4486
    %v4580 = vunpack.c.h.b16 %v4486
    %v4581 = vunpack.c.l.b16 %v4487
    %v4582 = vunpack.c.h.b16 %v4487
    %v4583 = vunpack.c.l.b16 %v4488
    %v4584 = vunpack.c.h.b16 %v4488
    %v4585 = vpack.c.b16 %v4523, %v4521
    %v4586 = vpack.c.b16 %v4524, %v4522
    %v4587 = vpack.c.b16 %v4527, %v4525
    %v4588 = vpack.c.b16 %v4528, %v4526
    %v4589 = vpack.c.b16 %v4531, %v4529
    %v4590 = vpack.c.b16 %v4532, %v4530
    %v4591 = vpack.c.b16 %v4535, %v4533
    %v4592 = vpack.c.b16 %v4536, %v4534
    %v4593 = vpack.c.b16 %v4539, %v4537
    %v4594 = vpack.c.b16 %v4540, %v4538
    %v4595 = vpack.c.b16 %v4543, %v4541
    %v4596 = vpack.c.b16 %v4544, %v4542
    %v4597 = vpack.c.b16 %v4547, %v4545
    %v4598 = vpack.c.b16 %v4548, %v4546
    %v4599 = vpack.c.b16 %v4551, %v4549
    %v4600 = vpack.c.b16 %v4552, %v4550
    %v4601 = vpack.c.b16 %v4555, %v4553
    %v4602 = vpack.c.b16 %v4556, %v4554
    %v4603 = vpack.c.b16 %v4559, %v4557
    %v4604 = vpack.c.b16 %v4560, %v4558
    %v4605 = vpack.c.b16 %v4563, %v4561
    %v4606 = vpack.c.b16 %v4564, %v4562
    %v4607 = vpack.c.b16 %v4567, %v4565
    %v4608 = vpack.c.b16 %v4568, %v4566
    %v4609 = vpack.c.b16 %v4571, %v4569
    %v4610 = vpack.c.b16 %v4572, %v4570
    %v4611 = vpack.c.b16 %v4575, %v4573
    %v4612 = vpack.c.b16 %v4576, %v4574
    %v4613 = vpack.c.b16 %v4579, %v4577
    %v4614 = vpack.c.b16 %v4580, %v4578
    %v4615 = vpack.c.b16 %v4583, %v4581
    %v4616 = vpack.c.b16 %v4584, %v4582
    %4649 = vmatprep.subr.bf16.mxu0 %v4586
    %4650 = vmatpush1.bf16.msra.mxu0 %v4585
    %4651 = vmatprep.subr.bf16.mxu0 %v4588
    %4652 = vmatpush1.bf16.msra.mxu0 %v4587
    %4653 = vmatprep.subr.bf16.mxu0 %v4590
    %4654 = vmatpush1.bf16.msra.mxu0 %v4589
    %4655 = vmatprep.subr.bf16.mxu0 %v4592
    %4656 = vmatpush1.bf16.msra.mxu0 %v4591
    %4657 = vmatprep.subr.bf16.mxu0 %v4594
    %4658 = vmatpush1.bf16.msra.mxu0 %v4593
    %4659 = vmatprep.subr.bf16.mxu0 %v4596
    %4660 = vmatpush1.bf16.msra.mxu0 %v4595
    %4661 = vmatprep.subr.bf16.mxu0 %v4598
    %4662 = vmatpush1.bf16.msra.mxu0 %v4597
    %4663 = vmatprep.subr.bf16.mxu0 %v4600
    %4664 = vmatpush1.bf16.msra.mxu0 %v4599
    %4665 = vmatprep.subr.bf16.mxu0 %v4602
    %4666 = vmatpush1.bf16.msra.mxu0 %v4601
    %4667 = vmatprep.subr.bf16.mxu0 %v4604
    %4668 = vmatpush1.bf16.msra.mxu0 %v4603
    %4669 = vmatprep.subr.bf16.mxu0 %v4606
    %4670 = vmatpush1.bf16.msra.mxu0 %v4605
    %4671 = vmatprep.subr.bf16.mxu0 %v4608
    %4672 = vmatpush1.bf16.msra.mxu0 %v4607
    %4673 = vmatprep.subr.bf16.mxu0 %v4610
    %4674 = vmatpush1.bf16.msra.mxu0 %v4609
    %4675 = vmatprep.subr.bf16.mxu0 %v4612
    %4676 = vmatpush1.bf16.msra.mxu0 %v4611
    %4677 = vmatprep.subr.bf16.mxu0 %v4614
    %4678 = vmatpush1.bf16.msra.mxu0 %v4613
    %4679 = vmatprep.subr.bf16.mxu0 %v4616
    %4680 = vmatpush1.bf16.msra.mxu0 %v4615
    %4681 = vmatprep.mubr.bf16.mxu0 %v4455
    %4682 = vmatmul.mubr.bf16.gmra.mrb[0].mxu0 %v4454
    %v4683 = vpop.f32.mrb[0].mxu0
    %v4684 = vadd.f32 0.0, %v4683
    %v4685 = vpop.f32.mrb[0].mxu0
    %v4686 = vadd.f32 0.0, %v4685
    %v4687 = vpop.f32.mrb[0].mxu0
    %v4688 = vpop.f32.mrb[0].mxu0
    %4689 = vdwg.mxu0
    %v4690 = vadd.f32 %v4402, %v4684
    %v4691 = vadd.f32 %v4404, %v4686
    %s4692 = scalar_lea.vmem %s12, 3
    %v4693 = vld [vmem:[%s4692] sm:$0x1]
    %v4695 = vsel %vm3839, %v4693, 0
    %4697 = vmatprep.subr.bf16.mxu0 %v3848
    %4698 = vmatpush1.bf16.msra.mxu0 %v3845
    %4699 = vmatprep.subr.bf16.mxu0 0
    %4700 = vmatpush1.bf16.msra.mxu0 0
    %4701 = vmatprep.subr.bf16.mxu0 0
    %4702 = vmatpush1.bf16.msra.mxu0 0
    %4703 = vmatprep.subr.bf16.mxu0 0
    %4704 = vmatpush1.bf16.msra.mxu0 0
    %4705 = vmatprep.subr.bf16.mxu0 0
    %4706 = vmatpush1.bf16.msra.mxu0 0
    %4707 = vmatprep.subr.bf16.mxu0 0
    %4708 = vmatpush1.bf16.msra.mxu0 0
    %4709 = vmatprep.subr.bf16.mxu0 0
    %4710 = vmatpush1.bf16.msra.mxu0 0
    %4711 = vmatprep.subr.bf16.mxu0 0
    %4712 = vmatpush1.bf16.msra.mxu0 0
    %4713 = vmatprep.subr.bf16.mxu0 0
    %4714 = vmatpush1.bf16.msra.mxu0 0
    %4715 = vmatprep.subr.bf16.mxu0 0
    %4716 = vmatpush1.bf16.msra.mxu0 0
    %4717 = vmatprep.subr.bf16.mxu0 0
    %4718 = vmatpush1.bf16.msra.mxu0 0
    %4719 = vmatprep.subr.bf16.mxu0 0
    %4720 = vmatpush1.bf16.msra.mxu0 0
    %4721 = vmatprep.subr.bf16.mxu0 0
    %4722 = vmatpush1.bf16.msra.mxu0 0
    %4723 = vmatprep.subr.bf16.mxu0 0
    %4724 = vmatpush1.bf16.msra.mxu0 0
    %4725 = vmatprep.subr.bf16.mxu0 0
    %4726 = vmatpush1.bf16.msra.mxu0 0
    %4727 = vmatprep.subr.bf16.mxu0 0
    %4728 = vmatpush1.bf16.msra.mxu0 0
    %4729 = vmatprep.mubr.bf16.mxu0 0
    %4730 = vmatmul.mubr.bf16.gmra.mrb[0].mxu0 %v4695
    %v4731 = vpop.f32.mrb[0].mxu0
    %v4732 = vadd.f32 0.0, %v4731
    %v4733 = vpop.f32.mrb[0].mxu0
    %v4734 = vadd.f32 0.0, %v4733
    %v4735 = vpop.f32.mrb[0].mxu0
    %v4736 = vpop.f32.mrb[0].mxu0
    %4737 = vdwg.mxu0
    %v4738 = vpack.c.bf16 %v4732, %v4732
    %v4739 = vpack.c.bf16 %v4734, %v4734
    %s4740 = scalar_lea.vmem %s13, 768
    %v4741 = vld [vmem:[%s4740] sm:$0xff]
    %v4742 = vld [vmem:[%s4740 + $0x8] sm:$0xff]
    %v4743 = vld [vmem:[%s4740 + $0x10] sm:$0xff]
    %v4744 = vld [vmem:[%s4740 + $0x18] sm:$0xff]
    %v4745 = vld [vmem:[%s4740 + $0x20] sm:$0xff]
    %v4746 = vld [vmem:[%s4740 + $0x28] sm:$0xff]
    %v4747 = vld [vmem:[%s4740 + $0x30] sm:$0xff]
    %v4748 = vld [vmem:[%s4740 + $0x38] sm:$0xff]
    %v4749 = vld [vmem:[%s4740 + $0x40] sm:$0xff]
    %v4750 = vld [vmem:[%s4740 + $0x48] sm:$0xff]
    %v4751 = vld [vmem:[%s4740 + $0x50] sm:$0xff]
    %v4752 = vld [vmem:[%s4740 + $0x58] sm:$0xff]
    %v4753 = vld [vmem:[%s4740 + $0x60] sm:$0xff]
    %v4754 = vld [vmem:[%s4740 + $0x68] sm:$0xff]
    %v4755 = vld [vmem:[%s4740 + $0x70] sm:$0xff]
    %v4756 = vld [vmem:[%s4740 + $0x78] sm:$0xff]
    %v4757 = vld [vmem:[%s4740 + $0x80] sm:$0xff]
    %v4758 = vld [vmem:[%s4740 + $0x88] sm:$0xff]
    %v4759 = vld [vmem:[%s4740 + $0x90] sm:$0xff]
    %v4760 = vld [vmem:[%s4740 + $0x98] sm:$0xff]
    %v4761 = vld [vmem:[%s4740 + $0xa0] sm:$0xff]
    %v4762 = vld [vmem:[%s4740 + $0xa8] sm:$0xff]
    %v4763 = vld [vmem:[%s4740 + $0xb0] sm:$0xff]
    %v4764 = vld [vmem:[%s4740 + $0xb8] sm:$0xff]
    %v4765 = vld [vmem:[%s4740 + $0xc0] sm:$0xff]
    %v4766 = vld [vmem:[%s4740 + $0xc8] sm:$0xff]
    %v4767 = vld [vmem:[%s4740 + $0xd0] sm:$0xff]
    %v4768 = vld [vmem:[%s4740 + $0xd8] sm:$0xff]
    %v4769 = vld [vmem:[%s4740 + $0xe0] sm:$0xff]
    %v4770 = vld [vmem:[%s4740 + $0xe8] sm:$0xff]
    %v4771 = vld [vmem:[%s4740 + $0xf0] sm:$0xff]
    %v4772 = vld [vmem:[%s4740 + $0xf8] sm:$0xff]
    %v4805 = vunpack.c.l.b16 %v4741
    %v4806 = vunpack.c.h.b16 %v4741
    %v4807 = vunpack.c.l.b16 %v4742
    %v4808 = vunpack.c.h.b16 %v4742
    %v4809 = vunpack.c.l.b16 %v4743
    %v4810 = vunpack.c.h.b16 %v4743
    %v4811 = vunpack.c.l.b16 %v4744
    %v4812 = vunpack.c.h.b16 %v4744
    %v4813 = vunpack.c.l.b16 %v4745
    %v4814 = vunpack.c.h.b16 %v4745
    %v4815 = vunpack.c.l.b16 %v4746
    %v4816 = vunpack.c.h.b16 %v4746
    %v4817 = vunpack.c.l.b16 %v4747
    %v4818 = vunpack.c.h.b16 %v4747
    %v4819 = vunpack.c.l.b16 %v4748
    %v4820 = vunpack.c.h.b16 %v4748
    %v4821 = vunpack.c.l.b16 %v4749
    %v4822 = vunpack.c.h.b16 %v4749
    %v4823 = vunpack.c.l.b16 %v4750
    %v4824 = vunpack.c.h.b16 %v4750
    %v4825 = vunpack.c.l.b16 %v4751
    %v4826 = vunpack.c.h.b16 %v4751
    %v4827 = vunpack.c.l.b16 %v4752
    %v4828 = vunpack.c.h.b16 %v4752
    %v4829 = vunpack.c.l.b16 %v4753
    %v4830 = vunpack.c.h.b16 %v4753
    %v4831 = vunpack.c.l.b16 %v4754
    %v4832 = vunpack.c.h.b16 %v4754
    %v4833 = vunpack.c.l.b16 %v4755
    %v4834 = vunpack.c.h.b16 %v4755
    %v4835 = vunpack.c.l.b16 %v4756
    %v4836 = vunpack.c.h.b16 %v4756
    %v4837 = vunpack.c.l.b16 %v4757
    %v4838 = vunpack.c.h.b16 %v4757
    %v4839 = vunpack.c.l.b16 %v4758
    %v4840 = vunpack.c.h.b16 %v4758
    %v4841 = vunpack.c.l.b16 %v4759
    %v4842 = vunpack.c.h.b16 %v4759
    %v4843 = vunpack.c.l.b16 %v4760
    %v4844 = vunpack.c.h.b16 %v4760
    %v4845 = vunpack.c.l.b16 %v4761
    %v4846 = vunpack.c.h.b16 %v4761
    %v4847 = vunpack.c.l.b16 %v4762
    %v4848 = vunpack.c.h.b16 %v4762
    %v4849 = vunpack.c.l.b16 %v4763
    %v4850 = vunpack.c.h.b16 %v4763
    %v4851 = vunpack.c.l.b16 %v4764
    %v4852 = vunpack.c.h.b16 %v4764
    %v4853 = vunpack.c.l.b16 %v4765
    %v4854 = vunpack.c.h.b16 %v4765
    %v4855 = vunpack.c.l.b16 %v4766
    %v4856 = vunpack.c.h.b16 %v4766
    %v4857 = vunpack.c.l.b16 %v4767
    %v4858 = vunpack.c.h.b16 %v4767
    %v4859 = vunpack.c.l.b16 %v4768
    %v4860 = vunpack.c.h.b16 %v4768
    %v4861 = vunpack.c.l.b16 %v4769
    %v4862 = vunpack.c.h.b16 %v4769
    %v4863 = vunpack.c.l.b16 %v4770
    %v4864 = vunpack.c.h.b16 %v4770
    %v4865 = vunpack.c.l.b16 %v4771
    %v4866 = vunpack.c.h.b16 %v4771
    %v4867 = vunpack.c.l.b16 %v4772
    %v4868 = vunpack.c.h.b16 %v4772
    %v4869 = vpack.c.b16 %v4807, %v4805
    %v4870 = vpack.c.b16 %v4808, %v4806
    %v4871 = vpack.c.b16 %v4811, %v4809
    %v4872 = vpack.c.b16 %v4812, %v4810
    %v4873 = vpack.c.b16 %v4815, %v4813
    %v4874 = vpack.c.b16 %v4816, %v4814
    %v4875 = vpack.c.b16 %v4819, %v4817
    %v4876 = vpack.c.b16 %v4820, %v4818
    %v4877 = vpack.c.b16 %v4823, %v4821
    %v4878 = vpack.c.b16 %v4824, %v4822
    %v4879 = vpack.c.b16 %v4827, %v4825
    %v4880 = vpack.c.b16 %v4828, %v4826
    %v4881 = vpack.c.b16 %v4831, %v4829
    %v4882 = vpack.c.b16 %v4832, %v4830
    %v4883 = vpack.c.b16 %v4835, %v4833
    %v4884 = vpack.c.b16 %v4836, %v4834
    %v4885 = vpack.c.b16 %v4839, %v4837
    %v4886 = vpack.c.b16 %v4840, %v4838
    %v4887 = vpack.c.b16 %v4843, %v4841
    %v4888 = vpack.c.b16 %v4844, %v4842
    %v4889 = vpack.c.b16 %v4847, %v4845
    %v4890 = vpack.c.b16 %v4848, %v4846
    %v4891 = vpack.c.b16 %v4851, %v4849
    %v4892 = vpack.c.b16 %v4852, %v4850
    %v4893 = vpack.c.b16 %v4855, %v4853
    %v4894 = vpack.c.b16 %v4856, %v4854
    %v4895 = vpack.c.b16 %v4859, %v4857
    %v4896 = vpack.c.b16 %v4860, %v4858
    %v4897 = vpack.c.b16 %v4863, %v4861
    %v4898 = vpack.c.b16 %v4864, %v4862
    %v4899 = vpack.c.b16 %v4867, %v4865
    %v4900 = vpack.c.b16 %v4868, %v4866
    %4933 = vmatprep.subr.bf16.mxu0 %v4870
    %4934 = vmatpush1.bf16.msra.mxu0 %v4869
    %4935 = vmatprep.subr.bf16.mxu0 %v4872
    %4936 = vmatpush1.bf16.msra.mxu0 %v4871
    %4937 = vmatprep.subr.bf16.mxu0 %v4874
    %4938 = vmatpush1.bf16.msra.mxu0 %v4873
    %4939 = vmatprep.subr.bf16.mxu0 %v4876
    %4940 = vmatpush1.bf16.msra.mxu0 %v4875
    %4941 = vmatprep.subr.bf16.mxu0 %v4878
    %4942 = vmatpush1.bf16.msra.mxu0 %v4877
    %4943 = vmatprep.subr.bf16.mxu0 %v4880
    %4944 = vmatpush1.bf16.msra.mxu0 %v4879
    %4945 = vmatprep.subr.bf16.mxu0 %v4882
    %4946 = vmatpush1.bf16.msra.mxu0 %v4881
    %4947 = vmatprep.subr.bf16.mxu0 %v4884
    %4948 = vmatpush1.bf16.msra.mxu0 %v4883
    %4949 = vmatprep.subr.bf16.mxu0 %v4886
    %4950 = vmatpush1.bf16.msra.mxu0 %v4885
    %4951 = vmatprep.subr.bf16.mxu0 %v4888
    %4952 = vmatpush1.bf16.msra.mxu0 %v4887
    %4953 = vmatprep.subr.bf16.mxu0 %v4890
    %4954 = vmatpush1.bf16.msra.mxu0 %v4889
    %4955 = vmatprep.subr.bf16.mxu0 %v4892
    %4956 = vmatpush1.bf16.msra.mxu0 %v4891
    %4957 = vmatprep.subr.bf16.mxu0 %v4894
    %4958 = vmatpush1.bf16.msra.mxu0 %v4893
    %4959 = vmatprep.subr.bf16.mxu0 %v4896
    %4960 = vmatpush1.bf16.msra.mxu0 %v4895
    %4961 = vmatprep.subr.bf16.mxu0 %v4898
    %4962 = vmatpush1.bf16.msra.mxu0 %v4897
    %4963 = vmatprep.subr.bf16.mxu0 %v4900
    %4964 = vmatpush1.bf16.msra.mxu0 %v4899
    %4965 = vmatprep.mubr.bf16.mxu0 %v4739
    %4966 = vmatmul.mubr.bf16.gmra.mrb[0].mxu0 %v4738
    %v4967 = vpop.f32.mrb[0].mxu0
    %v4968 = vadd.f32 0.0, %v4967
    %v4969 = vpop.f32.mrb[0].mxu0
    %v4970 = vadd.f32 0.0, %v4969
    %v4971 = vpop.f32.mrb[0].mxu0
    %v4972 = vpop.f32.mrb[0].mxu0
    %4973 = vdwg.mxu0
    %v4974 = vadd.f32 %v4690, %v4968
    %v4975 = vadd.f32 %v4691, %v4970
    %s4976 = scalar_lea.vmem %s12, 4
    %v4977 = vld [vmem:[%s4976] sm:$0x1]
    %v4979 = vsel %vm3839, %v4977, 0
    %4981 = vmatprep.subr.bf16.mxu0 %v3848
    %4982 = vmatpush1.bf16.msra.mxu0 %v3845
    %4983 = vmatprep.subr.bf16.mxu0 0
    %4984 = vmatpush1.bf16.msra.mxu0 0
    %4985 = vmatprep.subr.bf16.mxu0 0
    %4986 = vmatpush1.bf16.msra.mxu0 0
    %4987 = vmatprep.subr.bf16.mxu0 0
    %4988 = vmatpush1.bf16.msra.mxu0 0
    %4989 = vmatprep.subr.bf16.mxu0 0
    %4990 = vmatpush1.bf16.msra.mxu0 0
    %4991 = vmatprep.subr.bf16.mxu0 0
    %4992 = vmatpush1.bf16.msra.mxu0 0
    %4993 = vmatprep.subr.bf16.mxu0 0
    %4994 = vmatpush1.bf16.msra.mxu0 0
    %4995 = vmatprep.subr.bf16.mxu0 0
    %4996 = vmatpush1.bf16.msra.mxu0 0
    %4997 = vmatprep.subr.bf16.mxu0 0
    %4998 = vmatpush1.bf16.msra.mxu0 0
    %4999 = vmatprep.subr.bf16.mxu0 0
    %5000 = vmatpush1.bf16.msra.mxu0 0
    %5001 = vmatprep.subr.bf16.mxu0 0
    %5002 = vmatpush1.bf16.msra.mxu0 0
    %5003 = vmatprep.subr.bf16.mxu0 0
    %5004 = vmatpush1.bf16.msra.mxu0 0
    %5005 = vmatprep.subr.bf16.mxu0 0
    %5006 = vmatpush1.bf16.msra.mxu0 0
    %5007 = vmatprep.subr.bf16.mxu0 0
    %5008 = vmatpush1.bf16.msra.mxu0 0
    %5009 = vmatprep.subr.bf16.mxu0 0
    %5010 = vmatpush1.bf16.msra.mxu0 0
    %5011 = vmatprep.subr.bf16.mxu0 0
    %5012 = vmatpush1.bf16.msra.mxu0 0
    %5013 = vmatprep.mubr.bf16.mxu0 0
    %5014 = vmatmul.mubr.bf16.gmra.mrb[0].mxu0 %v4979
    %v5015 = vpop.f32.mrb[0].mxu0
    %v5016 = vadd.f32 0.0, %v5015
    %v5017 = vpop.f32.mrb[0].mxu0
    %v5018 = vadd.f32 0.0, %v5017
    %v5019 = vpop.f32.mrb[0].mxu0
    %v5020 = vpop.f32.mrb[0].mxu0
    %5021 = vdwg.mxu0
    %v5022 = vpack.c.bf16 %v5016, %v5016
    %v5023 = vpack.c.bf16 %v5018, %v5018
    %s5024 = scalar_lea.vmem %s13, 1024
    %v5025 = vld [vmem:[%s5024] sm:$0xff]
    %v5026 = vld [vmem:[%s5024 + $0x8] sm:$0xff]
    %v5027 = vld [vmem:[%s5024 + $0x10] sm:$0xff]
    %v5028 = vld [vmem:[%s5024 + $0x18] sm:$0xff]
    %v5029 = vld [vmem:[%s5024 + $0x20] sm:$0xff]
    %v5030 = vld [vmem:[%s5024 + $0x28] sm:$0xff]
    %v5031 = vld [vmem:[%s5024 + $0x30] sm:$0xff]
    %v5032 = vld [vmem:[%s5024 + $0x38] sm:$0xff]
    %v5033 = vld [vmem:[%s5024 + $0x40] sm:$0xff]
    %v5034 = vld [vmem:[%s5024 + $0x48] sm:$0xff]
    %v5035 = vld [vmem:[%s5024 + $0x50] sm:$0xff]
    %v5036 = vld [vmem:[%s5024 + $0x58] sm:$0xff]
    %v5037 = vld [vmem:[%s5024 + $0x60] sm:$0xff]
    %v5038 = vld [vmem:[%s5024 + $0x68] sm:$0xff]
    %v5039 = vld [vmem:[%s5024 + $0x70] sm:$0xff]
    %v5040 = vld [vmem:[%s5024 + $0x78] sm:$0xff]
    %v5041 = vld [vmem:[%s5024 + $0x80] sm:$0xff]
    %v5042 = vld [vmem:[%s5024 + $0x88] sm:$0xff]
    %v5043 = vld [vmem:[%s5024 + $0x90] sm:$0xff]
    %v5044 = vld [vmem:[%s5024 + $0x98] sm:$0xff]
    %v5045 = vld [vmem:[%s5024 + $0xa0] sm:$0xff]
    %v5046 = vld [vmem:[%s5024 + $0xa8] sm:$0xff]
    %v5047 = vld [vmem:[%s5024 + $0xb0] sm:$0xff]
    %v5048 = vld [vmem:[%s5024 + $0xb8] sm:$0xff]
    %v5049 = vld [vmem:[%s5024 + $0xc0] sm:$0xff]
    %v5050 = vld [vmem:[%s5024 + $0xc8] sm:$0xff]
    %v5051 = vld [vmem:[%s5024 + $0xd0] sm:$0xff]
    %v5052 = vld [vmem:[%s5024 + $0xd8] sm:$0xff]
    %v5053 = vld [vmem:[%s5024 + $0xe0] sm:$0xff]
    %v5054 = vld [vmem:[%s5024 + $0xe8] sm:$0xff]
    %v5055 = vld [vmem:[%s5024 + $0xf0] sm:$0xff]
    %v5056 = vld [vmem:[%s5024 + $0xf8] sm:$0xff]
    %v5089 = vunpack.c.l.b16 %v5025
    %v5090 = vunpack.c.h.b16 %v5025
    %v5091 = vunpack.c.l.b16 %v5026
    %v5092 = vunpack.c.h.b16 %v5026
    %v5093 = vunpack.c.l.b16 %v5027
    %v5094 = vunpack.c.h.b16 %v5027
    %v5095 = vunpack.c.l.b16 %v5028
    %v5096 = vunpack.c.h.b16 %v5028
    %v5097 = vunpack.c.l.b16 %v5029
    %v5098 = vunpack.c.h.b16 %v5029
    %v5099 = vunpack.c.l.b16 %v5030
    %v5100 = vunpack.c.h.b16 %v5030
    %v5101 = vunpack.c.l.b16 %v5031
    %v5102 = vunpack.c.h.b16 %v5031
    %v5103 = vunpack.c.l.b16 %v5032
    %v5104 = vunpack.c.h.b16 %v5032
    %v5105 = vunpack.c.l.b16 %v5033
    %v5106 = vunpack.c.h.b16 %v5033
    %v5107 = vunpack.c.l.b16 %v5034
    %v5108 = vunpack.c.h.b16 %v5034
    %v5109 = vunpack.c.l.b16 %v5035
    %v5110 = vunpack.c.h.b16 %v5035
    %v5111 = vunpack.c.l.b16 %v5036
    %v5112 = vunpack.c.h.b16 %v5036
    %v5113 = vunpack.c.l.b16 %v5037
    %v5114 = vunpack.c.h.b16 %v5037
    %v5115 = vunpack.c.l.b16 %v5038
    %v5116 = vunpack.c.h.b16 %v5038
    %v5117 = vunpack.c.l.b16 %v5039
    %v5118 = vunpack.c.h.b16 %v5039
    %v5119 = vunpack.c.l.b16 %v5040
    %v5120 = vunpack.c.h.b16 %v5040
    %v5121 = vunpack.c.l.b16 %v5041
    %v5122 = vunpack.c.h.b16 %v5041
    %v5123 = vunpack.c.l.b16 %v5042
    %v5124 = vunpack.c.h.b16 %v5042
    %v5125 = vunpack.c.l.b16 %v5043
    %v5126 = vunpack.c.h.b16 %v5043
    %v5127 = vunpack.c.l.b16 %v5044
    %v5128 = vunpack.c.h.b16 %v5044
    %v5129 = vunpack.c.l.b16 %v5045
    %v5130 = vunpack.c.h.b16 %v5045
    %v5131 = vunpack.c.l.b16 %v5046
    %v5132 = vunpack.c.h.b16 %v5046
    %v5133 = vunpack.c.l.b16 %v5047
    %v5134 = vunpack.c.h.b16 %v5047
    %v5135 = vunpack.c.l.b16 %v5048
    %v5136 = vunpack.c.h.b16 %v5048
    %v5137 = vunpack.c.l.b16 %v5049
    %v5138 = vunpack.c.h.b16 %v5049
    %v5139 = vunpack.c.l.b16 %v5050
    %v5140 = vunpack.c.h.b16 %v5050
    %v5141 = vunpack.c.l.b16 %v5051
    %v5142 = vunpack.c.h.b16 %v5051
    %v5143 = vunpack.c.l.b16 %v5052
    %v5144 = vunpack.c.h.b16 %v5052
    %v5145 = vunpack.c.l.b16 %v5053
    %v5146 = vunpack.c.h.b16 %v5053
    %v5147 = vunpack.c.l.b16 %v5054
    %v5148 = vunpack.c.h.b16 %v5054
    %v5149 = vunpack.c.l.b16 %v5055
    %v5150 = vunpack.c.h.b16 %v5055
    %v5151 = vunpack.c.l.b16 %v5056
    %v5152 = vunpack.c.h.b16 %v5056
    %v5153 = vpack.c.b16 %v5091, %v5089
    %v5154 = vpack.c.b16 %v5092, %v5090
    %v5155 = vpack.c.b16 %v5095, %v5093
    %v5156 = vpack.c.b16 %v5096, %v5094
    %v5157 = vpack.c.b16 %v5099, %v5097
    %v5158 = vpack.c.b16 %v5100, %v5098
    %v5159 = vpack.c.b16 %v5103, %v5101
    %v5160 = vpack.c.b16 %v5104, %v5102
    %v5161 = vpack.c.b16 %v5107, %v5105
    %v5162 = vpack.c.b16 %v5108, %v5106
    %v5163 = vpack.c.b16 %v5111, %v5109
    %v5164 = vpack.c.b16 %v5112, %v5110
    %v5165 = vpack.c.b16 %v5115, %v5113
    %v5166 = vpack.c.b16 %v5116, %v5114
    %v5167 = vpack.c.b16 %v5119, %v5117
    %v5168 = vpack.c.b16 %v5120, %v5118
    %v5169 = vpack.c.b16 %v5123, %v5121
    %v5170 = vpack.c.b16 %v5124, %v5122
    %v5171 = vpack.c.b16 %v5127, %v5125
    %v5172 = vpack.c.b16 %v5128, %v5126
    %v5173 = vpack.c.b16 %v5131, %v5129
    %v5174 = vpack.c.b16 %v5132, %v5130
    %v5175 = vpack.c.b16 %v5135, %v5133
    %v5176 = vpack.c.b16 %v5136, %v5134
    %v5177 = vpack.c.b16 %v5139, %v5137
    %v5178 = vpack.c.b16 %v5140, %v5138
    %v5179 = vpack.c.b16 %v5143, %v5141
    %v5180 = vpack.c.b16 %v5144, %v5142
    %v5181 = vpack.c.b16 %v5147, %v5145
    %v5182 = vpack.c.b16 %v5148, %v5146
    %v5183 = vpack.c.b16 %v5151, %v5149
    %v5184 = vpack.c.b16 %v5152, %v5150
    %5217 = vmatprep.subr.bf16.mxu0 %v5154
    %5218 = vmatpush1.bf16.msra.mxu0 %v5153
    %5219 = vmatprep.subr.bf16.mxu0 %v5156
    %5220 = vmatpush1.bf16.msra.mxu0 %v5155
    %5221 = vmatprep.subr.bf16.mxu0 %v5158
    %5222 = vmatpush1.bf16.msra.mxu0 %v5157
    %5223 = vmatprep.subr.bf16.mxu0 %v5160
    %5224 = vmatpush1.bf16.msra.mxu0 %v5159
    %5225 = vmatprep.subr.bf16.mxu0 %v5162
    %5226 = vmatpush1.bf16.msra.mxu0 %v5161
    %5227 = vmatprep.subr.bf16.mxu0 %v5164
    %5228 = vmatpush1.bf16.msra.mxu0 %v5163
    %5229 = vmatprep.subr.bf16.mxu0 %v5166
    %5230 = vmatpush1.bf16.msra.mxu0 %v5165
    %5231 = vmatprep.subr.bf16.mxu0 %v5168
    %5232 = vmatpush1.bf16.msra.mxu0 %v5167
    %5233 = vmatprep.subr.bf16.mxu0 %v5170
    %5234 = vmatpush1.bf16.msra.mxu0 %v5169
    %5235 = vmatprep.subr.bf16.mxu0 %v5172
    %5236 = vmatpush1.bf16.msra.mxu0 %v5171
    %5237 = vmatprep.subr.bf16.mxu0 %v5174
    %5238 = vmatpush1.bf16.msra.mxu0 %v5173
    %5239 = vmatprep.subr.bf16.mxu0 %v5176
    %5240 = vmatpush1.bf16.msra.mxu0 %v5175
    %5241 = vmatprep.subr.bf16.mxu0 %v5178
    %5242 = vmatpush1.bf16.msra.mxu0 %v5177
    %5243 = vmatprep.subr.bf16.mxu0 %v5180
    %5244 = vmatpush1.bf16.msra.mxu0 %v5179
    %5245 = vmatprep.subr.bf16.mxu0 %v5182
    %5246 = vmatpush1.bf16.msra.mxu0 %v5181
    %5247 = vmatprep.subr.bf16.mxu0 %v5184
    %5248 = vmatpush1.bf16.msra.mxu0 %v5183
    %5249 = vmatprep.mubr.bf16.mxu0 %v5023
    %5250 = vmatmul.mubr.bf16.gmra.mrb[0].mxu0 %v5022
    %v5251 = vpop.f32.mrb[0].mxu0
    %v5252 = vadd.f32 0.0, %v5251
    %v5253 = vpop.f32.mrb[0].mxu0
    %v5254 = vadd.f32 0.0, %v5253
    %v5255 = vpop.f32.mrb[0].mxu0
    %v5256 = vpop.f32.mrb[0].mxu0
    %5257 = vdwg.mxu0
    %v5258 = vadd.f32 %v4974, %v5252
    %v5259 = vadd.f32 %v4975, %v5254
    %s5260 = scalar_lea.vmem %s12, 5
    %v5261 = vld [vmem:[%s5260] sm:$0x1]
    %v5263 = vsel %vm3839, %v5261, 0
    %5265 = vmatprep.subr.bf16.mxu0 %v3848
    %5266 = vmatpush1.bf16.msra.mxu0 %v3845
    %5267 = vmatprep.subr.bf16.mxu0 0
    %5268 = vmatpush1.bf16.msra.mxu0 0
    %5269 = vmatprep.subr.bf16.mxu0 0
    %5270 = vmatpush1.bf16.msra.mxu0 0
    %5271 = vmatprep.subr.bf16.mxu0 0
    %5272 = vmatpush1.bf16.msra.mxu0 0
    %5273 = vmatprep.subr.bf16.mxu0 0
    %5274 = vmatpush1.bf16.msra.mxu0 0
    %5275 = vmatprep.subr.bf16.mxu0 0
    %5276 = vmatpush1.bf16.msra.mxu0 0
    %5277 = vmatprep.subr.bf16.mxu0 0
    %5278 = vmatpush1.bf16.msra.mxu0 0
    %5279 = vmatprep.subr.bf16.mxu0 0
    %5280 = vmatpush1.bf16.msra.mxu0 0
    %5281 = vmatprep.subr.bf16.mxu0 0
    %5282 = vmatpush1.bf16.msra.mxu0 0
    %5283 = vmatprep.subr.bf16.mxu0 0
    %5284 = vmatpush1.bf16.msra.mxu0 0
    %5285 = vmatprep.subr.bf16.mxu0 0
    %5286 = vmatpush1.bf16.msra.mxu0 0
    %5287 = vmatprep.subr.bf16.mxu0 0
    %5288 = vmatpush1.bf16.msra.mxu0 0
    %5289 = vmatprep.subr.bf16.mxu0 0
    %5290 = vmatpush1.bf16.msra.mxu0 0
    %5291 = vmatprep.subr.bf16.mxu0 0
    %5292 = vmatpush1.bf16.msra.mxu0 0
    %5293 = vmatprep.subr.bf16.mxu0 0
    %5294 = vmatpush1.bf16.msra.mxu0 0
    %5295 = vmatprep.subr.bf16.mxu0 0
    %5296 = vmatpush1.bf16.msra.mxu0 0
    %5297 = vmatprep.mubr.bf16.mxu0 0
    %5298 = vmatmul.mubr.bf16.gmra.mrb[0].mxu0 %v5263
    %v5299 = vpop.f32.mrb[0].mxu0
    %v5300 = vadd.f32 0.0, %v5299
    %v5301 = vpop.f32.mrb[0].mxu0
    %v5302 = vadd.f32 0.0, %v5301
    %v5303 = vpop.f32.mrb[0].mxu0
    %v5304 = vpop.f32.mrb[0].mxu0
    %5305 = vdwg.mxu0
    %v5306 = vpack.c.bf16 %v5300, %v5300
    %v5307 = vpack.c.bf16 %v5302, %v5302
    %s5308 = scalar_lea.vmem %s13, 1280
    %v5309 = vld [vmem:[%s5308] sm:$0xff]
    %v5310 = vld [vmem:[%s5308 + $0x8] sm:$0xff]
    %v5311 = vld [vmem:[%s5308 + $0x10] sm:$0xff]
    %v5312 = vld [vmem:[%s5308 + $0x18] sm:$0xff]
    %v5313 = vld [vmem:[%s5308 + $0x20] sm:$0xff]
    %v5314 = vld [vmem:[%s5308 + $0x28] sm:$0xff]
    %v5315 = vld [vmem:[%s5308 + $0x30] sm:$0xff]
    %v5316 = vld [vmem:[%s5308 + $0x38] sm:$0xff]
    %v5317 = vld [vmem:[%s5308 + $0x40] sm:$0xff]
    %v5318 = vld [vmem:[%s5308 + $0x48] sm:$0xff]
    %v5319 = vld [vmem:[%s5308 + $0x50] sm:$0xff]
    %v5320 = vld [vmem:[%s5308 + $0x58] sm:$0xff]
    %v5321 = vld [vmem:[%s5308 + $0x60] sm:$0xff]
    %v5322 = vld [vmem:[%s5308 + $0x68] sm:$0xff]
    %v5323 = vld [vmem:[%s5308 + $0x70] sm:$0xff]
    %v5324 = vld [vmem:[%s5308 + $0x78] sm:$0xff]
    %v5325 = vld [vmem:[%s5308 + $0x80] sm:$0xff]
    %v5326 = vld [vmem:[%s5308 + $0x88] sm:$0xff]
    %v5327 = vld [vmem:[%s5308 + $0x90] sm:$0xff]
    %v5328 = vld [vmem:[%s5308 + $0x98] sm:$0xff]
    %v5329 = vld [vmem:[%s5308 + $0xa0] sm:$0xff]
    %v5330 = vld [vmem:[%s5308 + $0xa8] sm:$0xff]
    %v5331 = vld [vmem:[%s5308 + $0xb0] sm:$0xff]
    %v5332 = vld [vmem:[%s5308 + $0xb8] sm:$0xff]
    %v5333 = vld [vmem:[%s5308 + $0xc0] sm:$0xff]
    %v5334 = vld [vmem:[%s5308 + $0xc8] sm:$0xff]
    %v5335 = vld [vmem:[%s5308 + $0xd0] sm:$0xff]
    %v5336 = vld [vmem:[%s5308 + $0xd8] sm:$0xff]
    %v5337 = vld [vmem:[%s5308 + $0xe0] sm:$0xff]
    %v5338 = vld [vmem:[%s5308 + $0xe8] sm:$0xff]
    %v5339 = vld [vmem:[%s5308 + $0xf0] sm:$0xff]
    %v5340 = vld [vmem:[%s5308 + $0xf8] sm:$0xff]
    %v5373 = vunpack.c.l.b16 %v5309
    %v5374 = vunpack.c.h.b16 %v5309
    %v5375 = vunpack.c.l.b16 %v5310
    %v5376 = vunpack.c.h.b16 %v5310
    %v5377 = vunpack.c.l.b16 %v5311
    %v5378 = vunpack.c.h.b16 %v5311
    %v5379 = vunpack.c.l.b16 %v5312
    %v5380 = vunpack.c.h.b16 %v5312
    %v5381 = vunpack.c.l.b16 %v5313
    %v5382 = vunpack.c.h.b16 %v5313
    %v5383 = vunpack.c.l.b16 %v5314
    %v5384 = vunpack.c.h.b16 %v5314
    %v5385 = vunpack.c.l.b16 %v5315
    %v5386 = vunpack.c.h.b16 %v5315
    %v5387 = vunpack.c.l.b16 %v5316
    %v5388 = vunpack.c.h.b16 %v5316
    %v5389 = vunpack.c.l.b16 %v5317
    %v5390 = vunpack.c.h.b16 %v5317
    %v5391 = vunpack.c.l.b16 %v5318
    %v5392 = vunpack.c.h.b16 %v5318
    %v5393 = vunpack.c.l.b16 %v5319
    %v5394 = vunpack.c.h.b16 %v5319
    %v5395 = vunpack.c.l.b16 %v5320
    %v5396 = vunpack.c.h.b16 %v5320
    %v5397 = vunpack.c.l.b16 %v5321
    %v5398 = vunpack.c.h.b16 %v5321
    %v5399 = vunpack.c.l.b16 %v5322
    %v5400 = vunpack.c.h.b16 %v5322
    %v5401 = vunpack.c.l.b16 %v5323
    %v5402 = vunpack.c.h.b16 %v5323
    %v5403 = vunpack.c.l.b16 %v5324
    %v5404 = vunpack.c.h.b16 %v5324
    %v5405 = vunpack.c.l.b16 %v5325
    %v5406 = vunpack.c.h.b16 %v5325
    %v5407 = vunpack.c.l.b16 %v5326
    %v5408 = vunpack.c.h.b16 %v5326
    %v5409 = vunpack.c.l.b16 %v5327
    %v5410 = vunpack.c.h.b16 %v5327
    %v5411 = vunpack.c.l.b16 %v5328
    %v5412 = vunpack.c.h.b16 %v5328
    %v5413 = vunpack.c.l.b16 %v5329
    %v5414 = vunpack.c.h.b16 %v5329
    %v5415 = vunpack.c.l.b16 %v5330
    %v5416 = vunpack.c.h.b16 %v5330
    %v5417 = vunpack.c.l.b16 %v5331
    %v5418 = vunpack.c.h.b16 %v5331
    %v5419 = vunpack.c.l.b16 %v5332
    %v5420 = vunpack.c.h.b16 %v5332
    %v5421 = vunpack.c.l.b16 %v5333
    %v5422 = vunpack.c.h.b16 %v5333
    %v5423 = vunpack.c.l.b16 %v5334
    %v5424 = vunpack.c.h.b16 %v5334
    %v5425 = vunpack.c.l.b16 %v5335
    %v5426 = vunpack.c.h.b16 %v5335
    %v5427 = vunpack.c.l.b16 %v5336
    %v5428 = vunpack.c.h.b16 %v5336
    %v5429 = vunpack.c.l.b16 %v5337
    %v5430 = vunpack.c.h.b16 %v5337
    %v5431 = vunpack.c.l.b16 %v5338
    %v5432 = vunpack.c.h.b16 %v5338
    %v5433 = vunpack.c.l.b16 %v5339
    %v5434 = vunpack.c.h.b16 %v5339
    %v5435 = vunpack.c.l.b16 %v5340
    %v5436 = vunpack.c.h.b16 %v5340
    %v5437 = vpack.c.b16 %v5375, %v5373
    %v5438 = vpack.c.b16 %v5376, %v5374
    %v5439 = vpack.c.b16 %v5379, %v5377
    %v5440 = vpack.c.b16 %v5380, %v5378
    %v5441 = vpack.c.b16 %v5383, %v5381
    %v5442 = vpack.c.b16 %v5384, %v5382
    %v5443 = vpack.c.b16 %v5387, %v5385
    %v5444 = vpack.c.b16 %v5388, %v5386
    %v5445 = vpack.c.b16 %v5391, %v5389
    %v5446 = vpack.c.b16 %v5392, %v5390
    %v5447 = vpack.c.b16 %v5395, %v5393
    %v5448 = vpack.c.b16 %v5396, %v5394
    %v5449 = vpack.c.b16 %v5399, %v5397
    %v5450 = vpack.c.b16 %v5400, %v5398
    %v5451 = vpack.c.b16 %v5403, %v5401
    %v5452 = vpack.c.b16 %v5404, %v5402
    %v5453 = vpack.c.b16 %v5407, %v5405
    %v5454 = vpack.c.b16 %v5408, %v5406
    %v5455 = vpack.c.b16 %v5411, %v5409
    %v5456 = vpack.c.b16 %v5412, %v5410
    %v5457 = vpack.c.b16 %v5415, %v5413
    %v5458 = vpack.c.b16 %v5416, %v5414
    %v5459 = vpack.c.b16 %v5419, %v5417
    %v5460 = vpack.c.b16 %v5420, %v5418
    %v5461 = vpack.c.b16 %v5423, %v5421
    %v5462 = vpack.c.b16 %v5424, %v5422
    %v5463 = vpack.c.b16 %v5427, %v5425
    %v5464 = vpack.c.b16 %v5428, %v5426
    %v5465 = vpack.c.b16 %v5431, %v5429
    %v5466 = vpack.c.b16 %v5432, %v5430
    %v5467 = vpack.c.b16 %v5435, %v5433
    %v5468 = vpack.c.b16 %v5436, %v5434
    %5501 = vmatprep.subr.bf16.mxu0 %v5438
    %5502 = vmatpush1.bf16.msra.mxu0 %v5437
    %5503 = vmatprep.subr.bf16.mxu0 %v5440
    %5504 = vmatpush1.bf16.msra.mxu0 %v5439
    %5505 = vmatprep.subr.bf16.mxu0 %v5442
    %5506 = vmatpush1.bf16.msra.mxu0 %v5441
    %5507 = vmatprep.subr.bf16.mxu0 %v5444
    %5508 = vmatpush1.bf16.msra.mxu0 %v5443
    %5509 = vmatprep.subr.bf16.mxu0 %v5446
    %5510 = vmatpush1.bf16.msra.mxu0 %v5445
    %5511 = vmatprep.subr.bf16.mxu0 %v5448
    %5512 = vmatpush1.bf16.msra.mxu0 %v5447
    %5513 = vmatprep.subr.bf16.mxu0 %v5450
    %5514 = vmatpush1.bf16.msra.mxu0 %v5449
    %5515 = vmatprep.subr.bf16.mxu0 %v5452
    %5516 = vmatpush1.bf16.msra.mxu0 %v5451
    %5517 = vmatprep.subr.bf16.mxu0 %v5454
    %5518 = vmatpush1.bf16.msra.mxu0 %v5453
    %5519 = vmatprep.subr.bf16.mxu0 %v5456
    %5520 = vmatpush1.bf16.msra.mxu0 %v5455
    %5521 = vmatprep.subr.bf16.mxu0 %v5458
    %5522 = vmatpush1.bf16.msra.mxu0 %v5457
    %5523 = vmatprep.subr.bf16.mxu0 %v5460
    %5524 = vmatpush1.bf16.msra.mxu0 %v5459
    %5525 = vmatprep.subr.bf16.mxu0 %v5462
    %5526 = vmatpush1.bf16.msra.mxu0 %v5461
    %5527 = vmatprep.subr.bf16.mxu0 %v5464
    %5528 = vmatpush1.bf16.msra.mxu0 %v5463
    %5529 = vmatprep.subr.bf16.mxu0 %v5466
    %5530 = vmatpush1.bf16.msra.mxu0 %v5465
    %5531 = vmatprep.subr.bf16.mxu0 %v5468
    %5532 = vmatpush1.bf16.msra.mxu0 %v5467
    %5533 = vmatprep.mubr.bf16.mxu0 %v5307
    %5534 = vmatmul.mubr.bf16.gmra.mrb[0].mxu0 %v5306
    %v5535 = vpop.f32.mrb[0].mxu0
    %v5536 = vadd.f32 0.0, %v5535
    %v5537 = vpop.f32.mrb[0].mxu0
    %v5538 = vadd.f32 0.0, %v5537
    %v5539 = vpop.f32.mrb[0].mxu0
    %v5540 = vpop.f32.mrb[0].mxu0
    %5541 = vdwg.mxu0
    %v5542 = vadd.f32 %v5258, %v5536
    %v5543 = vadd.f32 %v5259, %v5538
    %s5544 = scalar_lea.vmem %s12, 6
    %v5545 = vld [vmem:[%s5544] sm:$0x1]
    %v5547 = vsel %vm3839, %v5545, 0
    %5549 = vmatprep.subr.bf16.mxu0 %v3848
    %5550 = vmatpush1.bf16.msra.mxu0 %v3845
    %5551 = vmatprep.subr.bf16.mxu0 0
    %5552 = vmatpush1.bf16.msra.mxu0 0
    %5553 = vmatprep.subr.bf16.mxu0 0
    %5554 = vmatpush1.bf16.msra.mxu0 0
    %5555 = vmatprep.subr.bf16.mxu0 0
    %5556 = vmatpush1.bf16.msra.mxu0 0
    %5557 = vmatprep.subr.bf16.mxu0 0
    %5558 = vmatpush1.bf16.msra.mxu0 0
    %5559 = vmatprep.subr.bf16.mxu0 0
    %5560 = vmatpush1.bf16.msra.mxu0 0
    %5561 = vmatprep.subr.bf16.mxu0 0
    %5562 = vmatpush1.bf16.msra.mxu0 0
    %5563 = vmatprep.subr.bf16.mxu0 0
    %5564 = vmatpush1.bf16.msra.mxu0 0
    %5565 = vmatprep.subr.bf16.mxu0 0
    %5566 = vmatpush1.bf16.msra.mxu0 0
    %5567 = vmatprep.subr.bf16.mxu0 0
    %5568 = vmatpush1.bf16.msra.mxu0 0
    %5569 = vmatprep.subr.bf16.mxu0 0
    %5570 = vmatpush1.bf16.msra.mxu0 0
    %5571 = vmatprep.subr.bf16.mxu0 0
    %5572 = vmatpush1.bf16.msra.mxu0 0
    %5573 = vmatprep.subr.bf16.mxu0 0
    %5574 = vmatpush1.bf16.msra.mxu0 0
    %5575 = vmatprep.subr.bf16.mxu0 0
    %5576 = vmatpush1.bf16.msra.mxu0 0
    %5577 = vmatprep.subr.bf16.mxu0 0
    %5578 = vmatpush1.bf16.msra.mxu0 0
    %5579 = vmatprep.subr.bf16.mxu0 0
    %5580 = vmatpush1.bf16.msra.mxu0 0
    %5581 = vmatprep.mubr.bf16.mxu0 0
    %5582 = vmatmul.mubr.bf16.gmra.mrb[0].mxu0 %v5547
    %v5583 = vpop.f32.mrb[0].mxu0
    %v5584 = vadd.f32 0.0, %v5583
    %v5585 = vpop.f32.mrb[0].mxu0
    %v5586 = vadd.f32 0.0, %v5585
    %v5587 = vpop.f32.mrb[0].mxu0
    %v5588 = vpop.f32.mrb[0].mxu0
    %5589 = vdwg.mxu0
    %v5590 = vpack.c.bf16 %v5584, %v5584
    %v5591 = vpack.c.bf16 %v5586, %v5586
    %s5592 = scalar_lea.vmem %s13, 1536
    %v5593 = vld [vmem:[%s5592] sm:$0xff]
    %v5594 = vld [vmem:[%s5592 + $0x8] sm:$0xff]
    %v5595 = vld [vmem:[%s5592 + $0x10] sm:$0xff]
    %v5596 = vld [vmem:[%s5592 + $0x18] sm:$0xff]
    %v5597 = vld [vmem:[%s5592 + $0x20] sm:$0xff]
    %v5598 = vld [vmem:[%s5592 + $0x28] sm:$0xff]
    %v5599 = vld [vmem:[%s5592 + $0x30] sm:$0xff]
    %v5600 = vld [vmem:[%s5592 + $0x38] sm:$0xff]
    %v5601 = vld [vmem:[%s5592 + $0x40] sm:$0xff]
    %v5602 = vld [vmem:[%s5592 + $0x48] sm:$0xff]
    %v5603 = vld [vmem:[%s5592 + $0x50] sm:$0xff]
    %v5604 = vld [vmem:[%s5592 + $0x58] sm:$0xff]
    %v5605 = vld [vmem:[%s5592 + $0x60] sm:$0xff]
    %v5606 = vld [vmem:[%s5592 + $0x68] sm:$0xff]
    %v5607 = vld [vmem:[%s5592 + $0x70] sm:$0xff]
    %v5608 = vld [vmem:[%s5592 + $0x78] sm:$0xff]
    %v5609 = vld [vmem:[%s5592 + $0x80] sm:$0xff]
    %v5610 = vld [vmem:[%s5592 + $0x88] sm:$0xff]
    %v5611 = vld [vmem:[%s5592 + $0x90] sm:$0xff]
    %v5612 = vld [vmem:[%s5592 + $0x98] sm:$0xff]
    %v5613 = vld [vmem:[%s5592 + $0xa0] sm:$0xff]
    %v5614 = vld [vmem:[%s5592 + $0xa8] sm:$0xff]
    %v5615 = vld [vmem:[%s5592 + $0xb0] sm:$0xff]
    %v5616 = vld [vmem:[%s5592 + $0xb8] sm:$0xff]
    %v5617 = vld [vmem:[%s5592 + $0xc0] sm:$0xff]
    %v5618 = vld [vmem:[%s5592 + $0xc8] sm:$0xff]
    %v5619 = vld [vmem:[%s5592 + $0xd0] sm:$0xff]
    %v5620 = vld [vmem:[%s5592 + $0xd8] sm:$0xff]
    %v5621 = vld [vmem:[%s5592 + $0xe0] sm:$0xff]
    %v5622 = vld [vmem:[%s5592 + $0xe8] sm:$0xff]
    %v5623 = vld [vmem:[%s5592 + $0xf0] sm:$0xff]
    %v5624 = vld [vmem:[%s5592 + $0xf8] sm:$0xff]
    %v5657 = vunpack.c.l.b16 %v5593
    %v5658 = vunpack.c.h.b16 %v5593
    %v5659 = vunpack.c.l.b16 %v5594
    %v5660 = vunpack.c.h.b16 %v5594
    %v5661 = vunpack.c.l.b16 %v5595
    %v5662 = vunpack.c.h.b16 %v5595
    %v5663 = vunpack.c.l.b16 %v5596
    %v5664 = vunpack.c.h.b16 %v5596
    %v5665 = vunpack.c.l.b16 %v5597
    %v5666 = vunpack.c.h.b16 %v5597
    %v5667 = vunpack.c.l.b16 %v5598
    %v5668 = vunpack.c.h.b16 %v5598
    %v5669 = vunpack.c.l.b16 %v5599
    %v5670 = vunpack.c.h.b16 %v5599
    %v5671 = vunpack.c.l.b16 %v5600
    %v5672 = vunpack.c.h.b16 %v5600
    %v5673 = vunpack.c.l.b16 %v5601
    %v5674 = vunpack.c.h.b16 %v5601
    %v5675 = vunpack.c.l.b16 %v5602
    %v5676 = vunpack.c.h.b16 %v5602
    %v5677 = vunpack.c.l.b16 %v5603
    %v5678 = vunpack.c.h.b16 %v5603
    %v5679 = vunpack.c.l.b16 %v5604
    %v5680 = vunpack.c.h.b16 %v5604
    %v5681 = vunpack.c.l.b16 %v5605
    %v5682 = vunpack.c.h.b16 %v5605
    %v5683 = vunpack.c.l.b16 %v5606
    %v5684 = vunpack.c.h.b16 %v5606
    %v5685 = vunpack.c.l.b16 %v5607
    %v5686 = vunpack.c.h.b16 %v5607
    %v5687 = vunpack.c.l.b16 %v5608
    %v5688 = vunpack.c.h.b16 %v5608
    %v5689 = vunpack.c.l.b16 %v5609
    %v5690 = vunpack.c.h.b16 %v5609
    %v5691 = vunpack.c.l.b16 %v5610
    %v5692 = vunpack.c.h.b16 %v5610
    %v5693 = vunpack.c.l.b16 %v5611
    %v5694 = vunpack.c.h.b16 %v5611
    %v5695 = vunpack.c.l.b16 %v5612
    %v5696 = vunpack.c.h.b16 %v5612
    %v5697 = vunpack.c.l.b16 %v5613
    %v5698 = vunpack.c.h.b16 %v5613
    %v5699 = vunpack.c.l.b16 %v5614
    %v5700 = vunpack.c.h.b16 %v5614
    %v5701 = vunpack.c.l.b16 %v5615
    %v5702 = vunpack.c.h.b16 %v5615
    %v5703 = vunpack.c.l.b16 %v5616
    %v5704 = vunpack.c.h.b16 %v5616
    %v5705 = vunpack.c.l.b16 %v5617
    %v5706 = vunpack.c.h.b16 %v5617
    %v5707 = vunpack.c.l.b16 %v5618
    %v5708 = vunpack.c.h.b16 %v5618
    %v5709 = vunpack.c.l.b16 %v5619
    %v5710 = vunpack.c.h.b16 %v5619
    %v5711 = vunpack.c.l.b16 %v5620
    %v5712 = vunpack.c.h.b16 %v5620
    %v5713 = vunpack.c.l.b16 %v5621
    %v5714 = vunpack.c.h.b16 %v5621
    %v5715 = vunpack.c.l.b16 %v5622
    %v5716 = vunpack.c.h.b16 %v5622
    %v5717 = vunpack.c.l.b16 %v5623
    %v5718 = vunpack.c.h.b16 %v5623
    %v5719 = vunpack.c.l.b16 %v5624
    %v5720 = vunpack.c.h.b16 %v5624
    %v5721 = vpack.c.b16 %v5659, %v5657
    %v5722 = vpack.c.b16 %v5660, %v5658
    %v5723 = vpack.c.b16 %v5663, %v5661
    %v5724 = vpack.c.b16 %v5664, %v5662
    %v5725 = vpack.c.b16 %v5667, %v5665
    %v5726 = vpack.c.b16 %v5668, %v5666
    %v5727 = vpack.c.b16 %v5671, %v5669
    %v5728 = vpack.c.b16 %v5672, %v5670
    %v5729 = vpack.c.b16 %v5675, %v5673
    %v5730 = vpack.c.b16 %v5676, %v5674
    %v5731 = vpack.c.b16 %v5679, %v5677
    %v5732 = vpack.c.b16 %v5680, %v5678
    %v5733 = vpack.c.b16 %v5683, %v5681
    %v5734 = vpack.c.b16 %v5684, %v5682
    %v5735 = vpack.c.b16 %v5687, %v5685
    %v5736 = vpack.c.b16 %v5688, %v5686
    %v5737 = vpack.c.b16 %v5691, %v5689
    %v5738 = vpack.c.b16 %v5692, %v5690
    %v5739 = vpack.c.b16 %v5695, %v5693
    %v5740 = vpack.c.b16 %v5696, %v5694
    %v5741 = vpack.c.b16 %v5699, %v5697
    %v5742 = vpack.c.b16 %v5700, %v5698
    %v5743 = vpack.c.b16 %v5703, %v5701
    %v5744 = vpack.c.b16 %v5704, %v5702
    %v5745 = vpack.c.b16 %v5707, %v5705
    %v5746 = vpack.c.b16 %v5708, %v5706
    %v5747 = vpack.c.b16 %v5711, %v5709
    %v5748 = vpack.c.b16 %v5712, %v5710
    %v5749 = vpack.c.b16 %v5715, %v5713
    %v5750 = vpack.c.b16 %v5716, %v5714
    %v5751 = vpack.c.b16 %v5719, %v5717
    %v5752 = vpack.c.b16 %v5720, %v5718
    %5785 = vmatprep.subr.bf16.mxu0 %v5722
    %5786 = vmatpush1.bf16.msra.mxu0 %v5721
    %5787 = vmatprep.subr.bf16.mxu0 %v5724
    %5788 = vmatpush1.bf16.msra.mxu0 %v5723
    %5789 = vmatprep.subr.bf16.mxu0 %v5726
    %5790 = vmatpush1.bf16.msra.mxu0 %v5725
    %5791 = vmatprep.subr.bf16.mxu0 %v5728
    %5792 = vmatpush1.bf16.msra.mxu0 %v5727
    %5793 = vmatprep.subr.bf16.mxu0 %v5730
    %5794 = vmatpush1.bf16.msra.mxu0 %v5729
    %5795 = vmatprep.subr.bf16.mxu0 %v5732
    %5796 = vmatpush1.bf16.msra.mxu0 %v5731
    %5797 = vmatprep.subr.bf16.mxu0 %v5734
    %5798 = vmatpush1.bf16.msra.mxu0 %v5733
    %5799 = vmatprep.subr.bf16.mxu0 %v5736
    %5800 = vmatpush1.bf16.msra.mxu0 %v5735
    %5801 = vmatprep.subr.bf16.mxu0 %v5738
    %5802 = vmatpush1.bf16.msra.mxu0 %v5737
    %5803 = vmatprep.subr.bf16.mxu0 %v5740
    %5804 = vmatpush1.bf16.msra.mxu0 %v5739
    %5805 = vmatprep.subr.bf16.mxu0 %v5742
    %5806 = vmatpush1.bf16.msra.mxu0 %v5741
    %5807 = vmatprep.subr.bf16.mxu0 %v5744
    %5808 = vmatpush1.bf16.msra.mxu0 %v5743
    %5809 = vmatprep.subr.bf16.mxu0 %v5746
    %5810 = vmatpush1.bf16.msra.mxu0 %v5745
    %5811 = vmatprep.subr.bf16.mxu0 %v5748
    %5812 = vmatpush1.bf16.msra.mxu0 %v5747
    %5813 = vmatprep.subr.bf16.mxu0 %v5750
    %5814 = vmatpush1.bf16.msra.mxu0 %v5749
    %5815 = vmatprep.subr.bf16.mxu0 %v5752
    %5816 = vmatpush1.bf16.msra.mxu0 %v5751
    %5817 = vmatprep.mubr.bf16.mxu0 %v5591
    %5818 = vmatmul.mubr.bf16.gmra.mrb[0].mxu0 %v5590
    %v5819 = vpop.f32.mrb[0].mxu0
    %v5820 = vadd.f32 0.0, %v5819
    %v5821 = vpop.f32.mrb[0].mxu0
    %v5822 = vadd.f32 0.0, %v5821
    %v5823 = vpop.f32.mrb[0].mxu0
    %v5824 = vpop.f32.mrb[0].mxu0
    %5825 = vdwg.mxu0
    %v5826 = vadd.f32 %v5542, %v5820
    %v5827 = vadd.f32 %v5543, %v5822
    %s5828 = scalar_lea.vmem %s12, 7
    %v5829 = vld [vmem:[%s5828] sm:$0x1]
    %v5831 = vsel %vm3839, %v5829, 0
    %5833 = vmatprep.subr.bf16.mxu0 %v3848
    %5834 = vmatpush1.bf16.msra.mxu0 %v3845
    %5835 = vmatprep.subr.bf16.mxu0 0
    %5836 = vmatpush1.bf16.msra.mxu0 0
    %5837 = vmatprep.subr.bf16.mxu0 0
    %5838 = vmatpush1.bf16.msra.mxu0 0
    %5839 = vmatprep.subr.bf16.mxu0 0
    %5840 = vmatpush1.bf16.msra.mxu0 0
    %5841 = vmatprep.subr.bf16.mxu0 0
    %5842 = vmatpush1.bf16.msra.mxu0 0
    %5843 = vmatprep.subr.bf16.mxu0 0
    %5844 = vmatpush1.bf16.msra.mxu0 0
    %5845 = vmatprep.subr.bf16.mxu0 0
    %5846 = vmatpush1.bf16.msra.mxu0 0
    %5847 = vmatprep.subr.bf16.mxu0 0
    %5848 = vmatpush1.bf16.msra.mxu0 0
    %5849 = vmatprep.subr.bf16.mxu0 0
    %5850 = vmatpush1.bf16.msra.mxu0 0
    %5851 = vmatprep.subr.bf16.mxu0 0
    %5852 = vmatpush1.bf16.msra.mxu0 0
    %5853 = vmatprep.subr.bf16.mxu0 0
    %5854 = vmatpush1.bf16.msra.mxu0 0
    %5855 = vmatprep.subr.bf16.mxu0 0
    %5856 = vmatpush1.bf16.msra.mxu0 0
    %5857 = vmatprep.subr.bf16.mxu0 0
    %5858 = vmatpush1.bf16.msra.mxu0 0
    %5859 = vmatprep.subr.bf16.mxu0 0
    %5860 = vmatpush1.bf16.msra.mxu0 0
    %5861 = vmatprep.subr.bf16.mxu0 0
    %5862 = vmatpush1.bf16.msra.mxu0 0
    %5863 = vmatprep.subr.bf16.mxu0 0
    %5864 = vmatpush1.bf16.msra.mxu0 0
    %5865 = vmatprep.mubr.bf16.mxu0 0
    %5866 = vmatmul.mubr.bf16.gmra.mrb[0].mxu0 %v5831
    %v5867 = vpop.f32.mrb[0].mxu0
    %v5868 = vadd.f32 0.0, %v5867
    %v5869 = vpop.f32.mrb[0].mxu0
    %v5870 = vadd.f32 0.0, %v5869
    %v5871 = vpop.f32.mrb[0].mxu0
    %v5872 = vpop.f32.mrb[0].mxu0
    %5873 = vdwg.mxu0
    %v5874 = vpack.c.bf16 %v5868, %v5868
    %v5875 = vpack.c.bf16 %v5870, %v5870
    %s5876 = scalar_lea.vmem %s13, 1792
    %v5877 = vld [vmem:[%s5876] sm:$0xff]
    %v5878 = vld [vmem:[%s5876 + $0x8] sm:$0xff]
    %v5879 = vld [vmem:[%s5876 + $0x10] sm:$0xff]
    %v5880 = vld [vmem:[%s5876 + $0x18] sm:$0xff]
    %v5881 = vld [vmem:[%s5876 + $0x20] sm:$0xff]
    %v5882 = vld [vmem:[%s5876 + $0x28] sm:$0xff]
    %v5883 = vld [vmem:[%s5876 + $0x30] sm:$0xff]
    %v5884 = vld [vmem:[%s5876 + $0x38] sm:$0xff]
    %v5885 = vld [vmem:[%s5876 + $0x40] sm:$0xff]
    %v5886 = vld [vmem:[%s5876 + $0x48] sm:$0xff]
    %v5887 = vld [vmem:[%s5876 + $0x50] sm:$0xff]
    %v5888 = vld [vmem:[%s5876 + $0x58] sm:$0xff]
    %v5889 = vld [vmem:[%s5876 + $0x60] sm:$0xff]
    %v5890 = vld [vmem:[%s5876 + $0x68] sm:$0xff]
    %v5891 = vld [vmem:[%s5876 + $0x70] sm:$0xff]
    %v5892 = vld [vmem:[%s5876 + $0x78] sm:$0xff]
    %v5893 = vld [vmem:[%s5876 + $0x80] sm:$0xff]
    %v5894 = vld [vmem:[%s5876 + $0x88] sm:$0xff]
    %v5895 = vld [vmem:[%s5876 + $0x90] sm:$0xff]
    %v5896 = vld [vmem:[%s5876 + $0x98] sm:$0xff]
    %v5897 = vld [vmem:[%s5876 + $0xa0] sm:$0xff]
    %v5898 = vld [vmem:[%s5876 + $0xa8] sm:$0xff]
    %v5899 = vld [vmem:[%s5876 + $0xb0] sm:$0xff]
    %v5900 = vld [vmem:[%s5876 + $0xb8] sm:$0xff]
    %v5901 = vld [vmem:[%s5876 + $0xc0] sm:$0xff]
    %v5902 = vld [vmem:[%s5876 + $0xc8] sm:$0xff]
    %v5903 = vld [vmem:[%s5876 + $0xd0] sm:$0xff]
    %v5904 = vld [vmem:[%s5876 + $0xd8] sm:$0xff]
    %v5905 = vld [vmem:[%s5876 + $0xe0] sm:$0xff]
    %v5906 = vld [vmem:[%s5876 + $0xe8] sm:$0xff]
    %v5907 = vld [vmem:[%s5876 + $0xf0] sm:$0xff]
    %v5908 = vld [vmem:[%s5876 + $0xf8] sm:$0xff]
    %v5941 = vunpack.c.l.b16 %v5877
    %v5942 = vunpack.c.h.b16 %v5877
    %v5943 = vunpack.c.l.b16 %v5878
    %v5944 = vunpack.c.h.b16 %v5878
    %v5945 = vunpack.c.l.b16 %v5879
    %v5946 = vunpack.c.h.b16 %v5879
    %v5947 = vunpack.c.l.b16 %v5880
    %v5948 = vunpack.c.h.b16 %v5880
    %v5949 = vunpack.c.l.b16 %v5881
    %v5950 = vunpack.c.h.b16 %v5881
    %v5951 = vunpack.c.l.b16 %v5882
    %v5952 = vunpack.c.h.b16 %v5882
    %v5953 = vunpack.c.l.b16 %v5883
    %v5954 = vunpack.c.h.b16 %v5883
    %v5955 = vunpack.c.l.b16 %v5884
    %v5956 = vunpack.c.h.b16 %v5884
    %v5957 = vunpack.c.l.b16 %v5885
    %v5958 = vunpack.c.h.b16 %v5885
    %v5959 = vunpack.c.l.b16 %v5886
    %v5960 = vunpack.c.h.b16 %v5886
    %v5961 = vunpack.c.l.b16 %v5887
    %v5962 = vunpack.c.h.b16 %v5887
    %v5963 = vunpack.c.l.b16 %v5888
    %v5964 = vunpack.c.h.b16 %v5888
    %v5965 = vunpack.c.l.b16 %v5889
    %v5966 = vunpack.c.h.b16 %v5889
    %v5967 = vunpack.c.l.b16 %v5890
    %v5968 = vunpack.c.h.b16 %v5890
    %v5969 = vunpack.c.l.b16 %v5891
    %v5970 = vunpack.c.h.b16 %v5891
    %v5971 = vunpack.c.l.b16 %v5892
    %v5972 = vunpack.c.h.b16 %v5892
    %v5973 = vunpack.c.l.b16 %v5893
    %v5974 = vunpack.c.h.b16 %v5893
    %v5975 = vunpack.c.l.b16 %v5894
    %v5976 = vunpack.c.h.b16 %v5894
    %v5977 = vunpack.c.l.b16 %v5895
    %v5978 = vunpack.c.h.b16 %v5895
    %v5979 = vunpack.c.l.b16 %v5896
    %v5980 = vunpack.c.h.b16 %v5896
    %v5981 = vunpack.c.l.b16 %v5897
    %v5982 = vunpack.c.h.b16 %v5897
    %v5983 = vunpack.c.l.b16 %v5898
    %v5984 = vunpack.c.h.b16 %v5898
    %v5985 = vunpack.c.l.b16 %v5899
    %v5986 = vunpack.c.h.b16 %v5899
    %v5987 = vunpack.c.l.b16 %v5900
    %v5988 = vunpack.c.h.b16 %v5900
    %v5989 = vunpack.c.l.b16 %v5901
    %v5990 = vunpack.c.h.b16 %v5901
    %v5991 = vunpack.c.l.b16 %v5902
    %v5992 = vunpack.c.h.b16 %v5902
    %v5993 = vunpack.c.l.b16 %v5903
    %v5994 = vunpack.c.h.b16 %v5903
    %v5995 = vunpack.c.l.b16 %v5904
    %v5996 = vunpack.c.h.b16 %v5904
    %v5997 = vunpack.c.l.b16 %v5905
    %v5998 = vunpack.c.h.b16 %v5905
    %v5999 = vunpack.c.l.b16 %v5906
    %v6000 = vunpack.c.h.b16 %v5906
    %v6001 = vunpack.c.l.b16 %v5907
    %v6002 = vunpack.c.h.b16 %v5907
    %v6003 = vunpack.c.l.b16 %v5908
    %v6004 = vunpack.c.h.b16 %v5908
    %v6005 = vpack.c.b16 %v5943, %v5941
    %v6006 = vpack.c.b16 %v5944, %v5942
    %v6007 = vpack.c.b16 %v5947, %v5945
    %v6008 = vpack.c.b16 %v5948, %v5946
    %v6009 = vpack.c.b16 %v5951, %v5949
    %v6010 = vpack.c.b16 %v5952, %v5950
    %v6011 = vpack.c.b16 %v5955, %v5953
    %v6012 = vpack.c.b16 %v5956, %v5954
    %v6013 = vpack.c.b16 %v5959, %v5957
    %v6014 = vpack.c.b16 %v5960, %v5958
    %v6015 = vpack.c.b16 %v5963, %v5961
    %v6016 = vpack.c.b16 %v5964, %v5962
    %v6017 = vpack.c.b16 %v5967, %v5965
    %v6018 = vpack.c.b16 %v5968, %v5966
    %v6019 = vpack.c.b16 %v5971, %v5969
    %v6020 = vpack.c.b16 %v5972, %v5970
    %v6021 = vpack.c.b16 %v5975, %v5973
    %v6022 = vpack.c.b16 %v5976, %v5974
    %v6023 = vpack.c.b16 %v5979, %v5977
    %v6024 = vpack.c.b16 %v5980, %v5978
    %v6025 = vpack.c.b16 %v5983, %v5981
    %v6026 = vpack.c.b16 %v5984, %v5982
    %v6027 = vpack.c.b16 %v5987, %v5985
    %v6028 = vpack.c.b16 %v5988, %v5986
    %v6029 = vpack.c.b16 %v5991, %v5989
    %v6030 = vpack.c.b16 %v5992, %v5990
    %v6031 = vpack.c.b16 %v5995, %v5993
    %v6032 = vpack.c.b16 %v5996, %v5994
    %v6033 = vpack.c.b16 %v5999, %v5997
    %v6034 = vpack.c.b16 %v6000, %v5998
    %v6035 = vpack.c.b16 %v6003, %v6001
    %v6036 = vpack.c.b16 %v6004, %v6002
    %6069 = vmatprep.subr.bf16.mxu0 %v6006
    %6070 = vmatpush1.bf16.msra.mxu0 %v6005
    %6071 = vmatprep.subr.bf16.mxu0 %v6008
    %6072 = vmatpush1.bf16.msra.mxu0 %v6007
    %6073 = vmatprep.subr.bf16.mxu0 %v6010
    %6074 = vmatpush1.bf16.msra.mxu0 %v6009
    %6075 = vmatprep.subr.bf16.mxu0 %v6012
    %6076 = vmatpush1.bf16.msra.mxu0 %v6011
    %6077 = vmatprep.subr.bf16.mxu0 %v6014
    %6078 = vmatpush1.bf16.msra.mxu0 %v6013
    %6079 = vmatprep.subr.bf16.mxu0 %v6016
    %6080 = vmatpush1.bf16.msra.mxu0 %v6015
    %6081 = vmatprep.subr.bf16.mxu0 %v6018
    %6082 = vmatpush1.bf16.msra.mxu0 %v6017
    %6083 = vmatprep.subr.bf16.mxu0 %v6020
    %6084 = vmatpush1.bf16.msra.mxu0 %v6019
    %6085 = vmatprep.subr.bf16.mxu0 %v6022
    %6086 = vmatpush1.bf16.msra.mxu0 %v6021
    %6087 = vmatprep.subr.bf16.mxu0 %v6024
    %6088 = vmatpush1.bf16.msra.mxu0 %v6023
    %6089 = vmatprep.subr.bf16.mxu0 %v6026
    %6090 = vmatpush1.bf16.msra.mxu0 %v6025
    %6091 = vmatprep.subr.bf16.mxu0 %v6028
    %6092 = vmatpush1.bf16.msra.mxu0 %v6027
    %6093 = vmatprep.subr.bf16.mxu0 %v6030
    %6094 = vmatpush1.bf16.msra.mxu0 %v6029
    %6095 = vmatprep.subr.bf16.mxu0 %v6032
    %6096 = vmatpush1.bf16.msra.mxu0 %v6031
    %6097 = vmatprep.subr.bf16.mxu0 %v6034
    %6098 = vmatpush1.bf16.msra.mxu0 %v6033
    %6099 = vmatprep.subr.bf16.mxu0 %v6036
    %6100 = vmatpush1.bf16.msra.mxu0 %v6035
    %6101 = vmatprep.mubr.bf16.mxu0 %v5875
    %6102 = vmatmul.mubr.bf16.gmra.mrb[0].mxu0 %v5874
    %v6103 = vpop.f32.mrb[0].mxu0
    %v6104 = vadd.f32 0.0, %v6103
    %v6105 = vpop.f32.mrb[0].mxu0
    %v6106 = vadd.f32 0.0, %v6105
    %v6107 = vpop.f32.mrb[0].mxu0
    %v6108 = vpop.f32.mrb[0].mxu0
    %6109 = vdwg.mxu0
    %v6110 = vadd.f32 %v5826, %v6104
    %v6111 = vadd.f32 %v5827, %v6106
    %s6112 = scalar_lea.vmem %s12, 8
    %v6113 = vld [vmem:[%s6112] sm:$0x1]
    %v6115 = vsel %vm3839, %v6113, 0
    %6117 = vmatprep.subr.bf16.mxu0 %v3848
    %6118 = vmatpush1.bf16.msra.mxu0 %v3845
    %6119 = vmatprep.subr.bf16.mxu0 0
    %6120 = vmatpush1.bf16.msra.mxu0 0
    %6121 = vmatprep.subr.bf16.mxu0 0
    %6122 = vmatpush1.bf16.msra.mxu0 0
    %6123 = vmatprep.subr.bf16.mxu0 0
    %6124 = vmatpush1.bf16.msra.mxu0 0
    %6125 = vmatprep.subr.bf16.mxu0 0
    %6126 = vmatpush1.bf16.msra.mxu0 0
    %6127 = vmatprep.subr.bf16.mxu0 0
    %6128 = vmatpush1.bf16.msra.mxu0 0
    %6129 = vmatprep.subr.bf16.mxu0 0
    %6130 = vmatpush1.bf16.msra.mxu0 0
    %6131 = vmatprep.subr.bf16.mxu0 0
    %6132 = vmatpush1.bf16.msra.mxu0 0
    %6133 = vmatprep.subr.bf16.mxu0 0
    %6134 = vmatpush1.bf16.msra.mxu0 0
    %6135 = vmatprep.subr.bf16.mxu0 0
    %6136 = vmatpush1.bf16.msra.mxu0 0
    %6137 = vmatprep.subr.bf16.mxu0 0
    %6138 = vmatpush1.bf16.msra.mxu0 0
    %6139 = vmatprep.subr.bf16.mxu0 0
    %6140 = vmatpush1.bf16.msra.mxu0 0
    %6141 = vmatprep.subr.bf16.mxu0 0
    %6142 = vmatpush1.bf16.msra.mxu0 0
    %6143 = vmatprep.subr.bf16.mxu0 0
    %6144 = vmatpush1.bf16.msra.mxu0 0
    %6145 = vmatprep.subr.bf16.mxu0 0
    %6146 = vmatpush1.bf16.msra.mxu0 0
    %6147 = vmatprep.subr.bf16.mxu0 0
    %6148 = vmatpush1.bf16.msra.mxu0 0
    %6149 = vmatprep.mubr.bf16.mxu0 0
    %6150 = vmatmul.mubr.bf16.gmra.mrb[0].mxu0 %v6115
    %v6151 = vpop.f32.mrb[0].mxu0
    %v6152 = vadd.f32 0.0, %v6151
    %v6153 = vpop.f32.mrb[0].mxu0
    %v6154 = vadd.f32 0.0, %v6153
    %v6155 = vpop.f32.mrb[0].mxu0
    %v6156 = vpop.f32.mrb[0].mxu0
    %6157 = vdwg.mxu0
    %v6158 = vpack.c.bf16 %v6152, %v6152
    %v6159 = vpack.c.bf16 %v6154, %v6154
    %s6160 = scalar_lea.vmem %s13, 2048
    %v6161 = vld [vmem:[%s6160] sm:$0xff]
    %v6162 = vld [vmem:[%s6160 + $0x8] sm:$0xff]
    %v6163 = vld [vmem:[%s6160 + $0x10] sm:$0xff]
    %v6164 = vld [vmem:[%s6160 + $0x18] sm:$0xff]
    %v6165 = vld [vmem:[%s6160 + $0x20] sm:$0xff]
    %v6166 = vld [vmem:[%s6160 + $0x28] sm:$0xff]
    %v6167 = vld [vmem:[%s6160 + $0x30] sm:$0xff]
    %v6168 = vld [vmem:[%s6160 + $0x38] sm:$0xff]
    %v6169 = vld [vmem:[%s6160 + $0x40] sm:$0xff]
    %v6170 = vld [vmem:[%s6160 + $0x48] sm:$0xff]
    %v6171 = vld [vmem:[%s6160 + $0x50] sm:$0xff]
    %v6172 = vld [vmem:[%s6160 + $0x58] sm:$0xff]
    %v6173 = vld [vmem:[%s6160 + $0x60] sm:$0xff]
    %v6174 = vld [vmem:[%s6160 + $0x68] sm:$0xff]
    %v6175 = vld [vmem:[%s6160 + $0x70] sm:$0xff]
    %v6176 = vld [vmem:[%s6160 + $0x78] sm:$0xff]
    %v6177 = vld [vmem:[%s6160 + $0x80] sm:$0xff]
    %v6178 = vld [vmem:[%s6160 + $0x88] sm:$0xff]
    %v6179 = vld [vmem:[%s6160 + $0x90] sm:$0xff]
    %v6180 = vld [vmem:[%s6160 + $0x98] sm:$0xff]
    %v6181 = vld [vmem:[%s6160 + $0xa0] sm:$0xff]
    %v6182 = vld [vmem:[%s6160 + $0xa8] sm:$0xff]
    %v6183 = vld [vmem:[%s6160 + $0xb0] sm:$0xff]
    %v6184 = vld [vmem:[%s6160 + $0xb8] sm:$0xff]
    %v6185 = vld [vmem:[%s6160 + $0xc0] sm:$0xff]
    %v6186 = vld [vmem:[%s6160 + $0xc8] sm:$0xff]
    %v6187 = vld [vmem:[%s6160 + $0xd0] sm:$0xff]
    %v6188 = vld [vmem:[%s6160 + $0xd8] sm:$0xff]
    %v6189 = vld [vmem:[%s6160 + $0xe0] sm:$0xff]
    %v6190 = vld [vmem:[%s6160 + $0xe8] sm:$0xff]
    %v6191 = vld [vmem:[%s6160 + $0xf0] sm:$0xff]
    %v6192 = vld [vmem:[%s6160 + $0xf8] sm:$0xff]
    %v6225 = vunpack.c.l.b16 %v6161
    %v6226 = vunpack.c.h.b16 %v6161
    %v6227 = vunpack.c.l.b16 %v6162
    %v6228 = vunpack.c.h.b16 %v6162
    %v6229 = vunpack.c.l.b16 %v6163
    %v6230 = vunpack.c.h.b16 %v6163
    %v6231 = vunpack.c.l.b16 %v6164
    %v6232 = vunpack.c.h.b16 %v6164
    %v6233 = vunpack.c.l.b16 %v6165
    %v6234 = vunpack.c.h.b16 %v6165
    %v6235 = vunpack.c.l.b16 %v6166
    %v6236 = vunpack.c.h.b16 %v6166
    %v6237 = vunpack.c.l.b16 %v6167
    %v6238 = vunpack.c.h.b16 %v6167
    %v6239 = vunpack.c.l.b16 %v6168
    %v6240 = vunpack.c.h.b16 %v6168
    %v6241 = vunpack.c.l.b16 %v6169
    %v6242 = vunpack.c.h.b16 %v6169
    %v6243 = vunpack.c.l.b16 %v6170
    %v6244 = vunpack.c.h.b16 %v6170
    %v6245 = vunpack.c.l.b16 %v6171
    %v6246 = vunpack.c.h.b16 %v6171
    %v6247 = vunpack.c.l.b16 %v6172
    %v6248 = vunpack.c.h.b16 %v6172
    %v6249 = vunpack.c.l.b16 %v6173
    %v6250 = vunpack.c.h.b16 %v6173
    %v6251 = vunpack.c.l.b16 %v6174
    %v6252 = vunpack.c.h.b16 %v6174
    %v6253 = vunpack.c.l.b16 %v6175
    %v6254 = vunpack.c.h.b16 %v6175
    %v6255 = vunpack.c.l.b16 %v6176
    %v6256 = vunpack.c.h.b16 %v6176
    %v6257 = vunpack.c.l.b16 %v6177
    %v6258 = vunpack.c.h.b16 %v6177
    %v6259 = vunpack.c.l.b16 %v6178
    %v6260 = vunpack.c.h.b16 %v6178
    %v6261 = vunpack.c.l.b16 %v6179
    %v6262 = vunpack.c.h.b16 %v6179
    %v6263 = vunpack.c.l.b16 %v6180
    %v6264 = vunpack.c.h.b16 %v6180
    %v6265 = vunpack.c.l.b16 %v6181
    %v6266 = vunpack.c.h.b16 %v6181
    %v6267 = vunpack.c.l.b16 %v6182
    %v6268 = vunpack.c.h.b16 %v6182
    %v6269 = vunpack.c.l.b16 %v6183
    %v6270 = vunpack.c.h.b16 %v6183
    %v6271 = vunpack.c.l.b16 %v6184
    %v6272 = vunpack.c.h.b16 %v6184
    %v6273 = vunpack.c.l.b16 %v6185
    %v6274 = vunpack.c.h.b16 %v6185
    %v6275 = vunpack.c.l.b16 %v6186
    %v6276 = vunpack.c.h.b16 %v6186
    %v6277 = vunpack.c.l.b16 %v6187
    %v6278 = vunpack.c.h.b16 %v6187
    %v6279 = vunpack.c.l.b16 %v6188
    %v6280 = vunpack.c.h.b16 %v6188
    %v6281 = vunpack.c.l.b16 %v6189
    %v6282 = vunpack.c.h.b16 %v6189
    %v6283 = vunpack.c.l.b16 %v6190
    %v6284 = vunpack.c.h.b16 %v6190
    %v6285 = vunpack.c.l.b16 %v6191
    %v6286 = vunpack.c.h.b16 %v6191
    %v6287 = vunpack.c.l.b16 %v6192
    %v6288 = vunpack.c.h.b16 %v6192
    %v6289 = vpack.c.b16 %v6227, %v6225
    %v6290 = vpack.c.b16 %v6228, %v6226
    %v6291 = vpack.c.b16 %v6231, %v6229
    %v6292 = vpack.c.b16 %v6232, %v6230
    %v6293 = vpack.c.b16 %v6235, %v6233
    %v6294 = vpack.c.b16 %v6236, %v6234
    %v6295 = vpack.c.b16 %v6239, %v6237
    %v6296 = vpack.c.b16 %v6240, %v6238
    %v6297 = vpack.c.b16 %v6243, %v6241
    %v6298 = vpack.c.b16 %v6244, %v6242
    %v6299 = vpack.c.b16 %v6247, %v6245
    %v6300 = vpack.c.b16 %v6248, %v6246
    %v6301 = vpack.c.b16 %v6251, %v6249
    %v6302 = vpack.c.b16 %v6252, %v6250
    %v6303 = vpack.c.b16 %v6255, %v6253
    %v6304 = vpack.c.b16 %v6256, %v6254
    %v6305 = vpack.c.b16 %v6259, %v6257
    %v6306 = vpack.c.b16 %v6260, %v6258
    %v6307 = vpack.c.b16 %v6263, %v6261
    %v6308 = vpack.c.b16 %v6264, %v6262
    %v6309 = vpack.c.b16 %v6267, %v6265
    %v6310 = vpack.c.b16 %v6268, %v6266
    %v6311 = vpack.c.b16 %v6271, %v6269
    %v6312 = vpack.c.b16 %v6272, %v6270
    %v6313 = vpack.c.b16 %v6275, %v6273
    %v6314 = vpack.c.b16 %v6276, %v6274
    %v6315 = vpack.c.b16 %v6279, %v6277
    %v6316 = vpack.c.b16 %v6280, %v6278
    %v6317 = vpack.c.b16 %v6283, %v6281
    %v6318 = vpack.c.b16 %v6284, %v6282
    %v6319 = vpack.c.b16 %v6287, %v6285
    %v6320 = vpack.c.b16 %v6288, %v6286
    %6353 = vmatprep.subr.bf16.mxu0 %v6290
    %6354 = vmatpush1.bf16.msra.mxu0 %v6289
    %6355 = vmatprep.subr.bf16.mxu0 %v6292
    %6356 = vmatpush1.bf16.msra.mxu0 %v6291
    %6357 = vmatprep.subr.bf16.mxu0 %v6294
    %6358 = vmatpush1.bf16.msra.mxu0 %v6293
    %6359 = vmatprep.subr.bf16.mxu0 %v6296
    %6360 = vmatpush1.bf16.msra.mxu0 %v6295
    %6361 = vmatprep.subr.bf16.mxu0 %v6298
    %6362 = vmatpush1.bf16.msra.mxu0 %v6297
    %6363 = vmatprep.subr.bf16.mxu0 %v6300
    %6364 = vmatpush1.bf16.msra.mxu0 %v6299
    %6365 = vmatprep.subr.bf16.mxu0 %v6302
    %6366 = vmatpush1.bf16.msra.mxu0 %v6301
    %6367 = vmatprep.subr.bf16.mxu0 %v6304
    %6368 = vmatpush1.bf16.msra.mxu0 %v6303
    %6369 = vmatprep.subr.bf16.mxu0 %v6306
    %6370 = vmatpush1.bf16.msra.mxu0 %v6305
    %6371 = vmatprep.subr.bf16.mxu0 %v6308
    %6372 = vmatpush1.bf16.msra.mxu0 %v6307
    %6373 = vmatprep.subr.bf16.mxu0 %v6310
    %6374 = vmatpush1.bf16.msra.mxu0 %v6309
    %6375 = vmatprep.subr.bf16.mxu0 %v6312
    %6376 = vmatpush1.bf16.msra.mxu0 %v6311
    %6377 = vmatprep.subr.bf16.mxu0 %v6314
    %6378 = vmatpush1.bf16.msra.mxu0 %v6313
    %6379 = vmatprep.subr.bf16.mxu0 %v6316
    %6380 = vmatpush1.bf16.msra.mxu0 %v6315
    %6381 = vmatprep.subr.bf16.mxu0 %v6318
    %6382 = vmatpush1.bf16.msra.mxu0 %v6317
    %6383 = vmatprep.subr.bf16.mxu0 %v6320
    %6384 = vmatpush1.bf16.msra.mxu0 %v6319
    %6385 = vmatprep.mubr.bf16.mxu0 %v6159
    %6386 = vmatmul.mubr.bf16.gmra.mrb[0].mxu0 %v6158
    %v6387 = vpop.f32.mrb[0].mxu0
    %v6388 = vadd.f32 0.0, %v6387
    %v6389 = vpop.f32.mrb[0].mxu0
    %v6390 = vadd.f32 0.0, %v6389
    %v6391 = vpop.f32.mrb[0].mxu0
    %v6392 = vpop.f32.mrb[0].mxu0
    %6393 = vdwg.mxu0
    %v6394 = vadd.f32 %v6110, %v6388
    %v6395 = vadd.f32 %v6111, %v6390
    %vm6396 = vcmask 1041408
    %v6397 = vsel %vm6396, %v6394, 0.0
    %v6398 = vrot.slane %v6397, 4
    %v6399 = vadd.f32 %v6397, %v6398
    %v6400 = vrot.slane %v6399, 2
    %v6401 = vadd.f32 %v6399, %v6400
    %v6402 = vrot.slane %v6401, 1
    %v6403 = vadd.f32 %v6401, %v6402
    %v6404 = vsel %vm6396, %v6395, 0.0
    %v6405 = vrot.slane %v6404, 4
    %v6406 = vadd.f32 %v6404, %v6405
    %v6407 = vrot.slane %v6406, 2
    %v6408 = vadd.f32 %v6406, %v6407
    %v6409 = vrot.slane %v6408, 1
    %v6410 = vadd.f32 %v6408, %v6409
    %v6411 = vrcp.pop 2.0
    %v6412 = vmul.f32 %v6403, %v6411
    %v6413 = vmul.f32 %v6410, %v6411
    %v6414 = vmul.f32 %v6394, %v6394
    %v6415 = vmul.f32 %v6395, %v6395
    %v6416 = vsel %vm6396, %v6414, 0.0
    %v6417 = vrot.slane %v6416, 4
    %v6418 = vadd.f32 %v6416, %v6417
    %v6419 = vrot.slane %v6418, 2
    %v6420 = vadd.f32 %v6418, %v6419
    %v6421 = vrot.slane %v6420, 1
    %v6422 = vadd.f32 %v6420, %v6421
    %v6423 = vsel %vm6396, %v6415, 0.0
    %v6424 = vrot.slane %v6423, 4
    %v6425 = vadd.f32 %v6423, %v6424
    %v6426 = vrot.slane %v6425, 2
    %v6427 = vadd.f32 %v6425, %v6426
    %v6428 = vrot.slane %v6427, 1
    %v6429 = vadd.f32 %v6427, %v6428
    %v6430 = vmul.f32 %v6422, %v6411
    %v6431 = vmul.f32 %v6429, %v6411
    %v6432 = vmul.f32 %v6412, %v6412
    %v6433 = vmul.f32 %v6413, %v6413
    %v6434 = vsub.f32 %v6430, %v6432
    %v6435 = vsub.f32 %v6431, %v6433
    %v6436 = vld [vmem:[%s14] sm:$0x3]
    %v6437 = vadd.f32 %v6434, 1e-05
    %v6438 = vadd.f32 %v6435, 1e-05
    %v6439 = vrsqrt.pop %v6437
    %v6440 = vrsqrt.pop %v6438
    %v6443 = vcombine.low %v6439, %v6440
    %v6445 = vunpack.c.l.s4 1966171168
    %v6446 = vunpack.c.0.s8 %v6445
    %v6447 = vlaneseq
    %v6448 = vshrl.u32 %v6447, 7
    %v6449 = vsub.s32 %v6446, %v6448
    %v6450 = vrot.slane %v6443, %v6449
    %v6452 = vunpack.c.l.s4 1966171168
    %v6453 = vunpack.c.0.s8 %v6452
    %v6454 = vlaneseq
    %v6455 = vshrl.u32 %v6454, 7
    %v6456 = vsub.s32 %v6453, %v6455
    %v6457 = vrot.slane %v6450, %v6456
    %v6459 = vmul.f32 %v6436, %v6457
    %v6460 = vld [vmem:[%s15] sm:$0x3]
    %v6462 = vlaneseq
    %v6463 = vshrl.u32 %v6462, 7
    %v6464 = vsub.s32 0, %v6463
    %v6465 = vrot.slane %v6459, %v6464
    %v6466 = vlaneseq
    %v6467 = vshrl.u32 %v6466, 7
    %v6468 = vsub.s32 1, %v6467
    %v6469 = vrot.slane %v6459, %v6468
    %v6472 = vmul.f32 %v6412, %v6465
    %v6473 = vmul.f32 %v6413, %v6469
    %v6476 = vcombine.low %v6472, %v6473
    %v6478 = vunpack.c.l.s4 1966171168
    %v6479 = vunpack.c.0.s8 %v6478
    %v6480 = vlaneseq
    %v6481 = vshrl.u32 %v6480, 7
    %v6482 = vsub.s32 %v6479, %v6481
    %v6483 = vrot.slane %v6476, %v6482
    %v6485 = vunpack.c.l.s4 1966171168
    %v6486 = vunpack.c.0.s8 %v6485
    %v6487 = vlaneseq
    %v6488 = vshrl.u32 %v6487, 7
    %v6489 = vsub.s32 %v6486, %v6488
    %v6490 = vrot.slane %v6483, %v6489
    %v6492 = vsub.f32 %v6460, %v6490
    %v6493 = vmul.f32 %v6394, %v6465
    %v6494 = vmul.f32 %v6395, %v6469
    %v6496 = vlaneseq
    %v6497 = vshrl.u32 %v6496, 7
    %v6498 = vsub.s32 0, %v6497
    %v6499 = vrot.slane %v6492, %v6498
    %v6500 = vlaneseq
    %v6501 = vshrl.u32 %v6500, 7
    %v6502 = vsub.s32 1, %v6501
    %v6503 = vrot.slane %v6492, %v6502
    %v6506 = vadd.f32 %v6493, %v6499
    %v6507 = vadd.f32 %v6494, %v6503
    %v6508 = vmax.f32 %v6506, 0.0
    %v6509 = vmax.f32 %v6507, 0.0
    %v6510 = vpack.c.bf16 %v6508, %v6508
    %v6511 = vpack.c.bf16 %v6509, %v6509
    %v6512 = vld [vmem:[%s16] sm:$0x1]
    %vm6513 = vcmask 15360
    %v6515 = vsel %vm6513, %v6512, 0
    %vm6517 = vcmask 1040384
    %v6519 = vsel %vm6517, %v6510, 0
    %v6522 = vsel %vm6517, %v6511, 0
    %6524 = vmatprep.subr.bf16.mxu0 %v6522
    %6525 = vmatpush1.bf16.msra.mxu0 %v6519
    %6526 = vmatprep.subr.bf16.mxu0 0
    %6527 = vmatpush1.bf16.msra.mxu0 0
    %6528 = vmatprep.subr.bf16.mxu0 0
    %6529 = vmatpush1.bf16.msra.mxu0 0
    %6530 = vmatprep.subr.bf16.mxu0 0
    %6531 = vmatpush1.bf16.msra.mxu0 0
    %6532 = vmatprep.subr.bf16.mxu0 0
    %6533 = vmatpush1.bf16.msra.mxu0 0
    %6534 = vmatprep.subr.bf16.mxu0 0
    %6535 = vmatpush1.bf16.msra.mxu0 0
    %6536 = vmatprep.subr.bf16.mxu0 0
    %6537 = vmatpush1.bf16.msra.mxu0 0
    %6538 = vmatprep.subr.bf16.mxu0 0
    %6539 = vmatpush1.bf16.msra.mxu0 0
    %6540 = vmatprep.subr.bf16.mxu0 0
    %6541 = vmatpush1.bf16.msra.mxu0 0
    %6542 = vmatprep.subr.bf16.mxu0 0
    %6543 = vmatpush1.bf16.msra.mxu0 0
    %6544 = vmatprep.subr.bf16.mxu0 0
    %6545 = vmatpush1.bf16.msra.mxu0 0
    %6546 = vmatprep.subr.bf16.mxu0 0
    %6547 = vmatpush1.bf16.msra.mxu0 0
    %6548 = vmatprep.subr.bf16.mxu0 0
    %6549 = vmatpush1.bf16.msra.mxu0 0
    %6550 = vmatprep.subr.bf16.mxu0 0
    %6551 = vmatpush1.bf16.msra.mxu0 0
    %6552 = vmatprep.subr.bf16.mxu0 0
    %6553 = vmatpush1.bf16.msra.mxu0 0
    %6554 = vmatprep.subr.bf16.mxu0 0
    %6555 = vmatpush1.bf16.msra.mxu0 0
    %6556 = vmatprep.mubr.bf16.mxu0 0
    %6557 = vmatmul.mubr.bf16.gmra.mrb[0].mxu0 %v6515
    %v6558 = vpop.f32.mrb[0].mxu0
    %v6559 = vadd.f32 0.0, %v6558
    %v6560 = vpop.f32.mrb[0].mxu0
    %v6561 = vadd.f32 0.0, %v6560
    %v6562 = vpop.f32.mrb[0].mxu0
    %v6563 = vpop.f32.mrb[0].mxu0
    %6564 = vdwg.mxu0
    %v6565 = vpack.c.bf16 %v6559, %v6559
    %v6566 = vpack.c.bf16 %v6561, %v6561
    %v6567 = vld [vmem:[%s17] sm:$0xff]
    %v6568 = vld [vmem:[%s17 + $0x8] sm:$0xff]
    %v6569 = vld [vmem:[%s17 + $0x10] sm:$0xff]
    %v6570 = vld [vmem:[%s17 + $0x18] sm:$0xff]
    %v6571 = vld [vmem:[%s17 + $0x20] sm:$0xff]
    %v6572 = vld [vmem:[%s17 + $0x28] sm:$0xff]
    %v6573 = vld [vmem:[%s17 + $0x30] sm:$0xff]
    %v6574 = vld [vmem:[%s17 + $0x38] sm:$0xff]
    %v6575 = vld [vmem:[%s17 + $0x40] sm:$0xff]
    %v6576 = vld [vmem:[%s17 + $0x48] sm:$0xff]
    %v6577 = vld [vmem:[%s17 + $0x50] sm:$0xff]
    %v6578 = vld [vmem:[%s17 + $0x58] sm:$0xff]
    %v6579 = vld [vmem:[%s17 + $0x60] sm:$0xff]
    %v6580 = vld [vmem:[%s17 + $0x68] sm:$0xff]
    %v6581 = vld [vmem:[%s17 + $0x70] sm:$0xff]
    %v6582 = vld [vmem:[%s17 + $0x78] sm:$0xff]
    %v6583 = vld [vmem:[%s17 + $0x80] sm:$0xff]
    %v6584 = vld [vmem:[%s17 + $0x88] sm:$0xff]
    %v6585 = vld [vmem:[%s17 + $0x90] sm:$0xff]
    %v6586 = vld [vmem:[%s17 + $0x98] sm:$0xff]
    %v6587 = vld [vmem:[%s17 + $0xa0] sm:$0xff]
    %v6588 = vld [vmem:[%s17 + $0xa8] sm:$0xff]
    %v6589 = vld [vmem:[%s17 + $0xb0] sm:$0xff]
    %v6590 = vld [vmem:[%s17 + $0xb8] sm:$0xff]
    %v6591 = vld [vmem:[%s17 + $0xc0] sm:$0xff]
    %v6592 = vld [vmem:[%s17 + $0xc8] sm:$0xff]
    %v6593 = vld [vmem:[%s17 + $0xd0] sm:$0xff]
    %v6594 = vld [vmem:[%s17 + $0xd8] sm:$0xff]
    %v6595 = vld [vmem:[%s17 + $0xe0] sm:$0xff]
    %v6596 = vld [vmem:[%s17 + $0xe8] sm:$0xff]
    %v6597 = vld [vmem:[%s17 + $0xf0] sm:$0xff]
    %v6598 = vld [vmem:[%s17 + $0xf8] sm:$0xff]
    %s6599 = scalar_lea.vmem %s16, 1
    %v6600 = vld [vmem:[%s6599] sm:$0x1]
    %v6602 = vsel %vm6513, %v6600, 0
    %6604 = vmatprep.subr.bf16.mxu0 %v6522
    %6605 = vmatpush1.bf16.msra.mxu0 %v6519
    %6606 = vmatprep.subr.bf16.mxu0 0
    %6607 = vmatpush1.bf16.msra.mxu0 0
    %6608 = vmatprep.subr.bf16.mxu0 0
    %6609 = vmatpush1.bf16.msra.mxu0 0
    %6610 = vmatprep.subr.bf16.mxu0 0
    %6611 = vmatpush1.bf16.msra.mxu0 0
    %6612 = vmatprep.subr.bf16.mxu0 0
    %6613 = vmatpush1.bf16.msra.mxu0 0
    %6614 = vmatprep.subr.bf16.mxu0 0
    %6615 = vmatpush1.bf16.msra.mxu0 0
    %6616 = vmatprep.subr.bf16.mxu0 0
    %6617 = vmatpush1.bf16.msra.mxu0 0
    %6618 = vmatprep.subr.bf16.mxu0 0
    %6619 = vmatpush1.bf16.msra.mxu0 0
    %6620 = vmatprep.subr.bf16.mxu0 0
    %6621 = vmatpush1.bf16.msra.mxu0 0
    %6622 = vmatprep.subr.bf16.mxu0 0
    %6623 = vmatpush1.bf16.msra.mxu0 0
    %6624 = vmatprep.subr.bf16.mxu0 0
    %6625 = vmatpush1.bf16.msra.mxu0 0
    %6626 = vmatprep.subr.bf16.mxu0 0
    %6627 = vmatpush1.bf16.msra.mxu0 0
    %6628 = vmatprep.subr.bf16.mxu0 0
    %6629 = vmatpush1.bf16.msra.mxu0 0
    %6630 = vmatprep.subr.bf16.mxu0 0
    %6631 = vmatpush1.bf16.msra.mxu0 0
    %6632 = vmatprep.subr.bf16.mxu0 0
    %6633 = vmatpush1.bf16.msra.mxu0 0
    %6634 = vmatprep.subr.bf16.mxu0 0
    %6635 = vmatpush1.bf16.msra.mxu0 0
    %6636 = vmatprep.mubr.bf16.mxu0 0
    %6637 = vmatmul.mubr.bf16.gmra.mrb[0].mxu0 %v6602
    %v6638 = vpop.f32.mrb[0].mxu0
    %v6639 = vadd.f32 0.0, %v6638
    %v6640 = vpop.f32.mrb[0].mxu0
    %v6641 = vadd.f32 0.0, %v6640
    %v6642 = vpop.f32.mrb[0].mxu0
    %v6643 = vpop.f32.mrb[0].mxu0
    %6644 = vdwg.mxu0
    %v6645 = vpack.c.bf16 %v6639, %v6639
    %v6646 = vpack.c.bf16 %v6641, %v6641
    %s6647 = scalar_lea.vmem %s17, 256
    %v6648 = vld [vmem:[%s6647] sm:$0xff]
    %v6649 = vld [vmem:[%s6647 + $0x8] sm:$0xff]
    %v6650 = vld [vmem:[%s6647 + $0x10] sm:$0xff]
    %v6651 = vld [vmem:[%s6647 + $0x18] sm:$0xff]
    %v6652 = vld [vmem:[%s6647 + $0x20] sm:$0xff]
    %v6653 = vld [vmem:[%s6647 + $0x28] sm:$0xff]
    %v6654 = vld [vmem:[%s6647 + $0x30] sm:$0xff]
    %v6655 = vld [vmem:[%s6647 + $0x38] sm:$0xff]
    %v6656 = vld [vmem:[%s6647 + $0x40] sm:$0xff]
    %v6657 = vld [vmem:[%s6647 + $0x48] sm:$0xff]
    %v6658 = vld [vmem:[%s6647 + $0x50] sm:$0xff]
    %v6659 = vld [vmem:[%s6647 + $0x58] sm:$0xff]
    %v6660 = vld [vmem:[%s6647 + $0x60] sm:$0xff]
    %v6661 = vld [vmem:[%s6647 + $0x68] sm:$0xff]
    %v6662 = vld [vmem:[%s6647 + $0x70] sm:$0xff]
    %v6663 = vld [vmem:[%s6647 + $0x78] sm:$0xff]
    %v6664 = vld [vmem:[%s6647 + $0x80] sm:$0xff]
    %v6665 = vld [vmem:[%s6647 + $0x88] sm:$0xff]
    %v6666 = vld [vmem:[%s6647 + $0x90] sm:$0xff]
    %v6667 = vld [vmem:[%s6647 + $0x98] sm:$0xff]
    %v6668 = vld [vmem:[%s6647 + $0xa0] sm:$0xff]
    %v6669 = vld [vmem:[%s6647 + $0xa8] sm:$0xff]
    %v6670 = vld [vmem:[%s6647 + $0xb0] sm:$0xff]
    %v6671 = vld [vmem:[%s6647 + $0xb8] sm:$0xff]
    %v6672 = vld [vmem:[%s6647 + $0xc0] sm:$0xff]
    %v6673 = vld [vmem:[%s6647 + $0xc8] sm:$0xff]
    %v6674 = vld [vmem:[%s6647 + $0xd0] sm:$0xff]
    %v6675 = vld [vmem:[%s6647 + $0xd8] sm:$0xff]
    %v6676 = vld [vmem:[%s6647 + $0xe0] sm:$0xff]
    %v6677 = vld [vmem:[%s6647 + $0xe8] sm:$0xff]
    %v6678 = vld [vmem:[%s6647 + $0xf0] sm:$0xff]
    %v6679 = vld [vmem:[%s6647 + $0xf8] sm:$0xff]
    %v6712 = vunpack.c.l.b16 %v6648
    %v6713 = vunpack.c.h.b16 %v6648
    %v6714 = vunpack.c.l.b16 %v6649
    %v6715 = vunpack.c.h.b16 %v6649
    %v6716 = vunpack.c.l.b16 %v6650
    %v6717 = vunpack.c.h.b16 %v6650
    %v6718 = vunpack.c.l.b16 %v6651
    %v6719 = vunpack.c.h.b16 %v6651
    %v6720 = vunpack.c.l.b16 %v6652
    %v6721 = vunpack.c.h.b16 %v6652
    %v6722 = vunpack.c.l.b16 %v6653
    %v6723 = vunpack.c.h.b16 %v6653
    %v6724 = vunpack.c.l.b16 %v6654
    %v6725 = vunpack.c.h.b16 %v6654
    %v6726 = vunpack.c.l.b16 %v6655
    %v6727 = vunpack.c.h.b16 %v6655
    %v6728 = vunpack.c.l.b16 %v6656
    %v6729 = vunpack.c.h.b16 %v6656
    %v6730 = vunpack.c.l.b16 %v6657
    %v6731 = vunpack.c.h.b16 %v6657
    %v6732 = vunpack.c.l.b16 %v6658
    %v6733 = vunpack.c.h.b16 %v6658
    %v6734 = vunpack.c.l.b16 %v6659
    %v6735 = vunpack.c.h.b16 %v6659
    %v6736 = vunpack.c.l.b16 %v6660
    %v6737 = vunpack.c.h.b16 %v6660
    %v6738 = vunpack.c.l.b16 %v6661
    %v6739 = vunpack.c.h.b16 %v6661
    %v6740 = vunpack.c.l.b16 %v6662
    %v6741 = vunpack.c.h.b16 %v6662
    %v6742 = vunpack.c.l.b16 %v6663
    %v6743 = vunpack.c.h.b16 %v6663
    %v6744 = vunpack.c.l.b16 %v6664
    %v6745 = vunpack.c.h.b16 %v6664
    %v6746 = vunpack.c.l.b16 %v6665
    %v6747 = vunpack.c.h.b16 %v6665
    %v6748 = vunpack.c.l.b16 %v6666
    %v6749 = vunpack.c.h.b16 %v6666
    %v6750 = vunpack.c.l.b16 %v6667
    %v6751 = vunpack.c.h.b16 %v6667
    %v6752 = vunpack.c.l.b16 %v6668
    %v6753 = vunpack.c.h.b16 %v6668
    %v6754 = vunpack.c.l.b16 %v6669
    %v6755 = vunpack.c.h.b16 %v6669
    %v6756 = vunpack.c.l.b16 %v6670
    %v6757 = vunpack.c.h.b16 %v6670
    %v6758 = vunpack.c.l.b16 %v6671
    %v6759 = vunpack.c.h.b16 %v6671
    %v6760 = vunpack.c.l.b16 %v6672
    %v6761 = vunpack.c.h.b16 %v6672
    %v6762 = vunpack.c.l.b16 %v6673
    %v6763 = vunpack.c.h.b16 %v6673
    %v6764 = vunpack.c.l.b16 %v6674
    %v6765 = vunpack.c.h.b16 %v6674
    %v6766 = vunpack.c.l.b16 %v6675
    %v6767 = vunpack.c.h.b16 %v6675
    %v6768 = vunpack.c.l.b16 %v6676
    %v6769 = vunpack.c.h.b16 %v6676
    %v6770 = vunpack.c.l.b16 %v6677
    %v6771 = vunpack.c.h.b16 %v6677
    %v6772 = vunpack.c.l.b16 %v6678
    %v6773 = vunpack.c.h.b16 %v6678
    %v6774 = vunpack.c.l.b16 %v6679
    %v6775 = vunpack.c.h.b16 %v6679
    %v6776 = vpack.c.b16 %v6714, %v6712
    %v6777 = vpack.c.b16 %v6715, %v6713
    %v6778 = vpack.c.b16 %v6718, %v6716
    %v6779 = vpack.c.b16 %v6719, %v6717
    %v6780 = vpack.c.b16 %v6722, %v6720
    %v6781 = vpack.c.b16 %v6723, %v6721
    %v6782 = vpack.c.b16 %v6726, %v6724
    %v6783 = vpack.c.b16 %v6727, %v6725
    %v6784 = vpack.c.b16 %v6730, %v6728
    %v6785 = vpack.c.b16 %v6731, %v6729
    %v6786 = vpack.c.b16 %v6734, %v6732
    %v6787 = vpack.c.b16 %v6735, %v6733
    %v6788 = vpack.c.b16 %v6738, %v6736
    %v6789 = vpack.c.b16 %v6739, %v6737
    %v6790 = vpack.c.b16 %v6742, %v6740
    %v6791 = vpack.c.b16 %v6743, %v6741
    %v6792 = vpack.c.b16 %v6746, %v6744
    %v6793 = vpack.c.b16 %v6747, %v6745
    %v6794 = vpack.c.b16 %v6750, %v6748
    %v6795 = vpack.c.b16 %v6751, %v6749
    %v6796 = vpack.c.b16 %v6754, %v6752
    %v6797 = vpack.c.b16 %v6755, %v6753
    %v6798 = vpack.c.b16 %v6758, %v6756
    %v6799 = vpack.c.b16 %v6759, %v6757
    %v6800 = vpack.c.b16 %v6762, %v6760
    %v6801 = vpack.c.b16 %v6763, %v6761
    %v6802 = vpack.c.b16 %v6766, %v6764
    %v6803 = vpack.c.b16 %v6767, %v6765
    %v6804 = vpack.c.b16 %v6770, %v6768
    %v6805 = vpack.c.b16 %v6771, %v6769
    %v6806 = vpack.c.b16 %v6774, %v6772
    %v6807 = vpack.c.b16 %v6775, %v6773
    %6840 = vmatprep.subr.bf16.mxu0 %v6777
    %6841 = vmatpush1.bf16.msra.mxu0 %v6776
    %6842 = vmatprep.subr.bf16.mxu0 %v6779
    %6843 = vmatpush1.bf16.msra.mxu0 %v6778
    %6844 = vmatprep.subr.bf16.mxu0 %v6781
    %6845 = vmatpush1.bf16.msra.mxu0 %v6780
    %6846 = vmatprep.subr.bf16.mxu0 %v6783
    %6847 = vmatpush1.bf16.msra.mxu0 %v6782
    %6848 = vmatprep.subr.bf16.mxu0 %v6785
    %6849 = vmatpush1.bf16.msra.mxu0 %v6784
    %6850 = vmatprep.subr.bf16.mxu0 %v6787
    %6851 = vmatpush1.bf16.msra.mxu0 %v6786
    %6852 = vmatprep.subr.bf16.mxu0 %v6789
    %6853 = vmatpush1.bf16.msra.mxu0 %v6788
    %6854 = vmatprep.subr.bf16.mxu0 %v6791
    %6855 = vmatpush1.bf16.msra.mxu0 %v6790
    %6856 = vmatprep.subr.bf16.mxu0 %v6793
    %6857 = vmatpush1.bf16.msra.mxu0 %v6792
    %6858 = vmatprep.subr.bf16.mxu0 %v6795
    %6859 = vmatpush1.bf16.msra.mxu0 %v6794
    %6860 = vmatprep.subr.bf16.mxu0 %v6797
    %6861 = vmatpush1.bf16.msra.mxu0 %v6796
    %6862 = vmatprep.subr.bf16.mxu0 %v6799
    %6863 = vmatpush1.bf16.msra.mxu0 %v6798
    %6864 = vmatprep.subr.bf16.mxu0 %v6801
    %6865 = vmatpush1.bf16.msra.mxu0 %v6800
    %6866 = vmatprep.subr.bf16.mxu0 %v6803
    %6867 = vmatpush1.bf16.msra.mxu0 %v6802
    %6868 = vmatprep.subr.bf16.mxu0 %v6805
    %6869 = vmatpush1.bf16.msra.mxu0 %v6804
    %6870 = vmatprep.subr.bf16.mxu0 %v6807
    %6871 = vmatpush1.bf16.msra.mxu0 %v6806
    %6872 = vmatprep.mubr.bf16.mxu0 %v6646
    %6873 = vmatmul.mubr.bf16.gmra.mrb[0].mxu0 %v6645
    %v6874 = vpop.f32.mrb[0].mxu0
    %v6875 = vadd.f32 0.0, %v6874
    %v6876 = vpop.f32.mrb[0].mxu0
    %v6877 = vadd.f32 0.0, %v6876
    %v6878 = vpop.f32.mrb[0].mxu0
    %v6879 = vpop.f32.mrb[0].mxu0
    %6880 = vdwg.mxu0
    %v6913 = vunpack.c.l.b16 %v6567
    %v6914 = vunpack.c.h.b16 %v6567
    %v6915 = vunpack.c.l.b16 %v6568
    %v6916 = vunpack.c.h.b16 %v6568
    %v6917 = vunpack.c.l.b16 %v6569
    %v6918 = vunpack.c.h.b16 %v6569
    %v6919 = vunpack.c.l.b16 %v6570
    %v6920 = vunpack.c.h.b16 %v6570
    %v6921 = vunpack.c.l.b16 %v6571
    %v6922 = vunpack.c.h.b16 %v6571
    %v6923 = vunpack.c.l.b16 %v6572
    %v6924 = vunpack.c.h.b16 %v6572
    %v6925 = vunpack.c.l.b16 %v6573
    %v6926 = vunpack.c.h.b16 %v6573
    %v6927 = vunpack.c.l.b16 %v6574
    %v6928 = vunpack.c.h.b16 %v6574
    %v6929 = vunpack.c.l.b16 %v6575
    %v6930 = vunpack.c.h.b16 %v6575
    %v6931 = vunpack.c.l.b16 %v6576
    %v6932 = vunpack.c.h.b16 %v6576
    %v6933 = vunpack.c.l.b16 %v6577
    %v6934 = vunpack.c.h.b16 %v6577
    %v6935 = vunpack.c.l.b16 %v6578
    %v6936 = vunpack.c.h.b16 %v6578
    %v6937 = vunpack.c.l.b16 %v6579
    %v6938 = vunpack.c.h.b16 %v6579
    %v6939 = vunpack.c.l.b16 %v6580
    %v6940 = vunpack.c.h.b16 %v6580
    %v6941 = vunpack.c.l.b16 %v6581
    %v6942 = vunpack.c.h.b16 %v6581
    %v6943 = vunpack.c.l.b16 %v6582
    %v6944 = vunpack.c.h.b16 %v6582
    %v6945 = vunpack.c.l.b16 %v6583
    %v6946 = vunpack.c.h.b16 %v6583
    %v6947 = vunpack.c.l.b16 %v6584
    %v6948 = vunpack.c.h.b16 %v6584
    %v6949 = vunpack.c.l.b16 %v6585
    %v6950 = vunpack.c.h.b16 %v6585
    %v6951 = vunpack.c.l.b16 %v6586
    %v6952 = vunpack.c.h.b16 %v6586
    %v6953 = vunpack.c.l.b16 %v6587
    %v6954 = vunpack.c.h.b16 %v6587
    %v6955 = vunpack.c.l.b16 %v6588
    %v6956 = vunpack.c.h.b16 %v6588
    %v6957 = vunpack.c.l.b16 %v6589
    %v6958 = vunpack.c.h.b16 %v6589
    %v6959 = vunpack.c.l.b16 %v6590
    %v6960 = vunpack.c.h.b16 %v6590
    %v6961 = vunpack.c.l.b16 %v6591
    %v6962 = vunpack.c.h.b16 %v6591
    %v6963 = vunpack.c.l.b16 %v6592
    %v6964 = vunpack.c.h.b16 %v6592
    %v6965 = vunpack.c.l.b16 %v6593
    %v6966 = vunpack.c.h.b16 %v6593
    %v6967 = vunpack.c.l.b16 %v6594
    %v6968 = vunpack.c.h.b16 %v6594
    %v6969 = vunpack.c.l.b16 %v6595
    %v6970 = vunpack.c.h.b16 %v6595
    %v6971 = vunpack.c.l.b16 %v6596
    %v6972 = vunpack.c.h.b16 %v6596
    %v6973 = vunpack.c.l.b16 %v6597
    %v6974 = vunpack.c.h.b16 %v6597
    %v6975 = vunpack.c.l.b16 %v6598
    %v6976 = vunpack.c.h.b16 %v6598
    %v6977 = vpack.c.b16 %v6915, %v6913
    %v6978 = vpack.c.b16 %v6916, %v6914
    %v6979 = vpack.c.b16 %v6919, %v6917
    %v6980 = vpack.c.b16 %v6920, %v6918
    %v6981 = vpack.c.b16 %v6923, %v6921
    %v6982 = vpack.c.b16 %v6924, %v6922
    %v6983 = vpack.c.b16 %v6927, %v6925
    %v6984 = vpack.c.b16 %v6928, %v6926
    %v6985 = vpack.c.b16 %v6931, %v6929
    %v6986 = vpack.c.b16 %v6932, %v6930
    %v6987 = vpack.c.b16 %v6935, %v6933
    %v6988 = vpack.c.b16 %v6936, %v6934
    %v6989 = vpack.c.b16 %v6939, %v6937
    %v6990 = vpack.c.b16 %v6940, %v6938
    %v6991 = vpack.c.b16 %v6943, %v6941
    %v6992 = vpack.c.b16 %v6944, %v6942
    %v6993 = vpack.c.b16 %v6947, %v6945
    %v6994 = vpack.c.b16 %v6948, %v6946
    %v6995 = vpack.c.b16 %v6951, %v6949
    %v6996 = vpack.c.b16 %v6952, %v6950
    %v6997 = vpack.c.b16 %v6955, %v6953
    %v6998 = vpack.c.b16 %v6956, %v6954
    %v6999 = vpack.c.b16 %v6959, %v6957
    %v7000 = vpack.c.b16 %v6960, %v6958
    %v7001 = vpack.c.b16 %v6963, %v6961
    %v7002 = vpack.c.b16 %v6964, %v6962
    %v7003 = vpack.c.b16 %v6967, %v6965
    %v7004 = vpack.c.b16 %v6968, %v6966
    %v7005 = vpack.c.b16 %v6971, %v6969
    %v7006 = vpack.c.b16 %v6972, %v6970
    %v7007 = vpack.c.b16 %v6975, %v6973
    %v7008 = vpack.c.b16 %v6976, %v6974
    %7041 = vmatprep.subr.bf16.mxu0 %v6978
    %7042 = vmatpush1.bf16.msra.mxu0 %v6977
    %7043 = vmatprep.subr.bf16.mxu0 %v6980
    %7044 = vmatpush1.bf16.msra.mxu0 %v6979
    %7045 = vmatprep.subr.bf16.mxu0 %v6982
    %7046 = vmatpush1.bf16.msra.mxu0 %v6981
    %7047 = vmatprep.subr.bf16.mxu0 %v6984
    %7048 = vmatpush1.bf16.msra.mxu0 %v6983
    %7049 = vmatprep.subr.bf16.mxu0 %v6986
    %7050 = vmatpush1.bf16.msra.mxu0 %v6985
    %7051 = vmatprep.subr.bf16.mxu0 %v6988
    %7052 = vmatpush1.bf16.msra.mxu0 %v6987
    %7053 = vmatprep.subr.bf16.mxu0 %v6990
    %7054 = vmatpush1.bf16.msra.mxu0 %v6989
    %7055 = vmatprep.subr.bf16.mxu0 %v6992
    %7056 = vmatpush1.bf16.msra.mxu0 %v6991
    %7057 = vmatprep.subr.bf16.mxu0 %v6994
    %7058 = vmatpush1.bf16.msra.mxu0 %v6993
    %7059 = vmatprep.subr.bf16.mxu0 %v6996
    %7060 = vmatpush1.bf16.msra.mxu0 %v6995
    %7061 = vmatprep.subr.bf16.mxu0 %v6998
    %7062 = vmatpush1.bf16.msra.mxu0 %v6997
    %7063 = vmatprep.subr.bf16.mxu0 %v7000
    %7064 = vmatpush1.bf16.msra.mxu0 %v6999
    %7065 = vmatprep.subr.bf16.mxu0 %v7002
    %7066 = vmatpush1.bf16.msra.mxu0 %v7001
    %7067 = vmatprep.subr.bf16.mxu0 %v7004
    %7068 = vmatpush1.bf16.msra.mxu0 %v7003
    %7069 = vmatprep.subr.bf16.mxu0 %v7006
    %7070 = vmatpush1.bf16.msra.mxu0 %v7005
    %7071 = vmatprep.subr.bf16.mxu0 %v7008
    %7072 = vmatpush1.bf16.msra.mxu0 %v7007
    %7073 = vmatprep.mubr.bf16.mxu0 %v6566
    %7074 = vmatmul.mubr.bf16.gmra.mrb[0].mxu0 %v6565
    %v7075 = vpop.f32.mrb[0].mxu0
    %v7076 = vadd.f32 %v6875, %v7075
    %v7077 = vpop.f32.mrb[0].mxu0
    %v7078 = vadd.f32 %v6877, %v7077
    %v7079 = vpop.f32.mrb[0].mxu0
    %v7080 = vpop.f32.mrb[0].mxu0
    %7081 = vdwg.mxu0
    %s7082 = scalar_lea.vmem %s16, 2
    %v7083 = vld [vmem:[%s7082] sm:$0x1]
    %v7085 = vsel %vm6513, %v7083, 0
    %7087 = vmatprep.subr.bf16.mxu0 %v6522
    %7088 = vmatpush1.bf16.msra.mxu0 %v6519
    %7089 = vmatprep.subr.bf16.mxu0 0
    %7090 = vmatpush1.bf16.msra.mxu0 0
    %7091 = vmatprep.subr.bf16.mxu0 0
    %7092 = vmatpush1.bf16.msra.mxu0 0
    %7093 = vmatprep.subr.bf16.mxu0 0
    %7094 = vmatpush1.bf16.msra.mxu0 0
    %7095 = vmatprep.subr.bf16.mxu0 0
    %7096 = vmatpush1.bf16.msra.mxu0 0
    %7097 = vmatprep.subr.bf16.mxu0 0
    %7098 = vmatpush1.bf16.msra.mxu0 0
    %7099 = vmatprep.subr.bf16.mxu0 0
    %7100 = vmatpush1.bf16.msra.mxu0 0
    %7101 = vmatprep.subr.bf16.mxu0 0
    %7102 = vmatpush1.bf16.msra.mxu0 0
    %7103 = vmatprep.subr.bf16.mxu0 0
    %7104 = vmatpush1.bf16.msra.mxu0 0
    %7105 = vmatprep.subr.bf16.mxu0 0
    %7106 = vmatpush1.bf16.msra.mxu0 0
    %7107 = vmatprep.subr.bf16.mxu0 0
    %7108 = vmatpush1.bf16.msra.mxu0 0
    %7109 = vmatprep.subr.bf16.mxu0 0
    %7110 = vmatpush1.bf16.msra.mxu0 0
    %7111 = vmatprep.subr.bf16.mxu0 0
    %7112 = vmatpush1.bf16.msra.mxu0 0
    %7113 = vmatprep.subr.bf16.mxu0 0
    %7114 = vmatpush1.bf16.msra.mxu0 0
    %7115 = vmatprep.subr.bf16.mxu0 0
    %7116 = vmatpush1.bf16.msra.mxu0 0
    %7117 = vmatprep.subr.bf16.mxu0 0
    %7118 = vmatpush1.bf16.msra.mxu0 0
    %7119 = vmatprep.mubr.bf16.mxu0 0
    %7120 = vmatmul.mubr.bf16.gmra.mrb[0].mxu0 %v7085
    %v7121 = vpop.f32.mrb[0].mxu0
    %v7122 = vadd.f32 0.0, %v7121
    %v7123 = vpop.f32.mrb[0].mxu0
    %v7124 = vadd.f32 0.0, %v7123
    %v7125 = vpop.f32.mrb[0].mxu0
    %v7126 = vpop.f32.mrb[0].mxu0
    %7127 = vdwg.mxu0
    %v7128 = vpack.c.bf16 %v7122, %v7122
    %v7129 = vpack.c.bf16 %v7124, %v7124
    %s7130 = scalar_lea.vmem %s17, 512
    %v7131 = vld [vmem:[%s7130] sm:$0xff]
    %v7132 = vld [vmem:[%s7130 + $0x8] sm:$0xff]
    %v7133 = vld [vmem:[%s7130 + $0x10] sm:$0xff]
    %v7134 = vld [vmem:[%s7130 + $0x18] sm:$0xff]
    %v7135 = vld [vmem:[%s7130 + $0x20] sm:$0xff]
    %v7136 = vld [vmem:[%s7130 + $0x28] sm:$0xff]
    %v7137 = vld [vmem:[%s7130 + $0x30] sm:$0xff]
    %v7138 = vld [vmem:[%s7130 + $0x38] sm:$0xff]
    %v7139 = vld [vmem:[%s7130 + $0x40] sm:$0xff]
    %v7140 = vld [vmem:[%s7130 + $0x48] sm:$0xff]
    %v7141 = vld [vmem:[%s7130 + $0x50] sm:$0xff]
    %v7142 = vld [vmem:[%s7130 + $0x58] sm:$0xff]
    %v7143 = vld [vmem:[%s7130 + $0x60] sm:$0xff]
    %v7144 = vld [vmem:[%s7130 + $0x68] sm:$0xff]
    %v7145 = vld [vmem:[%s7130 + $0x70] sm:$0xff]
    %v7146 = vld [vmem:[%s7130 + $0x78] sm:$0xff]
    %v7147 = vld [vmem:[%s7130 + $0x80] sm:$0xff]
    %v7148 = vld [vmem:[%s7130 + $0x88] sm:$0xff]
    %v7149 = vld [vmem:[%s7130 + $0x90] sm:$0xff]
    %v7150 = vld [vmem:[%s7130 + $0x98] sm:$0xff]
    %v7151 = vld [vmem:[%s7130 + $0xa0] sm:$0xff]
    %v7152 = vld [vmem:[%s7130 + $0xa8] sm:$0xff]
    %v7153 = vld [vmem:[%s7130 + $0xb0] sm:$0xff]
    %v7154 = vld [vmem:[%s7130 + $0xb8] sm:$0xff]
    %v7155 = vld [vmem:[%s7130 + $0xc0] sm:$0xff]
    %v7156 = vld [vmem:[%s7130 + $0xc8] sm:$0xff]
    %v7157 = vld [vmem:[%s7130 + $0xd0] sm:$0xff]
    %v7158 = vld [vmem:[%s7130 + $0xd8] sm:$0xff]
    %v7159 = vld [vmem:[%s7130 + $0xe0] sm:$0xff]
    %v7160 = vld [vmem:[%s7130 + $0xe8] sm:$0xff]
    %v7161 = vld [vmem:[%s7130 + $0xf0] sm:$0xff]
    %v7162 = vld [vmem:[%s7130 + $0xf8] sm:$0xff]
    %v7195 = vunpack.c.l.b16 %v7131
    %v7196 = vunpack.c.h.b16 %v7131
    %v7197 = vunpack.c.l.b16 %v7132
    %v7198 = vunpack.c.h.b16 %v7132
    %v7199 = vunpack.c.l.b16 %v7133
    %v7200 = vunpack.c.h.b16 %v7133
    %v7201 = vunpack.c.l.b16 %v7134
    %v7202 = vunpack.c.h.b16 %v7134
    %v7203 = vunpack.c.l.b16 %v7135
    %v7204 = vunpack.c.h.b16 %v7135
    %v7205 = vunpack.c.l.b16 %v7136
    %v7206 = vunpack.c.h.b16 %v7136
    %v7207 = vunpack.c.l.b16 %v7137
    %v7208 = vunpack.c.h.b16 %v7137
    %v7209 = vunpack.c.l.b16 %v7138
    %v7210 = vunpack.c.h.b16 %v7138
    %v7211 = vunpack.c.l.b16 %v7139
    %v7212 = vunpack.c.h.b16 %v7139
    %v7213 = vunpack.c.l.b16 %v7140
    %v7214 = vunpack.c.h.b16 %v7140
    %v7215 = vunpack.c.l.b16 %v7141
    %v7216 = vunpack.c.h.b16 %v7141
    %v7217 = vunpack.c.l.b16 %v7142
    %v7218 = vunpack.c.h.b16 %v7142
    %v7219 = vunpack.c.l.b16 %v7143
    %v7220 = vunpack.c.h.b16 %v7143
    %v7221 = vunpack.c.l.b16 %v7144
    %v7222 = vunpack.c.h.b16 %v7144
    %v7223 = vunpack.c.l.b16 %v7145
    %v7224 = vunpack.c.h.b16 %v7145
    %v7225 = vunpack.c.l.b16 %v7146
    %v7226 = vunpack.c.h.b16 %v7146
    %v7227 = vunpack.c.l.b16 %v7147
    %v7228 = vunpack.c.h.b16 %v7147
    %v7229 = vunpack.c.l.b16 %v7148
    %v7230 = vunpack.c.h.b16 %v7148
    %v7231 = vunpack.c.l.b16 %v7149
    %v7232 = vunpack.c.h.b16 %v7149
    %v7233 = vunpack.c.l.b16 %v7150
    %v7234 = vunpack.c.h.b16 %v7150
    %v7235 = vunpack.c.l.b16 %v7151
    %v7236 = vunpack.c.h.b16 %v7151
    %v7237 = vunpack.c.l.b16 %v7152
    %v7238 = vunpack.c.h.b16 %v7152
    %v7239 = vunpack.c.l.b16 %v7153
    %v7240 = vunpack.c.h.b16 %v7153
    %v7241 = vunpack.c.l.b16 %v7154
    %v7242 = vunpack.c.h.b16 %v7154
    %v7243 = vunpack.c.l.b16 %v7155
    %v7244 = vunpack.c.h.b16 %v7155
    %v7245 = vunpack.c.l.b16 %v7156
    %v7246 = vunpack.c.h.b16 %v7156
    %v7247 = vunpack.c.l.b16 %v7157
    %v7248 = vunpack.c.h.b16 %v7157
    %v7249 = vunpack.c.l.b16 %v7158
    %v7250 = vunpack.c.h.b16 %v7158
    %v7251 = vunpack.c.l.b16 %v7159
    %v7252 = vunpack.c.h.b16 %v7159
    %v7253 = vunpack.c.l.b16 %v7160
    %v7254 = vunpack.c.h.b16 %v7160
    %v7255 = vunpack.c.l.b16 %v7161
    %v7256 = vunpack.c.h.b16 %v7161
    %v7257 = vunpack.c.l.b16 %v7162
    %v7258 = vunpack.c.h.b16 %v7162
    %v7259 = vpack.c.b16 %v7197, %v7195
    %v7260 = vpack.c.b16 %v7198, %v7196
    %v7261 = vpack.c.b16 %v7201, %v7199
    %v7262 = vpack.c.b16 %v7202, %v7200
    %v7263 = vpack.c.b16 %v7205, %v7203
    %v7264 = vpack.c.b16 %v7206, %v7204
    %v7265 = vpack.c.b16 %v7209, %v7207
    %v7266 = vpack.c.b16 %v7210, %v7208
    %v7267 = vpack.c.b16 %v7213, %v7211
    %v7268 = vpack.c.b16 %v7214, %v7212
    %v7269 = vpack.c.b16 %v7217, %v7215
    %v7270 = vpack.c.b16 %v7218, %v7216
    %v7271 = vpack.c.b16 %v7221, %v7219
    %v7272 = vpack.c.b16 %v7222, %v7220
    %v7273 = vpack.c.b16 %v7225, %v7223
    %v7274 = vpack.c.b16 %v7226, %v7224
    %v7275 = vpack.c.b16 %v7229, %v7227
    %v7276 = vpack.c.b16 %v7230, %v7228
    %v7277 = vpack.c.b16 %v7233, %v7231
    %v7278 = vpack.c.b16 %v7234, %v7232
    %v7279 = vpack.c.b16 %v7237, %v7235
    %v7280 = vpack.c.b16 %v7238, %v7236
    %v7281 = vpack.c.b16 %v7241, %v7239
    %v7282 = vpack.c.b16 %v7242, %v7240
    %v7283 = vpack.c.b16 %v7245, %v7243
    %v7284 = vpack.c.b16 %v7246, %v7244
    %v7285 = vpack.c.b16 %v7249, %v7247
    %v7286 = vpack.c.b16 %v7250, %v7248
    %v7287 = vpack.c.b16 %v7253, %v7251
    %v7288 = vpack.c.b16 %v7254, %v7252
    %v7289 = vpack.c.b16 %v7257, %v7255
    %v7290 = vpack.c.b16 %v7258, %v7256
    %7323 = vmatprep.subr.bf16.mxu0 %v7260
    %7324 = vmatpush1.bf16.msra.mxu0 %v7259
    %7325 = vmatprep.subr.bf16.mxu0 %v7262
    %7326 = vmatpush1.bf16.msra.mxu0 %v7261
    %7327 = vmatprep.subr.bf16.mxu0 %v7264
    %7328 = vmatpush1.bf16.msra.mxu0 %v7263
    %7329 = vmatprep.subr.bf16.mxu0 %v7266
    %7330 = vmatpush1.bf16.msra.mxu0 %v7265
    %7331 = vmatprep.subr.bf16.mxu0 %v7268
    %7332 = vmatpush1.bf16.msra.mxu0 %v7267
    %7333 = vmatprep.subr.bf16.mxu0 %v7270
    %7334 = vmatpush1.bf16.msra.mxu0 %v7269
    %7335 = vmatprep.subr.bf16.mxu0 %v7272
    %7336 = vmatpush1.bf16.msra.mxu0 %v7271
    %7337 = vmatprep.subr.bf16.mxu0 %v7274
    %7338 = vmatpush1.bf16.msra.mxu0 %v7273
    %7339 = vmatprep.subr.bf16.mxu0 %v7276
    %7340 = vmatpush1.bf16.msra.mxu0 %v7275
    %7341 = vmatprep.subr.bf16.mxu0 %v7278
    %7342 = vmatpush1.bf16.msra.mxu0 %v7277
    %7343 = vmatprep.subr.bf16.mxu0 %v7280
    %7344 = vmatpush1.bf16.msra.mxu0 %v7279
    %7345 = vmatprep.subr.bf16.mxu0 %v7282
    %7346 = vmatpush1.bf16.msra.mxu0 %v7281
    %7347 = vmatprep.subr.bf16.mxu0 %v7284
    %7348 = vmatpush1.bf16.msra.mxu0 %v7283
    %7349 = vmatprep.subr.bf16.mxu0 %v7286
    %7350 = vmatpush1.bf16.msra.mxu0 %v7285
    %7351 = vmatprep.subr.bf16.mxu0 %v7288
    %7352 = vmatpush1.bf16.msra.mxu0 %v7287
    %7353 = vmatprep.subr.bf16.mxu0 %v7290
    %7354 = vmatpush1.bf16.msra.mxu0 %v7289
    %7355 = vmatprep.mubr.bf16.mxu0 %v7129
    %7356 = vmatmul.mubr.bf16.gmra.mrb[0].mxu0 %v7128
    %v7357 = vpop.f32.mrb[0].mxu0
    %v7358 = vadd.f32 0.0, %v7357
    %v7359 = vpop.f32.mrb[0].mxu0
    %v7360 = vadd.f32 0.0, %v7359
    %v7361 = vpop.f32.mrb[0].mxu0
    %v7362 = vpop.f32.mrb[0].mxu0
    %7363 = vdwg.mxu0
    %v7364 = vadd.f32 %v7076, %v7358
    %v7365 = vadd.f32 %v7078, %v7360
    %s7366 = scalar_lea.vmem %s16, 3
    %v7367 = vld [vmem:[%s7366] sm:$0x1]
    %v7369 = vsel %vm6513, %v7367, 0
    %7371 = vmatprep.subr.bf16.mxu0 %v6522
    %7372 = vmatpush1.bf16.msra.mxu0 %v6519
    %7373 = vmatprep.subr.bf16.mxu0 0
    %7374 = vmatpush1.bf16.msra.mxu0 0
    %7375 = vmatprep.subr.bf16.mxu0 0
    %7376 = vmatpush1.bf16.msra.mxu0 0
    %7377 = vmatprep.subr.bf16.mxu0 0
    %7378 = vmatpush1.bf16.msra.mxu0 0
    %7379 = vmatprep.subr.bf16.mxu0 0
    %7380 = vmatpush1.bf16.msra.mxu0 0
    %7381 = vmatprep.subr.bf16.mxu0 0
    %7382 = vmatpush1.bf16.msra.mxu0 0
    %7383 = vmatprep.subr.bf16.mxu0 0
    %7384 = vmatpush1.bf16.msra.mxu0 0
    %7385 = vmatprep.subr.bf16.mxu0 0
    %7386 = vmatpush1.bf16.msra.mxu0 0
    %7387 = vmatprep.subr.bf16.mxu0 0
    %7388 = vmatpush1.bf16.msra.mxu0 0
    %7389 = vmatprep.subr.bf16.mxu0 0
    %7390 = vmatpush1.bf16.msra.mxu0 0
    %7391 = vmatprep.subr.bf16.mxu0 0
    %7392 = vmatpush1.bf16.msra.mxu0 0
    %7393 = vmatprep.subr.bf16.mxu0 0
    %7394 = vmatpush1.bf16.msra.mxu0 0
    %7395 = vmatprep.subr.bf16.mxu0 0
    %7396 = vmatpush1.bf16.msra.mxu0 0
    %7397 = vmatprep.subr.bf16.mxu0 0
    %7398 = vmatpush1.bf16.msra.mxu0 0
    %7399 = vmatprep.subr.bf16.mxu0 0
    %7400 = vmatpush1.bf16.msra.mxu0 0
    %7401 = vmatprep.subr.bf16.mxu0 0
    %7402 = vmatpush1.bf16.msra.mxu0 0
    %7403 = vmatprep.mubr.bf16.mxu0 0
    %7404 = vmatmul.mubr.bf16.gmra.mrb[0].mxu0 %v7369
    %v7405 = vpop.f32.mrb[0].mxu0
    %v7406 = vadd.f32 0.0, %v7405
    %v7407 = vpop.f32.mrb[0].mxu0
    %v7408 = vadd.f32 0.0, %v7407
    %v7409 = vpop.f32.mrb[0].mxu0
    %v7410 = vpop.f32.mrb[0].mxu0
    %7411 = vdwg.mxu0
    %v7412 = vpack.c.bf16 %v7406, %v7406
    %v7413 = vpack.c.bf16 %v7408, %v7408
    %s7414 = scalar_lea.vmem %s17, 768
    %v7415 = vld [vmem:[%s7414] sm:$0xff]
    %v7416 = vld [vmem:[%s7414 + $0x8] sm:$0xff]
    %v7417 = vld [vmem:[%s7414 + $0x10] sm:$0xff]
    %v7418 = vld [vmem:[%s7414 + $0x18] sm:$0xff]
    %v7419 = vld [vmem:[%s7414 + $0x20] sm:$0xff]
    %v7420 = vld [vmem:[%s7414 + $0x28] sm:$0xff]
    %v7421 = vld [vmem:[%s7414 + $0x30] sm:$0xff]
    %v7422 = vld [vmem:[%s7414 + $0x38] sm:$0xff]
    %v7423 = vld [vmem:[%s7414 + $0x40] sm:$0xff]
    %v7424 = vld [vmem:[%s7414 + $0x48] sm:$0xff]
    %v7425 = vld [vmem:[%s7414 + $0x50] sm:$0xff]
    %v7426 = vld [vmem:[%s7414 + $0x58] sm:$0xff]
    %v7427 = vld [vmem:[%s7414 + $0x60] sm:$0xff]
    %v7428 = vld [vmem:[%s7414 + $0x68] sm:$0xff]
    %v7429 = vld [vmem:[%s7414 + $0x70] sm:$0xff]
    %v7430 = vld [vmem:[%s7414 + $0x78] sm:$0xff]
    %v7431 = vld [vmem:[%s7414 + $0x80] sm:$0xff]
    %v7432 = vld [vmem:[%s7414 + $0x88] sm:$0xff]
    %v7433 = vld [vmem:[%s7414 + $0x90] sm:$0xff]
    %v7434 = vld [vmem:[%s7414 + $0x98] sm:$0xff]
    %v7435 = vld [vmem:[%s7414 + $0xa0] sm:$0xff]
    %v7436 = vld [vmem:[%s7414 + $0xa8] sm:$0xff]
    %v7437 = vld [vmem:[%s7414 + $0xb0] sm:$0xff]
    %v7438 = vld [vmem:[%s7414 + $0xb8] sm:$0xff]
    %v7439 = vld [vmem:[%s7414 + $0xc0] sm:$0xff]
    %v7440 = vld [vmem:[%s7414 + $0xc8] sm:$0xff]
    %v7441 = vld [vmem:[%s7414 + $0xd0] sm:$0xff]
    %v7442 = vld [vmem:[%s7414 + $0xd8] sm:$0xff]
    %v7443 = vld [vmem:[%s7414 + $0xe0] sm:$0xff]
    %v7444 = vld [vmem:[%s7414 + $0xe8] sm:$0xff]
    %v7445 = vld [vmem:[%s7414 + $0xf0] sm:$0xff]
    %v7446 = vld [vmem:[%s7414 + $0xf8] sm:$0xff]
    %v7479 = vunpack.c.l.b16 %v7415
    %v7480 = vunpack.c.h.b16 %v7415
    %v7481 = vunpack.c.l.b16 %v7416
    %v7482 = vunpack.c.h.b16 %v7416
    %v7483 = vunpack.c.l.b16 %v7417
    %v7484 = vunpack.c.h.b16 %v7417
    %v7485 = vunpack.c.l.b16 %v7418
    %v7486 = vunpack.c.h.b16 %v7418
    %v7487 = vunpack.c.l.b16 %v7419
    %v7488 = vunpack.c.h.b16 %v7419
    %v7489 = vunpack.c.l.b16 %v7420
    %v7490 = vunpack.c.h.b16 %v7420
    %v7491 = vunpack.c.l.b16 %v7421
    %v7492 = vunpack.c.h.b16 %v7421
    %v7493 = vunpack.c.l.b16 %v7422
    %v7494 = vunpack.c.h.b16 %v7422
    %v7495 = vunpack.c.l.b16 %v7423
    %v7496 = vunpack.c.h.b16 %v7423
    %v7497 = vunpack.c.l.b16 %v7424
    %v7498 = vunpack.c.h.b16 %v7424
    %v7499 = vunpack.c.l.b16 %v7425
    %v7500 = vunpack.c.h.b16 %v7425
    %v7501 = vunpack.c.l.b16 %v7426
    %v7502 = vunpack.c.h.b16 %v7426
    %v7503 = vunpack.c.l.b16 %v7427
    %v7504 = vunpack.c.h.b16 %v7427
    %v7505 = vunpack.c.l.b16 %v7428
    %v7506 = vunpack.c.h.b16 %v7428
    %v7507 = vunpack.c.l.b16 %v7429
    %v7508 = vunpack.c.h.b16 %v7429
    %v7509 = vunpack.c.l.b16 %v7430
    %v7510 = vunpack.c.h.b16 %v7430
    %v7511 = vunpack.c.l.b16 %v7431
    %v7512 = vunpack.c.h.b16 %v7431
    %v7513 = vunpack.c.l.b16 %v7432
    %v7514 = vunpack.c.h.b16 %v7432
    %v7515 = vunpack.c.l.b16 %v7433
    %v7516 = vunpack.c.h.b16 %v7433
    %v7517 = vunpack.c.l.b16 %v7434
    %v7518 = vunpack.c.h.b16 %v7434
    %v7519 = vunpack.c.l.b16 %v7435
    %v7520 = vunpack.c.h.b16 %v7435
    %v7521 = vunpack.c.l.b16 %v7436
    %v7522 = vunpack.c.h.b16 %v7436
    %v7523 = vunpack.c.l.b16 %v7437
    %v7524 = vunpack.c.h.b16 %v7437
    %v7525 = vunpack.c.l.b16 %v7438
    %v7526 = vunpack.c.h.b16 %v7438
    %v7527 = vunpack.c.l.b16 %v7439
    %v7528 = vunpack.c.h.b16 %v7439
    %v7529 = vunpack.c.l.b16 %v7440
    %v7530 = vunpack.c.h.b16 %v7440
    %v7531 = vunpack.c.l.b16 %v7441
    %v7532 = vunpack.c.h.b16 %v7441
    %v7533 = vunpack.c.l.b16 %v7442
    %v7534 = vunpack.c.h.b16 %v7442
    %v7535 = vunpack.c.l.b16 %v7443
    %v7536 = vunpack.c.h.b16 %v7443
    %v7537 = vunpack.c.l.b16 %v7444
    %v7538 = vunpack.c.h.b16 %v7444
    %v7539 = vunpack.c.l.b16 %v7445
    %v7540 = vunpack.c.h.b16 %v7445
    %v7541 = vunpack.c.l.b16 %v7446
    %v7542 = vunpack.c.h.b16 %v7446
    %v7543 = vpack.c.b16 %v7481, %v7479
    %v7544 = vpack.c.b16 %v7482, %v7480
    %v7545 = vpack.c.b16 %v7485, %v7483
    %v7546 = vpack.c.b16 %v7486, %v7484
    %v7547 = vpack.c.b16 %v7489, %v7487
    %v7548 = vpack.c.b16 %v7490, %v7488
    %v7549 = vpack.c.b16 %v7493, %v7491
    %v7550 = vpack.c.b16 %v7494, %v7492
    %v7551 = vpack.c.b16 %v7497, %v7495
    %v7552 = vpack.c.b16 %v7498, %v7496
    %v7553 = vpack.c.b16 %v7501, %v7499
    %v7554 = vpack.c.b16 %v7502, %v7500
    %v7555 = vpack.c.b16 %v7505, %v7503
    %v7556 = vpack.c.b16 %v7506, %v7504
    %v7557 = vpack.c.b16 %v7509, %v7507
    %v7558 = vpack.c.b16 %v7510, %v7508
    %v7559 = vpack.c.b16 %v7513, %v7511
    %v7560 = vpack.c.b16 %v7514, %v7512
    %v7561 = vpack.c.b16 %v7517, %v7515
    %v7562 = vpack.c.b16 %v7518, %v7516
    %v7563 = vpack.c.b16 %v7521, %v7519
    %v7564 = vpack.c.b16 %v7522, %v7520
    %v7565 = vpack.c.b16 %v7525, %v7523
    %v7566 = vpack.c.b16 %v7526, %v7524
    %v7567 = vpack.c.b16 %v7529, %v7527
    %v7568 = vpack.c.b16 %v7530, %v7528
    %v7569 = vpack.c.b16 %v7533, %v7531
    %v7570 = vpack.c.b16 %v7534, %v7532
    %v7571 = vpack.c.b16 %v7537, %v7535
    %v7572 = vpack.c.b16 %v7538, %v7536
    %v7573 = vpack.c.b16 %v7541, %v7539
    %v7574 = vpack.c.b16 %v7542, %v7540
    %7607 = vmatprep.subr.bf16.mxu0 %v7544
    %7608 = vmatpush1.bf16.msra.mxu0 %v7543
    %7609 = vmatprep.subr.bf16.mxu0 %v7546
    %7610 = vmatpush1.bf16.msra.mxu0 %v7545
    %7611 = vmatprep.subr.bf16.mxu0 %v7548
    %7612 = vmatpush1.bf16.msra.mxu0 %v7547
    %7613 = vmatprep.subr.bf16.mxu0 %v7550
    %7614 = vmatpush1.bf16.msra.mxu0 %v7549
    %7615 = vmatprep.subr.bf16.mxu0 %v7552
    %7616 = vmatpush1.bf16.msra.mxu0 %v7551
    %7617 = vmatprep.subr.bf16.mxu0 %v7554
    %7618 = vmatpush1.bf16.msra.mxu0 %v7553
    %7619 = vmatprep.subr.bf16.mxu0 %v7556
    %7620 = vmatpush1.bf16.msra.mxu0 %v7555
    %7621 = vmatprep.subr.bf16.mxu0 %v7558
    %7622 = vmatpush1.bf16.msra.mxu0 %v7557
    %7623 = vmatprep.subr.bf16.mxu0 %v7560
    %7624 = vmatpush1.bf16.msra.mxu0 %v7559
    %7625 = vmatprep.subr.bf16.mxu0 %v7562
    %7626 = vmatpush1.bf16.msra.mxu0 %v7561
    %7627 = vmatprep.subr.bf16.mxu0 %v7564
    %7628 = vmatpush1.bf16.msra.mxu0 %v7563
    %7629 = vmatprep.subr.bf16.mxu0 %v7566
    %7630 = vmatpush1.bf16.msra.mxu0 %v7565
    %7631 = vmatprep.subr.bf16.mxu0 %v7568
    %7632 = vmatpush1.bf16.msra.mxu0 %v7567
    %7633 = vmatprep.subr.bf16.mxu0 %v7570
    %7634 = vmatpush1.bf16.msra.mxu0 %v7569
    %7635 = vmatprep.subr.bf16.mxu0 %v7572
    %7636 = vmatpush1.bf16.msra.mxu0 %v7571
    %7637 = vmatprep.subr.bf16.mxu0 %v7574
    %7638 = vmatpush1.bf16.msra.mxu0 %v7573
    %7639 = vmatprep.mubr.bf16.mxu0 %v7413
    %7640 = vmatmul.mubr.bf16.gmra.mrb[0].mxu0 %v7412
    %v7641 = vpop.f32.mrb[0].mxu0
    %v7642 = vadd.f32 0.0, %v7641
    %v7643 = vpop.f32.mrb[0].mxu0
    %v7644 = vadd.f32 0.0, %v7643
    %v7645 = vpop.f32.mrb[0].mxu0
    %v7646 = vpop.f32.mrb[0].mxu0
    %7647 = vdwg.mxu0
    %v7648 = vadd.f32 %v7364, %v7642
    %v7649 = vadd.f32 %v7365, %v7644
    %s7650 = scalar_lea.vmem %s16, 4
    %v7651 = vld [vmem:[%s7650] sm:$0x1]
    %v7653 = vsel %vm6513, %v7651, 0
    %7655 = vmatprep.subr.bf16.mxu0 %v6522
    %7656 = vmatpush1.bf16.msra.mxu0 %v6519
    %7657 = vmatprep.subr.bf16.mxu0 0
    %7658 = vmatpush1.bf16.msra.mxu0 0
    %7659 = vmatprep.subr.bf16.mxu0 0
    %7660 = vmatpush1.bf16.msra.mxu0 0
    %7661 = vmatprep.subr.bf16.mxu0 0
    %7662 = vmatpush1.bf16.msra.mxu0 0
    %7663 = vmatprep.subr.bf16.mxu0 0
    %7664 = vmatpush1.bf16.msra.mxu0 0
    %7665 = vmatprep.subr.bf16.mxu0 0
    %7666 = vmatpush1.bf16.msra.mxu0 0
    %7667 = vmatprep.subr.bf16.mxu0 0
    %7668 = vmatpush1.bf16.msra.mxu0 0
    %7669 = vmatprep.subr.bf16.mxu0 0
    %7670 = vmatpush1.bf16.msra.mxu0 0
    %7671 = vmatprep.subr.bf16.mxu0 0
    %7672 = vmatpush1.bf16.msra.mxu0 0
    %7673 = vmatprep.subr.bf16.mxu0 0
    %7674 = vmatpush1.bf16.msra.mxu0 0
    %7675 = vmatprep.subr.bf16.mxu0 0
    %7676 = vmatpush1.bf16.msra.mxu0 0
    %7677 = vmatprep.subr.bf16.mxu0 0
    %7678 = vmatpush1.bf16.msra.mxu0 0
    %7679 = vmatprep.subr.bf16.mxu0 0
    %7680 = vmatpush1.bf16.msra.mxu0 0
    %7681 = vmatprep.subr.bf16.mxu0 0
    %7682 = vmatpush1.bf16.msra.mxu0 0
    %7683 = vmatprep.subr.bf16.mxu0 0
    %7684 = vmatpush1.bf16.msra.mxu0 0
    %7685 = vmatprep.subr.bf16.mxu0 0
    %7686 = vmatpush1.bf16.msra.mxu0 0
    %7687 = vmatprep.mubr.bf16.mxu0 0
    %7688 = vmatmul.mubr.bf16.gmra.mrb[0].mxu0 %v7653
    %v7689 = vpop.f32.mrb[0].mxu0
    %v7690 = vadd.f32 0.0, %v7689
    %v7691 = vpop.f32.mrb[0].mxu0
    %v7692 = vadd.f32 0.0, %v7691
    %v7693 = vpop.f32.mrb[0].mxu0
    %v7694 = vpop.f32.mrb[0].mxu0
    %7695 = vdwg.mxu0
    %v7696 = vpack.c.bf16 %v7690, %v7690
    %v7697 = vpack.c.bf16 %v7692, %v7692
    %s7698 = scalar_lea.vmem %s17, 1024
    %v7699 = vld [vmem:[%s7698] sm:$0xff]
    %v7700 = vld [vmem:[%s7698 + $0x8] sm:$0xff]
    %v7701 = vld [vmem:[%s7698 + $0x10] sm:$0xff]
    %v7702 = vld [vmem:[%s7698 + $0x18] sm:$0xff]
    %v7703 = vld [vmem:[%s7698 + $0x20] sm:$0xff]
    %v7704 = vld [vmem:[%s7698 + $0x28] sm:$0xff]
    %v7705 = vld [vmem:[%s7698 + $0x30] sm:$0xff]
    %v7706 = vld [vmem:[%s7698 + $0x38] sm:$0xff]
    %v7707 = vld [vmem:[%s7698 + $0x40] sm:$0xff]
    %v7708 = vld [vmem:[%s7698 + $0x48] sm:$0xff]
    %v7709 = vld [vmem:[%s7698 + $0x50] sm:$0xff]
    %v7710 = vld [vmem:[%s7698 + $0x58] sm:$0xff]
    %v7711 = vld [vmem:[%s7698 + $0x60] sm:$0xff]
    %v7712 = vld [vmem:[%s7698 + $0x68] sm:$0xff]
    %v7713 = vld [vmem:[%s7698 + $0x70] sm:$0xff]
    %v7714 = vld [vmem:[%s7698 + $0x78] sm:$0xff]
    %v7715 = vld [vmem:[%s7698 + $0x80] sm:$0xff]
    %v7716 = vld [vmem:[%s7698 + $0x88] sm:$0xff]
    %v7717 = vld [vmem:[%s7698 + $0x90] sm:$0xff]
    %v7718 = vld [vmem:[%s7698 + $0x98] sm:$0xff]
    %v7719 = vld [vmem:[%s7698 + $0xa0] sm:$0xff]
    %v7720 = vld [vmem:[%s7698 + $0xa8] sm:$0xff]
    %v7721 = vld [vmem:[%s7698 + $0xb0] sm:$0xff]
    %v7722 = vld [vmem:[%s7698 + $0xb8] sm:$0xff]
    %v7723 = vld [vmem:[%s7698 + $0xc0] sm:$0xff]
    %v7724 = vld [vmem:[%s7698 + $0xc8] sm:$0xff]
    %v7725 = vld [vmem:[%s7698 + $0xd0] sm:$0xff]
    %v7726 = vld [vmem:[%s7698 + $0xd8] sm:$0xff]
    %v7727 = vld [vmem:[%s7698 + $0xe0] sm:$0xff]
    %v7728 = vld [vmem:[%s7698 + $0xe8] sm:$0xff]
    %v7729 = vld [vmem:[%s7698 + $0xf0] sm:$0xff]
    %v7730 = vld [vmem:[%s7698 + $0xf8] sm:$0xff]
    %v7763 = vunpack.c.l.b16 %v7699
    %v7764 = vunpack.c.h.b16 %v7699
    %v7765 = vunpack.c.l.b16 %v7700
    %v7766 = vunpack.c.h.b16 %v7700
    %v7767 = vunpack.c.l.b16 %v7701
    %v7768 = vunpack.c.h.b16 %v7701
    %v7769 = vunpack.c.l.b16 %v7702
    %v7770 = vunpack.c.h.b16 %v7702
    %v7771 = vunpack.c.l.b16 %v7703
    %v7772 = vunpack.c.h.b16 %v7703
    %v7773 = vunpack.c.l.b16 %v7704
    %v7774 = vunpack.c.h.b16 %v7704
    %v7775 = vunpack.c.l.b16 %v7705
    %v7776 = vunpack.c.h.b16 %v7705
    %v7777 = vunpack.c.l.b16 %v7706
    %v7778 = vunpack.c.h.b16 %v7706
    %v7779 = vunpack.c.l.b16 %v7707
    %v7780 = vunpack.c.h.b16 %v7707
    %v7781 = vunpack.c.l.b16 %v7708
    %v7782 = vunpack.c.h.b16 %v7708
    %v7783 = vunpack.c.l.b16 %v7709
    %v7784 = vunpack.c.h.b16 %v7709
    %v7785 = vunpack.c.l.b16 %v7710
    %v7786 = vunpack.c.h.b16 %v7710
    %v7787 = vunpack.c.l.b16 %v7711
    %v7788 = vunpack.c.h.b16 %v7711
    %v7789 = vunpack.c.l.b16 %v7712
    %v7790 = vunpack.c.h.b16 %v7712
    %v7791 = vunpack.c.l.b16 %v7713
    %v7792 = vunpack.c.h.b16 %v7713
    %v7793 = vunpack.c.l.b16 %v7714
    %v7794 = vunpack.c.h.b16 %v7714
    %v7795 = vunpack.c.l.b16 %v7715
    %v7796 = vunpack.c.h.b16 %v7715
    %v7797 = vunpack.c.l.b16 %v7716
    %v7798 = vunpack.c.h.b16 %v7716
    %v7799 = vunpack.c.l.b16 %v7717
    %v7800 = vunpack.c.h.b16 %v7717
    %v7801 = vunpack.c.l.b16 %v7718
    %v7802 = vunpack.c.h.b16 %v7718
    %v7803 = vunpack.c.l.b16 %v7719
    %v7804 = vunpack.c.h.b16 %v7719
    %v7805 = vunpack.c.l.b16 %v7720
    %v7806 = vunpack.c.h.b16 %v7720
    %v7807 = vunpack.c.l.b16 %v7721
    %v7808 = vunpack.c.h.b16 %v7721
    %v7809 = vunpack.c.l.b16 %v7722
    %v7810 = vunpack.c.h.b16 %v7722
    %v7811 = vunpack.c.l.b16 %v7723
    %v7812 = vunpack.c.h.b16 %v7723
    %v7813 = vunpack.c.l.b16 %v7724
    %v7814 = vunpack.c.h.b16 %v7724
    %v7815 = vunpack.c.l.b16 %v7725
    %v7816 = vunpack.c.h.b16 %v7725
    %v7817 = vunpack.c.l.b16 %v7726
    %v7818 = vunpack.c.h.b16 %v7726
    %v7819 = vunpack.c.l.b16 %v7727
    %v7820 = vunpack.c.h.b16 %v7727
    %v7821 = vunpack.c.l.b16 %v7728
    %v7822 = vunpack.c.h.b16 %v7728
    %v7823 = vunpack.c.l.b16 %v7729
    %v7824 = vunpack.c.h.b16 %v7729
    %v7825 = vunpack.c.l.b16 %v7730
    %v7826 = vunpack.c.h.b16 %v7730
    %v7827 = vpack.c.b16 %v7765, %v7763
    %v7828 = vpack.c.b16 %v7766, %v7764
    %v7829 = vpack.c.b16 %v7769, %v7767
    %v7830 = vpack.c.b16 %v7770, %v7768
    %v7831 = vpack.c.b16 %v7773, %v7771
    %v7832 = vpack.c.b16 %v7774, %v7772
    %v7833 = vpack.c.b16 %v7777, %v7775
    %v7834 = vpack.c.b16 %v7778, %v7776
    %v7835 = vpack.c.b16 %v7781, %v7779
    %v7836 = vpack.c.b16 %v7782, %v7780
    %v7837 = vpack.c.b16 %v7785, %v7783
    %v7838 = vpack.c.b16 %v7786, %v7784
    %v7839 = vpack.c.b16 %v7789, %v7787
    %v7840 = vpack.c.b16 %v7790, %v7788
    %v7841 = vpack.c.b16 %v7793, %v7791
    %v7842 = vpack.c.b16 %v7794, %v7792
    %v7843 = vpack.c.b16 %v7797, %v7795
    %v7844 = vpack.c.b16 %v7798, %v7796
    %v7845 = vpack.c.b16 %v7801, %v7799
    %v7846 = vpack.c.b16 %v7802, %v7800
    %v7847 = vpack.c.b16 %v7805, %v7803
    %v7848 = vpack.c.b16 %v7806, %v7804
    %v7849 = vpack.c.b16 %v7809, %v7807
    %v7850 = vpack.c.b16 %v7810, %v7808
    %v7851 = vpack.c.b16 %v7813, %v7811
    %v7852 = vpack.c.b16 %v7814, %v7812
    %v7853 = vpack.c.b16 %v7817, %v7815
    %v7854 = vpack.c.b16 %v7818, %v7816
    %v7855 = vpack.c.b16 %v7821, %v7819
    %v7856 = vpack.c.b16 %v7822, %v7820
    %v7857 = vpack.c.b16 %v7825, %v7823
    %v7858 = vpack.c.b16 %v7826, %v7824
    %7891 = vmatprep.subr.bf16.mxu0 %v7828
    %7892 = vmatpush1.bf16.msra.mxu0 %v7827
    %7893 = vmatprep.subr.bf16.mxu0 %v7830
    %7894 = vmatpush1.bf16.msra.mxu0 %v7829
    %7895 = vmatprep.subr.bf16.mxu0 %v7832
    %7896 = vmatpush1.bf16.msra.mxu0 %v7831
    %7897 = vmatprep.subr.bf16.mxu0 %v7834
    %7898 = vmatpush1.bf16.msra.mxu0 %v7833
    %7899 = vmatprep.subr.bf16.mxu0 %v7836
    %7900 = vmatpush1.bf16.msra.mxu0 %v7835
    %7901 = vmatprep.subr.bf16.mxu0 %v7838
    %7902 = vmatpush1.bf16.msra.mxu0 %v7837
    %7903 = vmatprep.subr.bf16.mxu0 %v7840
    %7904 = vmatpush1.bf16.msra.mxu0 %v7839
    %7905 = vmatprep.subr.bf16.mxu0 %v7842
    %7906 = vmatpush1.bf16.msra.mxu0 %v7841
    %7907 = vmatprep.subr.bf16.mxu0 %v7844
    %7908 = vmatpush1.bf16.msra.mxu0 %v7843
    %7909 = vmatprep.subr.bf16.mxu0 %v7846
    %7910 = vmatpush1.bf16.msra.mxu0 %v7845
    %7911 = vmatprep.subr.bf16.mxu0 %v7848
    %7912 = vmatpush1.bf16.msra.mxu0 %v7847
    %7913 = vmatprep.subr.bf16.mxu0 %v7850
    %7914 = vmatpush1.bf16.msra.mxu0 %v7849
    %7915 = vmatprep.subr.bf16.mxu0 %v7852
    %7916 = vmatpush1.bf16.msra.mxu0 %v7851
    %7917 = vmatprep.subr.bf16.mxu0 %v7854
    %7918 = vmatpush1.bf16.msra.mxu0 %v7853
    %7919 = vmatprep.subr.bf16.mxu0 %v7856
    %7920 = vmatpush1.bf16.msra.mxu0 %v7855
    %7921 = vmatprep.subr.bf16.mxu0 %v7858
    %7922 = vmatpush1.bf16.msra.mxu0 %v7857
    %7923 = vmatprep.mubr.bf16.mxu0 %v7697
    %7924 = vmatmul.mubr.bf16.gmra.mrb[0].mxu0 %v7696
    %v7925 = vpop.f32.mrb[0].mxu0
    %v7926 = vadd.f32 0.0, %v7925
    %v7927 = vpop.f32.mrb[0].mxu0
    %v7928 = vadd.f32 0.0, %v7927
    %v7929 = vpop.f32.mrb[0].mxu0
    %v7930 = vpop.f32.mrb[0].mxu0
    %7931 = vdwg.mxu0
    %v7932 = vadd.f32 %v7648, %v7926
    %v7933 = vadd.f32 %v7649, %v7928
    %s7934 = scalar_lea.vmem %s16, 5
    %v7935 = vld [vmem:[%s7934] sm:$0x1]
    %v7937 = vsel %vm6513, %v7935, 0
    %7939 = vmatprep.subr.bf16.mxu0 %v6522
    %7940 = vmatpush1.bf16.msra.mxu0 %v6519
    %7941 = vmatprep.subr.bf16.mxu0 0
    %7942 = vmatpush1.bf16.msra.mxu0 0
    %7943 = vmatprep.subr.bf16.mxu0 0
    %7944 = vmatpush1.bf16.msra.mxu0 0
    %7945 = vmatprep.subr.bf16.mxu0 0
    %7946 = vmatpush1.bf16.msra.mxu0 0
    %7947 = vmatprep.subr.bf16.mxu0 0
    %7948 = vmatpush1.bf16.msra.mxu0 0
    %7949 = vmatprep.subr.bf16.mxu0 0
    %7950 = vmatpush1.bf16.msra.mxu0 0
    %7951 = vmatprep.subr.bf16.mxu0 0
    %7952 = vmatpush1.bf16.msra.mxu0 0
    %7953 = vmatprep.subr.bf16.mxu0 0
    %7954 = vmatpush1.bf16.msra.mxu0 0
    %7955 = vmatprep.subr.bf16.mxu0 0
    %7956 = vmatpush1.bf16.msra.mxu0 0
    %7957 = vmatprep.subr.bf16.mxu0 0
    %7958 = vmatpush1.bf16.msra.mxu0 0
    %7959 = vmatprep.subr.bf16.mxu0 0
    %7960 = vmatpush1.bf16.msra.mxu0 0
    %7961 = vmatprep.subr.bf16.mxu0 0
    %7962 = vmatpush1.bf16.msra.mxu0 0
    %7963 = vmatprep.subr.bf16.mxu0 0
    %7964 = vmatpush1.bf16.msra.mxu0 0
    %7965 = vmatprep.subr.bf16.mxu0 0
    %7966 = vmatpush1.bf16.msra.mxu0 0
    %7967 = vmatprep.subr.bf16.mxu0 0
    %7968 = vmatpush1.bf16.msra.mxu0 0
    %7969 = vmatprep.subr.bf16.mxu0 0
    %7970 = vmatpush1.bf16.msra.mxu0 0
    %7971 = vmatprep.mubr.bf16.mxu0 0
    %7972 = vmatmul.mubr.bf16.gmra.mrb[0].mxu0 %v7937
    %v7973 = vpop.f32.mrb[0].mxu0
    %v7974 = vadd.f32 0.0, %v7973
    %v7975 = vpop.f32.mrb[0].mxu0
    %v7976 = vadd.f32 0.0, %v7975
    %v7977 = vpop.f32.mrb[0].mxu0
    %v7978 = vpop.f32.mrb[0].mxu0
    %7979 = vdwg.mxu0
    %v7980 = vpack.c.bf16 %v7974, %v7974
    %v7981 = vpack.c.bf16 %v7976, %v7976
    %s7982 = scalar_lea.vmem %s17, 1280
    %v7983 = vld [vmem:[%s7982] sm:$0xff]
    %v7984 = vld [vmem:[%s7982 + $0x8] sm:$0xff]
    %v7985 = vld [vmem:[%s7982 + $0x10] sm:$0xff]
    %v7986 = vld [vmem:[%s7982 + $0x18] sm:$0xff]
    %v7987 = vld [vmem:[%s7982 + $0x20] sm:$0xff]
    %v7988 = vld [vmem:[%s7982 + $0x28] sm:$0xff]
    %v7989 = vld [vmem:[%s7982 + $0x30] sm:$0xff]
    %v7990 = vld [vmem:[%s7982 + $0x38] sm:$0xff]
    %v7991 = vld [vmem:[%s7982 + $0x40] sm:$0xff]
    %v7992 = vld [vmem:[%s7982 + $0x48] sm:$0xff]
    %v7993 = vld [vmem:[%s7982 + $0x50] sm:$0xff]
    %v7994 = vld [vmem:[%s7982 + $0x58] sm:$0xff]
    %v7995 = vld [vmem:[%s7982 + $0x60] sm:$0xff]
    %v7996 = vld [vmem:[%s7982 + $0x68] sm:$0xff]
    %v7997 = vld [vmem:[%s7982 + $0x70] sm:$0xff]
    %v7998 = vld [vmem:[%s7982 + $0x78] sm:$0xff]
    %v7999 = vld [vmem:[%s7982 + $0x80] sm:$0xff]
    %v8000 = vld [vmem:[%s7982 + $0x88] sm:$0xff]
    %v8001 = vld [vmem:[%s7982 + $0x90] sm:$0xff]
    %v8002 = vld [vmem:[%s7982 + $0x98] sm:$0xff]
    %v8003 = vld [vmem:[%s7982 + $0xa0] sm:$0xff]
    %v8004 = vld [vmem:[%s7982 + $0xa8] sm:$0xff]
    %v8005 = vld [vmem:[%s7982 + $0xb0] sm:$0xff]
    %v8006 = vld [vmem:[%s7982 + $0xb8] sm:$0xff]
    %v8007 = vld [vmem:[%s7982 + $0xc0] sm:$0xff]
    %v8008 = vld [vmem:[%s7982 + $0xc8] sm:$0xff]
    %v8009 = vld [vmem:[%s7982 + $0xd0] sm:$0xff]
    %v8010 = vld [vmem:[%s7982 + $0xd8] sm:$0xff]
    %v8011 = vld [vmem:[%s7982 + $0xe0] sm:$0xff]
    %v8012 = vld [vmem:[%s7982 + $0xe8] sm:$0xff]
    %v8013 = vld [vmem:[%s7982 + $0xf0] sm:$0xff]
    %v8014 = vld [vmem:[%s7982 + $0xf8] sm:$0xff]
    %v8047 = vunpack.c.l.b16 %v7983
    %v8048 = vunpack.c.h.b16 %v7983
    %v8049 = vunpack.c.l.b16 %v7984
    %v8050 = vunpack.c.h.b16 %v7984
    %v8051 = vunpack.c.l.b16 %v7985
    %v8052 = vunpack.c.h.b16 %v7985
    %v8053 = vunpack.c.l.b16 %v7986
    %v8054 = vunpack.c.h.b16 %v7986
    %v8055 = vunpack.c.l.b16 %v7987
    %v8056 = vunpack.c.h.b16 %v7987
    %v8057 = vunpack.c.l.b16 %v7988
    %v8058 = vunpack.c.h.b16 %v7988
    %v8059 = vunpack.c.l.b16 %v7989
    %v8060 = vunpack.c.h.b16 %v7989
    %v8061 = vunpack.c.l.b16 %v7990
    %v8062 = vunpack.c.h.b16 %v7990
    %v8063 = vunpack.c.l.b16 %v7991
    %v8064 = vunpack.c.h.b16 %v7991
    %v8065 = vunpack.c.l.b16 %v7992
    %v8066 = vunpack.c.h.b16 %v7992
    %v8067 = vunpack.c.l.b16 %v7993
    %v8068 = vunpack.c.h.b16 %v7993
    %v8069 = vunpack.c.l.b16 %v7994
    %v8070 = vunpack.c.h.b16 %v7994
    %v8071 = vunpack.c.l.b16 %v7995
    %v8072 = vunpack.c.h.b16 %v7995
    %v8073 = vunpack.c.l.b16 %v7996
    %v8074 = vunpack.c.h.b16 %v7996
    %v8075 = vunpack.c.l.b16 %v7997
    %v8076 = vunpack.c.h.b16 %v7997
    %v8077 = vunpack.c.l.b16 %v7998
    %v8078 = vunpack.c.h.b16 %v7998
    %v8079 = vunpack.c.l.b16 %v7999
    %v8080 = vunpack.c.h.b16 %v7999
    %v8081 = vunpack.c.l.b16 %v8000
    %v8082 = vunpack.c.h.b16 %v8000
    %v8083 = vunpack.c.l.b16 %v8001
    %v8084 = vunpack.c.h.b16 %v8001
    %v8085 = vunpack.c.l.b16 %v8002
    %v8086 = vunpack.c.h.b16 %v8002
    %v8087 = vunpack.c.l.b16 %v8003
    %v8088 = vunpack.c.h.b16 %v8003
    %v8089 = vunpack.c.l.b16 %v8004
    %v8090 = vunpack.c.h.b16 %v8004
    %v8091 = vunpack.c.l.b16 %v8005
    %v8092 = vunpack.c.h.b16 %v8005
    %v8093 = vunpack.c.l.b16 %v8006
    %v8094 = vunpack.c.h.b16 %v8006
    %v8095 = vunpack.c.l.b16 %v8007
    %v8096 = vunpack.c.h.b16 %v8007
    %v8097 = vunpack.c.l.b16 %v8008
    %v8098 = vunpack.c.h.b16 %v8008
    %v8099 = vunpack.c.l.b16 %v8009
    %v8100 = vunpack.c.h.b16 %v8009
    %v8101 = vunpack.c.l.b16 %v8010
    %v8102 = vunpack.c.h.b16 %v8010
    %v8103 = vunpack.c.l.b16 %v8011
    %v8104 = vunpack.c.h.b16 %v8011
    %v8105 = vunpack.c.l.b16 %v8012
    %v8106 = vunpack.c.h.b16 %v8012
    %v8107 = vunpack.c.l.b16 %v8013
    %v8108 = vunpack.c.h.b16 %v8013
    %v8109 = vunpack.c.l.b16 %v8014
    %v8110 = vunpack.c.h.b16 %v8014
    %v8111 = vpack.c.b16 %v8049, %v8047
    %v8112 = vpack.c.b16 %v8050, %v8048
    %v8113 = vpack.c.b16 %v8053, %v8051
    %v8114 = vpack.c.b16 %v8054, %v8052
    %v8115 = vpack.c.b16 %v8057, %v8055
    %v8116 = vpack.c.b16 %v8058, %v8056
    %v8117 = vpack.c.b16 %v8061, %v8059
    %v8118 = vpack.c.b16 %v8062, %v8060
    %v8119 = vpack.c.b16 %v8065, %v8063
    %v8120 = vpack.c.b16 %v8066, %v8064
    %v8121 = vpack.c.b16 %v8069, %v8067
    %v8122 = vpack.c.b16 %v8070, %v8068
    %v8123 = vpack.c.b16 %v8073, %v8071
    %v8124 = vpack.c.b16 %v8074, %v8072
    %v8125 = vpack.c.b16 %v8077, %v8075
    %v8126 = vpack.c.b16 %v8078, %v8076
    %v8127 = vpack.c.b16 %v8081, %v8079
    %v8128 = vpack.c.b16 %v8082, %v8080
    %v8129 = vpack.c.b16 %v8085, %v8083
    %v8130 = vpack.c.b16 %v8086, %v8084
    %v8131 = vpack.c.b16 %v8089, %v8087
    %v8132 = vpack.c.b16 %v8090, %v8088
    %v8133 = vpack.c.b16 %v8093, %v8091
    %v8134 = vpack.c.b16 %v8094, %v8092
    %v8135 = vpack.c.b16 %v8097, %v8095
    %v8136 = vpack.c.b16 %v8098, %v8096
    %v8137 = vpack.c.b16 %v8101, %v8099
    %v8138 = vpack.c.b16 %v8102, %v8100
    %v8139 = vpack.c.b16 %v8105, %v8103
    %v8140 = vpack.c.b16 %v8106, %v8104
    %v8141 = vpack.c.b16 %v8109, %v8107
    %v8142 = vpack.c.b16 %v8110, %v8108
    %8175 = vmatprep.subr.bf16.mxu0 %v8112
    %8176 = vmatpush1.bf16.msra.mxu0 %v8111
    %8177 = vmatprep.subr.bf16.mxu0 %v8114
    %8178 = vmatpush1.bf16.msra.mxu0 %v8113
    %8179 = vmatprep.subr.bf16.mxu0 %v8116
    %8180 = vmatpush1.bf16.msra.mxu0 %v8115
    %8181 = vmatprep.subr.bf16.mxu0 %v8118
    %8182 = vmatpush1.bf16.msra.mxu0 %v8117
    %8183 = vmatprep.subr.bf16.mxu0 %v8120
    %8184 = vmatpush1.bf16.msra.mxu0 %v8119
    %8185 = vmatprep.subr.bf16.mxu0 %v8122
    %8186 = vmatpush1.bf16.msra.mxu0 %v8121
    %8187 = vmatprep.subr.bf16.mxu0 %v8124
    %8188 = vmatpush1.bf16.msra.mxu0 %v8123
    %8189 = vmatprep.subr.bf16.mxu0 %v8126
    %8190 = vmatpush1.bf16.msra.mxu0 %v8125
    %8191 = vmatprep.subr.bf16.mxu0 %v8128
    %8192 = vmatpush1.bf16.msra.mxu0 %v8127
    %8193 = vmatprep.subr.bf16.mxu0 %v8130
    %8194 = vmatpush1.bf16.msra.mxu0 %v8129
    %8195 = vmatprep.subr.bf16.mxu0 %v8132
    %8196 = vmatpush1.bf16.msra.mxu0 %v8131
    %8197 = vmatprep.subr.bf16.mxu0 %v8134
    %8198 = vmatpush1.bf16.msra.mxu0 %v8133
    %8199 = vmatprep.subr.bf16.mxu0 %v8136
    %8200 = vmatpush1.bf16.msra.mxu0 %v8135
    %8201 = vmatprep.subr.bf16.mxu0 %v8138
    %8202 = vmatpush1.bf16.msra.mxu0 %v8137
    %8203 = vmatprep.subr.bf16.mxu0 %v8140
    %8204 = vmatpush1.bf16.msra.mxu0 %v8139
    %8205 = vmatprep.subr.bf16.mxu0 %v8142
    %8206 = vmatpush1.bf16.msra.mxu0 %v8141
    %8207 = vmatprep.mubr.bf16.mxu0 %v7981
    %8208 = vmatmul.mubr.bf16.gmra.mrb[0].mxu0 %v7980
    %v8209 = vpop.f32.mrb[0].mxu0
    %v8210 = vadd.f32 0.0, %v8209
    %v8211 = vpop.f32.mrb[0].mxu0
    %v8212 = vadd.f32 0.0, %v8211
    %v8213 = vpop.f32.mrb[0].mxu0
    %v8214 = vpop.f32.mrb[0].mxu0
    %8215 = vdwg.mxu0
    %v8216 = vadd.f32 %v7932, %v8210
    %v8217 = vadd.f32 %v7933, %v8212
    %s8218 = scalar_lea.vmem %s16, 6
    %v8219 = vld [vmem:[%s8218] sm:$0x1]
    %v8221 = vsel %vm6513, %v8219, 0
    %8223 = vmatprep.subr.bf16.mxu0 %v6522
    %8224 = vmatpush1.bf16.msra.mxu0 %v6519
    %8225 = vmatprep.subr.bf16.mxu0 0
    %8226 = vmatpush1.bf16.msra.mxu0 0
    %8227 = vmatprep.subr.bf16.mxu0 0
    %8228 = vmatpush1.bf16.msra.mxu0 0
    %8229 = vmatprep.subr.bf16.mxu0 0
    %8230 = vmatpush1.bf16.msra.mxu0 0
    %8231 = vmatprep.subr.bf16.mxu0 0
    %8232 = vmatpush1.bf16.msra.mxu0 0
    %8233 = vmatprep.subr.bf16.mxu0 0
    %8234 = vmatpush1.bf16.msra.mxu0 0
    %8235 = vmatprep.subr.bf16.mxu0 0
    %8236 = vmatpush1.bf16.msra.mxu0 0
    %8237 = vmatprep.subr.bf16.mxu0 0
    %8238 = vmatpush1.bf16.msra.mxu0 0
    %8239 = vmatprep.subr.bf16.mxu0 0
    %8240 = vmatpush1.bf16.msra.mxu0 0
    %8241 = vmatprep.subr.bf16.mxu0 0
    %8242 = vmatpush1.bf16.msra.mxu0 0
    %8243 = vmatprep.subr.bf16.mxu0 0
    %8244 = vmatpush1.bf16.msra.mxu0 0
    %8245 = vmatprep.subr.bf16.mxu0 0
    %8246 = vmatpush1.bf16.msra.mxu0 0
    %8247 = vmatprep.subr.bf16.mxu0 0
    %8248 = vmatpush1.bf16.msra.mxu0 0
    %8249 = vmatprep.subr.bf16.mxu0 0
    %8250 = vmatpush1.bf16.msra.mxu0 0
    %8251 = vmatprep.subr.bf16.mxu0 0
    %8252 = vmatpush1.bf16.msra.mxu0 0
    %8253 = vmatprep.subr.bf16.mxu0 0
    %8254 = vmatpush1.bf16.msra.mxu0 0
    %8255 = vmatprep.mubr.bf16.mxu0 0
    %8256 = vmatmul.mubr.bf16.gmra.mrb[0].mxu0 %v8221
    %v8257 = vpop.f32.mrb[0].mxu0
    %v8258 = vadd.f32 0.0, %v8257
    %v8259 = vpop.f32.mrb[0].mxu0
    %v8260 = vadd.f32 0.0, %v8259
    %v8261 = vpop.f32.mrb[0].mxu0
    %v8262 = vpop.f32.mrb[0].mxu0
    %8263 = vdwg.mxu0
    %v8264 = vpack.c.bf16 %v8258, %v8258
    %v8265 = vpack.c.bf16 %v8260, %v8260
    %s8266 = scalar_lea.vmem %s17, 1536
    %v8267 = vld [vmem:[%s8266] sm:$0xff]
    %v8268 = vld [vmem:[%s8266 + $0x8] sm:$0xff]
    %v8269 = vld [vmem:[%s8266 + $0x10] sm:$0xff]
    %v8270 = vld [vmem:[%s8266 + $0x18] sm:$0xff]
    %v8271 = vld [vmem:[%s8266 + $0x20] sm:$0xff]
    %v8272 = vld [vmem:[%s8266 + $0x28] sm:$0xff]
    %v8273 = vld [vmem:[%s8266 + $0x30] sm:$0xff]
    %v8274 = vld [vmem:[%s8266 + $0x38] sm:$0xff]
    %v8275 = vld [vmem:[%s8266 + $0x40] sm:$0xff]
    %v8276 = vld [vmem:[%s8266 + $0x48] sm:$0xff]
    %v8277 = vld [vmem:[%s8266 + $0x50] sm:$0xff]
    %v8278 = vld [vmem:[%s8266 + $0x58] sm:$0xff]
    %v8279 = vld [vmem:[%s8266 + $0x60] sm:$0xff]
    %v8280 = vld [vmem:[%s8266 + $0x68] sm:$0xff]
    %v8281 = vld [vmem:[%s8266 + $0x70] sm:$0xff]
    %v8282 = vld [vmem:[%s8266 + $0x78] sm:$0xff]
    %v8283 = vld [vmem:[%s8266 + $0x80] sm:$0xff]
    %v8284 = vld [vmem:[%s8266 + $0x88] sm:$0xff]
    %v8285 = vld [vmem:[%s8266 + $0x90] sm:$0xff]
    %v8286 = vld [vmem:[%s8266 + $0x98] sm:$0xff]
    %v8287 = vld [vmem:[%s8266 + $0xa0] sm:$0xff]
    %v8288 = vld [vmem:[%s8266 + $0xa8] sm:$0xff]
    %v8289 = vld [vmem:[%s8266 + $0xb0] sm:$0xff]
    %v8290 = vld [vmem:[%s8266 + $0xb8] sm:$0xff]
    %v8291 = vld [vmem:[%s8266 + $0xc0] sm:$0xff]
    %v8292 = vld [vmem:[%s8266 + $0xc8] sm:$0xff]
    %v8293 = vld [vmem:[%s8266 + $0xd0] sm:$0xff]
    %v8294 = vld [vmem:[%s8266 + $0xd8] sm:$0xff]
    %v8295 = vld [vmem:[%s8266 + $0xe0] sm:$0xff]
    %v8296 = vld [vmem:[%s8266 + $0xe8] sm:$0xff]
    %v8297 = vld [vmem:[%s8266 + $0xf0] sm:$0xff]
    %v8298 = vld [vmem:[%s8266 + $0xf8] sm:$0xff]
    %v8331 = vunpack.c.l.b16 %v8267
    %v8332 = vunpack.c.h.b16 %v8267
    %v8333 = vunpack.c.l.b16 %v8268
    %v8334 = vunpack.c.h.b16 %v8268
    %v8335 = vunpack.c.l.b16 %v8269
    %v8336 = vunpack.c.h.b16 %v8269
    %v8337 = vunpack.c.l.b16 %v8270
    %v8338 = vunpack.c.h.b16 %v8270
    %v8339 = vunpack.c.l.b16 %v8271
    %v8340 = vunpack.c.h.b16 %v8271
    %v8341 = vunpack.c.l.b16 %v8272
    %v8342 = vunpack.c.h.b16 %v8272
    %v8343 = vunpack.c.l.b16 %v8273
    %v8344 = vunpack.c.h.b16 %v8273
    %v8345 = vunpack.c.l.b16 %v8274
    %v8346 = vunpack.c.h.b16 %v8274
    %v8347 = vunpack.c.l.b16 %v8275
    %v8348 = vunpack.c.h.b16 %v8275
    %v8349 = vunpack.c.l.b16 %v8276
    %v8350 = vunpack.c.h.b16 %v8276
    %v8351 = vunpack.c.l.b16 %v8277
    %v8352 = vunpack.c.h.b16 %v8277
    %v8353 = vunpack.c.l.b16 %v8278
    %v8354 = vunpack.c.h.b16 %v8278
    %v8355 = vunpack.c.l.b16 %v8279
    %v8356 = vunpack.c.h.b16 %v8279
    %v8357 = vunpack.c.l.b16 %v8280
    %v8358 = vunpack.c.h.b16 %v8280
    %v8359 = vunpack.c.l.b16 %v8281
    %v8360 = vunpack.c.h.b16 %v8281
    %v8361 = vunpack.c.l.b16 %v8282
    %v8362 = vunpack.c.h.b16 %v8282
    %v8363 = vunpack.c.l.b16 %v8283
    %v8364 = vunpack.c.h.b16 %v8283
    %v8365 = vunpack.c.l.b16 %v8284
    %v8366 = vunpack.c.h.b16 %v8284
    %v8367 = vunpack.c.l.b16 %v8285
    %v8368 = vunpack.c.h.b16 %v8285
    %v8369 = vunpack.c.l.b16 %v8286
    %v8370 = vunpack.c.h.b16 %v8286
    %v8371 = vunpack.c.l.b16 %v8287
    %v8372 = vunpack.c.h.b16 %v8287
    %v8373 = vunpack.c.l.b16 %v8288
    %v8374 = vunpack.c.h.b16 %v8288
    %v8375 = vunpack.c.l.b16 %v8289
    %v8376 = vunpack.c.h.b16 %v8289
    %v8377 = vunpack.c.l.b16 %v8290
    %v8378 = vunpack.c.h.b16 %v8290
    %v8379 = vunpack.c.l.b16 %v8291
    %v8380 = vunpack.c.h.b16 %v8291
    %v8381 = vunpack.c.l.b16 %v8292
    %v8382 = vunpack.c.h.b16 %v8292
    %v8383 = vunpack.c.l.b16 %v8293
    %v8384 = vunpack.c.h.b16 %v8293
    %v8385 = vunpack.c.l.b16 %v8294
    %v8386 = vunpack.c.h.b16 %v8294
    %v8387 = vunpack.c.l.b16 %v8295
    %v8388 = vunpack.c.h.b16 %v8295
    %v8389 = vunpack.c.l.b16 %v8296
    %v8390 = vunpack.c.h.b16 %v8296
    %v8391 = vunpack.c.l.b16 %v8297
    %v8392 = vunpack.c.h.b16 %v8297
    %v8393 = vunpack.c.l.b16 %v8298
    %v8394 = vunpack.c.h.b16 %v8298
    %v8395 = vpack.c.b16 %v8333, %v8331
    %v8396 = vpack.c.b16 %v8334, %v8332
    %v8397 = vpack.c.b16 %v8337, %v8335
    %v8398 = vpack.c.b16 %v8338, %v8336
    %v8399 = vpack.c.b16 %v8341, %v8339
    %v8400 = vpack.c.b16 %v8342, %v8340
    %v8401 = vpack.c.b16 %v8345, %v8343
    %v8402 = vpack.c.b16 %v8346, %v8344
    %v8403 = vpack.c.b16 %v8349, %v8347
    %v8404 = vpack.c.b16 %v8350, %v8348
    %v8405 = vpack.c.b16 %v8353, %v8351
    %v8406 = vpack.c.b16 %v8354, %v8352
    %v8407 = vpack.c.b16 %v8357, %v8355
    %v8408 = vpack.c.b16 %v8358, %v8356
    %v8409 = vpack.c.b16 %v8361, %v8359
    %v8410 = vpack.c.b16 %v8362, %v8360
    %v8411 = vpack.c.b16 %v8365, %v8363
    %v8412 = vpack.c.b16 %v8366, %v8364
    %v8413 = vpack.c.b16 %v8369, %v8367
    %v8414 = vpack.c.b16 %v8370, %v8368
    %v8415 = vpack.c.b16 %v8373, %v8371
    %v8416 = vpack.c.b16 %v8374, %v8372
    %v8417 = vpack.c.b16 %v8377, %v8375
    %v8418 = vpack.c.b16 %v8378, %v8376
    %v8419 = vpack.c.b16 %v8381, %v8379
    %v8420 = vpack.c.b16 %v8382, %v8380
    %v8421 = vpack.c.b16 %v8385, %v8383
    %v8422 = vpack.c.b16 %v8386, %v8384
    %v8423 = vpack.c.b16 %v8389, %v8387
    %v8424 = vpack.c.b16 %v8390, %v8388
    %v8425 = vpack.c.b16 %v8393, %v8391
    %v8426 = vpack.c.b16 %v8394, %v8392
    %8459 = vmatprep.subr.bf16.mxu0 %v8396
    %8460 = vmatpush1.bf16.msra.mxu0 %v8395
    %8461 = vmatprep.subr.bf16.mxu0 %v8398
    %8462 = vmatpush1.bf16.msra.mxu0 %v8397
    %8463 = vmatprep.subr.bf16.mxu0 %v8400
    %8464 = vmatpush1.bf16.msra.mxu0 %v8399
    %8465 = vmatprep.subr.bf16.mxu0 %v8402
    %8466 = vmatpush1.bf16.msra.mxu0 %v8401
    %8467 = vmatprep.subr.bf16.mxu0 %v8404
    %8468 = vmatpush1.bf16.msra.mxu0 %v8403
    %8469 = vmatprep.subr.bf16.mxu0 %v8406
    %8470 = vmatpush1.bf16.msra.mxu0 %v8405
    %8471 = vmatprep.subr.bf16.mxu0 %v8408
    %8472 = vmatpush1.bf16.msra.mxu0 %v8407
    %8473 = vmatprep.subr.bf16.mxu0 %v8410
    %8474 = vmatpush1.bf16.msra.mxu0 %v8409
    %8475 = vmatprep.subr.bf16.mxu0 %v8412
    %8476 = vmatpush1.bf16.msra.mxu0 %v8411
    %8477 = vmatprep.subr.bf16.mxu0 %v8414
    %8478 = vmatpush1.bf16.msra.mxu0 %v8413
    %8479 = vmatprep.subr.bf16.mxu0 %v8416
    %8480 = vmatpush1.bf16.msra.mxu0 %v8415
    %8481 = vmatprep.subr.bf16.mxu0 %v8418
    %8482 = vmatpush1.bf16.msra.mxu0 %v8417
    %8483 = vmatprep.subr.bf16.mxu0 %v8420
    %8484 = vmatpush1.bf16.msra.mxu0 %v8419
    %8485 = vmatprep.subr.bf16.mxu0 %v8422
    %8486 = vmatpush1.bf16.msra.mxu0 %v8421
    %8487 = vmatprep.subr.bf16.mxu0 %v8424
    %8488 = vmatpush1.bf16.msra.mxu0 %v8423
    %8489 = vmatprep.subr.bf16.mxu0 %v8426
    %8490 = vmatpush1.bf16.msra.mxu0 %v8425
    %8491 = vmatprep.mubr.bf16.mxu0 %v8265
    %8492 = vmatmul.mubr.bf16.gmra.mrb[0].mxu0 %v8264
    %v8493 = vpop.f32.mrb[0].mxu0
    %v8494 = vadd.f32 0.0, %v8493
    %v8495 = vpop.f32.mrb[0].mxu0
    %v8496 = vadd.f32 0.0, %v8495
    %v8497 = vpop.f32.mrb[0].mxu0
    %v8498 = vpop.f32.mrb[0].mxu0
    %8499 = vdwg.mxu0
    %v8500 = vadd.f32 %v8216, %v8494
    %v8501 = vadd.f32 %v8217, %v8496
    %s8502 = scalar_lea.vmem %s16, 7
    %v8503 = vld [vmem:[%s8502] sm:$0x1]
    %v8505 = vsel %vm6513, %v8503, 0
    %8507 = vmatprep.subr.bf16.mxu0 %v6522
    %8508 = vmatpush1.bf16.msra.mxu0 %v6519
    %8509 = vmatprep.subr.bf16.mxu0 0
    %8510 = vmatpush1.bf16.msra.mxu0 0
    %8511 = vmatprep.subr.bf16.mxu0 0
    %8512 = vmatpush1.bf16.msra.mxu0 0
    %8513 = vmatprep.subr.bf16.mxu0 0
    %8514 = vmatpush1.bf16.msra.mxu0 0
    %8515 = vmatprep.subr.bf16.mxu0 0
    %8516 = vmatpush1.bf16.msra.mxu0 0
    %8517 = vmatprep.subr.bf16.mxu0 0
    %8518 = vmatpush1.bf16.msra.mxu0 0
    %8519 = vmatprep.subr.bf16.mxu0 0
    %8520 = vmatpush1.bf16.msra.mxu0 0
    %8521 = vmatprep.subr.bf16.mxu0 0
    %8522 = vmatpush1.bf16.msra.mxu0 0
    %8523 = vmatprep.subr.bf16.mxu0 0
    %8524 = vmatpush1.bf16.msra.mxu0 0
    %8525 = vmatprep.subr.bf16.mxu0 0
    %8526 = vmatpush1.bf16.msra.mxu0 0
    %8527 = vmatprep.subr.bf16.mxu0 0
    %8528 = vmatpush1.bf16.msra.mxu0 0
    %8529 = vmatprep.subr.bf16.mxu0 0
    %8530 = vmatpush1.bf16.msra.mxu0 0
    %8531 = vmatprep.subr.bf16.mxu0 0
    %8532 = vmatpush1.bf16.msra.mxu0 0
    %8533 = vmatprep.subr.bf16.mxu0 0
    %8534 = vmatpush1.bf16.msra.mxu0 0
    %8535 = vmatprep.subr.bf16.mxu0 0
    %8536 = vmatpush1.bf16.msra.mxu0 0
    %8537 = vmatprep.subr.bf16.mxu0 0
    %8538 = vmatpush1.bf16.msra.mxu0 0
    %8539 = vmatprep.mubr.bf16.mxu0 0
    %8540 = vmatmul.mubr.bf16.gmra.mrb[0].mxu0 %v8505
    %v8541 = vpop.f32.mrb[0].mxu0
    %v8542 = vadd.f32 0.0, %v8541
    %v8543 = vpop.f32.mrb[0].mxu0
    %v8544 = vadd.f32 0.0, %v8543
    %v8545 = vpop.f32.mrb[0].mxu0
    %v8546 = vpop.f32.mrb[0].mxu0
    %8547 = vdwg.mxu0
    %v8548 = vpack.c.bf16 %v8542, %v8542
    %v8549 = vpack.c.bf16 %v8544, %v8544
    %s8550 = scalar_lea.vmem %s17, 1792
    %v8551 = vld [vmem:[%s8550] sm:$0xff]
    %v8552 = vld [vmem:[%s8550 + $0x8] sm:$0xff]
    %v8553 = vld [vmem:[%s8550 + $0x10] sm:$0xff]
    %v8554 = vld [vmem:[%s8550 + $0x18] sm:$0xff]
    %v8555 = vld [vmem:[%s8550 + $0x20] sm:$0xff]
    %v8556 = vld [vmem:[%s8550 + $0x28] sm:$0xff]
    %v8557 = vld [vmem:[%s8550 + $0x30] sm:$0xff]
    %v8558 = vld [vmem:[%s8550 + $0x38] sm:$0xff]
    %v8559 = vld [vmem:[%s8550 + $0x40] sm:$0xff]
    %v8560 = vld [vmem:[%s8550 + $0x48] sm:$0xff]
    %v8561 = vld [vmem:[%s8550 + $0x50] sm:$0xff]
    %v8562 = vld [vmem:[%s8550 + $0x58] sm:$0xff]
    %v8563 = vld [vmem:[%s8550 + $0x60] sm:$0xff]
    %v8564 = vld [vmem:[%s8550 + $0x68] sm:$0xff]
    %v8565 = vld [vmem:[%s8550 + $0x70] sm:$0xff]
    %v8566 = vld [vmem:[%s8550 + $0x78] sm:$0xff]
    %v8567 = vld [vmem:[%s8550 + $0x80] sm:$0xff]
    %v8568 = vld [vmem:[%s8550 + $0x88] sm:$0xff]
    %v8569 = vld [vmem:[%s8550 + $0x90] sm:$0xff]
    %v8570 = vld [vmem:[%s8550 + $0x98] sm:$0xff]
    %v8571 = vld [vmem:[%s8550 + $0xa0] sm:$0xff]
    %v8572 = vld [vmem:[%s8550 + $0xa8] sm:$0xff]
    %v8573 = vld [vmem:[%s8550 + $0xb0] sm:$0xff]
    %v8574 = vld [vmem:[%s8550 + $0xb8] sm:$0xff]
    %v8575 = vld [vmem:[%s8550 + $0xc0] sm:$0xff]
    %v8576 = vld [vmem:[%s8550 + $0xc8] sm:$0xff]
    %v8577 = vld [vmem:[%s8550 + $0xd0] sm:$0xff]
    %v8578 = vld [vmem:[%s8550 + $0xd8] sm:$0xff]
    %v8579 = vld [vmem:[%s8550 + $0xe0] sm:$0xff]
    %v8580 = vld [vmem:[%s8550 + $0xe8] sm:$0xff]
    %v8581 = vld [vmem:[%s8550 + $0xf0] sm:$0xff]
    %v8582 = vld [vmem:[%s8550 + $0xf8] sm:$0xff]
    %v8615 = vunpack.c.l.b16 %v8551
    %v8616 = vunpack.c.h.b16 %v8551
    %v8617 = vunpack.c.l.b16 %v8552
    %v8618 = vunpack.c.h.b16 %v8552
    %v8619 = vunpack.c.l.b16 %v8553
    %v8620 = vunpack.c.h.b16 %v8553
    %v8621 = vunpack.c.l.b16 %v8554
    %v8622 = vunpack.c.h.b16 %v8554
    %v8623 = vunpack.c.l.b16 %v8555
    %v8624 = vunpack.c.h.b16 %v8555
    %v8625 = vunpack.c.l.b16 %v8556
    %v8626 = vunpack.c.h.b16 %v8556
    %v8627 = vunpack.c.l.b16 %v8557
    %v8628 = vunpack.c.h.b16 %v8557
    %v8629 = vunpack.c.l.b16 %v8558
    %v8630 = vunpack.c.h.b16 %v8558
    %v8631 = vunpack.c.l.b16 %v8559
    %v8632 = vunpack.c.h.b16 %v8559
    %v8633 = vunpack.c.l.b16 %v8560
    %v8634 = vunpack.c.h.b16 %v8560
    %v8635 = vunpack.c.l.b16 %v8561
    %v8636 = vunpack.c.h.b16 %v8561
    %v8637 = vunpack.c.l.b16 %v8562
    %v8638 = vunpack.c.h.b16 %v8562
    %v8639 = vunpack.c.l.b16 %v8563
    %v8640 = vunpack.c.h.b16 %v8563
    %v8641 = vunpack.c.l.b16 %v8564
    %v8642 = vunpack.c.h.b16 %v8564
    %v8643 = vunpack.c.l.b16 %v8565
    %v8644 = vunpack.c.h.b16 %v8565
    %v8645 = vunpack.c.l.b16 %v8566
    %v8646 = vunpack.c.h.b16 %v8566
    %v8647 = vunpack.c.l.b16 %v8567
    %v8648 = vunpack.c.h.b16 %v8567
    %v8649 = vunpack.c.l.b16 %v8568
    %v8650 = vunpack.c.h.b16 %v8568
    %v8651 = vunpack.c.l.b16 %v8569
    %v8652 = vunpack.c.h.b16 %v8569
    %v8653 = vunpack.c.l.b16 %v8570
    %v8654 = vunpack.c.h.b16 %v8570
    %v8655 = vunpack.c.l.b16 %v8571
    %v8656 = vunpack.c.h.b16 %v8571
    %v8657 = vunpack.c.l.b16 %v8572
    %v8658 = vunpack.c.h.b16 %v8572
    %v8659 = vunpack.c.l.b16 %v8573
    %v8660 = vunpack.c.h.b16 %v8573
    %v8661 = vunpack.c.l.b16 %v8574
    %v8662 = vunpack.c.h.b16 %v8574
    %v8663 = vunpack.c.l.b16 %v8575
    %v8664 = vunpack.c.h.b16 %v8575
    %v8665 = vunpack.c.l.b16 %v8576
    %v8666 = vunpack.c.h.b16 %v8576
    %v8667 = vunpack.c.l.b16 %v8577
    %v8668 = vunpack.c.h.b16 %v8577
    %v8669 = vunpack.c.l.b16 %v8578
    %v8670 = vunpack.c.h.b16 %v8578
    %v8671 = vunpack.c.l.b16 %v8579
    %v8672 = vunpack.c.h.b16 %v8579
    %v8673 = vunpack.c.l.b16 %v8580
    %v8674 = vunpack.c.h.b16 %v8580
    %v8675 = vunpack.c.l.b16 %v8581
    %v8676 = vunpack.c.h.b16 %v8581
    %v8677 = vunpack.c.l.b16 %v8582
    %v8678 = vunpack.c.h.b16 %v8582
    %v8679 = vpack.c.b16 %v8617, %v8615
    %v8680 = vpack.c.b16 %v8618, %v8616
    %v8681 = vpack.c.b16 %v8621, %v8619
    %v8682 = vpack.c.b16 %v8622, %v8620
    %v8683 = vpack.c.b16 %v8625, %v8623
    %v8684 = vpack.c.b16 %v8626, %v8624
    %v8685 = vpack.c.b16 %v8629, %v8627
    %v8686 = vpack.c.b16 %v8630, %v8628
    %v8687 = vpack.c.b16 %v8633, %v8631
    %v8688 = vpack.c.b16 %v8634, %v8632
    %v8689 = vpack.c.b16 %v8637, %v8635
    %v8690 = vpack.c.b16 %v8638, %v8636
    %v8691 = vpack.c.b16 %v8641, %v8639
    %v8692 = vpack.c.b16 %v8642, %v8640
    %v8693 = vpack.c.b16 %v8645, %v8643
    %v8694 = vpack.c.b16 %v8646, %v8644
    %v8695 = vpack.c.b16 %v8649, %v8647
    %v8696 = vpack.c.b16 %v8650, %v8648
    %v8697 = vpack.c.b16 %v8653, %v8651
    %v8698 = vpack.c.b16 %v8654, %v8652
    %v8699 = vpack.c.b16 %v8657, %v8655
    %v8700 = vpack.c.b16 %v8658, %v8656
    %v8701 = vpack.c.b16 %v8661, %v8659
    %v8702 = vpack.c.b16 %v8662, %v8660
    %v8703 = vpack.c.b16 %v8665, %v8663
    %v8704 = vpack.c.b16 %v8666, %v8664
    %v8705 = vpack.c.b16 %v8669, %v8667
    %v8706 = vpack.c.b16 %v8670, %v8668
    %v8707 = vpack.c.b16 %v8673, %v8671
    %v8708 = vpack.c.b16 %v8674, %v8672
    %v8709 = vpack.c.b16 %v8677, %v8675
    %v8710 = vpack.c.b16 %v8678, %v8676
    %8743 = vmatprep.subr.bf16.mxu0 %v8680
    %8744 = vmatpush1.bf16.msra.mxu0 %v8679
    %8745 = vmatprep.subr.bf16.mxu0 %v8682
    %8746 = vmatpush1.bf16.msra.mxu0 %v8681
    %8747 = vmatprep.subr.bf16.mxu0 %v8684
    %8748 = vmatpush1.bf16.msra.mxu0 %v8683
    %8749 = vmatprep.subr.bf16.mxu0 %v8686
    %8750 = vmatpush1.bf16.msra.mxu0 %v8685
    %8751 = vmatprep.subr.bf16.mxu0 %v8688
    %8752 = vmatpush1.bf16.msra.mxu0 %v8687
    %8753 = vmatprep.subr.bf16.mxu0 %v8690
    %8754 = vmatpush1.bf16.msra.mxu0 %v8689
    %8755 = vmatprep.subr.bf16.mxu0 %v8692
    %8756 = vmatpush1.bf16.msra.mxu0 %v8691
    %8757 = vmatprep.subr.bf16.mxu0 %v8694
    %8758 = vmatpush1.bf16.msra.mxu0 %v8693
    %8759 = vmatprep.subr.bf16.mxu0 %v8696
    %8760 = vmatpush1.bf16.msra.mxu0 %v8695
    %8761 = vmatprep.subr.bf16.mxu0 %v8698
    %8762 = vmatpush1.bf16.msra.mxu0 %v8697
    %8763 = vmatprep.subr.bf16.mxu0 %v8700
    %8764 = vmatpush1.bf16.msra.mxu0 %v8699
    %8765 = vmatprep.subr.bf16.mxu0 %v8702
    %8766 = vmatpush1.bf16.msra.mxu0 %v8701
    %8767 = vmatprep.subr.bf16.mxu0 %v8704
    %8768 = vmatpush1.bf16.msra.mxu0 %v8703
    %8769 = vmatprep.subr.bf16.mxu0 %v8706
    %8770 = vmatpush1.bf16.msra.mxu0 %v8705
    %8771 = vmatprep.subr.bf16.mxu0 %v8708
    %8772 = vmatpush1.bf16.msra.mxu0 %v8707
    %8773 = vmatprep.subr.bf16.mxu0 %v8710
    %8774 = vmatpush1.bf16.msra.mxu0 %v8709
    %8775 = vmatprep.mubr.bf16.mxu0 %v8549
    %8776 = vmatmul.mubr.bf16.gmra.mrb[0].mxu0 %v8548
    %v8777 = vpop.f32.mrb[0].mxu0
    %v8778 = vadd.f32 0.0, %v8777
    %v8779 = vpop.f32.mrb[0].mxu0
    %v8780 = vadd.f32 0.0, %v8779
    %v8781 = vpop.f32.mrb[0].mxu0
    %v8782 = vpop.f32.mrb[0].mxu0
    %8783 = vdwg.mxu0
    %v8784 = vadd.f32 %v8500, %v8778
    %v8785 = vadd.f32 %v8501, %v8780
    %s8786 = scalar_lea.vmem %s16, 8
    %v8787 = vld [vmem:[%s8786] sm:$0x1]
    %v8789 = vsel %vm6513, %v8787, 0
    %8791 = vmatprep.subr.bf16.mxu0 %v6522
    %8792 = vmatpush1.bf16.msra.mxu0 %v6519
    %8793 = vmatprep.subr.bf16.mxu0 0
    %8794 = vmatpush1.bf16.msra.mxu0 0
    %8795 = vmatprep.subr.bf16.mxu0 0
    %8796 = vmatpush1.bf16.msra.mxu0 0
    %8797 = vmatprep.subr.bf16.mxu0 0
    %8798 = vmatpush1.bf16.msra.mxu0 0
    %8799 = vmatprep.subr.bf16.mxu0 0
    %8800 = vmatpush1.bf16.msra.mxu0 0
    %8801 = vmatprep.subr.bf16.mxu0 0
    %8802 = vmatpush1.bf16.msra.mxu0 0
    %8803 = vmatprep.subr.bf16.mxu0 0
    %8804 = vmatpush1.bf16.msra.mxu0 0
    %8805 = vmatprep.subr.bf16.mxu0 0
    %8806 = vmatpush1.bf16.msra.mxu0 0
    %8807 = vmatprep.subr.bf16.mxu0 0
    %8808 = vmatpush1.bf16.msra.mxu0 0
    %8809 = vmatprep.subr.bf16.mxu0 0
    %8810 = vmatpush1.bf16.msra.mxu0 0
    %8811 = vmatprep.subr.bf16.mxu0 0
    %8812 = vmatpush1.bf16.msra.mxu0 0
    %8813 = vmatprep.subr.bf16.mxu0 0
    %8814 = vmatpush1.bf16.msra.mxu0 0
    %8815 = vmatprep.subr.bf16.mxu0 0
    %8816 = vmatpush1.bf16.msra.mxu0 0
    %8817 = vmatprep.subr.bf16.mxu0 0
    %8818 = vmatpush1.bf16.msra.mxu0 0
    %8819 = vmatprep.subr.bf16.mxu0 0
    %8820 = vmatpush1.bf16.msra.mxu0 0
    %8821 = vmatprep.subr.bf16.mxu0 0
    %8822 = vmatpush1.bf16.msra.mxu0 0
    %8823 = vmatprep.mubr.bf16.mxu0 0
    %8824 = vmatmul.mubr.bf16.gmra.mrb[0].mxu0 %v8789
    %v8825 = vpop.f32.mrb[0].mxu0
    %v8826 = vadd.f32 0.0, %v8825
    %v8827 = vpop.f32.mrb[0].mxu0
    %v8828 = vadd.f32 0.0, %v8827
    %v8829 = vpop.f32.mrb[0].mxu0
    %v8830 = vpop.f32.mrb[0].mxu0
    %8831 = vdwg.mxu0
    %v8832 = vpack.c.bf16 %v8826, %v8826
    %v8833 = vpack.c.bf16 %v8828, %v8828
    %s8834 = scalar_lea.vmem %s17, 2048
    %v8835 = vld [vmem:[%s8834] sm:$0xff]
    %v8836 = vld [vmem:[%s8834 + $0x8] sm:$0xff]
    %v8837 = vld [vmem:[%s8834 + $0x10] sm:$0xff]
    %v8838 = vld [vmem:[%s8834 + $0x18] sm:$0xff]
    %v8839 = vld [vmem:[%s8834 + $0x20] sm:$0xff]
    %v8840 = vld [vmem:[%s8834 + $0x28] sm:$0xff]
    %v8841 = vld [vmem:[%s8834 + $0x30] sm:$0xff]
    %v8842 = vld [vmem:[%s8834 + $0x38] sm:$0xff]
    %v8843 = vld [vmem:[%s8834 + $0x40] sm:$0xff]
    %v8844 = vld [vmem:[%s8834 + $0x48] sm:$0xff]
    %v8845 = vld [vmem:[%s8834 + $0x50] sm:$0xff]
    %v8846 = vld [vmem:[%s8834 + $0x58] sm:$0xff]
    %v8847 = vld [vmem:[%s8834 + $0x60] sm:$0xff]
    %v8848 = vld [vmem:[%s8834 + $0x68] sm:$0xff]
    %v8849 = vld [vmem:[%s8834 + $0x70] sm:$0xff]
    %v8850 = vld [vmem:[%s8834 + $0x78] sm:$0xff]
    %v8851 = vld [vmem:[%s8834 + $0x80] sm:$0xff]
    %v8852 = vld [vmem:[%s8834 + $0x88] sm:$0xff]
    %v8853 = vld [vmem:[%s8834 + $0x90] sm:$0xff]
    %v8854 = vld [vmem:[%s8834 + $0x98] sm:$0xff]
    %v8855 = vld [vmem:[%s8834 + $0xa0] sm:$0xff]
    %v8856 = vld [vmem:[%s8834 + $0xa8] sm:$0xff]
    %v8857 = vld [vmem:[%s8834 + $0xb0] sm:$0xff]
    %v8858 = vld [vmem:[%s8834 + $0xb8] sm:$0xff]
    %v8859 = vld [vmem:[%s8834 + $0xc0] sm:$0xff]
    %v8860 = vld [vmem:[%s8834 + $0xc8] sm:$0xff]
    %v8861 = vld [vmem:[%s8834 + $0xd0] sm:$0xff]
    %v8862 = vld [vmem:[%s8834 + $0xd8] sm:$0xff]
    %v8863 = vld [vmem:[%s8834 + $0xe0] sm:$0xff]
    %v8864 = vld [vmem:[%s8834 + $0xe8] sm:$0xff]
    %v8865 = vld [vmem:[%s8834 + $0xf0] sm:$0xff]
    %v8866 = vld [vmem:[%s8834 + $0xf8] sm:$0xff]
    %v8899 = vunpack.c.l.b16 %v8835
    %v8900 = vunpack.c.h.b16 %v8835
    %v8901 = vunpack.c.l.b16 %v8836
    %v8902 = vunpack.c.h.b16 %v8836
    %v8903 = vunpack.c.l.b16 %v8837
    %v8904 = vunpack.c.h.b16 %v8837
    %v8905 = vunpack.c.l.b16 %v8838
    %v8906 = vunpack.c.h.b16 %v8838
    %v8907 = vunpack.c.l.b16 %v8839
    %v8908 = vunpack.c.h.b16 %v8839
    %v8909 = vunpack.c.l.b16 %v8840
    %v8910 = vunpack.c.h.b16 %v8840
    %v8911 = vunpack.c.l.b16 %v8841
    %v8912 = vunpack.c.h.b16 %v8841
    %v8913 = vunpack.c.l.b16 %v8842
    %v8914 = vunpack.c.h.b16 %v8842
    %v8915 = vunpack.c.l.b16 %v8843
    %v8916 = vunpack.c.h.b16 %v8843
    %v8917 = vunpack.c.l.b16 %v8844
    %v8918 = vunpack.c.h.b16 %v8844
    %v8919 = vunpack.c.l.b16 %v8845
    %v8920 = vunpack.c.h.b16 %v8845
    %v8921 = vunpack.c.l.b16 %v8846
    %v8922 = vunpack.c.h.b16 %v8846
    %v8923 = vunpack.c.l.b16 %v8847
    %v8924 = vunpack.c.h.b16 %v8847
    %v8925 = vunpack.c.l.b16 %v8848
    %v8926 = vunpack.c.h.b16 %v8848
    %v8927 = vunpack.c.l.b16 %v8849
    %v8928 = vunpack.c.h.b16 %v8849
    %v8929 = vunpack.c.l.b16 %v8850
    %v8930 = vunpack.c.h.b16 %v8850
    %v8931 = vunpack.c.l.b16 %v8851
    %v8932 = vunpack.c.h.b16 %v8851
    %v8933 = vunpack.c.l.b16 %v8852
    %v8934 = vunpack.c.h.b16 %v8852
    %v8935 = vunpack.c.l.b16 %v8853
    %v8936 = vunpack.c.h.b16 %v8853
    %v8937 = vunpack.c.l.b16 %v8854
    %v8938 = vunpack.c.h.b16 %v8854
    %v8939 = vunpack.c.l.b16 %v8855
    %v8940 = vunpack.c.h.b16 %v8855
    %v8941 = vunpack.c.l.b16 %v8856
    %v8942 = vunpack.c.h.b16 %v8856
    %v8943 = vunpack.c.l.b16 %v8857
    %v8944 = vunpack.c.h.b16 %v8857
    %v8945 = vunpack.c.l.b16 %v8858
    %v8946 = vunpack.c.h.b16 %v8858
    %v8947 = vunpack.c.l.b16 %v8859
    %v8948 = vunpack.c.h.b16 %v8859
    %v8949 = vunpack.c.l.b16 %v8860
    %v8950 = vunpack.c.h.b16 %v8860
    %v8951 = vunpack.c.l.b16 %v8861
    %v8952 = vunpack.c.h.b16 %v8861
    %v8953 = vunpack.c.l.b16 %v8862
    %v8954 = vunpack.c.h.b16 %v8862
    %v8955 = vunpack.c.l.b16 %v8863
    %v8956 = vunpack.c.h.b16 %v8863
    %v8957 = vunpack.c.l.b16 %v8864
    %v8958 = vunpack.c.h.b16 %v8864
    %v8959 = vunpack.c.l.b16 %v8865
    %v8960 = vunpack.c.h.b16 %v8865
    %v8961 = vunpack.c.l.b16 %v8866
    %v8962 = vunpack.c.h.b16 %v8866
    %v8963 = vpack.c.b16 %v8901, %v8899
    %v8964 = vpack.c.b16 %v8902, %v8900
    %v8965 = vpack.c.b16 %v8905, %v8903
    %v8966 = vpack.c.b16 %v8906, %v8904
    %v8967 = vpack.c.b16 %v8909, %v8907
    %v8968 = vpack.c.b16 %v8910, %v8908
    %v8969 = vpack.c.b16 %v8913, %v8911
    %v8970 = vpack.c.b16 %v8914, %v8912
    %v8971 = vpack.c.b16 %v8917, %v8915
    %v8972 = vpack.c.b16 %v8918, %v8916
    %v8973 = vpack.c.b16 %v8921, %v8919
    %v8974 = vpack.c.b16 %v8922, %v8920
    %v8975 = vpack.c.b16 %v8925, %v8923
    %v8976 = vpack.c.b16 %v8926, %v8924
    %v8977 = vpack.c.b16 %v8929, %v8927
    %v8978 = vpack.c.b16 %v8930, %v8928
    %v8979 = vpack.c.b16 %v8933, %v8931
    %v8980 = vpack.c.b16 %v8934, %v8932
    %v8981 = vpack.c.b16 %v8937, %v8935
    %v8982 = vpack.c.b16 %v8938, %v8936
    %v8983 = vpack.c.b16 %v8941, %v8939
    %v8984 = vpack.c.b16 %v8942, %v8940
    %v8985 = vpack.c.b16 %v8945, %v8943
    %v8986 = vpack.c.b16 %v8946, %v8944
    %v8987 = vpack.c.b16 %v8949, %v8947
    %v8988 = vpack.c.b16 %v8950, %v8948
    %v8989 = vpack.c.b16 %v8953, %v8951
    %v8990 = vpack.c.b16 %v8954, %v8952
    %v8991 = vpack.c.b16 %v8957, %v8955
    %v8992 = vpack.c.b16 %v8958, %v8956
    %v8993 = vpack.c.b16 %v8961, %v8959
    %v8994 = vpack.c.b16 %v8962, %v8960
    %9027 = vmatprep.subr.bf16.mxu0 %v8964
    %9028 = vmatpush1.bf16.msra.mxu0 %v8963
    %9029 = vmatprep.subr.bf16.mxu0 %v8966
    %9030 = vmatpush1.bf16.msra.mxu0 %v8965
    %9031 = vmatprep.subr.bf16.mxu0 %v8968
    %9032 = vmatpush1.bf16.msra.mxu0 %v8967
    %9033 = vmatprep.subr.bf16.mxu0 %v8970
    %9034 = vmatpush1.bf16.msra.mxu0 %v8969
    %9035 = vmatprep.subr.bf16.mxu0 %v8972
    %9036 = vmatpush1.bf16.msra.mxu0 %v8971
    %9037 = vmatprep.subr.bf16.mxu0 %v8974
    %9038 = vmatpush1.bf16.msra.mxu0 %v8973
    %9039 = vmatprep.subr.bf16.mxu0 %v8976
    %9040 = vmatpush1.bf16.msra.mxu0 %v8975
    %9041 = vmatprep.subr.bf16.mxu0 %v8978
    %9042 = vmatpush1.bf16.msra.mxu0 %v8977
    %9043 = vmatprep.subr.bf16.mxu0 %v8980
    %9044 = vmatpush1.bf16.msra.mxu0 %v8979
    %9045 = vmatprep.subr.bf16.mxu0 %v8982
    %9046 = vmatpush1.bf16.msra.mxu0 %v8981
    %9047 = vmatprep.subr.bf16.mxu0 %v8984
    %9048 = vmatpush1.bf16.msra.mxu0 %v8983
    %9049 = vmatprep.subr.bf16.mxu0 %v8986
    %9050 = vmatpush1.bf16.msra.mxu0 %v8985
    %9051 = vmatprep.subr.bf16.mxu0 %v8988
    %9052 = vmatpush1.bf16.msra.mxu0 %v8987
    %9053 = vmatprep.subr.bf16.mxu0 %v8990
    %9054 = vmatpush1.bf16.msra.mxu0 %v8989
    %9055 = vmatprep.subr.bf16.mxu0 %v8992
    %9056 = vmatpush1.bf16.msra.mxu0 %v8991
    %9057 = vmatprep.subr.bf16.mxu0 %v8994
    %9058 = vmatpush1.bf16.msra.mxu0 %v8993
    %9059 = vmatprep.mubr.bf16.mxu0 %v8833
    %9060 = vmatmul.mubr.bf16.gmra.mrb[0].mxu0 %v8832
    %v9061 = vpop.f32.mrb[0].mxu0
    %v9062 = vadd.f32 0.0, %v9061
    %v9063 = vpop.f32.mrb[0].mxu0
    %v9064 = vadd.f32 0.0, %v9063
    %v9065 = vpop.f32.mrb[0].mxu0
    %v9066 = vpop.f32.mrb[0].mxu0
    %9067 = vdwg.mxu0
    %v9068 = vadd.f32 %v8784, %v9062
    %v9069 = vadd.f32 %v8785, %v9064
    %v9070 = vsel %vm6396, %v9068, 0.0
    %v9071 = vrot.slane %v9070, 4
    %v9072 = vadd.f32 %v9070, %v9071
    %v9073 = vrot.slane %v9072, 2
    %v9074 = vadd.f32 %v9072, %v9073
    %v9075 = vrot.slane %v9074, 1
    %v9076 = vadd.f32 %v9074, %v9075
    %v9077 = vsel %vm6396, %v9069, 0.0
    %v9078 = vrot.slane %v9077, 4
    %v9079 = vadd.f32 %v9077, %v9078
    %v9080 = vrot.slane %v9079, 2
    %v9081 = vadd.f32 %v9079, %v9080
    %v9082 = vrot.slane %v9081, 1
    %v9083 = vadd.f32 %v9081, %v9082
    %v9084 = vmul.f32 %v9076, %v6411
    %v9085 = vmul.f32 %v9083, %v6411
    %v9086 = vmul.f32 %v9068, %v9068
    %v9087 = vmul.f32 %v9069, %v9069
    %v9088 = vsel %vm6396, %v9086, 0.0
    %v9089 = vrot.slane %v9088, 4
    %v9090 = vadd.f32 %v9088, %v9089
    %v9091 = vrot.slane %v9090, 2
    %v9092 = vadd.f32 %v9090, %v9091
    %v9093 = vrot.slane %v9092, 1
    %v9094 = vadd.f32 %v9092, %v9093
    %v9095 = vsel %vm6396, %v9087, 0.0
    %v9096 = vrot.slane %v9095, 4
    %v9097 = vadd.f32 %v9095, %v9096
    %v9098 = vrot.slane %v9097, 2
    %v9099 = vadd.f32 %v9097, %v9098
    %v9100 = vrot.slane %v9099, 1
    %v9101 = vadd.f32 %v9099, %v9100
    %v9102 = vmul.f32 %v9094, %v6411
    %v9103 = vmul.f32 %v9101, %v6411
    %v9104 = vmul.f32 %v9084, %v9084
    %v9105 = vmul.f32 %v9085, %v9085
    %v9106 = vsub.f32 %v9102, %v9104
    %v9107 = vsub.f32 %v9103, %v9105
    %v9108 = vld [vmem:[%s18] sm:$0x3]
    %v9109 = vadd.f32 %v9106, 1e-05
    %v9110 = vadd.f32 %v9107, 1e-05
    %v9111 = vrsqrt.pop %v9109
    %v9112 = vrsqrt.pop %v9110
    %v9115 = vcombine.low %v9111, %v9112
    %v9117 = vunpack.c.l.s4 1966171168
    %v9118 = vunpack.c.0.s8 %v9117
    %v9119 = vlaneseq
    %v9120 = vshrl.u32 %v9119, 7
    %v9121 = vsub.s32 %v9118, %v9120
    %v9122 = vrot.slane %v9115, %v9121
    %v9124 = vunpack.c.l.s4 1966171168
    %v9125 = vunpack.c.0.s8 %v9124
    %v9126 = vlaneseq
    %v9127 = vshrl.u32 %v9126, 7
    %v9128 = vsub.s32 %v9125, %v9127
    %v9129 = vrot.slane %v9122, %v9128
    %v9131 = vmul.f32 %v9108, %v9129
    %v9132 = vld [vmem:[%s19] sm:$0x3]
    %v9134 = vlaneseq
    %v9135 = vshrl.u32 %v9134, 7
    %v9136 = vsub.s32 0, %v9135
    %v9137 = vrot.slane %v9131, %v9136
    %v9138 = vlaneseq
    %v9139 = vshrl.u32 %v9138, 7
    %v9140 = vsub.s32 1, %v9139
    %v9141 = vrot.slane %v9131, %v9140
    %v9144 = vmul.f32 %v9084, %v9137
    %v9145 = vmul.f32 %v9085, %v9141
    %v9148 = vcombine.low %v9144, %v9145
    %v9150 = vunpack.c.l.s4 1966171168
    %v9151 = vunpack.c.0.s8 %v9150
    %v9152 = vlaneseq
    %v9153 = vshrl.u32 %v9152, 7
    %v9154 = vsub.s32 %v9151, %v9153
    %v9155 = vrot.slane %v9148, %v9154
    %v9157 = vunpack.c.l.s4 1966171168
    %v9158 = vunpack.c.0.s8 %v9157
    %v9159 = vlaneseq
    %v9160 = vshrl.u32 %v9159, 7
    %v9161 = vsub.s32 %v9158, %v9160
    %v9162 = vrot.slane %v9155, %v9161
    %v9164 = vsub.f32 %v9132, %v9162
    %v9165 = vmul.f32 %v9068, %v9137
    %v9166 = vmul.f32 %v9069, %v9141
    %v9168 = vlaneseq
    %v9169 = vshrl.u32 %v9168, 7
    %v9170 = vsub.s32 0, %v9169
    %v9171 = vrot.slane %v9164, %v9170
    %v9172 = vlaneseq
    %v9173 = vshrl.u32 %v9172, 7
    %v9174 = vsub.s32 1, %v9173
    %v9175 = vrot.slane %v9164, %v9174
    %v9178 = vadd.f32 %v9165, %v9171
    %v9179 = vadd.f32 %v9166, %v9175
    %v9180 = vmax.f32 %v9178, 0.0
    %v9181 = vmax.f32 %v9179, 0.0
    %v9182 = vld [vmem:[%s20] sm:$0x1]
    %v9183 = vpack.c.bf16 %v9180, %v9180
    %v9184 = vpack.c.bf16 %v9181, %v9181
    %v9186 = vsel %vm6513, %v9182, 0
    %v9189 = vsel %vm6517, %v9183, 0
    %v9192 = vsel %vm6517, %v9184, 0
    %9194 = vmatprep.subr.bf16.mxu0 %v9192
    %9195 = vmatpush1.bf16.msra.mxu0 %v9189
    %9196 = vmatprep.subr.bf16.mxu0 0
    %9197 = vmatpush1.bf16.msra.mxu0 0
    %9198 = vmatprep.subr.bf16.mxu0 0
    %9199 = vmatpush1.bf16.msra.mxu0 0
    %9200 = vmatprep.subr.bf16.mxu0 0
    %9201 = vmatpush1.bf16.msra.mxu0 0
    %9202 = vmatprep.subr.bf16.mxu0 0
    %9203 = vmatpush1.bf16.msra.mxu0 0
    %9204 = vmatprep.subr.bf16.mxu0 0
    %9205 = vmatpush1.bf16.msra.mxu0 0
    %9206 = vmatprep.subr.bf16.mxu0 0
    %9207 = vmatpush1.bf16.msra.mxu0 0
    %9208 = vmatprep.subr.bf16.mxu0 0
    %9209 = vmatpush1.bf16.msra.mxu0 0
    %9210 = vmatprep.subr.bf16.mxu0 0
    %9211 = vmatpush1.bf16.msra.mxu0 0
    %9212 = vmatprep.subr.bf16.mxu0 0
    %9213 = vmatpush1.bf16.msra.mxu0 0
    %9214 = vmatprep.subr.bf16.mxu0 0
    %9215 = vmatpush1.bf16.msra.mxu0 0
    %9216 = vmatprep.subr.bf16.mxu0 0
    %9217 = vmatpush1.bf16.msra.mxu0 0
    %9218 = vmatprep.subr.bf16.mxu0 0
    %9219 = vmatpush1.bf16.msra.mxu0 0
    %9220 = vmatprep.subr.bf16.mxu0 0
    %9221 = vmatpush1.bf16.msra.mxu0 0
    %9222 = vmatprep.subr.bf16.mxu0 0
    %9223 = vmatpush1.bf16.msra.mxu0 0
    %9224 = vmatprep.subr.bf16.mxu0 0
    %9225 = vmatpush1.bf16.msra.mxu0 0
    %9226 = vmatprep.mubr.bf16.mxu0 0
    %9227 = vmatmul.mubr.bf16.gmra.mrb[0].mxu0 %v9186
    %v9228 = vpop.f32.mrb[0].mxu0
    %v9229 = vadd.f32 0.0, %v9228
    %v9230 = vpop.f32.mrb[0].mxu0
    %v9231 = vadd.f32 0.0, %v9230
    %v9232 = vpop.f32.mrb[0].mxu0
    %v9233 = vpop.f32.mrb[0].mxu0
    %9234 = vdwg.mxu0
    %v9235 = vpack.c.bf16 %v9229, %v9229
    %v9236 = vpack.c.bf16 %v9231, %v9231
    %v9237 = vld [vmem:[%s21] sm:$0xf]
    %v9238 = vld [vmem:[%s21 + $0x4] sm:$0xf]
    %v9239 = vld [vmem:[%s21 + $0x8] sm:$0xf]
    %v9240 = vld [vmem:[%s21 + $0xc] sm:$0xf]
    %v9241 = vld [vmem:[%s21 + $0x10] sm:$0xf]
    %v9242 = vld [vmem:[%s21 + $0x14] sm:$0xf]
    %v9243 = vld [vmem:[%s21 + $0x18] sm:$0xf]
    %v9244 = vld [vmem:[%s21 + $0x1c] sm:$0xf]
    %v9245 = vld [vmem:[%s21 + $0x20] sm:$0xf]
    %v9246 = vld [vmem:[%s21 + $0x24] sm:$0xf]
    %v9247 = vld [vmem:[%s21 + $0x28] sm:$0xf]
    %v9248 = vld [vmem:[%s21 + $0x2c] sm:$0xf]
    %v9249 = vld [vmem:[%s21 + $0x30] sm:$0xf]
    %v9250 = vld [vmem:[%s21 + $0x34] sm:$0xf]
    %v9251 = vld [vmem:[%s21 + $0x38] sm:$0xf]
    %v9252 = vld [vmem:[%s21 + $0x3c] sm:$0xf]
    %v9253 = vld [vmem:[%s21 + $0x40] sm:$0xf]
    %v9254 = vld [vmem:[%s21 + $0x44] sm:$0xf]
    %v9255 = vld [vmem:[%s21 + $0x48] sm:$0xf]
    %v9256 = vld [vmem:[%s21 + $0x4c] sm:$0xf]
    %v9257 = vld [vmem:[%s21 + $0x50] sm:$0xf]
    %v9258 = vld [vmem:[%s21 + $0x54] sm:$0xf]
    %v9259 = vld [vmem:[%s21 + $0x58] sm:$0xf]
    %v9260 = vld [vmem:[%s21 + $0x5c] sm:$0xf]
    %v9261 = vld [vmem:[%s21 + $0x60] sm:$0xf]
    %v9262 = vld [vmem:[%s21 + $0x64] sm:$0xf]
    %v9263 = vld [vmem:[%s21 + $0x68] sm:$0xf]
    %v9264 = vld [vmem:[%s21 + $0x6c] sm:$0xf]
    %v9265 = vld [vmem:[%s21 + $0x70] sm:$0xf]
    %v9266 = vld [vmem:[%s21 + $0x74] sm:$0xf]
    %v9267 = vld [vmem:[%s21 + $0x78] sm:$0xf]
    %v9268 = vld [vmem:[%s21 + $0x7c] sm:$0xf]
    %v9269 = vld [vmem:[%s22] sm:$0x1]
    %v9271 = vlaneseq
    %v9272 = vshrl.u32 %v9271, 7
    %v9273 = vsub.s32 0, %v9272
    %v9274 = vrot.slane %v9269, %v9273
    %v9308 = vunpack.c.l.b16 %v9237
    %v9309 = vunpack.c.l.b16 %v9238
    %v9310 = vunpack.c.l.b16 %v9239
    %v9311 = vunpack.c.l.b16 %v9240
    %v9312 = vunpack.c.l.b16 %v9241
    %v9313 = vunpack.c.l.b16 %v9242
    %v9314 = vunpack.c.l.b16 %v9243
    %v9315 = vunpack.c.l.b16 %v9244
    %v9316 = vunpack.c.l.b16 %v9245
    %v9317 = vunpack.c.l.b16 %v9246
    %v9318 = vunpack.c.l.b16 %v9247
    %v9319 = vunpack.c.l.b16 %v9248
    %v9320 = vunpack.c.l.b16 %v9249
    %v9321 = vunpack.c.l.b16 %v9250
    %v9322 = vunpack.c.l.b16 %v9251
    %v9323 = vunpack.c.l.b16 %v9252
    %v9324 = vunpack.c.l.b16 %v9253
    %v9325 = vunpack.c.l.b16 %v9254
    %v9326 = vunpack.c.l.b16 %v9255
    %v9327 = vunpack.c.l.b16 %v9256
    %v9328 = vunpack.c.l.b16 %v9257
    %v9329 = vunpack.c.l.b16 %v9258
    %v9330 = vunpack.c.l.b16 %v9259
    %v9331 = vunpack.c.l.b16 %v9260
    %v9332 = vunpack.c.l.b16 %v9261
    %v9333 = vunpack.c.l.b16 %v9262
    %v9334 = vunpack.c.l.b16 %v9263
    %v9335 = vunpack.c.l.b16 %v9264
    %v9336 = vunpack.c.l.b16 %v9265
    %v9337 = vunpack.c.l.b16 %v9266
    %v9338 = vunpack.c.l.b16 %v9267
    %v9339 = vunpack.c.l.b16 %v9268
    %v9340 = vpack.c.b16 %v9309, %v9308
    %v9341 = vpack.c.b16 %v9311, %v9310
    %v9342 = vpack.c.b16 %v9313, %v9312
    %v9343 = vpack.c.b16 %v9315, %v9314
    %v9344 = vpack.c.b16 %v9317, %v9316
    %v9345 = vpack.c.b16 %v9319, %v9318
    %v9346 = vpack.c.b16 %v9321, %v9320
    %v9347 = vpack.c.b16 %v9323, %v9322
    %v9348 = vpack.c.b16 %v9325, %v9324
    %v9349 = vpack.c.b16 %v9327, %v9326
    %v9350 = vpack.c.b16 %v9329, %v9328
    %v9351 = vpack.c.b16 %v9331, %v9330
    %v9352 = vpack.c.b16 %v9333, %v9332
    %v9353 = vpack.c.b16 %v9335, %v9334
    %v9354 = vpack.c.b16 %v9337, %v9336
    %v9355 = vpack.c.b16 %v9339, %v9338
    %9372 = vmatprep.subr.bf16.mxu0 0
    %9373 = vmatpush1.bf16.msra.mxu0 %v9340
    %9374 = vmatprep.subr.bf16.mxu0 0
    %9375 = vmatpush1.bf16.msra.mxu0 %v9341
    %9376 = vmatprep.subr.bf16.mxu0 0
    %9377 = vmatpush1.bf16.msra.mxu0 %v9342
    %9378 = vmatprep.subr.bf16.mxu0 0
    %9379 = vmatpush1.bf16.msra.mxu0 %v9343
    %9380 = vmatprep.subr.bf16.mxu0 0
    %9381 = vmatpush1.bf16.msra.mxu0 %v9344
    %9382 = vmatprep.subr.bf16.mxu0 0
    %9383 = vmatpush1.bf16.msra.mxu0 %v9345
    %9384 = vmatprep.subr.bf16.mxu0 0
    %9385 = vmatpush1.bf16.msra.mxu0 %v9346
    %9386 = vmatprep.subr.bf16.mxu0 0
    %9387 = vmatpush1.bf16.msra.mxu0 %v9347
    %9388 = vmatprep.subr.bf16.mxu0 0
    %9389 = vmatpush1.bf16.msra.mxu0 %v9348
    %9390 = vmatprep.subr.bf16.mxu0 0
    %9391 = vmatpush1.bf16.msra.mxu0 %v9349
    %9392 = vmatprep.subr.bf16.mxu0 0
    %9393 = vmatpush1.bf16.msra.mxu0 %v9350
    %9394 = vmatprep.subr.bf16.mxu0 0
    %9395 = vmatpush1.bf16.msra.mxu0 %v9351
    %9396 = vmatprep.subr.bf16.mxu0 0
    %9397 = vmatpush1.bf16.msra.mxu0 %v9352
    %9398 = vmatprep.subr.bf16.mxu0 0
    %9399 = vmatpush1.bf16.msra.mxu0 %v9353
    %9400 = vmatprep.subr.bf16.mxu0 0
    %9401 = vmatpush1.bf16.msra.mxu0 %v9354
    %9402 = vmatprep.subr.bf16.mxu0 0
    %9403 = vmatpush1.bf16.msra.mxu0 %v9355
    %9404 = vmatprep.mubr.bf16.mxu0 %v9236
    %9405 = vmatmul.mubr.bf16.gmra.mrb[0].mxu0 %v9235
    %v9406 = vpop.f32.mrb[0].mxu0
    %v9407 = vadd.f32 %v9274, %v9406
    %v9408 = vpop.f32.mrb[0].mxu0
    %v9409 = vpop.f32.mrb[0].mxu0
    %v9410 = vpop.f32.mrb[0].mxu0
    %9411 = vdwg.mxu0
    %vm9412 = vcmask 254976
    %9413 = vst.msk [vmem:[#allocation2] sm:$0x3] %vm9412, %v9407
    // Predicated region
    $region94: #{private_encoder_forward.1} parent=1 // pred_check
      _
    $region95: #{private_encoder_forward.1} parent=1 // pred_check_branch
      %9415 = sbr.rel (0) target = $region97
    $region96: #{private_encoder_forward.1} parent=1 // pred_region
      %s9417 = ssub.s32 32, 32
      %9418 = vsyncadd [#allocation3], %s9417
      %s9420 = sshll.u32 [#allocation2], 4
      %s9421 = int_to_ptr.vmem [resolvable:$true] %s9420
      %9423 = dma.vmem_to_hbm [thread:$0]  %s9421, 32, %s23, [#allocation3]
    $region97: #{private_encoder_forward.1} parent=1 // pred_fallthru
      _
    // Predicated region
    $region98: #{private_encoder_forward.1} parent=1 // pred_check
      _
    $region99: #{private_encoder_forward.1} parent=1 // pred_check_branch
      %9425 = sbr.rel (0) target = $region101
    $region100: #{private_encoder_forward.1} parent=1 // pred_region
      %9426 = dma.done [#allocation3], 32
    $region101: #{private_encoder_forward.1} parent=1 // pred_fallthru
      _
    %9427 = vsyncpa [#allocation3], 1

</llo_original>
